<compile_context>
chip_gen: v6e
topology: v6e:2x2x1
jax: 0.10.0
libtpu: 0.0.40
codegen_flags: <defaults>
</compile_context>

<pallas_src>
import jax
import jax.numpy as jnp
from jax.experimental import pallas as pl
from jax.experimental.pallas import tpu as pltpu

# Net6 layer widths: 429 -> 2048 -> 1024 -> 512 -> 256 -> 128 -> 64 -> 39
LAYER_DIMS = [429, 2048, 1024, 512, 256, 128, 64, 39]
N_LAYERS = len(LAYER_DIMS) - 1   # 7 linear layers
# Padded dims: 429->448 (multiple of 32 for int8 sublane packing), 64/39 -> 128 lanes.
PAD_DIMS = [448, 2048, 1024, 512, 256, 128, 128, 128]
TOT_OUT = sum(PAD_DIMS[1:])      # 4224 = 33 * 128 (all per-layer offsets lane-aligned)
LEAKY_SLOPE = 0.01
BN_EPS = 1e-5


def _round_up(x, m):
    return (x + m - 1) // m * m


def net6_fused_kernel(x_ref, *rest):
    """Whole Net6 forward for one batch tile.

    rest layout:
      rest[0:7]    : w1..w7   int8 HBM refs (memory_space=pl.ANY), BN+quant folded
      rest[7]      : scale slab (1, TOT_OUT) f32  (per-output-channel dequant scales)
      rest[8]      : bias  slab (1, TOT_OUT) f32  (BN-folded biases)
      rest[9]      : o_ref (Bt, 128) f32
      rest[10:17]  : w_vmem1..7  int8 VMEM scratch (persist across batch tiles)
      rest[17]     : DMA semaphore array (7,)
    """
    w_hbm = rest[0:N_LAYERS]
    scale_ref = rest[N_LAYERS]
    bias_ref = rest[N_LAYERS + 1]
    o_ref = rest[N_LAYERS + 2]
    w_vmem = rest[N_LAYERS + 3:2 * N_LAYERS + 3]
    sem = rest[2 * N_LAYERS + 3]

    step = pl.program_id(0)

    # Queue ALL weight DMAs once (first batch tile only); scratch persists, so
    # later batch tiles reuse the VMEM-resident weights with zero weight traffic.
    @pl.when(step == 0)
    def _start_all_weight_dmas():
        for li in range(N_LAYERS):
            pltpu.make_async_copy(w_hbm[li], w_vmem[li], sem.at[li]).start()

    h = x_ref[...]                                   # (Bt, 448) bf16
    off = 0
    out = None
    for li in range(N_LAYERS):                       # unrolled at trace time
        d_out = PAD_DIMS[li + 1]

        # Wait only for THIS layer's weight; later layers keep streaming in the
        # background while we dequant + matmul this one.
        @pl.when(step == 0)
        def _wait(li=li):
            pltpu.make_async_copy(w_hbm[li], w_vmem[li], sem.at[li]).wait()

        w = w_vmem[li][...].astype(jnp.bfloat16)     # int8 -> bf16 (exact values)
        acc = jnp.dot(h, w, preferred_element_type=jnp.float32)
        # Per-output-channel dequant scale + BN-folded bias, in f32.
        y = acc * scale_ref[:, off:off + d_out] + bias_ref[:, off:off + d_out]
        if li < N_LAYERS - 1:
            # LeakyReLU (slope 0.01) in f32 (v5e-safe); Dropout is identity in eval.
            y = jnp.where(y >= 0.0, y, LEAKY_SLOPE * y)
            h = y.astype(jnp.bfloat16)               # carry activations in bf16
        else:
            out = y
        off += d_out

    o_ref[...] = out                                 # (Bt, 128) f32, lane-dense


def net6_forward(x, params, *, batch_tile=None):
    """Fused 7-layer MLP forward. x: (B, 429) f32 -> (B, 39) f32."""
    B, d_in = x.shape
    assert d_in == LAYER_DIMS[0]
    k_pad = PAD_DIMS[0]
    bt = batch_tile if batch_tile is not None else min(128, _round_up(max(B, 8), 8))
    b_pad = _round_up(B, bt)
    n_bt = b_pad // bt

    x_p = jnp.zeros((b_pad, k_pad), jnp.bfloat16).at[:B, :d_in].set(
        x.astype(jnp.bfloat16))

    in_specs = [pl.BlockSpec((bt, k_pad), lambda b: (b, 0))]
    in_specs += [pl.BlockSpec(memory_space=pl.ANY) for _ in range(N_LAYERS)]
    in_specs += [pl.BlockSpec((1, TOT_OUT), lambda b: (0, 0)),
                 pl.BlockSpec((1, TOT_OUT), lambda b: (0, 0))]

    scratch = [pltpu.VMEM((PAD_DIMS[i], PAD_DIMS[i + 1]), jnp.int8)
               for i in range(N_LAYERS)]
    scratch.append(pltpu.SemaphoreType.DMA((N_LAYERS,)))

    out = pl.pallas_call(
        net6_fused_kernel,
        out_shape=jax.ShapeDtypeStruct((b_pad, PAD_DIMS[-1]), jnp.float32),
        grid_spec=pltpu.PrefetchScalarGridSpec(
            num_scalar_prefetch=0,
            grid=(n_bt,),
            in_specs=in_specs,
            out_specs=pl.BlockSpec((bt, PAD_DIMS[-1]), lambda b: (b, 0)),
            scratch_shapes=scratch,
        ),
        compiler_params=pltpu.CompilerParams(
            # "arbitrary": weights are loaded on batch step 0 only into per-core
            # scratch, so the batch axis must run sequentially on one core.
            dimension_semantics=("arbitrary",),
            vmem_limit_bytes=32 << 20,   # ~3.6 MB int8 weights + dequant temps
        ),
    )(x_p, *params["w_q"], params["scale_slab"], params["bias_slab"])
    return out[:B, :LAYER_DIMS[-1]]


def init_params(key):
    """Deterministic synthetic params, PyTorch-like init, BN folded, int8 quant."""
    w_q_list, scales, biases = [], [], []
    w_f32_list, b_f32_list = [], []
    for li in range(N_LAYERS):
        d_in, d_out = LAYER_DIMS[li], LAYER_DIMS[li + 1]
        p_in, p_out = PAD_DIMS[li], PAD_DIMS[li + 1]
        key, kw, kb, kg, kbt, km, kv = jax.random.split(key, 7)
        bound = 1.0 / (d_in ** 0.5)
        # PyTorch nn.Linear weight is (d_out, d_in); store transposed (d_in, d_out).
        w_t = jax.random.uniform(kw, (d_in, d_out), jnp.float32, -bound, bound)
        b = jax.random.uniform(kb, (d_out,), jnp.float32, -bound, bound)
        if li < N_LAYERS - 1:
            gamma = 1.0 + 0.1 * jax.random.normal(kg, (d_out,), jnp.float32)
            beta = 0.1 * jax.random.normal(kbt, (d_out,), jnp.float32)
            r_mean = 0.1 * jax.random.normal(km, (d_out,), jnp.float32)
            r_var = jnp.abs(1.0 + 0.1 * jax.random.normal(kv, (d_out,), jnp.float32))
            # Fold eval-mode BN: y = (xW + b)*s + t  ==  x(W*s) + (b*s + t)
            s = gamma / jnp.sqrt(r_var + BN_EPS)
            t = beta - r_mean * s
            w_t = w_t * s[None, :]
            b = b * s + t
        w_f32_list.append(w_t)
        b_f32_list.append(b)

        # Zero-pad to TPU-friendly dims (mathematically identity).
        w_pad = jnp.zeros((p_in, p_out), jnp.float32).at[:d_in, :d_out].set(w_t)
        b_pad = jnp.zeros((p_out,), jnp.float32).at[:d_out].set(b)

        # Per-output-channel int8 quantization (BN already folded in).
        amax = jnp.max(jnp.abs(w_pad), axis=0)
        qscale = jnp.maximum(amax, 1e-12) / 127.0
        w_q = jnp.clip(jnp.round(w_pad / qscale[None, :]), -127.0, 127.0)
        w_q_list.append(w_q.astype(jnp.int8))
        scales.append(qscale)
        biases.append(b_pad)

    scale_slab = jnp.concatenate(scales).reshape(1, -1).astype(jnp.float32)
    bias_slab = jnp.concatenate(biases).reshape(1, -1).astype(jnp.float32)
    return dict(w_q=w_q_list, scale_slab=scale_slab, bias_slab=bias_slab,
                w_f32=w_f32_list, b_f32=b_f32_list)


def net6_reference_quant(x, params):
    """Pure-JAX reference using exactly the kernel's quantized math."""
    B, d_in = x.shape
    h = jnp.zeros((B, PAD_DIMS[0]), jnp.float32).at[:, :d_in].set(x)
    h = h.astype(jnp.bfloat16)
    off = 0
    y = None
    for li in range(N_LAYERS):
        d_out = PAD_DIMS[li + 1]
        w = params["w_q"][li].astype(jnp.bfloat16)
        y = jnp.dot(h, w, preferred_element_type=jnp.float32)
        y = (y * params["scale_slab"][:, off:off + d_out]
             + params["bias_slab"][:, off:off + d_out])
        if li < N_LAYERS - 1:
            y = jnp.where(y >= 0.0, y, LEAKY_SLOPE * y)
            h = y.astype(jnp.bfloat16)
        off += d_out
    return y[:, :LAYER_DIMS[-1]]


def net6_reference_f32(x, params):
    """Full-precision f32 reference (BN-folded, unquantized weights)."""
    h = x
    y = None
    for li in range(N_LAYERS):
        y = h @ params["w_f32"][li] + params["b_f32"][li]
        if li < N_LAYERS - 1:
            y = jnp.where(y >= 0.0, y, LEAKY_SLOPE * y)
            h = y
    return y


if __name__ == "__main__":
    key = jax.random.PRNGKey(0)
    key, kx = jax.random.split(key)
    batch = 8
    x = jax.random.normal(kx, (batch, LAYER_DIMS[0]), jnp.float32)  # (8, 429)

    params = init_params(key)

    out = jax.block_until_ready(net6_forward(x, params))
    assert out.shape == (batch, LAYER_DIMS[-1]), out.shape  # (8, 39)

    # Exact-math check vs. a pure-JAX path using the same int8/bf16 arithmetic.
    ref_q = jax.block_until_ready(net6_reference_quant(x, params))
    assert jnp.allclose(out, ref_q, atol=2e-2, rtol=2e-2), (
        float(jnp.max(jnp.abs(out - ref_q))))

    # Drift check vs. the full-f32 (unquantized) forward: quantization + bf16
    # activations accumulate ~1e-2-level error over 7 layers — assert a loose bound.
    ref_f = jax.block_until_ready(net6_reference_f32(x, params))
    err = float(jnp.max(jnp.abs(out - ref_f)))
    assert err <= 0.25 * (1.0 + float(jnp.max(jnp.abs(ref_f)))), err

    print("KERNEL_OK")
</pallas_src>

<mosaic_0001>
module attributes {stable_mosaic.version = 11 : i64} {
  func.func @net6_fused_kernel(%arg0: i32, %arg1: memref<8x448xbf16, #tpu.memory_space<vmem>>, %arg2: memref<448x2048xi8, #tpu.memory_space<any>>, %arg3: memref<2048x1024xi8, #tpu.memory_space<any>>, %arg4: memref<1024x512xi8, #tpu.memory_space<any>>, %arg5: memref<512x256xi8, #tpu.memory_space<any>>, %arg6: memref<256x128xi8, #tpu.memory_space<any>>, %arg7: memref<128x128xi8, #tpu.memory_space<any>>, %arg8: memref<128x128xi8, #tpu.memory_space<any>>, %arg9: memref<1x4224xf32, #tpu.memory_space<vmem>>, %arg10: memref<1x4224xf32, #tpu.memory_space<vmem>>, %arg11: memref<8x128xf32, #tpu.memory_space<vmem>>, %arg12: memref<448x2048xi8, #tpu.memory_space<vmem>>, %arg13: memref<2048x1024xi8, #tpu.memory_space<vmem>>, %arg14: memref<1024x512xi8, #tpu.memory_space<vmem>>, %arg15: memref<512x256xi8, #tpu.memory_space<vmem>>, %arg16: memref<256x128xi8, #tpu.memory_space<vmem>>, %arg17: memref<128x128xi8, #tpu.memory_space<vmem>>, %arg18: memref<128x128xi8, #tpu.memory_space<vmem>>, %arg19: memref<7x!tpu.dma_semaphore, #tpu.memory_space<semaphore_mem>>) attributes {dimension_semantics = [#tpu.dimension_semantics<arbitrary>], iteration_bounds = array<i64: 1>, scalar_prefetch = 0 : i64, scratch_operands = 8 : i64, tpu.core_type = #tpu.core_type<tc>, window_params = [{transform_indices = @transform_0, window_bounds = array<i64: 8, 448>}, {}, {}, {}, {}, {}, {}, {}, {pipeline_mode = #tpu.pipeline_mode<synchronous>, transform_indices = @transform_8, window_bounds = array<i64: 1, 4224>}, {pipeline_mode = #tpu.pipeline_mode<synchronous>, transform_indices = @transform_9, window_bounds = array<i64: 1, 4224>}, {transform_indices = @transform_10, window_bounds = array<i64: 8, 128>}]} {
    %c0_i32 = arith.constant 0 : i32
    %0 = arith.cmpi eq, %arg0, %c0_i32 : i32
    %1 = arith.extui %0 : i1 to i32
    %c0_i32_0 = arith.constant 0 : i32
    %2 = arith.cmpi ne, %1, %c0_i32_0 : i32
    scf.if %2 {
      %c0_i32_72 = arith.constant 0 : i32
      %125 = tpu.memref_slice %arg19[%c0_i32_72] : memref<7x!tpu.dma_semaphore, #tpu.memory_space<semaphore_mem>> -> memref<1x!tpu.dma_semaphore, #tpu.memory_space<semaphore_mem>>
      %126 = tpu.memref_squeeze %125 : memref<1x!tpu.dma_semaphore, #tpu.memory_space<semaphore_mem>> -> memref<!tpu.dma_semaphore, #tpu.memory_space<semaphore_mem>>
      tpu.enqueue_dma source(%arg2 : memref<448x2048xi8, #tpu.memory_space<any>>) target(%arg12 : memref<448x2048xi8, #tpu.memory_space<vmem>>) target_semaphore(%126 : memref<!tpu.dma_semaphore, #tpu.memory_space<semaphore_mem>>)
      %c1_i32 = arith.constant 1 : i32
      %127 = tpu.memref_slice %arg19[%c1_i32] : memref<7x!tpu.dma_semaphore, #tpu.memory_space<semaphore_mem>> -> memref<1x!tpu.dma_semaphore, #tpu.memory_space<semaphore_mem>>
      %128 = tpu.memref_squeeze %127 : memref<1x!tpu.dma_semaphore, #tpu.memory_space<semaphore_mem>> -> memref<!tpu.dma_semaphore, #tpu.memory_space<semaphore_mem>>
      tpu.enqueue_dma source(%arg3 : memref<2048x1024xi8, #tpu.memory_space<any>>) target(%arg13 : memref<2048x1024xi8, #tpu.memory_space<vmem>>) target_semaphore(%128 : memref<!tpu.dma_semaphore, #tpu.memory_space<semaphore_mem>>)
      %c2_i32 = arith.constant 2 : i32
      %129 = tpu.memref_slice %arg19[%c2_i32] : memref<7x!tpu.dma_semaphore, #tpu.memory_space<semaphore_mem>> -> memref<1x!tpu.dma_semaphore, #tpu.memory_space<semaphore_mem>>
      %130 = tpu.memref_squeeze %129 : memref<1x!tpu.dma_semaphore, #tpu.memory_space<semaphore_mem>> -> memref<!tpu.dma_semaphore, #tpu.memory_space<semaphore_mem>>
      tpu.enqueue_dma source(%arg4 : memref<1024x512xi8, #tpu.memory_space<any>>) target(%arg14 : memref<1024x512xi8, #tpu.memory_space<vmem>>) target_semaphore(%130 : memref<!tpu.dma_semaphore, #tpu.memory_space<semaphore_mem>>)
      %c3_i32 = arith.constant 3 : i32
      %131 = tpu.memref_slice %arg19[%c3_i32] : memref<7x!tpu.dma_semaphore, #tpu.memory_space<semaphore_mem>> -> memref<1x!tpu.dma_semaphore, #tpu.memory_space<semaphore_mem>>
      %132 = tpu.memref_squeeze %131 : memref<1x!tpu.dma_semaphore, #tpu.memory_space<semaphore_mem>> -> memref<!tpu.dma_semaphore, #tpu.memory_space<semaphore_mem>>
      tpu.enqueue_dma source(%arg5 : memref<512x256xi8, #tpu.memory_space<any>>) target(%arg15 : memref<512x256xi8, #tpu.memory_space<vmem>>) target_semaphore(%132 : memref<!tpu.dma_semaphore, #tpu.memory_space<semaphore_mem>>)
      %c4_i32 = arith.constant 4 : i32
      %133 = tpu.memref_slice %arg19[%c4_i32] : memref<7x!tpu.dma_semaphore, #tpu.memory_space<semaphore_mem>> -> memref<1x!tpu.dma_semaphore, #tpu.memory_space<semaphore_mem>>
      %134 = tpu.memref_squeeze %133 : memref<1x!tpu.dma_semaphore, #tpu.memory_space<semaphore_mem>> -> memref<!tpu.dma_semaphore, #tpu.memory_space<semaphore_mem>>
      tpu.enqueue_dma source(%arg6 : memref<256x128xi8, #tpu.memory_space<any>>) target(%arg16 : memref<256x128xi8, #tpu.memory_space<vmem>>) target_semaphore(%134 : memref<!tpu.dma_semaphore, #tpu.memory_space<semaphore_mem>>)
      %c5_i32 = arith.constant 5 : i32
      %135 = tpu.memref_slice %arg19[%c5_i32] : memref<7x!tpu.dma_semaphore, #tpu.memory_space<semaphore_mem>> -> memref<1x!tpu.dma_semaphore, #tpu.memory_space<semaphore_mem>>
      %136 = tpu.memref_squeeze %135 : memref<1x!tpu.dma_semaphore, #tpu.memory_space<semaphore_mem>> -> memref<!tpu.dma_semaphore, #tpu.memory_space<semaphore_mem>>
      tpu.enqueue_dma source(%arg7 : memref<128x128xi8, #tpu.memory_space<any>>) target(%arg17 : memref<128x128xi8, #tpu.memory_space<vmem>>) target_semaphore(%136 : memref<!tpu.dma_semaphore, #tpu.memory_space<semaphore_mem>>)
      %c6_i32 = arith.constant 6 : i32
      %137 = tpu.memref_slice %arg19[%c6_i32] : memref<7x!tpu.dma_semaphore, #tpu.memory_space<semaphore_mem>> -> memref<1x!tpu.dma_semaphore, #tpu.memory_space<semaphore_mem>>
      %138 = tpu.memref_squeeze %137 : memref<1x!tpu.dma_semaphore, #tpu.memory_space<semaphore_mem>> -> memref<!tpu.dma_semaphore, #tpu.memory_space<semaphore_mem>>
      tpu.enqueue_dma source(%arg8 : memref<128x128xi8, #tpu.memory_space<any>>) target(%arg18 : memref<128x128xi8, #tpu.memory_space<vmem>>) target_semaphore(%138 : memref<!tpu.dma_semaphore, #tpu.memory_space<semaphore_mem>>)
    } else {
    }
    %c0 = arith.constant 0 : index
    %c0_1 = arith.constant 0 : index
    %3 = vector.load %arg1[%c0, %c0_1] : memref<8x448xbf16, #tpu.memory_space<vmem>>, vector<8x448xbf16>
    %c0_i32_2 = arith.constant 0 : i32
    %4 = arith.cmpi eq, %arg0, %c0_i32_2 : i32
    %5 = arith.extui %4 : i1 to i32
    %c0_i32_3 = arith.constant 0 : i32
    %6 = arith.cmpi ne, %5, %c0_i32_3 : i32
    scf.if %6 {
      %c0_i32_72 = arith.constant 0 : i32
      %125 = tpu.memref_slice %arg19[%c0_i32_72] : memref<7x!tpu.dma_semaphore, #tpu.memory_space<semaphore_mem>> -> memref<1x!tpu.dma_semaphore, #tpu.memory_space<semaphore_mem>>
      %126 = tpu.memref_squeeze %125 : memref<1x!tpu.dma_semaphore, #tpu.memory_space<semaphore_mem>> -> memref<!tpu.dma_semaphore, #tpu.memory_space<semaphore_mem>>
      tpu.wait_dma2 semaphore(%126 : memref<!tpu.dma_semaphore, #tpu.memory_space<semaphore_mem>>) src(%arg2 : memref<448x2048xi8, #tpu.memory_space<any>>) dst(%arg12 : memref<448x2048xi8, #tpu.memory_space<vmem>>)
    } else {
    }
    %c0_4 = arith.constant 0 : index
    %c0_5 = arith.constant 0 : index
    %7 = vector.load %arg12[%c0_4, %c0_5] : memref<448x2048xi8, #tpu.memory_space<vmem>>, vector<448x2048xi8>
    %8 = arith.sitofp %7 : vector<448x2048xi8> to vector<448x2048xbf16>
    %cst = arith.constant dense<0.000000e+00> : vector<8x2048xf32>
    %9 = tpu.matmul %3, %8, %cst {dimension_numbers = #tpu.dot_dimension_numbers<[1], [0], [0], [1], [0, 0, 1, 1], [], []>} : vector<8x448xbf16>, vector<448x2048xbf16>, vector<8x2048xf32> -> vector<8x2048xf32>
    %c0_6 = arith.constant 0 : index
    %c0_7 = arith.constant 0 : index
    %10 = vector.load %arg9[%c0_6, %c0_7] : memref<1x4224xf32, #tpu.memory_space<vmem>>, vector<1x2048xf32>
    %11 = vector.broadcast %10 : vector<1x2048xf32> to vector<8x2048xf32>
    %12 = arith.mulf %9, %11 : vector<8x2048xf32>
    %c0_8 = arith.constant 0 : index
    %c0_9 = arith.constant 0 : index
    %13 = vector.load %arg10[%c0_8, %c0_9] : memref<1x4224xf32, #tpu.memory_space<vmem>>, vector<1x2048xf32>
    %14 = vector.broadcast %13 : vector<1x2048xf32> to vector<8x2048xf32>
    %15 = arith.addf %12, %14 : vector<8x2048xf32>
    %cst_10 = arith.constant 0.000000e+00 : f32
    %16 = vector.broadcast %cst_10 : f32 to vector<8x2048xf32>
    %17 = arith.cmpf oge, %15, %16 : vector<8x2048xf32>
    %cst_11 = arith.constant 0.00999999977 : f32
    %18 = vector.broadcast %cst_11 : f32 to vector<8x2048xf32>
    %19 = arith.mulf %18, %15 : vector<8x2048xf32>
    %20 = arith.select %17, %15, %19 : vector<8x2048xi1>, vector<8x2048xf32>
    %21 = arith.truncf %20 : vector<8x2048xf32> to vector<8x2048xbf16>
    %c0_i32_12 = arith.constant 0 : i32
    %22 = arith.cmpi eq, %arg0, %c0_i32_12 : i32
    %23 = arith.extui %22 : i1 to i32
    %c0_i32_13 = arith.constant 0 : i32
    %24 = arith.cmpi ne, %23, %c0_i32_13 : i32
    scf.if %24 {
      %c1_i32 = arith.constant 1 : i32
      %125 = tpu.memref_slice %arg19[%c1_i32] : memref<7x!tpu.dma_semaphore, #tpu.memory_space<semaphore_mem>> -> memref<1x!tpu.dma_semaphore, #tpu.memory_space<semaphore_mem>>
      %126 = tpu.memref_squeeze %125 : memref<1x!tpu.dma_semaphore, #tpu.memory_space<semaphore_mem>> -> memref<!tpu.dma_semaphore, #tpu.memory_space<semaphore_mem>>
      tpu.wait_dma2 semaphore(%126 : memref<!tpu.dma_semaphore, #tpu.memory_space<semaphore_mem>>) src(%arg3 : memref<2048x1024xi8, #tpu.memory_space<any>>) dst(%arg13 : memref<2048x1024xi8, #tpu.memory_space<vmem>>)
    } else {
    }
    %c0_14 = arith.constant 0 : index
    %c0_15 = arith.constant 0 : index
    %25 = vector.load %arg13[%c0_14, %c0_15] : memref<2048x1024xi8, #tpu.memory_space<vmem>>, vector<2048x1024xi8>
    %26 = arith.sitofp %25 : vector<2048x1024xi8> to vector<2048x1024xbf16>
    %cst_16 = arith.constant dense<0.000000e+00> : vector<8x1024xf32>
    %27 = tpu.matmul %21, %26, %cst_16 {dimension_numbers = #tpu.dot_dimension_numbers<[1], [0], [0], [1], [0, 0, 1, 1], [], []>} : vector<8x2048xbf16>, vector<2048x1024xbf16>, vector<8x1024xf32> -> vector<8x1024xf32>
    %c0_17 = arith.constant 0 : index
    %c2048 = arith.constant 2048 : index
    %28 = vector.load %arg9[%c0_17, %c2048] : memref<1x4224xf32, #tpu.memory_space<vmem>>, vector<1x1024xf32>
    %29 = vector.broadcast %28 : vector<1x1024xf32> to vector<8x1024xf32>
    %30 = arith.mulf %27, %29 : vector<8x1024xf32>
    %c0_18 = arith.constant 0 : index
    %c2048_19 = arith.constant 2048 : index
    %31 = vector.load %arg10[%c0_18, %c2048_19] : memref<1x4224xf32, #tpu.memory_space<vmem>>, vector<1x1024xf32>
    %32 = vector.broadcast %31 : vector<1x1024xf32> to vector<8x1024xf32>
    %33 = arith.addf %30, %32 : vector<8x1024xf32>
    %cst_20 = arith.constant 0.000000e+00 : f32
    %34 = vector.broadcast %cst_20 : f32 to vector<8x1024xf32>
    %35 = arith.cmpf oge, %33, %34 : vector<8x1024xf32>
    %cst_21 = arith.constant 0.00999999977 : f32
    %36 = vector.broadcast %cst_21 : f32 to vector<8x1024xf32>
    %37 = arith.mulf %36, %33 : vector<8x1024xf32>
    %38 = arith.select %35, %33, %37 : vector<8x1024xi1>, vector<8x1024xf32>
    %39 = arith.truncf %38 : vector<8x1024xf32> to vector<8x1024xbf16>
    %c0_i32_22 = arith.constant 0 : i32
    %40 = arith.cmpi eq, %arg0, %c0_i32_22 : i32
    %41 = arith.extui %40 : i1 to i32
    %c0_i32_23 = arith.constant 0 : i32
    %42 = arith.cmpi ne, %41, %c0_i32_23 : i32
    scf.if %42 {
      %c2_i32 = arith.constant 2 : i32
      %125 = tpu.memref_slice %arg19[%c2_i32] : memref<7x!tpu.dma_semaphore, #tpu.memory_space<semaphore_mem>> -> memref<1x!tpu.dma_semaphore, #tpu.memory_space<semaphore_mem>>
      %126 = tpu.memref_squeeze %125 : memref<1x!tpu.dma_semaphore, #tpu.memory_space<semaphore_mem>> -> memref<!tpu.dma_semaphore, #tpu.memory_space<semaphore_mem>>
      tpu.wait_dma2 semaphore(%126 : memref<!tpu.dma_semaphore, #tpu.memory_space<semaphore_mem>>) src(%arg4 : memref<1024x512xi8, #tpu.memory_space<any>>) dst(%arg14 : memref<1024x512xi8, #tpu.memory_space<vmem>>)
    } else {
    }
    %c0_24 = arith.constant 0 : index
    %c0_25 = arith.constant 0 : index
    %43 = vector.load %arg14[%c0_24, %c0_25] : memref<1024x512xi8, #tpu.memory_space<vmem>>, vector<1024x512xi8>
    %44 = arith.sitofp %43 : vector<1024x512xi8> to vector<1024x512xbf16>
    %cst_26 = arith.constant dense<0.000000e+00> : vector<8x512xf32>
    %45 = tpu.matmul %39, %44, %cst_26 {dimension_numbers = #tpu.dot_dimension_numbers<[1], [0], [0], [1], [0, 0, 1, 1], [], []>} : vector<8x1024xbf16>, vector<1024x512xbf16>, vector<8x512xf32> -> vector<8x512xf32>
    %c0_27 = arith.constant 0 : index
    %c3072 = arith.constant 3072 : index
    %46 = vector.load %arg9[%c0_27, %c3072] : memref<1x4224xf32, #tpu.memory_space<vmem>>, vector<1x512xf32>
    %47 = vector.broadcast %46 : vector<1x512xf32> to vector<8x512xf32>
    %48 = arith.mulf %45, %47 : vector<8x512xf32>
    %c0_28 = arith.constant 0 : index
    %c3072_29 = arith.constant 3072 : index
    %49 = vector.load %arg10[%c0_28, %c3072_29] : memref<1x4224xf32, #tpu.memory_space<vmem>>, vector<1x512xf32>
    %50 = vector.broadcast %49 : vector<1x512xf32> to vector<8x512xf32>
    %51 = arith.addf %48, %50 : vector<8x512xf32>
    %cst_30 = arith.constant 0.000000e+00 : f32
    %52 = vector.broadcast %cst_30 : f32 to vector<8x512xf32>
    %53 = arith.cmpf oge, %51, %52 : vector<8x512xf32>
    %cst_31 = arith.constant 0.00999999977 : f32
    %54 = vector.broadcast %cst_31 : f32 to vector<8x512xf32>
    %55 = arith.mulf %54, %51 : vector<8x512xf32>
    %56 = arith.select %53, %51, %55 : vector<8x512xi1>, vector<8x512xf32>
    %57 = arith.truncf %56 : vector<8x512xf32> to vector<8x512xbf16>
    %c0_i32_32 = arith.constant 0 : i32
    %58 = arith.cmpi eq, %arg0, %c0_i32_32 : i32
    %59 = arith.extui %58 : i1 to i32
    %c0_i32_33 = arith.constant 0 : i32
    %60 = arith.cmpi ne, %59, %c0_i32_33 : i32
    scf.if %60 {
      %c3_i32 = arith.constant 3 : i32
      %125 = tpu.memref_slice %arg19[%c3_i32] : memref<7x!tpu.dma_semaphore, #tpu.memory_space<semaphore_mem>> -> memref<1x!tpu.dma_semaphore, #tpu.memory_space<semaphore_mem>>
      %126 = tpu.memref_squeeze %125 : memref<1x!tpu.dma_semaphore, #tpu.memory_space<semaphore_mem>> -> memref<!tpu.dma_semaphore, #tpu.memory_space<semaphore_mem>>
      tpu.wait_dma2 semaphore(%126 : memref<!tpu.dma_semaphore, #tpu.memory_space<semaphore_mem>>) src(%arg5 : memref<512x256xi8, #tpu.memory_space<any>>) dst(%arg15 : memref<512x256xi8, #tpu.memory_space<vmem>>)
    } else {
    }
    %c0_34 = arith.constant 0 : index
    %c0_35 = arith.constant 0 : index
    %61 = vector.load %arg15[%c0_34, %c0_35] : memref<512x256xi8, #tpu.memory_space<vmem>>, vector<512x256xi8>
    %62 = arith.sitofp %61 : vector<512x256xi8> to vector<512x256xbf16>
    %cst_36 = arith.constant dense<0.000000e+00> : vector<8x256xf32>
    %63 = tpu.matmul %57, %62, %cst_36 {dimension_numbers = #tpu.dot_dimension_numbers<[1], [0], [0], [1], [0, 0, 1, 1], [], []>} : vector<8x512xbf16>, vector<512x256xbf16>, vector<8x256xf32> -> vector<8x256xf32>
    %c0_37 = arith.constant 0 : index
    %c3584 = arith.constant 3584 : index
    %64 = vector.load %arg9[%c0_37, %c3584] : memref<1x4224xf32, #tpu.memory_space<vmem>>, vector<1x256xf32>
    %65 = vector.broadcast %64 : vector<1x256xf32> to vector<8x256xf32>
    %66 = arith.mulf %63, %65 : vector<8x256xf32>
    %c0_38 = arith.constant 0 : index
    %c3584_39 = arith.constant 3584 : index
    %67 = vector.load %arg10[%c0_38, %c3584_39] : memref<1x4224xf32, #tpu.memory_space<vmem>>, vector<1x256xf32>
    %68 = vector.broadcast %67 : vector<1x256xf32> to vector<8x256xf32>
    %69 = arith.addf %66, %68 : vector<8x256xf32>
    %cst_40 = arith.constant 0.000000e+00 : f32
    %70 = vector.broadcast %cst_40 : f32 to vector<8x256xf32>
    %71 = arith.cmpf oge, %69, %70 : vector<8x256xf32>
    %cst_41 = arith.constant 0.00999999977 : f32
    %72 = vector.broadcast %cst_41 : f32 to vector<8x256xf32>
    %73 = arith.mulf %72, %69 : vector<8x256xf32>
    %74 = arith.select %71, %69, %73 : vector<8x256xi1>, vector<8x256xf32>
    %75 = arith.truncf %74 : vector<8x256xf32> to vector<8x256xbf16>
    %c0_i32_42 = arith.constant 0 : i32
    %76 = arith.cmpi eq, %arg0, %c0_i32_42 : i32
    %77 = arith.extui %76 : i1 to i32
    %c0_i32_43 = arith.constant 0 : i32
    %78 = arith.cmpi ne, %77, %c0_i32_43 : i32
    scf.if %78 {
      %c4_i32 = arith.constant 4 : i32
      %125 = tpu.memref_slice %arg19[%c4_i32] : memref<7x!tpu.dma_semaphore, #tpu.memory_space<semaphore_mem>> -> memref<1x!tpu.dma_semaphore, #tpu.memory_space<semaphore_mem>>
      %126 = tpu.memref_squeeze %125 : memref<1x!tpu.dma_semaphore, #tpu.memory_space<semaphore_mem>> -> memref<!tpu.dma_semaphore, #tpu.memory_space<semaphore_mem>>
      tpu.wait_dma2 semaphore(%126 : memref<!tpu.dma_semaphore, #tpu.memory_space<semaphore_mem>>) src(%arg6 : memref<256x128xi8, #tpu.memory_space<any>>) dst(%arg16 : memref<256x128xi8, #tpu.memory_space<vmem>>)
    } else {
    }
    %c0_44 = arith.constant 0 : index
    %c0_45 = arith.constant 0 : index
    %79 = vector.load %arg16[%c0_44, %c0_45] : memref<256x128xi8, #tpu.memory_space<vmem>>, vector<256x128xi8>
    %80 = arith.sitofp %79 : vector<256x128xi8> to vector<256x128xbf16>
    %cst_46 = arith.constant dense<0.000000e+00> : vector<8x128xf32>
    %81 = tpu.matmul %75, %80, %cst_46 {dimension_numbers = #tpu.dot_dimension_numbers<[1], [0], [0], [1], [0, 0, 1, 1], [], []>} : vector<8x256xbf16>, vector<256x128xbf16>, vector<8x128xf32> -> vector<8x128xf32>
    %c0_47 = arith.constant 0 : index
    %c3840 = arith.constant 3840 : index
    %82 = vector.load %arg9[%c0_47, %c3840] : memref<1x4224xf32, #tpu.memory_space<vmem>>, vector<1x128xf32>
    %83 = vector.broadcast %82 : vector<1x128xf32> to vector<8x128xf32>
    %84 = arith.mulf %81, %83 : vector<8x128xf32>
    %c0_48 = arith.constant 0 : index
    %c3840_49 = arith.constant 3840 : index
    %85 = vector.load %arg10[%c0_48, %c3840_49] : memref<1x4224xf32, #tpu.memory_space<vmem>>, vector<1x128xf32>
    %86 = vector.broadcast %85 : vector<1x128xf32> to vector<8x128xf32>
    %87 = arith.addf %84, %86 : vector<8x128xf32>
    %cst_50 = arith.constant 0.000000e+00 : f32
    %88 = vector.broadcast %cst_50 : f32 to vector<8x128xf32>
    %89 = arith.cmpf oge, %87, %88 : vector<8x128xf32>
    %cst_51 = arith.constant 0.00999999977 : f32
    %90 = vector.broadcast %cst_51 : f32 to vector<8x128xf32>
    %91 = arith.mulf %90, %87 : vector<8x128xf32>
    %92 = arith.select %89, %87, %91 : vector<8x128xi1>, vector<8x128xf32>
    %93 = arith.truncf %92 : vector<8x128xf32> to vector<8x128xbf16>
    %c0_i32_52 = arith.constant 0 : i32
    %94 = arith.cmpi eq, %arg0, %c0_i32_52 : i32
    %95 = arith.extui %94 : i1 to i32
    %c0_i32_53 = arith.constant 0 : i32
    %96 = arith.cmpi ne, %95, %c0_i32_53 : i32
    scf.if %96 {
      %c5_i32 = arith.constant 5 : i32
      %125 = tpu.memref_slice %arg19[%c5_i32] : memref<7x!tpu.dma_semaphore, #tpu.memory_space<semaphore_mem>> -> memref<1x!tpu.dma_semaphore, #tpu.memory_space<semaphore_mem>>
      %126 = tpu.memref_squeeze %125 : memref<1x!tpu.dma_semaphore, #tpu.memory_space<semaphore_mem>> -> memref<!tpu.dma_semaphore, #tpu.memory_space<semaphore_mem>>
      tpu.wait_dma2 semaphore(%126 : memref<!tpu.dma_semaphore, #tpu.memory_space<semaphore_mem>>) src(%arg7 : memref<128x128xi8, #tpu.memory_space<any>>) dst(%arg17 : memref<128x128xi8, #tpu.memory_space<vmem>>)
    } else {
    }
    %c0_54 = arith.constant 0 : index
    %c0_55 = arith.constant 0 : index
    %97 = vector.load %arg17[%c0_54, %c0_55] : memref<128x128xi8, #tpu.memory_space<vmem>>, vector<128x128xi8>
    %98 = arith.sitofp %97 : vector<128x128xi8> to vector<128x128xbf16>
    %cst_56 = arith.constant dense<0.000000e+00> : vector<8x128xf32>
    %99 = tpu.matmul %93, %98, %cst_56 {dimension_numbers = #tpu.dot_dimension_numbers<[1], [0], [0], [1], [0, 0, 1, 1], [], []>} : vector<8x128xbf16>, vector<128x128xbf16>, vector<8x128xf32> -> vector<8x128xf32>
    %c0_57 = arith.constant 0 : index
    %c3968 = arith.constant 3968 : index
    %100 = vector.load %arg9[%c0_57, %c3968] : memref<1x4224xf32, #tpu.memory_space<vmem>>, vector<1x128xf32>
    %101 = vector.broadcast %100 : vector<1x128xf32> to vector<8x128xf32>
    %102 = arith.mulf %99, %101 : vector<8x128xf32>
    %c0_58 = arith.constant 0 : index
    %c3968_59 = arith.constant 3968 : index
    %103 = vector.load %arg10[%c0_58, %c3968_59] : memref<1x4224xf32, #tpu.memory_space<vmem>>, vector<1x128xf32>
    %104 = vector.broadcast %103 : vector<1x128xf32> to vector<8x128xf32>
    %105 = arith.addf %102, %104 : vector<8x128xf32>
    %cst_60 = arith.constant 0.000000e+00 : f32
    %106 = vector.broadcast %cst_60 : f32 to vector<8x128xf32>
    %107 = arith.cmpf oge, %105, %106 : vector<8x128xf32>
    %cst_61 = arith.constant 0.00999999977 : f32
    %108 = vector.broadcast %cst_61 : f32 to vector<8x128xf32>
    %109 = arith.mulf %108, %105 : vector<8x128xf32>
    %110 = arith.select %107, %105, %109 : vector<8x128xi1>, vector<8x128xf32>
    %111 = arith.truncf %110 : vector<8x128xf32> to vector<8x128xbf16>
    %c0_i32_62 = arith.constant 0 : i32
    %112 = arith.cmpi eq, %arg0, %c0_i32_62 : i32
    %113 = arith.extui %112 : i1 to i32
    %c0_i32_63 = arith.constant 0 : i32
    %114 = arith.cmpi ne, %113, %c0_i32_63 : i32
    scf.if %114 {
      %c6_i32 = arith.constant 6 : i32
      %125 = tpu.memref_slice %arg19[%c6_i32] : memref<7x!tpu.dma_semaphore, #tpu.memory_space<semaphore_mem>> -> memref<1x!tpu.dma_semaphore, #tpu.memory_space<semaphore_mem>>
      %126 = tpu.memref_squeeze %125 : memref<1x!tpu.dma_semaphore, #tpu.memory_space<semaphore_mem>> -> memref<!tpu.dma_semaphore, #tpu.memory_space<semaphore_mem>>
      tpu.wait_dma2 semaphore(%126 : memref<!tpu.dma_semaphore, #tpu.memory_space<semaphore_mem>>) src(%arg8 : memref<128x128xi8, #tpu.memory_space<any>>) dst(%arg18 : memref<128x128xi8, #tpu.memory_space<vmem>>)
    } else {
    }
    %c0_64 = arith.constant 0 : index
    %c0_65 = arith.constant 0 : index
    %115 = vector.load %arg18[%c0_64, %c0_65] : memref<128x128xi8, #tpu.memory_space<vmem>>, vector<128x128xi8>
    %116 = arith.sitofp %115 : vector<128x128xi8> to vector<128x128xbf16>
    %cst_66 = arith.constant dense<0.000000e+00> : vector<8x128xf32>
    %117 = tpu.matmul %111, %116, %cst_66 {dimension_numbers = #tpu.dot_dimension_numbers<[1], [0], [0], [1], [0, 0, 1, 1], [], []>} : vector<8x128xbf16>, vector<128x128xbf16>, vector<8x128xf32> -> vector<8x128xf32>
    %c0_67 = arith.constant 0 : index
    %c4096 = arith.constant 4096 : index
    %118 = vector.load %arg9[%c0_67, %c4096] : memref<1x4224xf32, #tpu.memory_space<vmem>>, vector<1x128xf32>
    %119 = vector.broadcast %118 : vector<1x128xf32> to vector<8x128xf32>
    %120 = arith.mulf %117, %119 : vector<8x128xf32>
    %c0_68 = arith.constant 0 : index
    %c4096_69 = arith.constant 4096 : index
    %121 = vector.load %arg10[%c0_68, %c4096_69] : memref<1x4224xf32, #tpu.memory_space<vmem>>, vector<1x128xf32>
    %122 = vector.broadcast %121 : vector<1x128xf32> to vector<8x128xf32>
    %123 = arith.addf %120, %122 : vector<8x128xf32>
    %c0_70 = arith.constant 0 : index
    %c0_71 = arith.constant 0 : index
    %124 = vector.load %arg11[%c0_70, %c0_71] : memref<8x128xf32, #tpu.memory_space<vmem>>, vector<8x128xf32>
    tpu.vector_store %arg11[%c0_70, %c0_71], %123 {strides = array<i32>} : memref<8x128xf32, #tpu.memory_space<vmem>>, vector<8x128xf32>,
    return
  }
  func.func @transform_0(%arg0: i32) -> (i32, i32) {
    %c0_i32 = arith.constant 0 : i32
    %c0_i32_0 = arith.constant 0 : i32
    return %arg0, %c0_i32 : i32, i32
  }
  func.func @transform_8(%arg0: i32) -> (i32, i32) {
    %c0_i32 = arith.constant 0 : i32
    %c0_i32_0 = arith.constant 0 : i32
    %c0_i32_1 = arith.constant 0 : i32
    return %c0_i32, %c0_i32_0 : i32, i32
  }
  func.func @transform_9(%arg0: i32) -> (i32, i32) {
    %c0_i32 = arith.constant 0 : i32
    %c0_i32_0 = arith.constant 0 : i32
    %c0_i32_1 = arith.constant 0 : i32
    return %c0_i32, %c0_i32_0 : i32, i32
  }
  func.func @transform_10(%arg0: i32) -> (i32, i32) {
    %c0_i32 = arith.constant 0 : i32
    %c0_i32_0 = arith.constant 0 : i32
    return %arg0, %c0_i32 : i32, i32
  }
}

</mosaic_0001>

<llo_original>
// kernel: tpu_custom_call.1
$region0: #{tpu_custom_call.1}
  #allocation0 [shape = 'u32[]', space=smem, size = 0x4, offset = 0x4, fixed_abs, tag = 'smem constant byte address 0x4 - core index']
  #allocation1 [shape = 'u32[144,128]{1,0:T(1,128)}', space=vmem, size = 0x12000, scoped, tag = 'internal scratch']
  #allocation2 [shape = 's8[448,2048]{1,0:T(32,128)(4,1)}', space=vmem, size = 0xe0000, scoped, tag = 'scratch operand']
  #allocation3 [shape = 's8[2048,1024]{1,0:T(32,128)(4,1)}', space=vmem, size = 0x200000, scoped, tag = 'scratch operand']
  #allocation4 [shape = 's8[1024,512]{1,0:T(32,128)(4,1)}', space=vmem, size = 0x80000, scoped, tag = 'scratch operand']
  #allocation5 [shape = 's8[512,256]{1,0:T(32,128)(4,1)}', space=vmem, size = 0x20000, scoped, tag = 'scratch operand']
  #allocation6 [shape = 's8[256,128]{1,0:T(32,128)(4,1)}', space=vmem, size = 0x8000, scoped, tag = 'scratch operand']
  #allocation7 [shape = 's8[128,128]{1,0:T(32,128)(4,1)}', space=vmem, size = 0x4000, scoped, tag = 'scratch operand']
  #allocation8 [shape = 's8[128,128]{1,0:T(32,128)(4,1)}', space=vmem, size = 0x4000, scoped, tag = 'scratch operand']
  #allocation9 [shape = 's32[7]{0}', space=sflag, size = 0x1c, scoped, tag = 'scratch operand']
  #allocation17 [shape = 's32[]', space=sflag, size = 0x4, offset = 0, fixed_abs, tag = 'sflag constant byte address 0x0 - dummy sync flag']
  #allocation18 [shape = 's32[]', space=sflag, size = 0x4, offset = 0, fixed_abs, tag = 'sflag constant byte address 0x0 - dummy sync flag']
  #allocation19 [shape = 'u32[]', space=smem, size = 0x4, offset = 0x44, fixed_abs, tag = 'smem constant byte address 0x44 - assertion arg 0']
  #allocation20 [shape = 'u32[]', space=smem, size = 0x4, offset = 0x48, fixed_abs, tag = 'smem constant byte address 0x48 - assertion arg 1']
  #allocation21 [shape = 's32[]', space=sflag, size = 0x4, offset = 0, fixed_abs, tag = 'sflag constant byte address 0x0 - dummy sync flag']
  #allocation22 [shape = 's32[]', space=sflag, size = 0x4, offset = 0, fixed_abs, tag = 'sflag constant byte address 0x0 - dummy sync flag']
  #allocation23 [shape = 's32[]', space=sflag, size = 0x4, offset = 0, fixed_abs, tag = 'sflag constant byte address 0x0 - dummy sync flag']
  #allocation24 [shape = 's32[]', space=sflag, size = 0x4, offset = 0, fixed_abs, tag = 'sflag constant byte address 0x0 - dummy sync flag']
  #allocation25 [shape = 's32[]', space=sflag, size = 0x4, offset = 0, fixed_abs, tag = 'sflag constant byte address 0x0 - dummy sync flag']
  #allocation26 [shape = 's32[]', space=sflag, size = 0x4, offset = 0, fixed_abs, tag = 'sflag constant byte address 0x0 - dummy sync flag']
  #allocation27 [shape = 's32[]', space=sflag, size = 0x4, offset = 0, fixed_abs, tag = 'sflag constant byte address 0x0 - dummy sync flag']
  #allocation28 [shape = 's32[]', space=sflag, size = 0x4, offset = 0, fixed_abs, tag = 'sflag constant byte address 0x0 - dummy sync flag']
  #allocation29 [shape = 's32[]', space=sflag, size = 0x4, offset = 0, fixed_abs, tag = 'sflag constant byte address 0x0 - dummy sync flag']
  #allocation30 [shape = 's32[]', space=sflag, size = 0x4, offset = 0, fixed_abs, tag = 'sflag constant byte address 0x0 - dummy sync flag']
  #allocation31 [shape = 's32[]', space=sflag, size = 0x4, offset = 0, fixed_abs, tag = 'sflag constant byte address 0x0 - dummy sync flag']
  #allocation32 [shape = 's32[]', space=sflag, size = 0x4, offset = 0, fixed_abs, tag = 'sflag constant byte address 0x0 - dummy sync flag']
  %s0 = inlined_call_operand.hbm [shape: bf16[8,448], index: 0, kind: input, shape index: {}]
  %s1 = inlined_call_operand.hbm [shape: s8[448,2048], index: 1, kind: input, shape index: {}]
  %s2 = inlined_call_operand.hbm [shape: s8[2048,1024], index: 2, kind: input, shape index: {}]
  %s3 = inlined_call_operand.hbm [shape: s8[1024,512], index: 3, kind: input, shape index: {}]
  %s4 = inlined_call_operand.hbm [shape: s8[512,256], index: 4, kind: input, shape index: {}]
  %s5 = inlined_call_operand.hbm [shape: s8[256,128], index: 5, kind: input, shape index: {}]
  %s6 = inlined_call_operand.hbm [shape: s8[128,128], index: 6, kind: input, shape index: {}]
  %s7 = inlined_call_operand.hbm [shape: s8[128,128], index: 7, kind: input, shape index: {}]
  %s8 = inlined_call_operand.hbm [shape: f32[1,4224], index: 8, kind: input, shape index: {}]
  %s9 = inlined_call_operand.hbm [shape: f32[1,4224], index: 9, kind: input, shape index: {}]
  %s10 = inlined_call_operand.hbm [shape: f32[8,128], index: 10, kind: output, shape index: {}]
  %s11 = sld [smem:[#allocation0]]
  $region94: #{tpu_custom_call.1} parent=0
    _
  %s13 = ssub.s32 1, %s11
  %s14 = scalar_select 0, %s13, %s11
  $region1: #{tpu_custom_call.1} parent=0
    #allocation10 [shape = 'u8[8192]{0}', space=vmem, size = 0x2000, scoped, tag = 'input window, operand 0, single buffered']
    #allocation11 [shape = 's32[1]{0}', space=sflag, size = 0x4, scoped, tag = 'scoped memory for tpu_custom_call.1']
    #allocation12 [shape = 's32[1]{0}', space=sflag, size = 0x4, scoped, tag = 'scoped memory for tpu_custom_call.1']
    #allocation13 [shape = 'u8[16896]{0}', space=vmem, size = 0x4400, scoped, tag = 'input window, operand 8, single buffered']
    #allocation14 [shape = 's32[1]{0}', space=sflag, size = 0x4, scoped, tag = 'scoped memory for tpu_custom_call.1']
    #allocation15 [shape = 'u8[16896]{0}', space=vmem, size = 0x4400, scoped, tag = 'input window, operand 9, single buffered']
    #allocation16 [shape = 'u8[4096]{0}', space=vmem, size = 0x1000, scoped, tag = 'output window, operand 0, single buffered']
    %15 = vsyncpa [#allocation11], 0
    %16 = vsyncpa [#allocation14], 0
    %17 = vsyncpa [#allocation12], 0
    // Predicated region
    $region2: #{tpu_custom_call.1} parent=1 // pred_check
      _
    $region3: #{tpu_custom_call.1} parent=1 // pred_check_branch
      %19 = sbr.rel (0) target = $region5
    $region4: #{tpu_custom_call.1} parent=1 // pred_region
      %s21 = ssub.s32 256, 256
      %22 = vsyncadd [#allocation11], %s21
      %s24 = sshll.u32 [#allocation10], 4
      %s25 = int_to_ptr.vmem [resolvable:$true] %s24
      %27 = dma.hbm_to_vmem [thread:$0]  %s0, 256, %s25, [#allocation11]
    $region5: #{tpu_custom_call.1} parent=1 // pred_fallthru
      _
    // Predicated region
    $region6: #{tpu_custom_call.1} parent=1 // pred_check
      _
    $region7: #{tpu_custom_call.1} parent=1 // pred_check_branch
      %29 = sbr.rel (0) target = $region9
    $region8: #{tpu_custom_call.1} parent=1 // pred_region
      %s31 = ssub.s32 528, 528
      %32 = vsyncadd [#allocation14], %s31
      %s34 = sshll.u32 [#allocation13], 4
      %s35 = int_to_ptr.vmem [resolvable:$true] %s34
      %37 = dma.hbm_to_vmem [thread:$0]  %s8, 528, %s35, [#allocation14]
    $region9: #{tpu_custom_call.1} parent=1 // pred_fallthru
      _
    // Predicated region
    $region10: #{tpu_custom_call.1} parent=1 // pred_check
      _
    $region11: #{tpu_custom_call.1} parent=1 // pred_check_branch
      %39 = sbr.rel (0) target = $region13
    $region12: #{tpu_custom_call.1} parent=1 // pred_region
      %s41 = ssub.s32 528, 528
      %42 = vsyncadd [#allocation14], %s41
      %s44 = sshll.u32 [#allocation15], 4
      %s45 = int_to_ptr.vmem [resolvable:$true] %s44
      %47 = dma.hbm_to_vmem [thread:$0]  %s9, 528, %s45, [#allocation14]
    $region13: #{tpu_custom_call.1} parent=1 // pred_fallthru
      _
    // Predicated region
    $region14: #{tpu_custom_call.1} parent=1 // pred_check
      _
    $region15: #{tpu_custom_call.1} parent=1 // pred_check_branch
      %49 = sbr.rel (0) target = $region17
    $region16: #{tpu_custom_call.1} parent=1 // pred_region
      %50 = dma.done [#allocation11], 256
    $region17: #{tpu_custom_call.1} parent=1 // pred_fallthru
      _
    // Predicated region
    $region18: #{tpu_custom_call.1} parent=1 // pred_check
      _
    $region19: #{tpu_custom_call.1} parent=1 // pred_check_branch
      %52 = sbr.rel (0) target = $region21
    $region20: #{tpu_custom_call.1} parent=1 // pred_region
      %53 = dma.done [#allocation14], 528
    $region21: #{tpu_custom_call.1} parent=1 // pred_fallthru
      _
    // Predicated region
    $region22: #{tpu_custom_call.1} parent=1 // pred_check
      _
    $region23: #{tpu_custom_call.1} parent=1 // pred_check_branch
      %55 = sbr.rel (0) target = $region25
    $region24: #{tpu_custom_call.1} parent=1 // pred_region
      %56 = dma.done [#allocation14], 528
    $region25: #{tpu_custom_call.1} parent=1 // pred_fallthru
      _
    %p58 = scmp.eq.s32.totalorder 0, 0
    // Predicated region
    $region26: #{tpu_custom_call.1} parent=1 // pred_check
      %p59 = pneg %p58
    $region27: #{tpu_custom_call.1} parent=1 // pred_check_branch
      %61 = sbr.rel (%p59) target = $region29
    $region28: #{tpu_custom_call.1} parent=1 // pred_region
      // Predicated region
      $region30: #{tpu_custom_call.1} parent=28 // pred_check
        _
      $region31: #{tpu_custom_call.1} parent=28 // pred_check_branch
        %63 = sbr.rel target = $region33
      $region32: #{tpu_custom_call.1} parent=28 // pred_region
        %64 = sst [smem:[#allocation19]] [#allocation18]
        %65 = sst [smem:[#allocation20]] [#allocation17]
      $region33: #{tpu_custom_call.1} parent=28 // pred_fallthru
        _
      %67 = shalt.err (0)
      %s69 = sshll.u32 [#allocation2], 4
      %s70 = int_to_ptr.vmem [resolvable:$true] %s69
      %72 = dma.hbm_to_vmem [thread:$0]  %s1, 28672, %s70, [#allocation9]
      %s73 = scalar_lea.sflag [#allocation9], 1
      // Predicated region
      $region34: #{tpu_custom_call.1} parent=28 // pred_check
        _
      $region35: #{tpu_custom_call.1} parent=28 // pred_check_branch
        %75 = sbr.rel target = $region37
      $region36: #{tpu_custom_call.1} parent=28 // pred_region
        %76 = sst [smem:[#allocation19]] [#allocation22]
        %77 = sst [smem:[#allocation20]] [#allocation21]
      $region37: #{tpu_custom_call.1} parent=28 // pred_fallthru
        _
      %79 = shalt.err (0)
      %s81 = sshll.u32 [#allocation3], 4
      %s82 = int_to_ptr.vmem [resolvable:$true] %s81
      %84 = dma.hbm_to_vmem [thread:$0]  %s2, 65536, %s82, %s73
      %s85 = scalar_lea.sflag [#allocation9], 2
      // Predicated region
      $region38: #{tpu_custom_call.1} parent=28 // pred_check
        _
      $region39: #{tpu_custom_call.1} parent=28 // pred_check_branch
        %87 = sbr.rel target = $region41
      $region40: #{tpu_custom_call.1} parent=28 // pred_region
        %88 = sst [smem:[#allocation19]] [#allocation24]
        %89 = sst [smem:[#allocation20]] [#allocation23]
      $region41: #{tpu_custom_call.1} parent=28 // pred_fallthru
        _
      %91 = shalt.err (0)
      %s93 = sshll.u32 [#allocation4], 4
      %s94 = int_to_ptr.vmem [resolvable:$true] %s93
      %96 = dma.hbm_to_vmem [thread:$0]  %s3, 16384, %s94, %s85
      %s97 = scalar_lea.sflag [#allocation9], 3
      // Predicated region
      $region42: #{tpu_custom_call.1} parent=28 // pred_check
        _
      $region43: #{tpu_custom_call.1} parent=28 // pred_check_branch
        %99 = sbr.rel target = $region45
      $region44: #{tpu_custom_call.1} parent=28 // pred_region
        %100 = sst [smem:[#allocation19]] [#allocation26]
        %101 = sst [smem:[#allocation20]] [#allocation25]
      $region45: #{tpu_custom_call.1} parent=28 // pred_fallthru
        _
      %103 = shalt.err (0)
      %s105 = sshll.u32 [#allocation5], 4
      %s106 = int_to_ptr.vmem [resolvable:$true] %s105
      %108 = dma.hbm_to_vmem [thread:$0]  %s4, 4096, %s106, %s97
      %s109 = scalar_lea.sflag [#allocation9], 4
      // Predicated region
      $region46: #{tpu_custom_call.1} parent=28 // pred_check
        _
      $region47: #{tpu_custom_call.1} parent=28 // pred_check_branch
        %111 = sbr.rel target = $region49
      $region48: #{tpu_custom_call.1} parent=28 // pred_region
        %112 = sst [smem:[#allocation19]] [#allocation28]
        %113 = sst [smem:[#allocation20]] [#allocation27]
      $region49: #{tpu_custom_call.1} parent=28 // pred_fallthru
        _
      %115 = shalt.err (0)
      %s117 = sshll.u32 [#allocation6], 4
      %s118 = int_to_ptr.vmem [resolvable:$true] %s117
      %120 = dma.hbm_to_vmem [thread:$0]  %s5, 1024, %s118, %s109
      %s121 = scalar_lea.sflag [#allocation9], 5
      // Predicated region
      $region50: #{tpu_custom_call.1} parent=28 // pred_check
        _
      $region51: #{tpu_custom_call.1} parent=28 // pred_check_branch
        %123 = sbr.rel target = $region53
      $region52: #{tpu_custom_call.1} parent=28 // pred_region
        %124 = sst [smem:[#allocation19]] [#allocation30]
        %125 = sst [smem:[#allocation20]] [#allocation29]
      $region53: #{tpu_custom_call.1} parent=28 // pred_fallthru
        _
      %127 = shalt.err (0)
      %s129 = sshll.u32 [#allocation7], 4
      %s130 = int_to_ptr.vmem [resolvable:$true] %s129
      %132 = dma.hbm_to_vmem [thread:$0]  %s6, 512, %s130, %s121
      %s133 = scalar_lea.sflag [#allocation9], 6
      // Predicated region
      $region54: #{tpu_custom_call.1} parent=28 // pred_check
        _
      $region55: #{tpu_custom_call.1} parent=28 // pred_check_branch
        %135 = sbr.rel target = $region57
      $region56: #{tpu_custom_call.1} parent=28 // pred_region
        %136 = sst [smem:[#allocation19]] [#allocation32]
        %137 = sst [smem:[#allocation20]] [#allocation31]
      $region57: #{tpu_custom_call.1} parent=28 // pred_fallthru
        _
      %139 = shalt.err (0)
      %s141 = sshll.u32 [#allocation8], 4
      %s142 = int_to_ptr.vmem [resolvable:$true] %s141
      %144 = dma.hbm_to_vmem [thread:$0]  %s7, 512, %s142, %s133
    $region29: #{tpu_custom_call.1} parent=1 // pred_fallthru
      _
    %v145 = vld [vmem:[#allocation10] sm:$0xff]
    %v146 = vld [vmem:[#allocation10 + $0x8] sm:$0xff]
    // Predicated region
    $region58: #{tpu_custom_call.1} parent=1 // pred_check
      %p147 = pneg %p58
    $region59: #{tpu_custom_call.1} parent=1 // pred_check_branch
      %149 = sbr.rel (%p147) target = $region61
    $region60: #{tpu_custom_call.1} parent=1 // pred_region
      %s150 = smul.u32 2, 56
      %s151 = smul.u32 %s150, 16
      %s152 = sshll.u32 %s151, 4
      %153 = dma.done [#allocation9], %s152
    $region61: #{tpu_custom_call.1} parent=1 // pred_fallthru
      _
    %v154 = vld [vmem:[#allocation2] sm:$0xff]
    %v155 = vld [vmem:[#allocation2 + $0x8] sm:$0xff]
    %v156 = vld [vmem:[#allocation2 + $0x10] sm:$0xff]
    %v157 = vld [vmem:[#allocation2 + $0x18] sm:$0xff]
    %v158 = vld [vmem:[#allocation2 + $0x20] sm:$0xff]
    %v159 = vld [vmem:[#allocation2 + $0x28] sm:$0xff]
    %v160 = vld [vmem:[#allocation2 + $0x30] sm:$0xff]
    %v161 = vld [vmem:[#allocation2 + $0x38] sm:$0xff]
    %v162 = vld [vmem:[#allocation2 + $0x40] sm:$0xff]
    %v163 = vld [vmem:[#allocation2 + $0x48] sm:$0xff]
    %v164 = vld [vmem:[#allocation2 + $0x50] sm:$0xff]
    %v165 = vld [vmem:[#allocation2 + $0x58] sm:$0xff]
    %v166 = vld [vmem:[#allocation2 + $0x60] sm:$0xff]
    %v167 = vld [vmem:[#allocation2 + $0x68] sm:$0xff]
    %v168 = vld [vmem:[#allocation2 + $0x70] sm:$0xff]
    %v169 = vld [vmem:[#allocation2 + $0x78] sm:$0xff]
    %v170 = vld [vmem:[#allocation2 + $0x80] sm:$0xff]
    %v171 = vld [vmem:[#allocation2 + $0x88] sm:$0xff]
    %v172 = vld [vmem:[#allocation2 + $0x90] sm:$0xff]
    %v173 = vld [vmem:[#allocation2 + $0x98] sm:$0xff]
    %v174 = vld [vmem:[#allocation2 + $0xa0] sm:$0xff]
    %v175 = vld [vmem:[#allocation2 + $0xa8] sm:$0xff]
    %v176 = vld [vmem:[#allocation2 + $0xb0] sm:$0xff]
    %v177 = vld [vmem:[#allocation2 + $0xb8] sm:$0xff]
    %v178 = vld [vmem:[#allocation2 + $0xc0] sm:$0xff]
    %v179 = vld [vmem:[#allocation2 + $0xc8] sm:$0xff]
    %v180 = vld [vmem:[#allocation2 + $0xd0] sm:$0xff]
    %v181 = vld [vmem:[#allocation2 + $0xd8] sm:$0xff]
    %v182 = vld [vmem:[#allocation2 + $0xe0] sm:$0xff]
    %v183 = vld [vmem:[#allocation2 + $0xe8] sm:$0xff]
    %v184 = vld [vmem:[#allocation2 + $0xf0] sm:$0xff]
    %v185 = vld [vmem:[#allocation2 + $0xf8] sm:$0xff]
    %v186 = vld [vmem:[#allocation2 + $0x100] sm:$0xff]
    %v187 = vld [vmem:[#allocation2 + $0x108] sm:$0xff]
    %v188 = vld [vmem:[#allocation2 + $0x110] sm:$0xff]
    %v189 = vld [vmem:[#allocation2 + $0x118] sm:$0xff]
    %v190 = vld [vmem:[#allocation2 + $0x120] sm:$0xff]
    %v191 = vld [vmem:[#allocation2 + $0x128] sm:$0xff]
    %v192 = vld [vmem:[#allocation2 + $0x130] sm:$0xff]
    %v193 = vld [vmem:[#allocation2 + $0x138] sm:$0xff]
    %v194 = vld [vmem:[#allocation2 + $0x140] sm:$0xff]
    %v195 = vld [vmem:[#allocation2 + $0x148] sm:$0xff]
    %v196 = vld [vmem:[#allocation2 + $0x150] sm:$0xff]
    %v197 = vld [vmem:[#allocation2 + $0x158] sm:$0xff]
    %v198 = vld [vmem:[#allocation2 + $0x160] sm:$0xff]
    %v199 = vld [vmem:[#allocation2 + $0x168] sm:$0xff]
    %v200 = vld [vmem:[#allocation2 + $0x170] sm:$0xff]
    %v201 = vld [vmem:[#allocation2 + $0x178] sm:$0xff]
    %v202 = vld [vmem:[#allocation2 + $0x180] sm:$0xff]
    %v203 = vld [vmem:[#allocation2 + $0x188] sm:$0xff]
    %v204 = vld [vmem:[#allocation2 + $0x190] sm:$0xff]
    %v205 = vld [vmem:[#allocation2 + $0x198] sm:$0xff]
    %v206 = vld [vmem:[#allocation2 + $0x1a0] sm:$0xff]
    %v207 = vld [vmem:[#allocation2 + $0x1a8] sm:$0xff]
    %v208 = vld [vmem:[#allocation2 + $0x1b0] sm:$0xff]
    %v209 = vld [vmem:[#allocation2 + $0x1b8] sm:$0xff]
    %v210 = vld [vmem:[#allocation2 + $0x1c0] sm:$0xff]
    %v211 = vld [vmem:[#allocation2 + $0x1c8] sm:$0xff]
    %v212 = vld [vmem:[#allocation2 + $0x1d0] sm:$0xff]
    %v213 = vld [vmem:[#allocation2 + $0x1d8] sm:$0xff]
    %v214 = vld [vmem:[#allocation2 + $0x1e0] sm:$0xff]
    %v215 = vld [vmem:[#allocation2 + $0x1e8] sm:$0xff]
    %v216 = vld [vmem:[#allocation2 + $0x1f0] sm:$0xff]
    %v217 = vld [vmem:[#allocation2 + $0x1f8] sm:$0xff]
    %v218 = vld [vmem:[#allocation2 + $0x200] sm:$0xff]
    %v219 = vld [vmem:[#allocation2 + $0x208] sm:$0xff]
    %v220 = vld [vmem:[#allocation2 + $0x210] sm:$0xff]
    %v221 = vld [vmem:[#allocation2 + $0x218] sm:$0xff]
    %v222 = vld [vmem:[#allocation2 + $0x220] sm:$0xff]
    %v223 = vld [vmem:[#allocation2 + $0x228] sm:$0xff]
    %v224 = vld [vmem:[#allocation2 + $0x230] sm:$0xff]
    %v225 = vld [vmem:[#allocation2 + $0x238] sm:$0xff]
    %v226 = vld [vmem:[#allocation2 + $0x240] sm:$0xff]
    %v227 = vld [vmem:[#allocation2 + $0x248] sm:$0xff]
    %v228 = vld [vmem:[#allocation2 + $0x250] sm:$0xff]
    %v229 = vld [vmem:[#allocation2 + $0x258] sm:$0xff]
    %v230 = vld [vmem:[#allocation2 + $0x260] sm:$0xff]
    %v231 = vld [vmem:[#allocation2 + $0x268] sm:$0xff]
    %v232 = vld [vmem:[#allocation2 + $0x270] sm:$0xff]
    %v233 = vld [vmem:[#allocation2 + $0x278] sm:$0xff]
    %v234 = vld [vmem:[#allocation2 + $0x280] sm:$0xff]
    %v235 = vld [vmem:[#allocation2 + $0x288] sm:$0xff]
    %v236 = vld [vmem:[#allocation2 + $0x290] sm:$0xff]
    %v237 = vld [vmem:[#allocation2 + $0x298] sm:$0xff]
    %v238 = vld [vmem:[#allocation2 + $0x2a0] sm:$0xff]
    %v239 = vld [vmem:[#allocation2 + $0x2a8] sm:$0xff]
    %v240 = vld [vmem:[#allocation2 + $0x2b0] sm:$0xff]
    %v241 = vld [vmem:[#allocation2 + $0x2b8] sm:$0xff]
    %v242 = vld [vmem:[#allocation2 + $0x2c0] sm:$0xff]
    %v243 = vld [vmem:[#allocation2 + $0x2c8] sm:$0xff]
    %v244 = vld [vmem:[#allocation2 + $0x2d0] sm:$0xff]
    %v245 = vld [vmem:[#allocation2 + $0x2d8] sm:$0xff]
    %v246 = vld [vmem:[#allocation2 + $0x2e0] sm:$0xff]
    %v247 = vld [vmem:[#allocation2 + $0x2e8] sm:$0xff]
    %v248 = vld [vmem:[#allocation2 + $0x2f0] sm:$0xff]
    %v249 = vld [vmem:[#allocation2 + $0x2f8] sm:$0xff]
    %v250 = vld [vmem:[#allocation2 + $0x300] sm:$0xff]
    %v251 = vld [vmem:[#allocation2 + $0x308] sm:$0xff]
    %v252 = vld [vmem:[#allocation2 + $0x310] sm:$0xff]
    %v253 = vld [vmem:[#allocation2 + $0x318] sm:$0xff]
    %v254 = vld [vmem:[#allocation2 + $0x320] sm:$0xff]
    %v255 = vld [vmem:[#allocation2 + $0x328] sm:$0xff]
    %v256 = vld [vmem:[#allocation2 + $0x330] sm:$0xff]
    %v257 = vld [vmem:[#allocation2 + $0x338] sm:$0xff]
    %v258 = vld [vmem:[#allocation2 + $0x340] sm:$0xff]
    %v259 = vld [vmem:[#allocation2 + $0x348] sm:$0xff]
    %v260 = vld [vmem:[#allocation2 + $0x350] sm:$0xff]
    %v261 = vld [vmem:[#allocation2 + $0x358] sm:$0xff]
    %v262 = vld [vmem:[#allocation2 + $0x360] sm:$0xff]
    %v263 = vld [vmem:[#allocation2 + $0x368] sm:$0xff]
    %v264 = vld [vmem:[#allocation2 + $0x370] sm:$0xff]
    %v265 = vld [vmem:[#allocation2 + $0x378] sm:$0xff]
    %v266 = vld [vmem:[#allocation2 + $0x380] sm:$0xff]
    %v267 = vld [vmem:[#allocation2 + $0x388] sm:$0xff]
    %v268 = vld [vmem:[#allocation2 + $0x390] sm:$0xff]
    %v269 = vld [vmem:[#allocation2 + $0x398] sm:$0xff]
    %v270 = vld [vmem:[#allocation2 + $0x3a0] sm:$0xff]
    %v271 = vld [vmem:[#allocation2 + $0x3a8] sm:$0xff]
    %v272 = vld [vmem:[#allocation2 + $0x3b0] sm:$0xff]
    %v273 = vld [vmem:[#allocation2 + $0x3b8] sm:$0xff]
    %v274 = vld [vmem:[#allocation2 + $0x3c0] sm:$0xff]
    %v275 = vld [vmem:[#allocation2 + $0x3c8] sm:$0xff]
    %v276 = vld [vmem:[#allocation2 + $0x3d0] sm:$0xff]
    %v277 = vld [vmem:[#allocation2 + $0x3d8] sm:$0xff]
    %v278 = vld [vmem:[#allocation2 + $0x3e0] sm:$0xff]
    %v279 = vld [vmem:[#allocation2 + $0x3e8] sm:$0xff]
    %v280 = vld [vmem:[#allocation2 + $0x3f0] sm:$0xff]
    %v281 = vld [vmem:[#allocation2 + $0x3f8] sm:$0xff]
    %v282 = vld [vmem:[#allocation2 + $0x400] sm:$0xff]
    %v283 = vld [vmem:[#allocation2 + $0x408] sm:$0xff]
    %v284 = vld [vmem:[#allocation2 + $0x410] sm:$0xff]
    %v285 = vld [vmem:[#allocation2 + $0x418] sm:$0xff]
    %v286 = vld [vmem:[#allocation2 + $0x420] sm:$0xff]
    %v287 = vld [vmem:[#allocation2 + $0x428] sm:$0xff]
    %v288 = vld [vmem:[#allocation2 + $0x430] sm:$0xff]
    %v289 = vld [vmem:[#allocation2 + $0x438] sm:$0xff]
    %v290 = vld [vmem:[#allocation2 + $0x440] sm:$0xff]
    %v291 = vld [vmem:[#allocation2 + $0x448] sm:$0xff]
    %v292 = vld [vmem:[#allocation2 + $0x450] sm:$0xff]
    %v293 = vld [vmem:[#allocation2 + $0x458] sm:$0xff]
    %v294 = vld [vmem:[#allocation2 + $0x460] sm:$0xff]
    %v295 = vld [vmem:[#allocation2 + $0x468] sm:$0xff]
    %v296 = vld [vmem:[#allocation2 + $0x470] sm:$0xff]
    %v297 = vld [vmem:[#allocation2 + $0x478] sm:$0xff]
    %v298 = vld [vmem:[#allocation2 + $0x480] sm:$0xff]
    %v299 = vld [vmem:[#allocation2 + $0x488] sm:$0xff]
    %v300 = vld [vmem:[#allocation2 + $0x490] sm:$0xff]
    %v301 = vld [vmem:[#allocation2 + $0x498] sm:$0xff]
    %v302 = vld [vmem:[#allocation2 + $0x4a0] sm:$0xff]
    %v303 = vld [vmem:[#allocation2 + $0x4a8] sm:$0xff]
    %v304 = vld [vmem:[#allocation2 + $0x4b0] sm:$0xff]
    %v305 = vld [vmem:[#allocation2 + $0x4b8] sm:$0xff]
    %v306 = vld [vmem:[#allocation2 + $0x4c0] sm:$0xff]
    %v307 = vld [vmem:[#allocation2 + $0x4c8] sm:$0xff]
    %v308 = vld [vmem:[#allocation2 + $0x4d0] sm:$0xff]
    %v309 = vld [vmem:[#allocation2 + $0x4d8] sm:$0xff]
    %v310 = vld [vmem:[#allocation2 + $0x4e0] sm:$0xff]
    %v311 = vld [vmem:[#allocation2 + $0x4e8] sm:$0xff]
    %v312 = vld [vmem:[#allocation2 + $0x4f0] sm:$0xff]
    %v313 = vld [vmem:[#allocation2 + $0x4f8] sm:$0xff]
    %v314 = vld [vmem:[#allocation2 + $0x500] sm:$0xff]
    %v315 = vld [vmem:[#allocation2 + $0x508] sm:$0xff]
    %v316 = vld [vmem:[#allocation2 + $0x510] sm:$0xff]
    %v317 = vld [vmem:[#allocation2 + $0x518] sm:$0xff]
    %v318 = vld [vmem:[#allocation2 + $0x520] sm:$0xff]
    %v319 = vld [vmem:[#allocation2 + $0x528] sm:$0xff]
    %v320 = vld [vmem:[#allocation2 + $0x530] sm:$0xff]
    %v321 = vld [vmem:[#allocation2 + $0x538] sm:$0xff]
    %v322 = vld [vmem:[#allocation2 + $0x540] sm:$0xff]
    %v323 = vld [vmem:[#allocation2 + $0x548] sm:$0xff]
    %v324 = vld [vmem:[#allocation2 + $0x550] sm:$0xff]
    %v325 = vld [vmem:[#allocation2 + $0x558] sm:$0xff]
    %v326 = vld [vmem:[#allocation2 + $0x560] sm:$0xff]
    %v327 = vld [vmem:[#allocation2 + $0x568] sm:$0xff]
    %v328 = vld [vmem:[#allocation2 + $0x570] sm:$0xff]
    %v329 = vld [vmem:[#allocation2 + $0x578] sm:$0xff]
    %v330 = vld [vmem:[#allocation2 + $0x580] sm:$0xff]
    %v331 = vld [vmem:[#allocation2 + $0x588] sm:$0xff]
    %v332 = vld [vmem:[#allocation2 + $0x590] sm:$0xff]
    %v333 = vld [vmem:[#allocation2 + $0x598] sm:$0xff]
    %v334 = vld [vmem:[#allocation2 + $0x5a0] sm:$0xff]
    %v335 = vld [vmem:[#allocation2 + $0x5a8] sm:$0xff]
    %v336 = vld [vmem:[#allocation2 + $0x5b0] sm:$0xff]
    %v337 = vld [vmem:[#allocation2 + $0x5b8] sm:$0xff]
    %v338 = vld [vmem:[#allocation2 + $0x5c0] sm:$0xff]
    %v339 = vld [vmem:[#allocation2 + $0x5c8] sm:$0xff]
    %v340 = vld [vmem:[#allocation2 + $0x5d0] sm:$0xff]
    %v341 = vld [vmem:[#allocation2 + $0x5d8] sm:$0xff]
    %v342 = vld [vmem:[#allocation2 + $0x5e0] sm:$0xff]
    %v343 = vld [vmem:[#allocation2 + $0x5e8] sm:$0xff]
    %v344 = vld [vmem:[#allocation2 + $0x5f0] sm:$0xff]
    %v345 = vld [vmem:[#allocation2 + $0x5f8] sm:$0xff]
    %v346 = vld [vmem:[#allocation2 + $0x600] sm:$0xff]
    %v347 = vld [vmem:[#allocation2 + $0x608] sm:$0xff]
    %v348 = vld [vmem:[#allocation2 + $0x610] sm:$0xff]
    %v349 = vld [vmem:[#allocation2 + $0x618] sm:$0xff]
    %v350 = vld [vmem:[#allocation2 + $0x620] sm:$0xff]
    %v351 = vld [vmem:[#allocation2 + $0x628] sm:$0xff]
    %v352 = vld [vmem:[#allocation2 + $0x630] sm:$0xff]
    %v353 = vld [vmem:[#allocation2 + $0x638] sm:$0xff]
    %v354 = vld [vmem:[#allocation2 + $0x640] sm:$0xff]
    %v355 = vld [vmem:[#allocation2 + $0x648] sm:$0xff]
    %v356 = vld [vmem:[#allocation2 + $0x650] sm:$0xff]
    %v357 = vld [vmem:[#allocation2 + $0x658] sm:$0xff]
    %v358 = vld [vmem:[#allocation2 + $0x660] sm:$0xff]
    %v359 = vld [vmem:[#allocation2 + $0x668] sm:$0xff]
    %v360 = vld [vmem:[#allocation2 + $0x670] sm:$0xff]
    %v361 = vld [vmem:[#allocation2 + $0x678] sm:$0xff]
    %v362 = vld [vmem:[#allocation2 + $0x680] sm:$0xff]
    %v363 = vld [vmem:[#allocation2 + $0x688] sm:$0xff]
    %v364 = vld [vmem:[#allocation2 + $0x690] sm:$0xff]
    %v365 = vld [vmem:[#allocation2 + $0x698] sm:$0xff]
    %v366 = vld [vmem:[#allocation2 + $0x6a0] sm:$0xff]
    %v367 = vld [vmem:[#allocation2 + $0x6a8] sm:$0xff]
    %v368 = vld [vmem:[#allocation2 + $0x6b0] sm:$0xff]
    %v369 = vld [vmem:[#allocation2 + $0x6b8] sm:$0xff]
    %v370 = vld [vmem:[#allocation2 + $0x6c0] sm:$0xff]
    %v371 = vld [vmem:[#allocation2 + $0x6c8] sm:$0xff]
    %v372 = vld [vmem:[#allocation2 + $0x6d0] sm:$0xff]
    %v373 = vld [vmem:[#allocation2 + $0x6d8] sm:$0xff]
    %v374 = vld [vmem:[#allocation2 + $0x6e0] sm:$0xff]
    %v375 = vld [vmem:[#allocation2 + $0x6e8] sm:$0xff]
    %v376 = vld [vmem:[#allocation2 + $0x6f0] sm:$0xff]
    %v377 = vld [vmem:[#allocation2 + $0x6f8] sm:$0xff]
    %v378 = vunpack.c.l.s8.bf16 %v154
    %v379 = vunpack.c.l.s8.bf16 %v155
    %v380 = vunpack.c.l.s8.bf16 %v156
    %v381 = vunpack.c.l.s8.bf16 %v157
    %v382 = vunpack.c.l.s8.bf16 %v158
    %v383 = vunpack.c.l.s8.bf16 %v159
    %v384 = vunpack.c.l.s8.bf16 %v160
    %v385 = vunpack.c.l.s8.bf16 %v161
    %v386 = vunpack.c.l.s8.bf16 %v162
    %v387 = vunpack.c.l.s8.bf16 %v163
    %v388 = vunpack.c.l.s8.bf16 %v164
    %v389 = vunpack.c.l.s8.bf16 %v165
    %v390 = vunpack.c.l.s8.bf16 %v166
    %v391 = vunpack.c.l.s8.bf16 %v167
    %v392 = vunpack.c.l.s8.bf16 %v168
    %v393 = vunpack.c.l.s8.bf16 %v169
    %v394 = vunpack.c.h.s8.bf16 %v154
    %v395 = vunpack.c.h.s8.bf16 %v155
    %v396 = vunpack.c.h.s8.bf16 %v156
    %v397 = vunpack.c.h.s8.bf16 %v157
    %v398 = vunpack.c.h.s8.bf16 %v158
    %v399 = vunpack.c.h.s8.bf16 %v159
    %v400 = vunpack.c.h.s8.bf16 %v160
    %v401 = vunpack.c.h.s8.bf16 %v161
    %v402 = vunpack.c.h.s8.bf16 %v162
    %v403 = vunpack.c.h.s8.bf16 %v163
    %v404 = vunpack.c.h.s8.bf16 %v164
    %v405 = vunpack.c.h.s8.bf16 %v165
    %v406 = vunpack.c.h.s8.bf16 %v166
    %v407 = vunpack.c.h.s8.bf16 %v167
    %v408 = vunpack.c.h.s8.bf16 %v168
    %v409 = vunpack.c.h.s8.bf16 %v169
    %v410 = vunpack.c.l.s8.bf16 %v170
    %v411 = vunpack.c.l.s8.bf16 %v171
    %v412 = vunpack.c.l.s8.bf16 %v172
    %v413 = vunpack.c.l.s8.bf16 %v173
    %v414 = vunpack.c.l.s8.bf16 %v174
    %v415 = vunpack.c.l.s8.bf16 %v175
    %v416 = vunpack.c.l.s8.bf16 %v176
    %v417 = vunpack.c.l.s8.bf16 %v177
    %v418 = vunpack.c.l.s8.bf16 %v178
    %v419 = vunpack.c.l.s8.bf16 %v179
    %v420 = vunpack.c.l.s8.bf16 %v180
    %v421 = vunpack.c.l.s8.bf16 %v181
    %v422 = vunpack.c.l.s8.bf16 %v182
    %v423 = vunpack.c.l.s8.bf16 %v183
    %v424 = vunpack.c.l.s8.bf16 %v184
    %v425 = vunpack.c.l.s8.bf16 %v185
    %v426 = vunpack.c.h.s8.bf16 %v170
    %v427 = vunpack.c.h.s8.bf16 %v171
    %v428 = vunpack.c.h.s8.bf16 %v172
    %v429 = vunpack.c.h.s8.bf16 %v173
    %v430 = vunpack.c.h.s8.bf16 %v174
    %v431 = vunpack.c.h.s8.bf16 %v175
    %v432 = vunpack.c.h.s8.bf16 %v176
    %v433 = vunpack.c.h.s8.bf16 %v177
    %v434 = vunpack.c.h.s8.bf16 %v178
    %v435 = vunpack.c.h.s8.bf16 %v179
    %v436 = vunpack.c.h.s8.bf16 %v180
    %v437 = vunpack.c.h.s8.bf16 %v181
    %v438 = vunpack.c.h.s8.bf16 %v182
    %v439 = vunpack.c.h.s8.bf16 %v183
    %v440 = vunpack.c.h.s8.bf16 %v184
    %v441 = vunpack.c.h.s8.bf16 %v185
    %v442 = vunpack.c.l.s8.bf16 %v186
    %v443 = vunpack.c.l.s8.bf16 %v187
    %v444 = vunpack.c.l.s8.bf16 %v188
    %v445 = vunpack.c.l.s8.bf16 %v189
    %v446 = vunpack.c.l.s8.bf16 %v190
    %v447 = vunpack.c.l.s8.bf16 %v191
    %v448 = vunpack.c.l.s8.bf16 %v192
    %v449 = vunpack.c.l.s8.bf16 %v193
    %v450 = vunpack.c.l.s8.bf16 %v194
    %v451 = vunpack.c.l.s8.bf16 %v195
    %v452 = vunpack.c.l.s8.bf16 %v196
    %v453 = vunpack.c.l.s8.bf16 %v197
    %v454 = vunpack.c.l.s8.bf16 %v198
    %v455 = vunpack.c.l.s8.bf16 %v199
    %v456 = vunpack.c.l.s8.bf16 %v200
    %v457 = vunpack.c.l.s8.bf16 %v201
    %v458 = vunpack.c.h.s8.bf16 %v186
    %v459 = vunpack.c.h.s8.bf16 %v187
    %v460 = vunpack.c.h.s8.bf16 %v188
    %v461 = vunpack.c.h.s8.bf16 %v189
    %v462 = vunpack.c.h.s8.bf16 %v190
    %v463 = vunpack.c.h.s8.bf16 %v191
    %v464 = vunpack.c.h.s8.bf16 %v192
    %v465 = vunpack.c.h.s8.bf16 %v193
    %v466 = vunpack.c.h.s8.bf16 %v194
    %v467 = vunpack.c.h.s8.bf16 %v195
    %v468 = vunpack.c.h.s8.bf16 %v196
    %v469 = vunpack.c.h.s8.bf16 %v197
    %v470 = vunpack.c.h.s8.bf16 %v198
    %v471 = vunpack.c.h.s8.bf16 %v199
    %v472 = vunpack.c.h.s8.bf16 %v200
    %v473 = vunpack.c.h.s8.bf16 %v201
    %v474 = vunpack.c.l.s8.bf16 %v202
    %v475 = vunpack.c.l.s8.bf16 %v203
    %v476 = vunpack.c.l.s8.bf16 %v204
    %v477 = vunpack.c.l.s8.bf16 %v205
    %v478 = vunpack.c.l.s8.bf16 %v206
    %v479 = vunpack.c.l.s8.bf16 %v207
    %v480 = vunpack.c.l.s8.bf16 %v208
    %v481 = vunpack.c.l.s8.bf16 %v209
    %v482 = vunpack.c.l.s8.bf16 %v210
    %v483 = vunpack.c.l.s8.bf16 %v211
    %v484 = vunpack.c.l.s8.bf16 %v212
    %v485 = vunpack.c.l.s8.bf16 %v213
    %v486 = vunpack.c.l.s8.bf16 %v214
    %v487 = vunpack.c.l.s8.bf16 %v215
    %v488 = vunpack.c.l.s8.bf16 %v216
    %v489 = vunpack.c.l.s8.bf16 %v217
    %v490 = vunpack.c.h.s8.bf16 %v202
    %v491 = vunpack.c.h.s8.bf16 %v203
    %v492 = vunpack.c.h.s8.bf16 %v204
    %v493 = vunpack.c.h.s8.bf16 %v205
    %v494 = vunpack.c.h.s8.bf16 %v206
    %v495 = vunpack.c.h.s8.bf16 %v207
    %v496 = vunpack.c.h.s8.bf16 %v208
    %v497 = vunpack.c.h.s8.bf16 %v209
    %v498 = vunpack.c.h.s8.bf16 %v210
    %v499 = vunpack.c.h.s8.bf16 %v211
    %v500 = vunpack.c.h.s8.bf16 %v212
    %v501 = vunpack.c.h.s8.bf16 %v213
    %v502 = vunpack.c.h.s8.bf16 %v214
    %v503 = vunpack.c.h.s8.bf16 %v215
    %v504 = vunpack.c.h.s8.bf16 %v216
    %v505 = vunpack.c.h.s8.bf16 %v217
    %v506 = vunpack.c.l.s8.bf16 %v218
    %v507 = vunpack.c.l.s8.bf16 %v219
    %v508 = vunpack.c.l.s8.bf16 %v220
    %v509 = vunpack.c.l.s8.bf16 %v221
    %v510 = vunpack.c.l.s8.bf16 %v222
    %v511 = vunpack.c.l.s8.bf16 %v223
    %v512 = vunpack.c.l.s8.bf16 %v224
    %v513 = vunpack.c.l.s8.bf16 %v225
    %v514 = vunpack.c.l.s8.bf16 %v226
    %v515 = vunpack.c.l.s8.bf16 %v227
    %v516 = vunpack.c.l.s8.bf16 %v228
    %v517 = vunpack.c.l.s8.bf16 %v229
    %v518 = vunpack.c.l.s8.bf16 %v230
    %v519 = vunpack.c.l.s8.bf16 %v231
    %v520 = vunpack.c.l.s8.bf16 %v232
    %v521 = vunpack.c.l.s8.bf16 %v233
    %v522 = vunpack.c.h.s8.bf16 %v218
    %v523 = vunpack.c.h.s8.bf16 %v219
    %v524 = vunpack.c.h.s8.bf16 %v220
    %v525 = vunpack.c.h.s8.bf16 %v221
    %v526 = vunpack.c.h.s8.bf16 %v222
    %v527 = vunpack.c.h.s8.bf16 %v223
    %v528 = vunpack.c.h.s8.bf16 %v224
    %v529 = vunpack.c.h.s8.bf16 %v225
    %v530 = vunpack.c.h.s8.bf16 %v226
    %v531 = vunpack.c.h.s8.bf16 %v227
    %v532 = vunpack.c.h.s8.bf16 %v228
    %v533 = vunpack.c.h.s8.bf16 %v229
    %v534 = vunpack.c.h.s8.bf16 %v230
    %v535 = vunpack.c.h.s8.bf16 %v231
    %v536 = vunpack.c.h.s8.bf16 %v232
    %v537 = vunpack.c.h.s8.bf16 %v233
    %v538 = vunpack.c.l.s8.bf16 %v234
    %v539 = vunpack.c.l.s8.bf16 %v235
    %v540 = vunpack.c.l.s8.bf16 %v236
    %v541 = vunpack.c.l.s8.bf16 %v237
    %v542 = vunpack.c.l.s8.bf16 %v238
    %v543 = vunpack.c.l.s8.bf16 %v239
    %v544 = vunpack.c.l.s8.bf16 %v240
    %v545 = vunpack.c.l.s8.bf16 %v241
    %v546 = vunpack.c.l.s8.bf16 %v242
    %v547 = vunpack.c.l.s8.bf16 %v243
    %v548 = vunpack.c.l.s8.bf16 %v244
    %v549 = vunpack.c.l.s8.bf16 %v245
    %v550 = vunpack.c.l.s8.bf16 %v246
    %v551 = vunpack.c.l.s8.bf16 %v247
    %v552 = vunpack.c.l.s8.bf16 %v248
    %v553 = vunpack.c.l.s8.bf16 %v249
    %v554 = vunpack.c.h.s8.bf16 %v234
    %v555 = vunpack.c.h.s8.bf16 %v235
    %v556 = vunpack.c.h.s8.bf16 %v236
    %v557 = vunpack.c.h.s8.bf16 %v237
    %v558 = vunpack.c.h.s8.bf16 %v238
    %v559 = vunpack.c.h.s8.bf16 %v239
    %v560 = vunpack.c.h.s8.bf16 %v240
    %v561 = vunpack.c.h.s8.bf16 %v241
    %v562 = vunpack.c.h.s8.bf16 %v242
    %v563 = vunpack.c.h.s8.bf16 %v243
    %v564 = vunpack.c.h.s8.bf16 %v244
    %v565 = vunpack.c.h.s8.bf16 %v245
    %v566 = vunpack.c.h.s8.bf16 %v246
    %v567 = vunpack.c.h.s8.bf16 %v247
    %v568 = vunpack.c.h.s8.bf16 %v248
    %v569 = vunpack.c.h.s8.bf16 %v249
    %v570 = vunpack.c.l.s8.bf16 %v250
    %v571 = vunpack.c.l.s8.bf16 %v251
    %v572 = vunpack.c.l.s8.bf16 %v252
    %v573 = vunpack.c.l.s8.bf16 %v253
    %v574 = vunpack.c.l.s8.bf16 %v254
    %v575 = vunpack.c.l.s8.bf16 %v255
    %v576 = vunpack.c.l.s8.bf16 %v256
    %v577 = vunpack.c.l.s8.bf16 %v257
    %v578 = vunpack.c.l.s8.bf16 %v258
    %v579 = vunpack.c.l.s8.bf16 %v259
    %v580 = vunpack.c.l.s8.bf16 %v260
    %v581 = vunpack.c.l.s8.bf16 %v261
    %v582 = vunpack.c.l.s8.bf16 %v262
    %v583 = vunpack.c.l.s8.bf16 %v263
    %v584 = vunpack.c.l.s8.bf16 %v264
    %v585 = vunpack.c.l.s8.bf16 %v265
    %v586 = vunpack.c.h.s8.bf16 %v250
    %v587 = vunpack.c.h.s8.bf16 %v251
    %v588 = vunpack.c.h.s8.bf16 %v252
    %v589 = vunpack.c.h.s8.bf16 %v253
    %v590 = vunpack.c.h.s8.bf16 %v254
    %v591 = vunpack.c.h.s8.bf16 %v255
    %v592 = vunpack.c.h.s8.bf16 %v256
    %v593 = vunpack.c.h.s8.bf16 %v257
    %v594 = vunpack.c.h.s8.bf16 %v258
    %v595 = vunpack.c.h.s8.bf16 %v259
    %v596 = vunpack.c.h.s8.bf16 %v260
    %v597 = vunpack.c.h.s8.bf16 %v261
    %v598 = vunpack.c.h.s8.bf16 %v262
    %v599 = vunpack.c.h.s8.bf16 %v263
    %v600 = vunpack.c.h.s8.bf16 %v264
    %v601 = vunpack.c.h.s8.bf16 %v265
    %v602 = vunpack.c.l.s8.bf16 %v266
    %v603 = vunpack.c.l.s8.bf16 %v267
    %v604 = vunpack.c.l.s8.bf16 %v268
    %v605 = vunpack.c.l.s8.bf16 %v269
    %v606 = vunpack.c.l.s8.bf16 %v270
    %v607 = vunpack.c.l.s8.bf16 %v271
    %v608 = vunpack.c.l.s8.bf16 %v272
    %v609 = vunpack.c.l.s8.bf16 %v273
    %v610 = vunpack.c.l.s8.bf16 %v274
    %v611 = vunpack.c.l.s8.bf16 %v275
    %v612 = vunpack.c.l.s8.bf16 %v276
    %v613 = vunpack.c.l.s8.bf16 %v277
    %v614 = vunpack.c.l.s8.bf16 %v278
    %v615 = vunpack.c.l.s8.bf16 %v279
    %v616 = vunpack.c.l.s8.bf16 %v280
    %v617 = vunpack.c.l.s8.bf16 %v281
    %v618 = vunpack.c.h.s8.bf16 %v266
    %v619 = vunpack.c.h.s8.bf16 %v267
    %v620 = vunpack.c.h.s8.bf16 %v268
    %v621 = vunpack.c.h.s8.bf16 %v269
    %v622 = vunpack.c.h.s8.bf16 %v270
    %v623 = vunpack.c.h.s8.bf16 %v271
    %v624 = vunpack.c.h.s8.bf16 %v272
    %v625 = vunpack.c.h.s8.bf16 %v273
    %v626 = vunpack.c.h.s8.bf16 %v274
    %v627 = vunpack.c.h.s8.bf16 %v275
    %v628 = vunpack.c.h.s8.bf16 %v276
    %v629 = vunpack.c.h.s8.bf16 %v277
    %v630 = vunpack.c.h.s8.bf16 %v278
    %v631 = vunpack.c.h.s8.bf16 %v279
    %v632 = vunpack.c.h.s8.bf16 %v280
    %v633 = vunpack.c.h.s8.bf16 %v281
    %v634 = vunpack.c.l.s8.bf16 %v282
    %v635 = vunpack.c.l.s8.bf16 %v283
    %v636 = vunpack.c.l.s8.bf16 %v284
    %v637 = vunpack.c.l.s8.bf16 %v285
    %v638 = vunpack.c.l.s8.bf16 %v286
    %v639 = vunpack.c.l.s8.bf16 %v287
    %v640 = vunpack.c.l.s8.bf16 %v288
    %v641 = vunpack.c.l.s8.bf16 %v289
    %v642 = vunpack.c.l.s8.bf16 %v290
    %v643 = vunpack.c.l.s8.bf16 %v291
    %v644 = vunpack.c.l.s8.bf16 %v292
    %v645 = vunpack.c.l.s8.bf16 %v293
    %v646 = vunpack.c.l.s8.bf16 %v294
    %v647 = vunpack.c.l.s8.bf16 %v295
    %v648 = vunpack.c.l.s8.bf16 %v296
    %v649 = vunpack.c.l.s8.bf16 %v297
    %v650 = vunpack.c.h.s8.bf16 %v282
    %v651 = vunpack.c.h.s8.bf16 %v283
    %v652 = vunpack.c.h.s8.bf16 %v284
    %v653 = vunpack.c.h.s8.bf16 %v285
    %v654 = vunpack.c.h.s8.bf16 %v286
    %v655 = vunpack.c.h.s8.bf16 %v287
    %v656 = vunpack.c.h.s8.bf16 %v288
    %v657 = vunpack.c.h.s8.bf16 %v289
    %v658 = vunpack.c.h.s8.bf16 %v290
    %v659 = vunpack.c.h.s8.bf16 %v291
    %v660 = vunpack.c.h.s8.bf16 %v292
    %v661 = vunpack.c.h.s8.bf16 %v293
    %v662 = vunpack.c.h.s8.bf16 %v294
    %v663 = vunpack.c.h.s8.bf16 %v295
    %v664 = vunpack.c.h.s8.bf16 %v296
    %v665 = vunpack.c.h.s8.bf16 %v297
    %v666 = vunpack.c.l.s8.bf16 %v298
    %v667 = vunpack.c.l.s8.bf16 %v299
    %v668 = vunpack.c.l.s8.bf16 %v300
    %v669 = vunpack.c.l.s8.bf16 %v301
    %v670 = vunpack.c.l.s8.bf16 %v302
    %v671 = vunpack.c.l.s8.bf16 %v303
    %v672 = vunpack.c.l.s8.bf16 %v304
    %v673 = vunpack.c.l.s8.bf16 %v305
    %v674 = vunpack.c.l.s8.bf16 %v306
    %v675 = vunpack.c.l.s8.bf16 %v307
    %v676 = vunpack.c.l.s8.bf16 %v308
    %v677 = vunpack.c.l.s8.bf16 %v309
    %v678 = vunpack.c.l.s8.bf16 %v310
    %v679 = vunpack.c.l.s8.bf16 %v311
    %v680 = vunpack.c.l.s8.bf16 %v312
    %v681 = vunpack.c.l.s8.bf16 %v313
    %v682 = vunpack.c.h.s8.bf16 %v298
    %v683 = vunpack.c.h.s8.bf16 %v299
    %v684 = vunpack.c.h.s8.bf16 %v300
    %v685 = vunpack.c.h.s8.bf16 %v301
    %v686 = vunpack.c.h.s8.bf16 %v302
    %v687 = vunpack.c.h.s8.bf16 %v303
    %v688 = vunpack.c.h.s8.bf16 %v304
    %v689 = vunpack.c.h.s8.bf16 %v305
    %v690 = vunpack.c.h.s8.bf16 %v306
    %v691 = vunpack.c.h.s8.bf16 %v307
    %v692 = vunpack.c.h.s8.bf16 %v308
    %v693 = vunpack.c.h.s8.bf16 %v309
    %v694 = vunpack.c.h.s8.bf16 %v310
    %v695 = vunpack.c.h.s8.bf16 %v311
    %v696 = vunpack.c.h.s8.bf16 %v312
    %v697 = vunpack.c.h.s8.bf16 %v313
    %v698 = vunpack.c.l.s8.bf16 %v314
    %v699 = vunpack.c.l.s8.bf16 %v315
    %v700 = vunpack.c.l.s8.bf16 %v316
    %v701 = vunpack.c.l.s8.bf16 %v317
    %v702 = vunpack.c.l.s8.bf16 %v318
    %v703 = vunpack.c.l.s8.bf16 %v319
    %v704 = vunpack.c.l.s8.bf16 %v320
    %v705 = vunpack.c.l.s8.bf16 %v321
    %v706 = vunpack.c.l.s8.bf16 %v322
    %v707 = vunpack.c.l.s8.bf16 %v323
    %v708 = vunpack.c.l.s8.bf16 %v324
    %v709 = vunpack.c.l.s8.bf16 %v325
    %v710 = vunpack.c.l.s8.bf16 %v326
    %v711 = vunpack.c.l.s8.bf16 %v327
    %v712 = vunpack.c.l.s8.bf16 %v328
    %v713 = vunpack.c.l.s8.bf16 %v329
    %v714 = vunpack.c.h.s8.bf16 %v314
    %v715 = vunpack.c.h.s8.bf16 %v315
    %v716 = vunpack.c.h.s8.bf16 %v316
    %v717 = vunpack.c.h.s8.bf16 %v317
    %v718 = vunpack.c.h.s8.bf16 %v318
    %v719 = vunpack.c.h.s8.bf16 %v319
    %v720 = vunpack.c.h.s8.bf16 %v320
    %v721 = vunpack.c.h.s8.bf16 %v321
    %v722 = vunpack.c.h.s8.bf16 %v322
    %v723 = vunpack.c.h.s8.bf16 %v323
    %v724 = vunpack.c.h.s8.bf16 %v324
    %v725 = vunpack.c.h.s8.bf16 %v325
    %v726 = vunpack.c.h.s8.bf16 %v326
    %v727 = vunpack.c.h.s8.bf16 %v327
    %v728 = vunpack.c.h.s8.bf16 %v328
    %v729 = vunpack.c.h.s8.bf16 %v329
    %v730 = vunpack.c.l.s8.bf16 %v330
    %v731 = vunpack.c.l.s8.bf16 %v331
    %v732 = vunpack.c.l.s8.bf16 %v332
    %v733 = vunpack.c.l.s8.bf16 %v333
    %v734 = vunpack.c.l.s8.bf16 %v334
    %v735 = vunpack.c.l.s8.bf16 %v335
    %v736 = vunpack.c.l.s8.bf16 %v336
    %v737 = vunpack.c.l.s8.bf16 %v337
    %v738 = vunpack.c.l.s8.bf16 %v338
    %v739 = vunpack.c.l.s8.bf16 %v339
    %v740 = vunpack.c.l.s8.bf16 %v340
    %v741 = vunpack.c.l.s8.bf16 %v341
    %v742 = vunpack.c.l.s8.bf16 %v342
    %v743 = vunpack.c.l.s8.bf16 %v343
    %v744 = vunpack.c.l.s8.bf16 %v344
    %v745 = vunpack.c.l.s8.bf16 %v345
    %v746 = vunpack.c.h.s8.bf16 %v330
    %v747 = vunpack.c.h.s8.bf16 %v331
    %v748 = vunpack.c.h.s8.bf16 %v332
    %v749 = vunpack.c.h.s8.bf16 %v333
    %v750 = vunpack.c.h.s8.bf16 %v334
    %v751 = vunpack.c.h.s8.bf16 %v335
    %v752 = vunpack.c.h.s8.bf16 %v336
    %v753 = vunpack.c.h.s8.bf16 %v337
    %v754 = vunpack.c.h.s8.bf16 %v338
    %v755 = vunpack.c.h.s8.bf16 %v339
    %v756 = vunpack.c.h.s8.bf16 %v340
    %v757 = vunpack.c.h.s8.bf16 %v341
    %v758 = vunpack.c.h.s8.bf16 %v342
    %v759 = vunpack.c.h.s8.bf16 %v343
    %v760 = vunpack.c.h.s8.bf16 %v344
    %v761 = vunpack.c.h.s8.bf16 %v345
    %v762 = vunpack.c.l.s8.bf16 %v346
    %v763 = vunpack.c.l.s8.bf16 %v347
    %v764 = vunpack.c.l.s8.bf16 %v348
    %v765 = vunpack.c.l.s8.bf16 %v349
    %v766 = vunpack.c.l.s8.bf16 %v350
    %v767 = vunpack.c.l.s8.bf16 %v351
    %v768 = vunpack.c.l.s8.bf16 %v352
    %v769 = vunpack.c.l.s8.bf16 %v353
    %v770 = vunpack.c.l.s8.bf16 %v354
    %v771 = vunpack.c.l.s8.bf16 %v355
    %v772 = vunpack.c.l.s8.bf16 %v356
    %v773 = vunpack.c.l.s8.bf16 %v357
    %v774 = vunpack.c.l.s8.bf16 %v358
    %v775 = vunpack.c.l.s8.bf16 %v359
    %v776 = vunpack.c.l.s8.bf16 %v360
    %v777 = vunpack.c.l.s8.bf16 %v361
    %v778 = vunpack.c.h.s8.bf16 %v346
    %v779 = vunpack.c.h.s8.bf16 %v347
    %v780 = vunpack.c.h.s8.bf16 %v348
    %v781 = vunpack.c.h.s8.bf16 %v349
    %v782 = vunpack.c.h.s8.bf16 %v350
    %v783 = vunpack.c.h.s8.bf16 %v351
    %v784 = vunpack.c.h.s8.bf16 %v352
    %v785 = vunpack.c.h.s8.bf16 %v353
    %v786 = vunpack.c.h.s8.bf16 %v354
    %v787 = vunpack.c.h.s8.bf16 %v355
    %v788 = vunpack.c.h.s8.bf16 %v356
    %v789 = vunpack.c.h.s8.bf16 %v357
    %v790 = vunpack.c.h.s8.bf16 %v358
    %v791 = vunpack.c.h.s8.bf16 %v359
    %v792 = vunpack.c.h.s8.bf16 %v360
    %v793 = vunpack.c.h.s8.bf16 %v361
    %v794 = vunpack.c.l.s8.bf16 %v362
    %v795 = vunpack.c.l.s8.bf16 %v363
    %v796 = vunpack.c.l.s8.bf16 %v364
    %v797 = vunpack.c.l.s8.bf16 %v365
    %v798 = vunpack.c.l.s8.bf16 %v366
    %v799 = vunpack.c.l.s8.bf16 %v367
    %v800 = vunpack.c.l.s8.bf16 %v368
    %v801 = vunpack.c.l.s8.bf16 %v369
    %v802 = vunpack.c.l.s8.bf16 %v370
    %v803 = vunpack.c.l.s8.bf16 %v371
    %v804 = vunpack.c.l.s8.bf16 %v372
    %v805 = vunpack.c.l.s8.bf16 %v373
    %v806 = vunpack.c.l.s8.bf16 %v374
    %v807 = vunpack.c.l.s8.bf16 %v375
    %v808 = vunpack.c.l.s8.bf16 %v376
    %v809 = vunpack.c.l.s8.bf16 %v377
    %v810 = vunpack.c.h.s8.bf16 %v362
    %v811 = vunpack.c.h.s8.bf16 %v363
    %v812 = vunpack.c.h.s8.bf16 %v364
    %v813 = vunpack.c.h.s8.bf16 %v365
    %v814 = vunpack.c.h.s8.bf16 %v366
    %v815 = vunpack.c.h.s8.bf16 %v367
    %v816 = vunpack.c.h.s8.bf16 %v368
    %v817 = vunpack.c.h.s8.bf16 %v369
    %v818 = vunpack.c.h.s8.bf16 %v370
    %v819 = vunpack.c.h.s8.bf16 %v371
    %v820 = vunpack.c.h.s8.bf16 %v372
    %v821 = vunpack.c.h.s8.bf16 %v373
    %v822 = vunpack.c.h.s8.bf16 %v374
    %v823 = vunpack.c.h.s8.bf16 %v375
    %v824 = vunpack.c.h.s8.bf16 %v376
    %v825 = vunpack.c.h.s8.bf16 %v377
    %v828 = vunpack.c.l.b16 %v145
    %v829 = vunpack.c.h.b16 %v145
    %v830 = vunpack.c.l.b16 %v146
    %v831 = vunpack.c.h.b16 %v146
    %v832 = vpack.c.b16 %v828, %v828
    %v833 = vpack.c.b16 %v829, %v829
    %v834 = vpack.c.b16 %v830, %v830
    %v835 = vpack.c.b16 %v831, %v831
    %vm839 = vcmask 523264
    %v841 = vsel %vm839, %v835, 0
    %843 = vmatprep.subr.bf16.mxu0 %v491
    %844 = vmatpush1.bf16.msra.mxu0 %v490
    %845 = vmatprep.subr.bf16.mxu0 %v475
    %846 = vmatpush1.bf16.msra.mxu0 %v474
    %847 = vmatprep.subr.bf16.mxu0 %v459
    %848 = vmatpush1.bf16.msra.mxu0 %v458
    %849 = vmatprep.subr.bf16.mxu0 %v443
    %850 = vmatpush1.bf16.msra.mxu0 %v442
    %851 = vmatprep.subr.bf16.mxu0 %v427
    %852 = vmatpush1.bf16.msra.mxu0 %v426
    %853 = vmatprep.subr.bf16.mxu0 %v411
    %854 = vmatpush1.bf16.msra.mxu0 %v410
    %855 = vmatprep.subr.bf16.mxu0 %v395
    %856 = vmatpush1.bf16.msra.mxu0 %v394
    %857 = vmatprep.subr.bf16.mxu0 %v379
    %858 = vmatpush1.bf16.msra.mxu0 %v378
    %859 = vmatprep.subr.bf16.mxu0 %v619
    %860 = vmatpush2.bf16.msra.mxu0 %v618
    %861 = vmatprep.subr.bf16.mxu0 %v603
    %862 = vmatpush2.bf16.msra.mxu0 %v602
    %863 = vmatprep.subr.bf16.mxu0 %v587
    %864 = vmatpush2.bf16.msra.mxu0 %v586
    %865 = vmatprep.subr.bf16.mxu0 %v571
    %866 = vmatpush2.bf16.msra.mxu0 %v570
    %867 = vmatprep.subr.bf16.mxu0 %v555
    %868 = vmatpush2.bf16.msra.mxu0 %v554
    %869 = vmatprep.subr.bf16.mxu0 %v539
    %870 = vmatpush2.bf16.msra.mxu0 %v538
    %871 = vmatprep.subr.bf16.mxu0 %v523
    %872 = vmatpush2.bf16.msra.mxu0 %v522
    %873 = vmatprep.subr.bf16.mxu0 %v507
    %874 = vmatpush2.bf16.msra.mxu0 %v506
    %875 = vmatprep.mubr.bf16.mxu0 %v833
    %876 = vmatmul.mubr.bf16.gmra.mxu0 %v832
    %v877 = vpop.f32.mrf.mxu0
    %v878 = vadd.f32 0.0, %v877
    %v879 = vpop.f32.mrf.mxu0
    %v880 = vadd.f32 0.0, %v879
    %v881 = vpop.f32.mrf.mxu0
    %v882 = vpop.f32.mrf.mxu0
    %883 = vdwg.mxu0
    %884 = vmatprep.subr.bf16.mxu0 %v747
    %885 = vmatpush1.bf16.msra.mxu0 %v746
    %886 = vmatprep.subr.bf16.mxu0 %v731
    %887 = vmatpush1.bf16.msra.mxu0 %v730
    %888 = vmatprep.subr.bf16.mxu0 %v715
    %889 = vmatpush1.bf16.msra.mxu0 %v714
    %890 = vmatprep.subr.bf16.mxu0 %v699
    %891 = vmatpush1.bf16.msra.mxu0 %v698
    %892 = vmatprep.subr.bf16.mxu0 %v683
    %893 = vmatpush1.bf16.msra.mxu0 %v682
    %894 = vmatprep.subr.bf16.mxu0 %v667
    %895 = vmatpush1.bf16.msra.mxu0 %v666
    %896 = vmatprep.subr.bf16.mxu0 %v651
    %897 = vmatpush1.bf16.msra.mxu0 %v650
    %898 = vmatprep.subr.bf16.mxu0 %v635
    %899 = vmatpush1.bf16.msra.mxu0 %v634
    %900 = vmatprep.subr.bf16.mxu0 0
    %901 = vmatpush2.bf16.msra.mxu0 0
    %902 = vmatprep.subr.bf16.mxu0 0
    %903 = vmatpush2.bf16.msra.mxu0 0
    %904 = vmatprep.subr.bf16.mxu0 0
    %905 = vmatpush2.bf16.msra.mxu0 0
    %906 = vmatprep.subr.bf16.mxu0 0
    %907 = vmatpush2.bf16.msra.mxu0 0
    %908 = vmatprep.subr.bf16.mxu0 %v811
    %909 = vmatpush2.bf16.msra.mxu0 %v810
    %910 = vmatprep.subr.bf16.mxu0 %v795
    %911 = vmatpush2.bf16.msra.mxu0 %v794
    %912 = vmatprep.subr.bf16.mxu0 %v779
    %913 = vmatpush2.bf16.msra.mxu0 %v778
    %914 = vmatprep.subr.bf16.mxu0 %v763
    %915 = vmatpush2.bf16.msra.mxu0 %v762
    %916 = vmatprep.mubr.bf16.mxu0 %v841
    %917 = vmatmul.mubr.bf16.gmra.mxu0 %v834
    %v918 = vpop.f32.mrf.mxu0
    %v919 = vadd.f32 %v878, %v918
    %v920 = vpop.f32.mrf.mxu0
    %v921 = vadd.f32 %v880, %v920
    %v922 = vpop.f32.mrf.mxu0
    %v923 = vpop.f32.mrf.mxu0
    %924 = vdwg.mxu0
    %925 = vmatprep.subr.bf16.mxu0 %v493
    %926 = vmatpush1.bf16.msra.mxu0 %v492
    %927 = vmatprep.subr.bf16.mxu0 %v477
    %928 = vmatpush1.bf16.msra.mxu0 %v476
    %929 = vmatprep.subr.bf16.mxu0 %v461
    %930 = vmatpush1.bf16.msra.mxu0 %v460
    %931 = vmatprep.subr.bf16.mxu0 %v445
    %932 = vmatpush1.bf16.msra.mxu0 %v444
    %933 = vmatprep.subr.bf16.mxu0 %v429
    %934 = vmatpush1.bf16.msra.mxu0 %v428
    %935 = vmatprep.subr.bf16.mxu0 %v413
    %936 = vmatpush1.bf16.msra.mxu0 %v412
    %937 = vmatprep.subr.bf16.mxu0 %v397
    %938 = vmatpush1.bf16.msra.mxu0 %v396
    %939 = vmatprep.subr.bf16.mxu0 %v381
    %940 = vmatpush1.bf16.msra.mxu0 %v380
    %941 = vmatprep.subr.bf16.mxu0 %v621
    %942 = vmatpush2.bf16.msra.mxu0 %v620
    %943 = vmatprep.subr.bf16.mxu0 %v605
    %944 = vmatpush2.bf16.msra.mxu0 %v604
    %945 = vmatprep.subr.bf16.mxu0 %v589
    %946 = vmatpush2.bf16.msra.mxu0 %v588
    %947 = vmatprep.subr.bf16.mxu0 %v573
    %948 = vmatpush2.bf16.msra.mxu0 %v572
    %949 = vmatprep.subr.bf16.mxu0 %v557
    %950 = vmatpush2.bf16.msra.mxu0 %v556
    %951 = vmatprep.subr.bf16.mxu0 %v541
    %952 = vmatpush2.bf16.msra.mxu0 %v540
    %953 = vmatprep.subr.bf16.mxu0 %v525
    %954 = vmatpush2.bf16.msra.mxu0 %v524
    %955 = vmatprep.subr.bf16.mxu0 %v509
    %956 = vmatpush2.bf16.msra.mxu0 %v508
    %957 = vmatprep.mubr.bf16.mxu0 %v833
    %958 = vmatmul.mubr.bf16.gmra.mxu0 %v832
    %v959 = vpop.f32.mrf.mxu0
    %v960 = vadd.f32 0.0, %v959
    %v961 = vpop.f32.mrf.mxu0
    %v962 = vadd.f32 0.0, %v961
    %v963 = vpop.f32.mrf.mxu0
    %v964 = vpop.f32.mrf.mxu0
    %965 = vdwg.mxu0
    %966 = vmatprep.subr.bf16.mxu0 %v749
    %967 = vmatpush1.bf16.msra.mxu0 %v748
    %968 = vmatprep.subr.bf16.mxu0 %v733
    %969 = vmatpush1.bf16.msra.mxu0 %v732
    %970 = vmatprep.subr.bf16.mxu0 %v717
    %971 = vmatpush1.bf16.msra.mxu0 %v716
    %972 = vmatprep.subr.bf16.mxu0 %v701
    %973 = vmatpush1.bf16.msra.mxu0 %v700
    %974 = vmatprep.subr.bf16.mxu0 %v685
    %975 = vmatpush1.bf16.msra.mxu0 %v684
    %976 = vmatprep.subr.bf16.mxu0 %v669
    %977 = vmatpush1.bf16.msra.mxu0 %v668
    %978 = vmatprep.subr.bf16.mxu0 %v653
    %979 = vmatpush1.bf16.msra.mxu0 %v652
    %980 = vmatprep.subr.bf16.mxu0 %v637
    %981 = vmatpush1.bf16.msra.mxu0 %v636
    %982 = vmatprep.subr.bf16.mxu0 0
    %983 = vmatpush2.bf16.msra.mxu0 0
    %984 = vmatprep.subr.bf16.mxu0 0
    %985 = vmatpush2.bf16.msra.mxu0 0
    %986 = vmatprep.subr.bf16.mxu0 0
    %987 = vmatpush2.bf16.msra.mxu0 0
    %988 = vmatprep.subr.bf16.mxu0 0
    %989 = vmatpush2.bf16.msra.mxu0 0
    %990 = vmatprep.subr.bf16.mxu0 %v813
    %991 = vmatpush2.bf16.msra.mxu0 %v812
    %992 = vmatprep.subr.bf16.mxu0 %v797
    %993 = vmatpush2.bf16.msra.mxu0 %v796
    %994 = vmatprep.subr.bf16.mxu0 %v781
    %995 = vmatpush2.bf16.msra.mxu0 %v780
    %996 = vmatprep.subr.bf16.mxu0 %v765
    %997 = vmatpush2.bf16.msra.mxu0 %v764
    %998 = vmatprep.mubr.bf16.mxu0 %v841
    %999 = vmatmul.mubr.bf16.gmra.mxu0 %v834
    %v1000 = vpop.f32.mrf.mxu0
    %v1001 = vadd.f32 %v960, %v1000
    %v1002 = vpop.f32.mrf.mxu0
    %v1003 = vadd.f32 %v962, %v1002
    %v1004 = vpop.f32.mrf.mxu0
    %v1005 = vpop.f32.mrf.mxu0
    %1006 = vdwg.mxu0
    %1007 = vmatprep.subr.bf16.mxu0 %v495
    %1008 = vmatpush1.bf16.msra.mxu0 %v494
    %1009 = vmatprep.subr.bf16.mxu0 %v479
    %1010 = vmatpush1.bf16.msra.mxu0 %v478
    %1011 = vmatprep.subr.bf16.mxu0 %v463
    %1012 = vmatpush1.bf16.msra.mxu0 %v462
    %1013 = vmatprep.subr.bf16.mxu0 %v447
    %1014 = vmatpush1.bf16.msra.mxu0 %v446
    %1015 = vmatprep.subr.bf16.mxu0 %v431
    %1016 = vmatpush1.bf16.msra.mxu0 %v430
    %1017 = vmatprep.subr.bf16.mxu0 %v415
    %1018 = vmatpush1.bf16.msra.mxu0 %v414
    %1019 = vmatprep.subr.bf16.mxu0 %v399
    %1020 = vmatpush1.bf16.msra.mxu0 %v398
    %1021 = vmatprep.subr.bf16.mxu0 %v383
    %1022 = vmatpush1.bf16.msra.mxu0 %v382
    %1023 = vmatprep.subr.bf16.mxu0 %v623
    %1024 = vmatpush2.bf16.msra.mxu0 %v622
    %1025 = vmatprep.subr.bf16.mxu0 %v607
    %1026 = vmatpush2.bf16.msra.mxu0 %v606
    %1027 = vmatprep.subr.bf16.mxu0 %v591
    %1028 = vmatpush2.bf16.msra.mxu0 %v590
    %1029 = vmatprep.subr.bf16.mxu0 %v575
    %1030 = vmatpush2.bf16.msra.mxu0 %v574
    %1031 = vmatprep.subr.bf16.mxu0 %v559
    %1032 = vmatpush2.bf16.msra.mxu0 %v558
    %1033 = vmatprep.subr.bf16.mxu0 %v543
    %1034 = vmatpush2.bf16.msra.mxu0 %v542
    %1035 = vmatprep.subr.bf16.mxu0 %v527
    %1036 = vmatpush2.bf16.msra.mxu0 %v526
    %1037 = vmatprep.subr.bf16.mxu0 %v511
    %1038 = vmatpush2.bf16.msra.mxu0 %v510
    %1039 = vmatprep.mubr.bf16.mxu0 %v833
    %1040 = vmatmul.mubr.bf16.gmra.mxu0 %v832
    %v1041 = vpop.f32.mrf.mxu0
    %v1042 = vadd.f32 0.0, %v1041
    %v1043 = vpop.f32.mrf.mxu0
    %v1044 = vadd.f32 0.0, %v1043
    %v1045 = vpop.f32.mrf.mxu0
    %v1046 = vpop.f32.mrf.mxu0
    %1047 = vdwg.mxu0
    %1048 = vmatprep.subr.bf16.mxu0 %v751
    %1049 = vmatpush1.bf16.msra.mxu0 %v750
    %1050 = vmatprep.subr.bf16.mxu0 %v735
    %1051 = vmatpush1.bf16.msra.mxu0 %v734
    %1052 = vmatprep.subr.bf16.mxu0 %v719
    %1053 = vmatpush1.bf16.msra.mxu0 %v718
    %1054 = vmatprep.subr.bf16.mxu0 %v703
    %1055 = vmatpush1.bf16.msra.mxu0 %v702
    %1056 = vmatprep.subr.bf16.mxu0 %v687
    %1057 = vmatpush1.bf16.msra.mxu0 %v686
    %1058 = vmatprep.subr.bf16.mxu0 %v671
    %1059 = vmatpush1.bf16.msra.mxu0 %v670
    %1060 = vmatprep.subr.bf16.mxu0 %v655
    %1061 = vmatpush1.bf16.msra.mxu0 %v654
    %1062 = vmatprep.subr.bf16.mxu0 %v639
    %1063 = vmatpush1.bf16.msra.mxu0 %v638
    %1064 = vmatprep.subr.bf16.mxu0 0
    %1065 = vmatpush2.bf16.msra.mxu0 0
    %1066 = vmatprep.subr.bf16.mxu0 0
    %1067 = vmatpush2.bf16.msra.mxu0 0
    %1068 = vmatprep.subr.bf16.mxu0 0
    %1069 = vmatpush2.bf16.msra.mxu0 0
    %1070 = vmatprep.subr.bf16.mxu0 0
    %1071 = vmatpush2.bf16.msra.mxu0 0
    %1072 = vmatprep.subr.bf16.mxu0 %v815
    %1073 = vmatpush2.bf16.msra.mxu0 %v814
    %1074 = vmatprep.subr.bf16.mxu0 %v799
    %1075 = vmatpush2.bf16.msra.mxu0 %v798
    %1076 = vmatprep.subr.bf16.mxu0 %v783
    %1077 = vmatpush2.bf16.msra.mxu0 %v782
    %1078 = vmatprep.subr.bf16.mxu0 %v767
    %1079 = vmatpush2.bf16.msra.mxu0 %v766
    %1080 = vmatprep.mubr.bf16.mxu0 %v841
    %1081 = vmatmul.mubr.bf16.gmra.mxu0 %v834
    %v1082 = vpop.f32.mrf.mxu0
    %v1083 = vadd.f32 %v1042, %v1082
    %v1084 = vpop.f32.mrf.mxu0
    %v1085 = vadd.f32 %v1044, %v1084
    %v1086 = vpop.f32.mrf.mxu0
    %v1087 = vpop.f32.mrf.mxu0
    %1088 = vdwg.mxu0
    %1089 = vmatprep.subr.bf16.mxu0 %v497
    %1090 = vmatpush1.bf16.msra.mxu0 %v496
    %1091 = vmatprep.subr.bf16.mxu0 %v481
    %1092 = vmatpush1.bf16.msra.mxu0 %v480
    %1093 = vmatprep.subr.bf16.mxu0 %v465
    %1094 = vmatpush1.bf16.msra.mxu0 %v464
    %1095 = vmatprep.subr.bf16.mxu0 %v449
    %1096 = vmatpush1.bf16.msra.mxu0 %v448
    %1097 = vmatprep.subr.bf16.mxu0 %v433
    %1098 = vmatpush1.bf16.msra.mxu0 %v432
    %1099 = vmatprep.subr.bf16.mxu0 %v417
    %1100 = vmatpush1.bf16.msra.mxu0 %v416
    %1101 = vmatprep.subr.bf16.mxu0 %v401
    %1102 = vmatpush1.bf16.msra.mxu0 %v400
    %1103 = vmatprep.subr.bf16.mxu0 %v385
    %1104 = vmatpush1.bf16.msra.mxu0 %v384
    %1105 = vmatprep.subr.bf16.mxu0 %v625
    %1106 = vmatpush2.bf16.msra.mxu0 %v624
    %1107 = vmatprep.subr.bf16.mxu0 %v609
    %1108 = vmatpush2.bf16.msra.mxu0 %v608
    %1109 = vmatprep.subr.bf16.mxu0 %v593
    %1110 = vmatpush2.bf16.msra.mxu0 %v592
    %1111 = vmatprep.subr.bf16.mxu0 %v577
    %1112 = vmatpush2.bf16.msra.mxu0 %v576
    %1113 = vmatprep.subr.bf16.mxu0 %v561
    %1114 = vmatpush2.bf16.msra.mxu0 %v560
    %1115 = vmatprep.subr.bf16.mxu0 %v545
    %1116 = vmatpush2.bf16.msra.mxu0 %v544
    %1117 = vmatprep.subr.bf16.mxu0 %v529
    %1118 = vmatpush2.bf16.msra.mxu0 %v528
    %1119 = vmatprep.subr.bf16.mxu0 %v513
    %1120 = vmatpush2.bf16.msra.mxu0 %v512
    %1121 = vmatprep.mubr.bf16.mxu0 %v833
    %1122 = vmatmul.mubr.bf16.gmra.mxu0 %v832
    %v1123 = vpop.f32.mrf.mxu0
    %v1124 = vadd.f32 0.0, %v1123
    %v1125 = vpop.f32.mrf.mxu0
    %v1126 = vadd.f32 0.0, %v1125
    %v1127 = vpop.f32.mrf.mxu0
    %v1128 = vpop.f32.mrf.mxu0
    %1129 = vdwg.mxu0
    %1130 = vmatprep.subr.bf16.mxu0 %v753
    %1131 = vmatpush1.bf16.msra.mxu0 %v752
    %1132 = vmatprep.subr.bf16.mxu0 %v737
    %1133 = vmatpush1.bf16.msra.mxu0 %v736
    %1134 = vmatprep.subr.bf16.mxu0 %v721
    %1135 = vmatpush1.bf16.msra.mxu0 %v720
    %1136 = vmatprep.subr.bf16.mxu0 %v705
    %1137 = vmatpush1.bf16.msra.mxu0 %v704
    %1138 = vmatprep.subr.bf16.mxu0 %v689
    %1139 = vmatpush1.bf16.msra.mxu0 %v688
    %1140 = vmatprep.subr.bf16.mxu0 %v673
    %1141 = vmatpush1.bf16.msra.mxu0 %v672
    %1142 = vmatprep.subr.bf16.mxu0 %v657
    %1143 = vmatpush1.bf16.msra.mxu0 %v656
    %1144 = vmatprep.subr.bf16.mxu0 %v641
    %1145 = vmatpush1.bf16.msra.mxu0 %v640
    %1146 = vmatprep.subr.bf16.mxu0 0
    %1147 = vmatpush2.bf16.msra.mxu0 0
    %1148 = vmatprep.subr.bf16.mxu0 0
    %1149 = vmatpush2.bf16.msra.mxu0 0
    %1150 = vmatprep.subr.bf16.mxu0 0
    %1151 = vmatpush2.bf16.msra.mxu0 0
    %1152 = vmatprep.subr.bf16.mxu0 0
    %1153 = vmatpush2.bf16.msra.mxu0 0
    %1154 = vmatprep.subr.bf16.mxu0 %v817
    %1155 = vmatpush2.bf16.msra.mxu0 %v816
    %1156 = vmatprep.subr.bf16.mxu0 %v801
    %1157 = vmatpush2.bf16.msra.mxu0 %v800
    %1158 = vmatprep.subr.bf16.mxu0 %v785
    %1159 = vmatpush2.bf16.msra.mxu0 %v784
    %1160 = vmatprep.subr.bf16.mxu0 %v769
    %1161 = vmatpush2.bf16.msra.mxu0 %v768
    %1162 = vmatprep.mubr.bf16.mxu0 %v841
    %1163 = vmatmul.mubr.bf16.gmra.mxu0 %v834
    %v1164 = vpop.f32.mrf.mxu0
    %v1165 = vadd.f32 %v1124, %v1164
    %v1166 = vpop.f32.mrf.mxu0
    %v1167 = vadd.f32 %v1126, %v1166
    %v1168 = vpop.f32.mrf.mxu0
    %v1169 = vpop.f32.mrf.mxu0
    %1170 = vdwg.mxu0
    %1171 = vmatprep.subr.bf16.mxu0 %v499
    %1172 = vmatpush1.bf16.msra.mxu0 %v498
    %1173 = vmatprep.subr.bf16.mxu0 %v483
    %1174 = vmatpush1.bf16.msra.mxu0 %v482
    %1175 = vmatprep.subr.bf16.mxu0 %v467
    %1176 = vmatpush1.bf16.msra.mxu0 %v466
    %1177 = vmatprep.subr.bf16.mxu0 %v451
    %1178 = vmatpush1.bf16.msra.mxu0 %v450
    %1179 = vmatprep.subr.bf16.mxu0 %v435
    %1180 = vmatpush1.bf16.msra.mxu0 %v434
    %1181 = vmatprep.subr.bf16.mxu0 %v419
    %1182 = vmatpush1.bf16.msra.mxu0 %v418
    %1183 = vmatprep.subr.bf16.mxu0 %v403
    %1184 = vmatpush1.bf16.msra.mxu0 %v402
    %1185 = vmatprep.subr.bf16.mxu0 %v387
    %1186 = vmatpush1.bf16.msra.mxu0 %v386
    %1187 = vmatprep.subr.bf16.mxu0 %v627
    %1188 = vmatpush2.bf16.msra.mxu0 %v626
    %1189 = vmatprep.subr.bf16.mxu0 %v611
    %1190 = vmatpush2.bf16.msra.mxu0 %v610
    %1191 = vmatprep.subr.bf16.mxu0 %v595
    %1192 = vmatpush2.bf16.msra.mxu0 %v594
    %1193 = vmatprep.subr.bf16.mxu0 %v579
    %1194 = vmatpush2.bf16.msra.mxu0 %v578
    %1195 = vmatprep.subr.bf16.mxu0 %v563
    %1196 = vmatpush2.bf16.msra.mxu0 %v562
    %1197 = vmatprep.subr.bf16.mxu0 %v547
    %1198 = vmatpush2.bf16.msra.mxu0 %v546
    %1199 = vmatprep.subr.bf16.mxu0 %v531
    %1200 = vmatpush2.bf16.msra.mxu0 %v530
    %1201 = vmatprep.subr.bf16.mxu0 %v515
    %1202 = vmatpush2.bf16.msra.mxu0 %v514
    %1203 = vmatprep.mubr.bf16.mxu0 %v833
    %1204 = vmatmul.mubr.bf16.gmra.mxu0 %v832
    %v1205 = vpop.f32.mrf.mxu0
    %v1206 = vadd.f32 0.0, %v1205
    %v1207 = vpop.f32.mrf.mxu0
    %v1208 = vadd.f32 0.0, %v1207
    %v1209 = vpop.f32.mrf.mxu0
    %v1210 = vpop.f32.mrf.mxu0
    %1211 = vdwg.mxu0
    %1212 = vmatprep.subr.bf16.mxu0 %v755
    %1213 = vmatpush1.bf16.msra.mxu0 %v754
    %1214 = vmatprep.subr.bf16.mxu0 %v739
    %1215 = vmatpush1.bf16.msra.mxu0 %v738
    %1216 = vmatprep.subr.bf16.mxu0 %v723
    %1217 = vmatpush1.bf16.msra.mxu0 %v722
    %1218 = vmatprep.subr.bf16.mxu0 %v707
    %1219 = vmatpush1.bf16.msra.mxu0 %v706
    %1220 = vmatprep.subr.bf16.mxu0 %v691
    %1221 = vmatpush1.bf16.msra.mxu0 %v690
    %1222 = vmatprep.subr.bf16.mxu0 %v675
    %1223 = vmatpush1.bf16.msra.mxu0 %v674
    %1224 = vmatprep.subr.bf16.mxu0 %v659
    %1225 = vmatpush1.bf16.msra.mxu0 %v658
    %1226 = vmatprep.subr.bf16.mxu0 %v643
    %1227 = vmatpush1.bf16.msra.mxu0 %v642
    %1228 = vmatprep.subr.bf16.mxu0 0
    %1229 = vmatpush2.bf16.msra.mxu0 0
    %1230 = vmatprep.subr.bf16.mxu0 0
    %1231 = vmatpush2.bf16.msra.mxu0 0
    %1232 = vmatprep.subr.bf16.mxu0 0
    %1233 = vmatpush2.bf16.msra.mxu0 0
    %1234 = vmatprep.subr.bf16.mxu0 0
    %1235 = vmatpush2.bf16.msra.mxu0 0
    %1236 = vmatprep.subr.bf16.mxu0 %v819
    %1237 = vmatpush2.bf16.msra.mxu0 %v818
    %1238 = vmatprep.subr.bf16.mxu0 %v803
    %1239 = vmatpush2.bf16.msra.mxu0 %v802
    %1240 = vmatprep.subr.bf16.mxu0 %v787
    %1241 = vmatpush2.bf16.msra.mxu0 %v786
    %1242 = vmatprep.subr.bf16.mxu0 %v771
    %1243 = vmatpush2.bf16.msra.mxu0 %v770
    %1244 = vmatprep.mubr.bf16.mxu0 %v841
    %1245 = vmatmul.mubr.bf16.gmra.mxu0 %v834
    %v1246 = vpop.f32.mrf.mxu0
    %v1247 = vadd.f32 %v1206, %v1246
    %v1248 = vpop.f32.mrf.mxu0
    %v1249 = vadd.f32 %v1208, %v1248
    %v1250 = vpop.f32.mrf.mxu0
    %v1251 = vpop.f32.mrf.mxu0
    %1252 = vdwg.mxu0
    %1253 = vmatprep.subr.bf16.mxu0 %v501
    %1254 = vmatpush1.bf16.msra.mxu0 %v500
    %1255 = vmatprep.subr.bf16.mxu0 %v485
    %1256 = vmatpush1.bf16.msra.mxu0 %v484
    %1257 = vmatprep.subr.bf16.mxu0 %v469
    %1258 = vmatpush1.bf16.msra.mxu0 %v468
    %1259 = vmatprep.subr.bf16.mxu0 %v453
    %1260 = vmatpush1.bf16.msra.mxu0 %v452
    %1261 = vmatprep.subr.bf16.mxu0 %v437
    %1262 = vmatpush1.bf16.msra.mxu0 %v436
    %1263 = vmatprep.subr.bf16.mxu0 %v421
    %1264 = vmatpush1.bf16.msra.mxu0 %v420
    %1265 = vmatprep.subr.bf16.mxu0 %v405
    %1266 = vmatpush1.bf16.msra.mxu0 %v404
    %1267 = vmatprep.subr.bf16.mxu0 %v389
    %1268 = vmatpush1.bf16.msra.mxu0 %v388
    %1269 = vmatprep.subr.bf16.mxu0 %v629
    %1270 = vmatpush2.bf16.msra.mxu0 %v628
    %1271 = vmatprep.subr.bf16.mxu0 %v613
    %1272 = vmatpush2.bf16.msra.mxu0 %v612
    %1273 = vmatprep.subr.bf16.mxu0 %v597
    %1274 = vmatpush2.bf16.msra.mxu0 %v596
    %1275 = vmatprep.subr.bf16.mxu0 %v581
    %1276 = vmatpush2.bf16.msra.mxu0 %v580
    %1277 = vmatprep.subr.bf16.mxu0 %v565
    %1278 = vmatpush2.bf16.msra.mxu0 %v564
    %1279 = vmatprep.subr.bf16.mxu0 %v549
    %1280 = vmatpush2.bf16.msra.mxu0 %v548
    %1281 = vmatprep.subr.bf16.mxu0 %v533
    %1282 = vmatpush2.bf16.msra.mxu0 %v532
    %1283 = vmatprep.subr.bf16.mxu0 %v517
    %1284 = vmatpush2.bf16.msra.mxu0 %v516
    %1285 = vmatprep.mubr.bf16.mxu0 %v833
    %1286 = vmatmul.mubr.bf16.gmra.mxu0 %v832
    %v1287 = vpop.f32.mrf.mxu0
    %v1288 = vadd.f32 0.0, %v1287
    %v1289 = vpop.f32.mrf.mxu0
    %v1290 = vadd.f32 0.0, %v1289
    %v1291 = vpop.f32.mrf.mxu0
    %v1292 = vpop.f32.mrf.mxu0
    %1293 = vdwg.mxu0
    %1294 = vmatprep.subr.bf16.mxu0 %v757
    %1295 = vmatpush1.bf16.msra.mxu0 %v756
    %1296 = vmatprep.subr.bf16.mxu0 %v741
    %1297 = vmatpush1.bf16.msra.mxu0 %v740
    %1298 = vmatprep.subr.bf16.mxu0 %v725
    %1299 = vmatpush1.bf16.msra.mxu0 %v724
    %1300 = vmatprep.subr.bf16.mxu0 %v709
    %1301 = vmatpush1.bf16.msra.mxu0 %v708
    %1302 = vmatprep.subr.bf16.mxu0 %v693
    %1303 = vmatpush1.bf16.msra.mxu0 %v692
    %1304 = vmatprep.subr.bf16.mxu0 %v677
    %1305 = vmatpush1.bf16.msra.mxu0 %v676
    %1306 = vmatprep.subr.bf16.mxu0 %v661
    %1307 = vmatpush1.bf16.msra.mxu0 %v660
    %1308 = vmatprep.subr.bf16.mxu0 %v645
    %1309 = vmatpush1.bf16.msra.mxu0 %v644
    %1310 = vmatprep.subr.bf16.mxu0 0
    %1311 = vmatpush2.bf16.msra.mxu0 0
    %1312 = vmatprep.subr.bf16.mxu0 0
    %1313 = vmatpush2.bf16.msra.mxu0 0
    %1314 = vmatprep.subr.bf16.mxu0 0
    %1315 = vmatpush2.bf16.msra.mxu0 0
    %1316 = vmatprep.subr.bf16.mxu0 0
    %1317 = vmatpush2.bf16.msra.mxu0 0
    %1318 = vmatprep.subr.bf16.mxu0 %v821
    %1319 = vmatpush2.bf16.msra.mxu0 %v820
    %1320 = vmatprep.subr.bf16.mxu0 %v805
    %1321 = vmatpush2.bf16.msra.mxu0 %v804
    %1322 = vmatprep.subr.bf16.mxu0 %v789
    %1323 = vmatpush2.bf16.msra.mxu0 %v788
    %1324 = vmatprep.subr.bf16.mxu0 %v773
    %1325 = vmatpush2.bf16.msra.mxu0 %v772
    %1326 = vmatprep.mubr.bf16.mxu0 %v841
    %1327 = vmatmul.mubr.bf16.gmra.mxu0 %v834
    %v1328 = vpop.f32.mrf.mxu0
    %v1329 = vadd.f32 %v1288, %v1328
    %v1330 = vpop.f32.mrf.mxu0
    %v1331 = vadd.f32 %v1290, %v1330
    %v1332 = vpop.f32.mrf.mxu0
    %v1333 = vpop.f32.mrf.mxu0
    %1334 = vdwg.mxu0
    %1335 = vmatprep.subr.bf16.mxu0 %v503
    %1336 = vmatpush1.bf16.msra.mxu0 %v502
    %1337 = vmatprep.subr.bf16.mxu0 %v487
    %1338 = vmatpush1.bf16.msra.mxu0 %v486
    %1339 = vmatprep.subr.bf16.mxu0 %v471
    %1340 = vmatpush1.bf16.msra.mxu0 %v470
    %1341 = vmatprep.subr.bf16.mxu0 %v455
    %1342 = vmatpush1.bf16.msra.mxu0 %v454
    %1343 = vmatprep.subr.bf16.mxu0 %v439
    %1344 = vmatpush1.bf16.msra.mxu0 %v438
    %1345 = vmatprep.subr.bf16.mxu0 %v423
    %1346 = vmatpush1.bf16.msra.mxu0 %v422
    %1347 = vmatprep.subr.bf16.mxu0 %v407
    %1348 = vmatpush1.bf16.msra.mxu0 %v406
    %1349 = vmatprep.subr.bf16.mxu0 %v391
    %1350 = vmatpush1.bf16.msra.mxu0 %v390
    %1351 = vmatprep.subr.bf16.mxu0 %v631
    %1352 = vmatpush2.bf16.msra.mxu0 %v630
    %1353 = vmatprep.subr.bf16.mxu0 %v615
    %1354 = vmatpush2.bf16.msra.mxu0 %v614
    %1355 = vmatprep.subr.bf16.mxu0 %v599
    %1356 = vmatpush2.bf16.msra.mxu0 %v598
    %1357 = vmatprep.subr.bf16.mxu0 %v583
    %1358 = vmatpush2.bf16.msra.mxu0 %v582
    %1359 = vmatprep.subr.bf16.mxu0 %v567
    %1360 = vmatpush2.bf16.msra.mxu0 %v566
    %1361 = vmatprep.subr.bf16.mxu0 %v551
    %1362 = vmatpush2.bf16.msra.mxu0 %v550
    %1363 = vmatprep.subr.bf16.mxu0 %v535
    %1364 = vmatpush2.bf16.msra.mxu0 %v534
    %1365 = vmatprep.subr.bf16.mxu0 %v519
    %1366 = vmatpush2.bf16.msra.mxu0 %v518
    %1367 = vmatprep.mubr.bf16.mxu0 %v833
    %1368 = vmatmul.mubr.bf16.gmra.mxu0 %v832
    %v1369 = vpop.f32.mrf.mxu0
    %v1370 = vadd.f32 0.0, %v1369
    %v1371 = vpop.f32.mrf.mxu0
    %v1372 = vadd.f32 0.0, %v1371
    %v1373 = vpop.f32.mrf.mxu0
    %v1374 = vpop.f32.mrf.mxu0
    %1375 = vdwg.mxu0
    %1376 = vmatprep.subr.bf16.mxu0 %v759
    %1377 = vmatpush1.bf16.msra.mxu0 %v758
    %1378 = vmatprep.subr.bf16.mxu0 %v743
    %1379 = vmatpush1.bf16.msra.mxu0 %v742
    %1380 = vmatprep.subr.bf16.mxu0 %v727
    %1381 = vmatpush1.bf16.msra.mxu0 %v726
    %1382 = vmatprep.subr.bf16.mxu0 %v711
    %1383 = vmatpush1.bf16.msra.mxu0 %v710
    %1384 = vmatprep.subr.bf16.mxu0 %v695
    %1385 = vmatpush1.bf16.msra.mxu0 %v694
    %1386 = vmatprep.subr.bf16.mxu0 %v679
    %1387 = vmatpush1.bf16.msra.mxu0 %v678
    %1388 = vmatprep.subr.bf16.mxu0 %v663
    %1389 = vmatpush1.bf16.msra.mxu0 %v662
    %1390 = vmatprep.subr.bf16.mxu0 %v647
    %1391 = vmatpush1.bf16.msra.mxu0 %v646
    %1392 = vmatprep.subr.bf16.mxu0 0
    %1393 = vmatpush2.bf16.msra.mxu0 0
    %1394 = vmatprep.subr.bf16.mxu0 0
    %1395 = vmatpush2.bf16.msra.mxu0 0
    %1396 = vmatprep.subr.bf16.mxu0 0
    %1397 = vmatpush2.bf16.msra.mxu0 0
    %1398 = vmatprep.subr.bf16.mxu0 0
    %1399 = vmatpush2.bf16.msra.mxu0 0
    %1400 = vmatprep.subr.bf16.mxu0 %v823
    %1401 = vmatpush2.bf16.msra.mxu0 %v822
    %1402 = vmatprep.subr.bf16.mxu0 %v807
    %1403 = vmatpush2.bf16.msra.mxu0 %v806
    %1404 = vmatprep.subr.bf16.mxu0 %v791
    %1405 = vmatpush2.bf16.msra.mxu0 %v790
    %1406 = vmatprep.subr.bf16.mxu0 %v775
    %1407 = vmatpush2.bf16.msra.mxu0 %v774
    %1408 = vmatprep.mubr.bf16.mxu0 %v841
    %1409 = vmatmul.mubr.bf16.gmra.mxu0 %v834
    %v1410 = vpop.f32.mrf.mxu0
    %v1411 = vadd.f32 %v1370, %v1410
    %v1412 = vpop.f32.mrf.mxu0
    %v1413 = vadd.f32 %v1372, %v1412
    %v1414 = vpop.f32.mrf.mxu0
    %v1415 = vpop.f32.mrf.mxu0
    %1416 = vdwg.mxu0
    %1417 = vmatprep.subr.bf16.mxu0 %v505
    %1418 = vmatpush1.bf16.msra.mxu0 %v504
    %1419 = vmatprep.subr.bf16.mxu0 %v489
    %1420 = vmatpush1.bf16.msra.mxu0 %v488
    %1421 = vmatprep.subr.bf16.mxu0 %v473
    %1422 = vmatpush1.bf16.msra.mxu0 %v472
    %1423 = vmatprep.subr.bf16.mxu0 %v457
    %1424 = vmatpush1.bf16.msra.mxu0 %v456
    %1425 = vmatprep.subr.bf16.mxu0 %v441
    %1426 = vmatpush1.bf16.msra.mxu0 %v440
    %1427 = vmatprep.subr.bf16.mxu0 %v425
    %1428 = vmatpush1.bf16.msra.mxu0 %v424
    %1429 = vmatprep.subr.bf16.mxu0 %v409
    %1430 = vmatpush1.bf16.msra.mxu0 %v408
    %1431 = vmatprep.subr.bf16.mxu0 %v393
    %1432 = vmatpush1.bf16.msra.mxu0 %v392
    %1433 = vmatprep.subr.bf16.mxu0 %v633
    %1434 = vmatpush2.bf16.msra.mxu0 %v632
    %1435 = vmatprep.subr.bf16.mxu0 %v617
    %1436 = vmatpush2.bf16.msra.mxu0 %v616
    %1437 = vmatprep.subr.bf16.mxu0 %v601
    %1438 = vmatpush2.bf16.msra.mxu0 %v600
    %1439 = vmatprep.subr.bf16.mxu0 %v585
    %1440 = vmatpush2.bf16.msra.mxu0 %v584
    %1441 = vmatprep.subr.bf16.mxu0 %v569
    %1442 = vmatpush2.bf16.msra.mxu0 %v568
    %1443 = vmatprep.subr.bf16.mxu0 %v553
    %1444 = vmatpush2.bf16.msra.mxu0 %v552
    %1445 = vmatprep.subr.bf16.mxu0 %v537
    %1446 = vmatpush2.bf16.msra.mxu0 %v536
    %1447 = vmatprep.subr.bf16.mxu0 %v521
    %1448 = vmatpush2.bf16.msra.mxu0 %v520
    %1449 = vmatprep.mubr.bf16.mxu0 %v833
    %1450 = vmatmul.mubr.bf16.gmra.mxu0 %v832
    %v1451 = vpop.f32.mrf.mxu0
    %v1452 = vadd.f32 0.0, %v1451
    %v1453 = vpop.f32.mrf.mxu0
    %v1454 = vadd.f32 0.0, %v1453
    %v1455 = vpop.f32.mrf.mxu0
    %v1456 = vpop.f32.mrf.mxu0
    %1457 = vdwg.mxu0
    %1458 = vmatprep.subr.bf16.mxu0 %v761
    %1459 = vmatpush1.bf16.msra.mxu0 %v760
    %1460 = vmatprep.subr.bf16.mxu0 %v745
    %1461 = vmatpush1.bf16.msra.mxu0 %v744
    %1462 = vmatprep.subr.bf16.mxu0 %v729
    %1463 = vmatpush1.bf16.msra.mxu0 %v728
    %1464 = vmatprep.subr.bf16.mxu0 %v713
    %1465 = vmatpush1.bf16.msra.mxu0 %v712
    %1466 = vmatprep.subr.bf16.mxu0 %v697
    %1467 = vmatpush1.bf16.msra.mxu0 %v696
    %1468 = vmatprep.subr.bf16.mxu0 %v681
    %1469 = vmatpush1.bf16.msra.mxu0 %v680
    %1470 = vmatprep.subr.bf16.mxu0 %v665
    %1471 = vmatpush1.bf16.msra.mxu0 %v664
    %1472 = vmatprep.subr.bf16.mxu0 %v649
    %1473 = vmatpush1.bf16.msra.mxu0 %v648
    %1474 = vmatprep.subr.bf16.mxu0 0
    %1475 = vmatpush2.bf16.msra.mxu0 0
    %1476 = vmatprep.subr.bf16.mxu0 0
    %1477 = vmatpush2.bf16.msra.mxu0 0
    %1478 = vmatprep.subr.bf16.mxu0 0
    %1479 = vmatpush2.bf16.msra.mxu0 0
    %1480 = vmatprep.subr.bf16.mxu0 0
    %1481 = vmatpush2.bf16.msra.mxu0 0
    %1482 = vmatprep.subr.bf16.mxu0 %v825
    %1483 = vmatpush2.bf16.msra.mxu0 %v824
    %1484 = vmatprep.subr.bf16.mxu0 %v809
    %1485 = vmatpush2.bf16.msra.mxu0 %v808
    %1486 = vmatprep.subr.bf16.mxu0 %v793
    %1487 = vmatpush2.bf16.msra.mxu0 %v792
    %1488 = vmatprep.subr.bf16.mxu0 %v777
    %1489 = vmatpush2.bf16.msra.mxu0 %v776
    %1490 = vmatprep.mubr.bf16.mxu0 %v841
    %1491 = vmatmul.mubr.bf16.gmra.mxu0 %v834
    %v1492 = vpop.f32.mrf.mxu0
    %v1493 = vadd.f32 %v1452, %v1492
    %v1494 = vpop.f32.mrf.mxu0
    %v1495 = vadd.f32 %v1454, %v1494
    %v1496 = vpop.f32.mrf.mxu0
    %v1497 = vpop.f32.mrf.mxu0
    %1498 = vdwg.mxu0
    %v1499 = vld [vmem:[#allocation13] sm:$0xff]
    %v1500 = vld [vmem:[#allocation13 + $0x8] sm:$0xff]
    %v1503 = vlaneseq
    %v1504 = vshrl.u32 %v1503, 7
    %v1505 = vsub.s32 0, %v1504
    %v1506 = vrot.slane %v1499, %v1505
    %v1507 = vlaneseq
    %v1508 = vshrl.u32 %v1507, 7
    %v1509 = vsub.s32 1, %v1508
    %v1510 = vrot.slane %v1499, %v1509
    %v1511 = vlaneseq
    %v1512 = vshrl.u32 %v1511, 7
    %v1513 = vsub.s32 2, %v1512
    %v1514 = vrot.slane %v1499, %v1513
    %v1515 = vlaneseq
    %v1516 = vshrl.u32 %v1515, 7
    %v1517 = vsub.s32 3, %v1516
    %v1518 = vrot.slane %v1499, %v1517
    %v1519 = vlaneseq
    %v1520 = vshrl.u32 %v1519, 7
    %v1521 = vsub.s32 4, %v1520
    %v1522 = vrot.slane %v1499, %v1521
    %v1523 = vlaneseq
    %v1524 = vshrl.u32 %v1523, 7
    %v1525 = vsub.s32 5, %v1524
    %v1526 = vrot.slane %v1499, %v1525
    %v1527 = vlaneseq
    %v1528 = vshrl.u32 %v1527, 7
    %v1529 = vsub.s32 6, %v1528
    %v1530 = vrot.slane %v1499, %v1529
    %v1531 = vlaneseq
    %v1532 = vshrl.u32 %v1531, 7
    %v1533 = vsub.s32 7, %v1532
    %v1534 = vrot.slane %v1499, %v1533
    %v1535 = vlaneseq
    %v1536 = vshrl.u32 %v1535, 7
    %v1537 = vsub.s32 0, %v1536
    %v1538 = vrot.slane %v1500, %v1537
    %v1539 = vlaneseq
    %v1540 = vshrl.u32 %v1539, 7
    %v1541 = vsub.s32 1, %v1540
    %v1542 = vrot.slane %v1500, %v1541
    %v1543 = vlaneseq
    %v1544 = vshrl.u32 %v1543, 7
    %v1545 = vsub.s32 2, %v1544
    %v1546 = vrot.slane %v1500, %v1545
    %v1547 = vlaneseq
    %v1548 = vshrl.u32 %v1547, 7
    %v1549 = vsub.s32 3, %v1548
    %v1550 = vrot.slane %v1500, %v1549
    %v1551 = vlaneseq
    %v1552 = vshrl.u32 %v1551, 7
    %v1553 = vsub.s32 4, %v1552
    %v1554 = vrot.slane %v1500, %v1553
    %v1555 = vlaneseq
    %v1556 = vshrl.u32 %v1555, 7
    %v1557 = vsub.s32 5, %v1556
    %v1558 = vrot.slane %v1500, %v1557
    %v1559 = vlaneseq
    %v1560 = vshrl.u32 %v1559, 7
    %v1561 = vsub.s32 6, %v1560
    %v1562 = vrot.slane %v1500, %v1561
    %v1563 = vlaneseq
    %v1564 = vshrl.u32 %v1563, 7
    %v1565 = vsub.s32 7, %v1564
    %v1566 = vrot.slane %v1500, %v1565
    %v1583 = vmul.f32 %v919, %v1506
    %v1584 = vmul.f32 %v921, %v1510
    %v1585 = vmul.f32 %v1001, %v1514
    %v1586 = vmul.f32 %v1003, %v1518
    %v1587 = vmul.f32 %v1083, %v1522
    %v1588 = vmul.f32 %v1085, %v1526
    %v1589 = vmul.f32 %v1165, %v1530
    %v1590 = vmul.f32 %v1167, %v1534
    %v1591 = vmul.f32 %v1247, %v1538
    %v1592 = vmul.f32 %v1249, %v1542
    %v1593 = vmul.f32 %v1329, %v1546
    %v1594 = vmul.f32 %v1331, %v1550
    %v1595 = vmul.f32 %v1411, %v1554
    %v1596 = vmul.f32 %v1413, %v1558
    %v1597 = vmul.f32 %v1493, %v1562
    %v1598 = vmul.f32 %v1495, %v1566
    %v1599 = vld [vmem:[#allocation15] sm:$0xff]
    %v1600 = vld [vmem:[#allocation15 + $0x8] sm:$0xff]
    %v1603 = vlaneseq
    %v1604 = vshrl.u32 %v1603, 7
    %v1605 = vsub.s32 0, %v1604
    %v1606 = vrot.slane %v1599, %v1605
    %v1607 = vlaneseq
    %v1608 = vshrl.u32 %v1607, 7
    %v1609 = vsub.s32 1, %v1608
    %v1610 = vrot.slane %v1599, %v1609
    %v1611 = vlaneseq
    %v1612 = vshrl.u32 %v1611, 7
    %v1613 = vsub.s32 2, %v1612
    %v1614 = vrot.slane %v1599, %v1613
    %v1615 = vlaneseq
    %v1616 = vshrl.u32 %v1615, 7
    %v1617 = vsub.s32 3, %v1616
    %v1618 = vrot.slane %v1599, %v1617
    %v1619 = vlaneseq
    %v1620 = vshrl.u32 %v1619, 7
    %v1621 = vsub.s32 4, %v1620
    %v1622 = vrot.slane %v1599, %v1621
    %v1623 = vlaneseq
    %v1624 = vshrl.u32 %v1623, 7
    %v1625 = vsub.s32 5, %v1624
    %v1626 = vrot.slane %v1599, %v1625
    %v1627 = vlaneseq
    %v1628 = vshrl.u32 %v1627, 7
    %v1629 = vsub.s32 6, %v1628
    %v1630 = vrot.slane %v1599, %v1629
    %v1631 = vlaneseq
    %v1632 = vshrl.u32 %v1631, 7
    %v1633 = vsub.s32 7, %v1632
    %v1634 = vrot.slane %v1599, %v1633
    %v1635 = vlaneseq
    %v1636 = vshrl.u32 %v1635, 7
    %v1637 = vsub.s32 0, %v1636
    %v1638 = vrot.slane %v1600, %v1637
    %v1639 = vlaneseq
    %v1640 = vshrl.u32 %v1639, 7
    %v1641 = vsub.s32 1, %v1640
    %v1642 = vrot.slane %v1600, %v1641
    %v1643 = vlaneseq
    %v1644 = vshrl.u32 %v1643, 7
    %v1645 = vsub.s32 2, %v1644
    %v1646 = vrot.slane %v1600, %v1645
    %v1647 = vlaneseq
    %v1648 = vshrl.u32 %v1647, 7
    %v1649 = vsub.s32 3, %v1648
    %v1650 = vrot.slane %v1600, %v1649
    %v1651 = vlaneseq
    %v1652 = vshrl.u32 %v1651, 7
    %v1653 = vsub.s32 4, %v1652
    %v1654 = vrot.slane %v1600, %v1653
    %v1655 = vlaneseq
    %v1656 = vshrl.u32 %v1655, 7
    %v1657 = vsub.s32 5, %v1656
    %v1658 = vrot.slane %v1600, %v1657
    %v1659 = vlaneseq
    %v1660 = vshrl.u32 %v1659, 7
    %v1661 = vsub.s32 6, %v1660
    %v1662 = vrot.slane %v1600, %v1661
    %v1663 = vlaneseq
    %v1664 = vshrl.u32 %v1663, 7
    %v1665 = vsub.s32 7, %v1664
    %v1666 = vrot.slane %v1600, %v1665
    %v1683 = vadd.f32 %v1583, %v1606
    %v1684 = vadd.f32 %v1584, %v1610
    %v1685 = vadd.f32 %v1585, %v1614
    %v1686 = vadd.f32 %v1586, %v1618
    %v1687 = vadd.f32 %v1587, %v1622
    %v1688 = vadd.f32 %v1588, %v1626
    %v1689 = vadd.f32 %v1589, %v1630
    %v1690 = vadd.f32 %v1590, %v1634
    %v1691 = vadd.f32 %v1591, %v1638
    %v1692 = vadd.f32 %v1592, %v1642
    %v1693 = vadd.f32 %v1593, %v1646
    %v1694 = vadd.f32 %v1594, %v1650
    %v1695 = vadd.f32 %v1595, %v1654
    %v1696 = vadd.f32 %v1596, %v1658
    %v1697 = vadd.f32 %v1597, %v1662
    %v1698 = vadd.f32 %v1598, %v1666
    %vm1699 = vcmp.ge.f32.partialorder %v1683, 0.0
    %vm1700 = vcmp.ge.f32.partialorder %v1684, 0.0
    %vm1701 = vcmp.ge.f32.partialorder %v1685, 0.0
    %vm1702 = vcmp.ge.f32.partialorder %v1686, 0.0
    %vm1703 = vcmp.ge.f32.partialorder %v1687, 0.0
    %vm1704 = vcmp.ge.f32.partialorder %v1688, 0.0
    %vm1705 = vcmp.ge.f32.partialorder %v1689, 0.0
    %vm1706 = vcmp.ge.f32.partialorder %v1690, 0.0
    %vm1707 = vcmp.ge.f32.partialorder %v1691, 0.0
    %vm1708 = vcmp.ge.f32.partialorder %v1692, 0.0
    %vm1709 = vcmp.ge.f32.partialorder %v1693, 0.0
    %vm1710 = vcmp.ge.f32.partialorder %v1694, 0.0
    %vm1711 = vcmp.ge.f32.partialorder %v1695, 0.0
    %vm1712 = vcmp.ge.f32.partialorder %v1696, 0.0
    %vm1713 = vcmp.ge.f32.partialorder %v1697, 0.0
    %vm1714 = vcmp.ge.f32.partialorder %v1698, 0.0
    %v1715 = vmul.f32 %v1683, 0.01
    %v1716 = vmul.f32 %v1684, 0.01
    %v1717 = vmul.f32 %v1685, 0.01
    %v1718 = vmul.f32 %v1686, 0.01
    %v1719 = vmul.f32 %v1687, 0.01
    %v1720 = vmul.f32 %v1688, 0.01
    %v1721 = vmul.f32 %v1689, 0.01
    %v1722 = vmul.f32 %v1690, 0.01
    %v1723 = vmul.f32 %v1691, 0.01
    %v1724 = vmul.f32 %v1692, 0.01
    %v1725 = vmul.f32 %v1693, 0.01
    %v1726 = vmul.f32 %v1694, 0.01
    %v1727 = vmul.f32 %v1695, 0.01
    %v1728 = vmul.f32 %v1696, 0.01
    %v1729 = vmul.f32 %v1697, 0.01
    %v1730 = vmul.f32 %v1698, 0.01
    %v1731 = vsel %vm1699, %v1683, %v1715
    %v1732 = vsel %vm1700, %v1684, %v1716
    %v1733 = vsel %vm1701, %v1685, %v1717
    %v1734 = vsel %vm1702, %v1686, %v1718
    %v1735 = vsel %vm1703, %v1687, %v1719
    %v1736 = vsel %vm1704, %v1688, %v1720
    %v1737 = vsel %vm1705, %v1689, %v1721
    %v1738 = vsel %vm1706, %v1690, %v1722
    %v1739 = vsel %vm1707, %v1691, %v1723
    %v1740 = vsel %vm1708, %v1692, %v1724
    %v1741 = vsel %vm1709, %v1693, %v1725
    %v1742 = vsel %vm1710, %v1694, %v1726
    %v1743 = vsel %vm1711, %v1695, %v1727
    %v1744 = vsel %vm1712, %v1696, %v1728
    %v1745 = vsel %vm1713, %v1697, %v1729
    %v1746 = vsel %vm1714, %v1698, %v1730
    %v1747 = vpack.c.bf16 %v1731, %v1731
    %v1748 = vpack.c.bf16 %v1732, %v1732
    %v1749 = vpack.c.bf16 %v1733, %v1733
    %v1750 = vpack.c.bf16 %v1734, %v1734
    %v1751 = vpack.c.bf16 %v1735, %v1735
    %v1752 = vpack.c.bf16 %v1736, %v1736
    %v1753 = vpack.c.bf16 %v1737, %v1737
    %v1754 = vpack.c.bf16 %v1738, %v1738
    %v1755 = vpack.c.bf16 %v1739, %v1739
    %v1756 = vpack.c.bf16 %v1740, %v1740
    %v1757 = vpack.c.bf16 %v1741, %v1741
    %v1758 = vpack.c.bf16 %v1742, %v1742
    %v1759 = vpack.c.bf16 %v1743, %v1743
    %v1760 = vpack.c.bf16 %v1744, %v1744
    %v1761 = vpack.c.bf16 %v1745, %v1745
    %v1762 = vpack.c.bf16 %v1746, %v1746
    // Predicated region
    $region62: #{tpu_custom_call.1} parent=1 // pred_check
      %p1763 = pneg %p58
    $region63: #{tpu_custom_call.1} parent=1 // pred_check_branch
      %1765 = sbr.rel (%p1763) target = $region65
    $region64: #{tpu_custom_call.1} parent=1 // pred_region
      %s1766 = scalar_lea.sflag [#allocation9], 1
      %s1767 = smul.u32 2, 256
      %s1768 = smul.u32 %s1767, 8
      %s1769 = sshll.u32 %s1768, 4
      %1770 = dma.done %s1766, %s1769
    $region65: #{tpu_custom_call.1} parent=1 // pred_fallthru
      _
    %v1771 = vld [vmem:[#allocation3] sm:$0xff]
    %v1772 = vld [vmem:[#allocation3 + $0x8] sm:$0xff]
    %v1773 = vld [vmem:[#allocation3 + $0x10] sm:$0xff]
    %v1774 = vld [vmem:[#allocation3 + $0x18] sm:$0xff]
    %v1775 = vld [vmem:[#allocation3 + $0x20] sm:$0xff]
    %v1776 = vld [vmem:[#allocation3 + $0x28] sm:$0xff]
    %v1777 = vld [vmem:[#allocation3 + $0x30] sm:$0xff]
    %v1778 = vld [vmem:[#allocation3 + $0x38] sm:$0xff]
    %v1779 = vld [vmem:[#allocation3 + $0x40] sm:$0xff]
    %v1780 = vld [vmem:[#allocation3 + $0x48] sm:$0xff]
    %v1781 = vld [vmem:[#allocation3 + $0x50] sm:$0xff]
    %v1782 = vld [vmem:[#allocation3 + $0x58] sm:$0xff]
    %v1783 = vld [vmem:[#allocation3 + $0x60] sm:$0xff]
    %v1784 = vld [vmem:[#allocation3 + $0x68] sm:$0xff]
    %v1785 = vld [vmem:[#allocation3 + $0x70] sm:$0xff]
    %v1786 = vld [vmem:[#allocation3 + $0x78] sm:$0xff]
    %v1787 = vld [vmem:[#allocation3 + $0x80] sm:$0xff]
    %v1788 = vld [vmem:[#allocation3 + $0x88] sm:$0xff]
    %v1789 = vld [vmem:[#allocation3 + $0x90] sm:$0xff]
    %v1790 = vld [vmem:[#allocation3 + $0x98] sm:$0xff]
    %v1791 = vld [vmem:[#allocation3 + $0xa0] sm:$0xff]
    %v1792 = vld [vmem:[#allocation3 + $0xa8] sm:$0xff]
    %v1793 = vld [vmem:[#allocation3 + $0xb0] sm:$0xff]
    %v1794 = vld [vmem:[#allocation3 + $0xb8] sm:$0xff]
    %v1795 = vld [vmem:[#allocation3 + $0xc0] sm:$0xff]
    %v1796 = vld [vmem:[#allocation3 + $0xc8] sm:$0xff]
    %v1797 = vld [vmem:[#allocation3 + $0xd0] sm:$0xff]
    %v1798 = vld [vmem:[#allocation3 + $0xd8] sm:$0xff]
    %v1799 = vld [vmem:[#allocation3 + $0xe0] sm:$0xff]
    %v1800 = vld [vmem:[#allocation3 + $0xe8] sm:$0xff]
    %v1801 = vld [vmem:[#allocation3 + $0xf0] sm:$0xff]
    %v1802 = vld [vmem:[#allocation3 + $0xf8] sm:$0xff]
    %v1803 = vld [vmem:[#allocation3 + $0x100] sm:$0xff]
    %v1804 = vld [vmem:[#allocation3 + $0x108] sm:$0xff]
    %v1805 = vld [vmem:[#allocation3 + $0x110] sm:$0xff]
    %v1806 = vld [vmem:[#allocation3 + $0x118] sm:$0xff]
    %v1807 = vld [vmem:[#allocation3 + $0x120] sm:$0xff]
    %v1808 = vld [vmem:[#allocation3 + $0x128] sm:$0xff]
    %v1809 = vld [vmem:[#allocation3 + $0x130] sm:$0xff]
    %v1810 = vld [vmem:[#allocation3 + $0x138] sm:$0xff]
    %v1811 = vld [vmem:[#allocation3 + $0x140] sm:$0xff]
    %v1812 = vld [vmem:[#allocation3 + $0x148] sm:$0xff]
    %v1813 = vld [vmem:[#allocation3 + $0x150] sm:$0xff]
    %v1814 = vld [vmem:[#allocation3 + $0x158] sm:$0xff]
    %v1815 = vld [vmem:[#allocation3 + $0x160] sm:$0xff]
    %v1816 = vld [vmem:[#allocation3 + $0x168] sm:$0xff]
    %v1817 = vld [vmem:[#allocation3 + $0x170] sm:$0xff]
    %v1818 = vld [vmem:[#allocation3 + $0x178] sm:$0xff]
    %v1819 = vld [vmem:[#allocation3 + $0x180] sm:$0xff]
    %v1820 = vld [vmem:[#allocation3 + $0x188] sm:$0xff]
    %v1821 = vld [vmem:[#allocation3 + $0x190] sm:$0xff]
    %v1822 = vld [vmem:[#allocation3 + $0x198] sm:$0xff]
    %v1823 = vld [vmem:[#allocation3 + $0x1a0] sm:$0xff]
    %v1824 = vld [vmem:[#allocation3 + $0x1a8] sm:$0xff]
    %v1825 = vld [vmem:[#allocation3 + $0x1b0] sm:$0xff]
    %v1826 = vld [vmem:[#allocation3 + $0x1b8] sm:$0xff]
    %v1827 = vld [vmem:[#allocation3 + $0x1c0] sm:$0xff]
    %v1828 = vld [vmem:[#allocation3 + $0x1c8] sm:$0xff]
    %v1829 = vld [vmem:[#allocation3 + $0x1d0] sm:$0xff]
    %v1830 = vld [vmem:[#allocation3 + $0x1d8] sm:$0xff]
    %v1831 = vld [vmem:[#allocation3 + $0x1e0] sm:$0xff]
    %v1832 = vld [vmem:[#allocation3 + $0x1e8] sm:$0xff]
    %v1833 = vld [vmem:[#allocation3 + $0x1f0] sm:$0xff]
    %v1834 = vld [vmem:[#allocation3 + $0x1f8] sm:$0xff]
    %v1835 = vld [vmem:[#allocation3 + $0x200] sm:$0xff]
    %v1836 = vld [vmem:[#allocation3 + $0x208] sm:$0xff]
    %v1837 = vld [vmem:[#allocation3 + $0x210] sm:$0xff]
    %v1838 = vld [vmem:[#allocation3 + $0x218] sm:$0xff]
    %v1839 = vld [vmem:[#allocation3 + $0x220] sm:$0xff]
    %v1840 = vld [vmem:[#allocation3 + $0x228] sm:$0xff]
    %v1841 = vld [vmem:[#allocation3 + $0x230] sm:$0xff]
    %v1842 = vld [vmem:[#allocation3 + $0x238] sm:$0xff]
    %v1843 = vld [vmem:[#allocation3 + $0x240] sm:$0xff]
    %v1844 = vld [vmem:[#allocation3 + $0x248] sm:$0xff]
    %v1845 = vld [vmem:[#allocation3 + $0x250] sm:$0xff]
    %v1846 = vld [vmem:[#allocation3 + $0x258] sm:$0xff]
    %v1847 = vld [vmem:[#allocation3 + $0x260] sm:$0xff]
    %v1848 = vld [vmem:[#allocation3 + $0x268] sm:$0xff]
    %v1849 = vld [vmem:[#allocation3 + $0x270] sm:$0xff]
    %v1850 = vld [vmem:[#allocation3 + $0x278] sm:$0xff]
    %v1851 = vld [vmem:[#allocation3 + $0x280] sm:$0xff]
    %v1852 = vld [vmem:[#allocation3 + $0x288] sm:$0xff]
    %v1853 = vld [vmem:[#allocation3 + $0x290] sm:$0xff]
    %v1854 = vld [vmem:[#allocation3 + $0x298] sm:$0xff]
    %v1855 = vld [vmem:[#allocation3 + $0x2a0] sm:$0xff]
    %v1856 = vld [vmem:[#allocation3 + $0x2a8] sm:$0xff]
    %v1857 = vld [vmem:[#allocation3 + $0x2b0] sm:$0xff]
    %v1858 = vld [vmem:[#allocation3 + $0x2b8] sm:$0xff]
    %v1859 = vld [vmem:[#allocation3 + $0x2c0] sm:$0xff]
    %v1860 = vld [vmem:[#allocation3 + $0x2c8] sm:$0xff]
    %v1861 = vld [vmem:[#allocation3 + $0x2d0] sm:$0xff]
    %v1862 = vld [vmem:[#allocation3 + $0x2d8] sm:$0xff]
    %v1863 = vld [vmem:[#allocation3 + $0x2e0] sm:$0xff]
    %v1864 = vld [vmem:[#allocation3 + $0x2e8] sm:$0xff]
    %v1865 = vld [vmem:[#allocation3 + $0x2f0] sm:$0xff]
    %v1866 = vld [vmem:[#allocation3 + $0x2f8] sm:$0xff]
    %v1867 = vld [vmem:[#allocation3 + $0x300] sm:$0xff]
    %v1868 = vld [vmem:[#allocation3 + $0x308] sm:$0xff]
    %v1869 = vld [vmem:[#allocation3 + $0x310] sm:$0xff]
    %v1870 = vld [vmem:[#allocation3 + $0x318] sm:$0xff]
    %v1871 = vld [vmem:[#allocation3 + $0x320] sm:$0xff]
    %v1872 = vld [vmem:[#allocation3 + $0x328] sm:$0xff]
    %v1873 = vld [vmem:[#allocation3 + $0x330] sm:$0xff]
    %v1874 = vld [vmem:[#allocation3 + $0x338] sm:$0xff]
    %v1875 = vld [vmem:[#allocation3 + $0x340] sm:$0xff]
    %v1876 = vld [vmem:[#allocation3 + $0x348] sm:$0xff]
    %v1877 = vld [vmem:[#allocation3 + $0x350] sm:$0xff]
    %v1878 = vld [vmem:[#allocation3 + $0x358] sm:$0xff]
    %v1879 = vld [vmem:[#allocation3 + $0x360] sm:$0xff]
    %v1880 = vld [vmem:[#allocation3 + $0x368] sm:$0xff]
    %v1881 = vld [vmem:[#allocation3 + $0x370] sm:$0xff]
    %v1882 = vld [vmem:[#allocation3 + $0x378] sm:$0xff]
    %v1883 = vld [vmem:[#allocation3 + $0x380] sm:$0xff]
    %v1884 = vld [vmem:[#allocation3 + $0x388] sm:$0xff]
    %v1885 = vld [vmem:[#allocation3 + $0x390] sm:$0xff]
    %v1886 = vld [vmem:[#allocation3 + $0x398] sm:$0xff]
    %v1887 = vld [vmem:[#allocation3 + $0x3a0] sm:$0xff]
    %v1888 = vld [vmem:[#allocation3 + $0x3a8] sm:$0xff]
    %v1889 = vld [vmem:[#allocation3 + $0x3b0] sm:$0xff]
    %v1890 = vld [vmem:[#allocation3 + $0x3b8] sm:$0xff]
    %v1891 = vld [vmem:[#allocation3 + $0x3c0] sm:$0xff]
    %v1892 = vld [vmem:[#allocation3 + $0x3c8] sm:$0xff]
    %v1893 = vld [vmem:[#allocation3 + $0x3d0] sm:$0xff]
    %v1894 = vld [vmem:[#allocation3 + $0x3d8] sm:$0xff]
    %v1895 = vld [vmem:[#allocation3 + $0x3e0] sm:$0xff]
    %v1896 = vld [vmem:[#allocation3 + $0x3e8] sm:$0xff]
    %v1897 = vld [vmem:[#allocation3 + $0x3f0] sm:$0xff]
    %v1898 = vld [vmem:[#allocation3 + $0x3f8] sm:$0xff]
    %v1899 = vld [vmem:[#allocation3 + $0x400] sm:$0xff]
    %v1900 = vld [vmem:[#allocation3 + $0x408] sm:$0xff]
    %v1901 = vld [vmem:[#allocation3 + $0x410] sm:$0xff]
    %v1902 = vld [vmem:[#allocation3 + $0x418] sm:$0xff]
    %v1903 = vld [vmem:[#allocation3 + $0x420] sm:$0xff]
    %v1904 = vld [vmem:[#allocation3 + $0x428] sm:$0xff]
    %v1905 = vld [vmem:[#allocation3 + $0x430] sm:$0xff]
    %v1906 = vld [vmem:[#allocation3 + $0x438] sm:$0xff]
    %v1907 = vld [vmem:[#allocation3 + $0x440] sm:$0xff]
    %v1908 = vld [vmem:[#allocation3 + $0x448] sm:$0xff]
    %v1909 = vld [vmem:[#allocation3 + $0x450] sm:$0xff]
    %v1910 = vld [vmem:[#allocation3 + $0x458] sm:$0xff]
    %v1911 = vld [vmem:[#allocation3 + $0x460] sm:$0xff]
    %v1912 = vld [vmem:[#allocation3 + $0x468] sm:$0xff]
    %v1913 = vld [vmem:[#allocation3 + $0x470] sm:$0xff]
    %v1914 = vld [vmem:[#allocation3 + $0x478] sm:$0xff]
    %v1915 = vld [vmem:[#allocation3 + $0x480] sm:$0xff]
    %v1916 = vld [vmem:[#allocation3 + $0x488] sm:$0xff]
    %v1917 = vld [vmem:[#allocation3 + $0x490] sm:$0xff]
    %v1918 = vld [vmem:[#allocation3 + $0x498] sm:$0xff]
    %v1919 = vld [vmem:[#allocation3 + $0x4a0] sm:$0xff]
    %v1920 = vld [vmem:[#allocation3 + $0x4a8] sm:$0xff]
    %v1921 = vld [vmem:[#allocation3 + $0x4b0] sm:$0xff]
    %v1922 = vld [vmem:[#allocation3 + $0x4b8] sm:$0xff]
    %v1923 = vld [vmem:[#allocation3 + $0x4c0] sm:$0xff]
    %v1924 = vld [vmem:[#allocation3 + $0x4c8] sm:$0xff]
    %v1925 = vld [vmem:[#allocation3 + $0x4d0] sm:$0xff]
    %v1926 = vld [vmem:[#allocation3 + $0x4d8] sm:$0xff]
    %v1927 = vld [vmem:[#allocation3 + $0x4e0] sm:$0xff]
    %v1928 = vld [vmem:[#allocation3 + $0x4e8] sm:$0xff]
    %v1929 = vld [vmem:[#allocation3 + $0x4f0] sm:$0xff]
    %v1930 = vld [vmem:[#allocation3 + $0x4f8] sm:$0xff]
    %v1931 = vld [vmem:[#allocation3 + $0x500] sm:$0xff]
    %v1932 = vld [vmem:[#allocation3 + $0x508] sm:$0xff]
    %v1933 = vld [vmem:[#allocation3 + $0x510] sm:$0xff]
    %v1934 = vld [vmem:[#allocation3 + $0x518] sm:$0xff]
    %v1935 = vld [vmem:[#allocation3 + $0x520] sm:$0xff]
    %v1936 = vld [vmem:[#allocation3 + $0x528] sm:$0xff]
    %v1937 = vld [vmem:[#allocation3 + $0x530] sm:$0xff]
    %v1938 = vld [vmem:[#allocation3 + $0x538] sm:$0xff]
    %v1939 = vld [vmem:[#allocation3 + $0x540] sm:$0xff]
    %v1940 = vld [vmem:[#allocation3 + $0x548] sm:$0xff]
    %v1941 = vld [vmem:[#allocation3 + $0x550] sm:$0xff]
    %v1942 = vld [vmem:[#allocation3 + $0x558] sm:$0xff]
    %v1943 = vld [vmem:[#allocation3 + $0x560] sm:$0xff]
    %v1944 = vld [vmem:[#allocation3 + $0x568] sm:$0xff]
    %v1945 = vld [vmem:[#allocation3 + $0x570] sm:$0xff]
    %v1946 = vld [vmem:[#allocation3 + $0x578] sm:$0xff]
    %v1947 = vld [vmem:[#allocation3 + $0x580] sm:$0xff]
    %v1948 = vld [vmem:[#allocation3 + $0x588] sm:$0xff]
    %v1949 = vld [vmem:[#allocation3 + $0x590] sm:$0xff]
    %v1950 = vld [vmem:[#allocation3 + $0x598] sm:$0xff]
    %v1951 = vld [vmem:[#allocation3 + $0x5a0] sm:$0xff]
    %v1952 = vld [vmem:[#allocation3 + $0x5a8] sm:$0xff]
    %v1953 = vld [vmem:[#allocation3 + $0x5b0] sm:$0xff]
    %v1954 = vld [vmem:[#allocation3 + $0x5b8] sm:$0xff]
    %v1955 = vld [vmem:[#allocation3 + $0x5c0] sm:$0xff]
    %v1956 = vld [vmem:[#allocation3 + $0x5c8] sm:$0xff]
    %v1957 = vld [vmem:[#allocation3 + $0x5d0] sm:$0xff]
    %v1958 = vld [vmem:[#allocation3 + $0x5d8] sm:$0xff]
    %v1959 = vld [vmem:[#allocation3 + $0x5e0] sm:$0xff]
    %v1960 = vld [vmem:[#allocation3 + $0x5e8] sm:$0xff]
    %v1961 = vld [vmem:[#allocation3 + $0x5f0] sm:$0xff]
    %v1962 = vld [vmem:[#allocation3 + $0x5f8] sm:$0xff]
    %v1963 = vld [vmem:[#allocation3 + $0x600] sm:$0xff]
    %v1964 = vld [vmem:[#allocation3 + $0x608] sm:$0xff]
    %v1965 = vld [vmem:[#allocation3 + $0x610] sm:$0xff]
    %v1966 = vld [vmem:[#allocation3 + $0x618] sm:$0xff]
    %v1967 = vld [vmem:[#allocation3 + $0x620] sm:$0xff]
    %v1968 = vld [vmem:[#allocation3 + $0x628] sm:$0xff]
    %v1969 = vld [vmem:[#allocation3 + $0x630] sm:$0xff]
    %v1970 = vld [vmem:[#allocation3 + $0x638] sm:$0xff]
    %v1971 = vld [vmem:[#allocation3 + $0x640] sm:$0xff]
    %v1972 = vld [vmem:[#allocation3 + $0x648] sm:$0xff]
    %v1973 = vld [vmem:[#allocation3 + $0x650] sm:$0xff]
    %v1974 = vld [vmem:[#allocation3 + $0x658] sm:$0xff]
    %v1975 = vld [vmem:[#allocation3 + $0x660] sm:$0xff]
    %v1976 = vld [vmem:[#allocation3 + $0x668] sm:$0xff]
    %v1977 = vld [vmem:[#allocation3 + $0x670] sm:$0xff]
    %v1978 = vld [vmem:[#allocation3 + $0x678] sm:$0xff]
    %v1979 = vld [vmem:[#allocation3 + $0x680] sm:$0xff]
    %v1980 = vld [vmem:[#allocation3 + $0x688] sm:$0xff]
    %v1981 = vld [vmem:[#allocation3 + $0x690] sm:$0xff]
    %v1982 = vld [vmem:[#allocation3 + $0x698] sm:$0xff]
    %v1983 = vld [vmem:[#allocation3 + $0x6a0] sm:$0xff]
    %v1984 = vld [vmem:[#allocation3 + $0x6a8] sm:$0xff]
    %v1985 = vld [vmem:[#allocation3 + $0x6b0] sm:$0xff]
    %v1986 = vld [vmem:[#allocation3 + $0x6b8] sm:$0xff]
    %v1987 = vld [vmem:[#allocation3 + $0x6c0] sm:$0xff]
    %v1988 = vld [vmem:[#allocation3 + $0x6c8] sm:$0xff]
    %v1989 = vld [vmem:[#allocation3 + $0x6d0] sm:$0xff]
    %v1990 = vld [vmem:[#allocation3 + $0x6d8] sm:$0xff]
    %v1991 = vld [vmem:[#allocation3 + $0x6e0] sm:$0xff]
    %v1992 = vld [vmem:[#allocation3 + $0x6e8] sm:$0xff]
    %v1993 = vld [vmem:[#allocation3 + $0x6f0] sm:$0xff]
    %v1994 = vld [vmem:[#allocation3 + $0x6f8] sm:$0xff]
    %v1995 = vld [vmem:[#allocation3 + $0x700] sm:$0xff]
    %v1996 = vld [vmem:[#allocation3 + $0x708] sm:$0xff]
    %v1997 = vld [vmem:[#allocation3 + $0x710] sm:$0xff]
    %v1998 = vld [vmem:[#allocation3 + $0x718] sm:$0xff]
    %v1999 = vld [vmem:[#allocation3 + $0x720] sm:$0xff]
    %v2000 = vld [vmem:[#allocation3 + $0x728] sm:$0xff]
    %v2001 = vld [vmem:[#allocation3 + $0x730] sm:$0xff]
    %v2002 = vld [vmem:[#allocation3 + $0x738] sm:$0xff]
    %v2003 = vld [vmem:[#allocation3 + $0x740] sm:$0xff]
    %v2004 = vld [vmem:[#allocation3 + $0x748] sm:$0xff]
    %v2005 = vld [vmem:[#allocation3 + $0x750] sm:$0xff]
    %v2006 = vld [vmem:[#allocation3 + $0x758] sm:$0xff]
    %v2007 = vld [vmem:[#allocation3 + $0x760] sm:$0xff]
    %v2008 = vld [vmem:[#allocation3 + $0x768] sm:$0xff]
    %v2009 = vld [vmem:[#allocation3 + $0x770] sm:$0xff]
    %v2010 = vld [vmem:[#allocation3 + $0x778] sm:$0xff]
    %v2011 = vld [vmem:[#allocation3 + $0x780] sm:$0xff]
    %v2012 = vld [vmem:[#allocation3 + $0x788] sm:$0xff]
    %v2013 = vld [vmem:[#allocation3 + $0x790] sm:$0xff]
    %v2014 = vld [vmem:[#allocation3 + $0x798] sm:$0xff]
    %v2015 = vld [vmem:[#allocation3 + $0x7a0] sm:$0xff]
    %v2016 = vld [vmem:[#allocation3 + $0x7a8] sm:$0xff]
    %v2017 = vld [vmem:[#allocation3 + $0x7b0] sm:$0xff]
    %v2018 = vld [vmem:[#allocation3 + $0x7b8] sm:$0xff]
    %v2019 = vld [vmem:[#allocation3 + $0x7c0] sm:$0xff]
    %v2020 = vld [vmem:[#allocation3 + $0x7c8] sm:$0xff]
    %v2021 = vld [vmem:[#allocation3 + $0x7d0] sm:$0xff]
    %v2022 = vld [vmem:[#allocation3 + $0x7d8] sm:$0xff]
    %v2023 = vld [vmem:[#allocation3 + $0x7e0] sm:$0xff]
    %v2024 = vld [vmem:[#allocation3 + $0x7e8] sm:$0xff]
    %v2025 = vld [vmem:[#allocation3 + $0x7f0] sm:$0xff]
    %v2026 = vld [vmem:[#allocation3 + $0x7f8] sm:$0xff]
    %v2027 = vld [vmem:[#allocation3 + $0x800] sm:$0xff]
    %v2028 = vld [vmem:[#allocation3 + $0x808] sm:$0xff]
    %v2029 = vld [vmem:[#allocation3 + $0x810] sm:$0xff]
    %v2030 = vld [vmem:[#allocation3 + $0x818] sm:$0xff]
    %v2031 = vld [vmem:[#allocation3 + $0x820] sm:$0xff]
    %v2032 = vld [vmem:[#allocation3 + $0x828] sm:$0xff]
    %v2033 = vld [vmem:[#allocation3 + $0x830] sm:$0xff]
    %v2034 = vld [vmem:[#allocation3 + $0x838] sm:$0xff]
    %v2035 = vld [vmem:[#allocation3 + $0x840] sm:$0xff]
    %v2036 = vld [vmem:[#allocation3 + $0x848] sm:$0xff]
    %v2037 = vld [vmem:[#allocation3 + $0x850] sm:$0xff]
    %v2038 = vld [vmem:[#allocation3 + $0x858] sm:$0xff]
    %v2039 = vld [vmem:[#allocation3 + $0x860] sm:$0xff]
    %v2040 = vld [vmem:[#allocation3 + $0x868] sm:$0xff]
    %v2041 = vld [vmem:[#allocation3 + $0x870] sm:$0xff]
    %v2042 = vld [vmem:[#allocation3 + $0x878] sm:$0xff]
    %v2043 = vld [vmem:[#allocation3 + $0x880] sm:$0xff]
    %v2044 = vld [vmem:[#allocation3 + $0x888] sm:$0xff]
    %v2045 = vld [vmem:[#allocation3 + $0x890] sm:$0xff]
    %v2046 = vld [vmem:[#allocation3 + $0x898] sm:$0xff]
    %v2047 = vld [vmem:[#allocation3 + $0x8a0] sm:$0xff]
    %v2048 = vld [vmem:[#allocation3 + $0x8a8] sm:$0xff]
    %v2049 = vld [vmem:[#allocation3 + $0x8b0] sm:$0xff]
    %v2050 = vld [vmem:[#allocation3 + $0x8b8] sm:$0xff]
    %v2051 = vld [vmem:[#allocation3 + $0x8c0] sm:$0xff]
    %v2052 = vld [vmem:[#allocation3 + $0x8c8] sm:$0xff]
    %v2053 = vld [vmem:[#allocation3 + $0x8d0] sm:$0xff]
    %v2054 = vld [vmem:[#allocation3 + $0x8d8] sm:$0xff]
    %v2055 = vld [vmem:[#allocation3 + $0x8e0] sm:$0xff]
    %v2056 = vld [vmem:[#allocation3 + $0x8e8] sm:$0xff]
    %v2057 = vld [vmem:[#allocation3 + $0x8f0] sm:$0xff]
    %v2058 = vld [vmem:[#allocation3 + $0x8f8] sm:$0xff]
    %v2059 = vld [vmem:[#allocation3 + $0x900] sm:$0xff]
    %v2060 = vld [vmem:[#allocation3 + $0x908] sm:$0xff]
    %v2061 = vld [vmem:[#allocation3 + $0x910] sm:$0xff]
    %v2062 = vld [vmem:[#allocation3 + $0x918] sm:$0xff]
    %v2063 = vld [vmem:[#allocation3 + $0x920] sm:$0xff]
    %v2064 = vld [vmem:[#allocation3 + $0x928] sm:$0xff]
    %v2065 = vld [vmem:[#allocation3 + $0x930] sm:$0xff]
    %v2066 = vld [vmem:[#allocation3 + $0x938] sm:$0xff]
    %v2067 = vld [vmem:[#allocation3 + $0x940] sm:$0xff]
    %v2068 = vld [vmem:[#allocation3 + $0x948] sm:$0xff]
    %v2069 = vld [vmem:[#allocation3 + $0x950] sm:$0xff]
    %v2070 = vld [vmem:[#allocation3 + $0x958] sm:$0xff]
    %v2071 = vld [vmem:[#allocation3 + $0x960] sm:$0xff]
    %v2072 = vld [vmem:[#allocation3 + $0x968] sm:$0xff]
    %v2073 = vld [vmem:[#allocation3 + $0x970] sm:$0xff]
    %v2074 = vld [vmem:[#allocation3 + $0x978] sm:$0xff]
    %v2075 = vld [vmem:[#allocation3 + $0x980] sm:$0xff]
    %v2076 = vld [vmem:[#allocation3 + $0x988] sm:$0xff]
    %v2077 = vld [vmem:[#allocation3 + $0x990] sm:$0xff]
    %v2078 = vld [vmem:[#allocation3 + $0x998] sm:$0xff]
    %v2079 = vld [vmem:[#allocation3 + $0x9a0] sm:$0xff]
    %v2080 = vld [vmem:[#allocation3 + $0x9a8] sm:$0xff]
    %v2081 = vld [vmem:[#allocation3 + $0x9b0] sm:$0xff]
    %v2082 = vld [vmem:[#allocation3 + $0x9b8] sm:$0xff]
    %v2083 = vld [vmem:[#allocation3 + $0x9c0] sm:$0xff]
    %v2084 = vld [vmem:[#allocation3 + $0x9c8] sm:$0xff]
    %v2085 = vld [vmem:[#allocation3 + $0x9d0] sm:$0xff]
    %v2086 = vld [vmem:[#allocation3 + $0x9d8] sm:$0xff]
    %v2087 = vld [vmem:[#allocation3 + $0x9e0] sm:$0xff]
    %v2088 = vld [vmem:[#allocation3 + $0x9e8] sm:$0xff]
    %v2089 = vld [vmem:[#allocation3 + $0x9f0] sm:$0xff]
    %v2090 = vld [vmem:[#allocation3 + $0x9f8] sm:$0xff]
    %v2091 = vld [vmem:[#allocation3 + $0xa00] sm:$0xff]
    %v2092 = vld [vmem:[#allocation3 + $0xa08] sm:$0xff]
    %v2093 = vld [vmem:[#allocation3 + $0xa10] sm:$0xff]
    %v2094 = vld [vmem:[#allocation3 + $0xa18] sm:$0xff]
    %v2095 = vld [vmem:[#allocation3 + $0xa20] sm:$0xff]
    %v2096 = vld [vmem:[#allocation3 + $0xa28] sm:$0xff]
    %v2097 = vld [vmem:[#allocation3 + $0xa30] sm:$0xff]
    %v2098 = vld [vmem:[#allocation3 + $0xa38] sm:$0xff]
    %v2099 = vld [vmem:[#allocation3 + $0xa40] sm:$0xff]
    %v2100 = vld [vmem:[#allocation3 + $0xa48] sm:$0xff]
    %v2101 = vld [vmem:[#allocation3 + $0xa50] sm:$0xff]
    %v2102 = vld [vmem:[#allocation3 + $0xa58] sm:$0xff]
    %v2103 = vld [vmem:[#allocation3 + $0xa60] sm:$0xff]
    %v2104 = vld [vmem:[#allocation3 + $0xa68] sm:$0xff]
    %v2105 = vld [vmem:[#allocation3 + $0xa70] sm:$0xff]
    %v2106 = vld [vmem:[#allocation3 + $0xa78] sm:$0xff]
    %v2107 = vld [vmem:[#allocation3 + $0xa80] sm:$0xff]
    %v2108 = vld [vmem:[#allocation3 + $0xa88] sm:$0xff]
    %v2109 = vld [vmem:[#allocation3 + $0xa90] sm:$0xff]
    %v2110 = vld [vmem:[#allocation3 + $0xa98] sm:$0xff]
    %v2111 = vld [vmem:[#allocation3 + $0xaa0] sm:$0xff]
    %v2112 = vld [vmem:[#allocation3 + $0xaa8] sm:$0xff]
    %v2113 = vld [vmem:[#allocation3 + $0xab0] sm:$0xff]
    %v2114 = vld [vmem:[#allocation3 + $0xab8] sm:$0xff]
    %v2115 = vld [vmem:[#allocation3 + $0xac0] sm:$0xff]
    %v2116 = vld [vmem:[#allocation3 + $0xac8] sm:$0xff]
    %v2117 = vld [vmem:[#allocation3 + $0xad0] sm:$0xff]
    %v2118 = vld [vmem:[#allocation3 + $0xad8] sm:$0xff]
    %v2119 = vld [vmem:[#allocation3 + $0xae0] sm:$0xff]
    %v2120 = vld [vmem:[#allocation3 + $0xae8] sm:$0xff]
    %v2121 = vld [vmem:[#allocation3 + $0xaf0] sm:$0xff]
    %v2122 = vld [vmem:[#allocation3 + $0xaf8] sm:$0xff]
    %v2123 = vld [vmem:[#allocation3 + $0xb00] sm:$0xff]
    %v2124 = vld [vmem:[#allocation3 + $0xb08] sm:$0xff]
    %v2125 = vld [vmem:[#allocation3 + $0xb10] sm:$0xff]
    %v2126 = vld [vmem:[#allocation3 + $0xb18] sm:$0xff]
    %v2127 = vld [vmem:[#allocation3 + $0xb20] sm:$0xff]
    %v2128 = vld [vmem:[#allocation3 + $0xb28] sm:$0xff]
    %v2129 = vld [vmem:[#allocation3 + $0xb30] sm:$0xff]
    %v2130 = vld [vmem:[#allocation3 + $0xb38] sm:$0xff]
    %v2131 = vld [vmem:[#allocation3 + $0xb40] sm:$0xff]
    %v2132 = vld [vmem:[#allocation3 + $0xb48] sm:$0xff]
    %v2133 = vld [vmem:[#allocation3 + $0xb50] sm:$0xff]
    %v2134 = vld [vmem:[#allocation3 + $0xb58] sm:$0xff]
    %v2135 = vld [vmem:[#allocation3 + $0xb60] sm:$0xff]
    %v2136 = vld [vmem:[#allocation3 + $0xb68] sm:$0xff]
    %v2137 = vld [vmem:[#allocation3 + $0xb70] sm:$0xff]
    %v2138 = vld [vmem:[#allocation3 + $0xb78] sm:$0xff]
    %v2139 = vld [vmem:[#allocation3 + $0xb80] sm:$0xff]
    %v2140 = vld [vmem:[#allocation3 + $0xb88] sm:$0xff]
    %v2141 = vld [vmem:[#allocation3 + $0xb90] sm:$0xff]
    %v2142 = vld [vmem:[#allocation3 + $0xb98] sm:$0xff]
    %v2143 = vld [vmem:[#allocation3 + $0xba0] sm:$0xff]
    %v2144 = vld [vmem:[#allocation3 + $0xba8] sm:$0xff]
    %v2145 = vld [vmem:[#allocation3 + $0xbb0] sm:$0xff]
    %v2146 = vld [vmem:[#allocation3 + $0xbb8] sm:$0xff]
    %v2147 = vld [vmem:[#allocation3 + $0xbc0] sm:$0xff]
    %v2148 = vld [vmem:[#allocation3 + $0xbc8] sm:$0xff]
    %v2149 = vld [vmem:[#allocation3 + $0xbd0] sm:$0xff]
    %v2150 = vld [vmem:[#allocation3 + $0xbd8] sm:$0xff]
    %v2151 = vld [vmem:[#allocation3 + $0xbe0] sm:$0xff]
    %v2152 = vld [vmem:[#allocation3 + $0xbe8] sm:$0xff]
    %v2153 = vld [vmem:[#allocation3 + $0xbf0] sm:$0xff]
    %v2154 = vld [vmem:[#allocation3 + $0xbf8] sm:$0xff]
    %v2155 = vld [vmem:[#allocation3 + $0xc00] sm:$0xff]
    %v2156 = vld [vmem:[#allocation3 + $0xc08] sm:$0xff]
    %v2157 = vld [vmem:[#allocation3 + $0xc10] sm:$0xff]
    %v2158 = vld [vmem:[#allocation3 + $0xc18] sm:$0xff]
    %v2159 = vld [vmem:[#allocation3 + $0xc20] sm:$0xff]
    %v2160 = vld [vmem:[#allocation3 + $0xc28] sm:$0xff]
    %v2161 = vld [vmem:[#allocation3 + $0xc30] sm:$0xff]
    %v2162 = vld [vmem:[#allocation3 + $0xc38] sm:$0xff]
    %v2163 = vld [vmem:[#allocation3 + $0xc40] sm:$0xff]
    %v2164 = vld [vmem:[#allocation3 + $0xc48] sm:$0xff]
    %v2165 = vld [vmem:[#allocation3 + $0xc50] sm:$0xff]
    %v2166 = vld [vmem:[#allocation3 + $0xc58] sm:$0xff]
    %v2167 = vld [vmem:[#allocation3 + $0xc60] sm:$0xff]
    %v2168 = vld [vmem:[#allocation3 + $0xc68] sm:$0xff]
    %v2169 = vld [vmem:[#allocation3 + $0xc70] sm:$0xff]
    %v2170 = vld [vmem:[#allocation3 + $0xc78] sm:$0xff]
    %v2171 = vld [vmem:[#allocation3 + $0xc80] sm:$0xff]
    %v2172 = vld [vmem:[#allocation3 + $0xc88] sm:$0xff]
    %v2173 = vld [vmem:[#allocation3 + $0xc90] sm:$0xff]
    %v2174 = vld [vmem:[#allocation3 + $0xc98] sm:$0xff]
    %v2175 = vld [vmem:[#allocation3 + $0xca0] sm:$0xff]
    %v2176 = vld [vmem:[#allocation3 + $0xca8] sm:$0xff]
    %v2177 = vld [vmem:[#allocation3 + $0xcb0] sm:$0xff]
    %v2178 = vld [vmem:[#allocation3 + $0xcb8] sm:$0xff]
    %v2179 = vld [vmem:[#allocation3 + $0xcc0] sm:$0xff]
    %v2180 = vld [vmem:[#allocation3 + $0xcc8] sm:$0xff]
    %v2181 = vld [vmem:[#allocation3 + $0xcd0] sm:$0xff]
    %v2182 = vld [vmem:[#allocation3 + $0xcd8] sm:$0xff]
    %v2183 = vld [vmem:[#allocation3 + $0xce0] sm:$0xff]
    %v2184 = vld [vmem:[#allocation3 + $0xce8] sm:$0xff]
    %v2185 = vld [vmem:[#allocation3 + $0xcf0] sm:$0xff]
    %v2186 = vld [vmem:[#allocation3 + $0xcf8] sm:$0xff]
    %v2187 = vld [vmem:[#allocation3 + $0xd00] sm:$0xff]
    %v2188 = vld [vmem:[#allocation3 + $0xd08] sm:$0xff]
    %v2189 = vld [vmem:[#allocation3 + $0xd10] sm:$0xff]
    %v2190 = vld [vmem:[#allocation3 + $0xd18] sm:$0xff]
    %v2191 = vld [vmem:[#allocation3 + $0xd20] sm:$0xff]
    %v2192 = vld [vmem:[#allocation3 + $0xd28] sm:$0xff]
    %v2193 = vld [vmem:[#allocation3 + $0xd30] sm:$0xff]
    %v2194 = vld [vmem:[#allocation3 + $0xd38] sm:$0xff]
    %v2195 = vld [vmem:[#allocation3 + $0xd40] sm:$0xff]
    %v2196 = vld [vmem:[#allocation3 + $0xd48] sm:$0xff]
    %v2197 = vld [vmem:[#allocation3 + $0xd50] sm:$0xff]
    %v2198 = vld [vmem:[#allocation3 + $0xd58] sm:$0xff]
    %v2199 = vld [vmem:[#allocation3 + $0xd60] sm:$0xff]
    %v2200 = vld [vmem:[#allocation3 + $0xd68] sm:$0xff]
    %v2201 = vld [vmem:[#allocation3 + $0xd70] sm:$0xff]
    %v2202 = vld [vmem:[#allocation3 + $0xd78] sm:$0xff]
    %v2203 = vld [vmem:[#allocation3 + $0xd80] sm:$0xff]
    %v2204 = vld [vmem:[#allocation3 + $0xd88] sm:$0xff]
    %v2205 = vld [vmem:[#allocation3 + $0xd90] sm:$0xff]
    %v2206 = vld [vmem:[#allocation3 + $0xd98] sm:$0xff]
    %v2207 = vld [vmem:[#allocation3 + $0xda0] sm:$0xff]
    %v2208 = vld [vmem:[#allocation3 + $0xda8] sm:$0xff]
    %v2209 = vld [vmem:[#allocation3 + $0xdb0] sm:$0xff]
    %v2210 = vld [vmem:[#allocation3 + $0xdb8] sm:$0xff]
    %v2211 = vld [vmem:[#allocation3 + $0xdc0] sm:$0xff]
    %v2212 = vld [vmem:[#allocation3 + $0xdc8] sm:$0xff]
    %v2213 = vld [vmem:[#allocation3 + $0xdd0] sm:$0xff]
    %v2214 = vld [vmem:[#allocation3 + $0xdd8] sm:$0xff]
    %v2215 = vld [vmem:[#allocation3 + $0xde0] sm:$0xff]
    %v2216 = vld [vmem:[#allocation3 + $0xde8] sm:$0xff]
    %v2217 = vld [vmem:[#allocation3 + $0xdf0] sm:$0xff]
    %v2218 = vld [vmem:[#allocation3 + $0xdf8] sm:$0xff]
    %v2219 = vld [vmem:[#allocation3 + $0xe00] sm:$0xff]
    %v2220 = vld [vmem:[#allocation3 + $0xe08] sm:$0xff]
    %v2221 = vld [vmem:[#allocation3 + $0xe10] sm:$0xff]
    %v2222 = vld [vmem:[#allocation3 + $0xe18] sm:$0xff]
    %v2223 = vld [vmem:[#allocation3 + $0xe20] sm:$0xff]
    %v2224 = vld [vmem:[#allocation3 + $0xe28] sm:$0xff]
    %v2225 = vld [vmem:[#allocation3 + $0xe30] sm:$0xff]
    %v2226 = vld [vmem:[#allocation3 + $0xe38] sm:$0xff]
    %v2227 = vld [vmem:[#allocation3 + $0xe40] sm:$0xff]
    %v2228 = vld [vmem:[#allocation3 + $0xe48] sm:$0xff]
    %v2229 = vld [vmem:[#allocation3 + $0xe50] sm:$0xff]
    %v2230 = vld [vmem:[#allocation3 + $0xe58] sm:$0xff]
    %v2231 = vld [vmem:[#allocation3 + $0xe60] sm:$0xff]
    %v2232 = vld [vmem:[#allocation3 + $0xe68] sm:$0xff]
    %v2233 = vld [vmem:[#allocation3 + $0xe70] sm:$0xff]
    %v2234 = vld [vmem:[#allocation3 + $0xe78] sm:$0xff]
    %v2235 = vld [vmem:[#allocation3 + $0xe80] sm:$0xff]
    %v2236 = vld [vmem:[#allocation3 + $0xe88] sm:$0xff]
    %v2237 = vld [vmem:[#allocation3 + $0xe90] sm:$0xff]
    %v2238 = vld [vmem:[#allocation3 + $0xe98] sm:$0xff]
    %v2239 = vld [vmem:[#allocation3 + $0xea0] sm:$0xff]
    %v2240 = vld [vmem:[#allocation3 + $0xea8] sm:$0xff]
    %v2241 = vld [vmem:[#allocation3 + $0xeb0] sm:$0xff]
    %v2242 = vld [vmem:[#allocation3 + $0xeb8] sm:$0xff]
    %v2243 = vld [vmem:[#allocation3 + $0xec0] sm:$0xff]
    %v2244 = vld [vmem:[#allocation3 + $0xec8] sm:$0xff]
    %v2245 = vld [vmem:[#allocation3 + $0xed0] sm:$0xff]
    %v2246 = vld [vmem:[#allocation3 + $0xed8] sm:$0xff]
    %v2247 = vld [vmem:[#allocation3 + $0xee0] sm:$0xff]
    %v2248 = vld [vmem:[#allocation3 + $0xee8] sm:$0xff]
    %v2249 = vld [vmem:[#allocation3 + $0xef0] sm:$0xff]
    %v2250 = vld [vmem:[#allocation3 + $0xef8] sm:$0xff]
    %v2251 = vld [vmem:[#allocation3 + $0xf00] sm:$0xff]
    %v2252 = vld [vmem:[#allocation3 + $0xf08] sm:$0xff]
    %v2253 = vld [vmem:[#allocation3 + $0xf10] sm:$0xff]
    %v2254 = vld [vmem:[#allocation3 + $0xf18] sm:$0xff]
    %v2255 = vld [vmem:[#allocation3 + $0xf20] sm:$0xff]
    %v2256 = vld [vmem:[#allocation3 + $0xf28] sm:$0xff]
    %v2257 = vld [vmem:[#allocation3 + $0xf30] sm:$0xff]
    %v2258 = vld [vmem:[#allocation3 + $0xf38] sm:$0xff]
    %v2259 = vld [vmem:[#allocation3 + $0xf40] sm:$0xff]
    %v2260 = vld [vmem:[#allocation3 + $0xf48] sm:$0xff]
    %v2261 = vld [vmem:[#allocation3 + $0xf50] sm:$0xff]
    %v2262 = vld [vmem:[#allocation3 + $0xf58] sm:$0xff]
    %v2263 = vld [vmem:[#allocation3 + $0xf60] sm:$0xff]
    %v2264 = vld [vmem:[#allocation3 + $0xf68] sm:$0xff]
    %v2265 = vld [vmem:[#allocation3 + $0xf70] sm:$0xff]
    %v2266 = vld [vmem:[#allocation3 + $0xf78] sm:$0xff]
    %v2267 = vld [vmem:[#allocation3 + $0xf80] sm:$0xff]
    %v2268 = vld [vmem:[#allocation3 + $0xf88] sm:$0xff]
    %v2269 = vld [vmem:[#allocation3 + $0xf90] sm:$0xff]
    %v2270 = vld [vmem:[#allocation3 + $0xf98] sm:$0xff]
    %v2271 = vld [vmem:[#allocation3 + $0xfa0] sm:$0xff]
    %v2272 = vld [vmem:[#allocation3 + $0xfa8] sm:$0xff]
    %v2273 = vld [vmem:[#allocation3 + $0xfb0] sm:$0xff]
    %v2274 = vld [vmem:[#allocation3 + $0xfb8] sm:$0xff]
    %v2275 = vld [vmem:[#allocation3 + $0xfc0] sm:$0xff]
    %v2276 = vld [vmem:[#allocation3 + $0xfc8] sm:$0xff]
    %v2277 = vld [vmem:[#allocation3 + $0xfd0] sm:$0xff]
    %v2278 = vld [vmem:[#allocation3 + $0xfd8] sm:$0xff]
    %v2279 = vld [vmem:[#allocation3 + $0xfe0] sm:$0xff]
    %v2280 = vld [vmem:[#allocation3 + $0xfe8] sm:$0xff]
    %v2281 = vld [vmem:[#allocation3 + $0xff0] sm:$0xff]
    %v2282 = vld [vmem:[#allocation3 + $0xff8] sm:$0xff]
    %v2283 = vunpack.c.l.s8.bf16 %v1771
    %v2284 = vunpack.c.l.s8.bf16 %v1772
    %v2285 = vunpack.c.l.s8.bf16 %v1773
    %v2286 = vunpack.c.l.s8.bf16 %v1774
    %v2287 = vunpack.c.l.s8.bf16 %v1775
    %v2288 = vunpack.c.l.s8.bf16 %v1776
    %v2289 = vunpack.c.l.s8.bf16 %v1777
    %v2290 = vunpack.c.l.s8.bf16 %v1778
    %v2291 = vunpack.c.h.s8.bf16 %v1771
    %v2292 = vunpack.c.h.s8.bf16 %v1772
    %v2293 = vunpack.c.h.s8.bf16 %v1773
    %v2294 = vunpack.c.h.s8.bf16 %v1774
    %v2295 = vunpack.c.h.s8.bf16 %v1775
    %v2296 = vunpack.c.h.s8.bf16 %v1776
    %v2297 = vunpack.c.h.s8.bf16 %v1777
    %v2298 = vunpack.c.h.s8.bf16 %v1778
    %v2299 = vunpack.c.l.s8.bf16 %v1779
    %v2300 = vunpack.c.l.s8.bf16 %v1780
    %v2301 = vunpack.c.l.s8.bf16 %v1781
    %v2302 = vunpack.c.l.s8.bf16 %v1782
    %v2303 = vunpack.c.l.s8.bf16 %v1783
    %v2304 = vunpack.c.l.s8.bf16 %v1784
    %v2305 = vunpack.c.l.s8.bf16 %v1785
    %v2306 = vunpack.c.l.s8.bf16 %v1786
    %v2307 = vunpack.c.h.s8.bf16 %v1779
    %v2308 = vunpack.c.h.s8.bf16 %v1780
    %v2309 = vunpack.c.h.s8.bf16 %v1781
    %v2310 = vunpack.c.h.s8.bf16 %v1782
    %v2311 = vunpack.c.h.s8.bf16 %v1783
    %v2312 = vunpack.c.h.s8.bf16 %v1784
    %v2313 = vunpack.c.h.s8.bf16 %v1785
    %v2314 = vunpack.c.h.s8.bf16 %v1786
    %v2315 = vunpack.c.l.s8.bf16 %v1787
    %v2316 = vunpack.c.l.s8.bf16 %v1788
    %v2317 = vunpack.c.l.s8.bf16 %v1789
    %v2318 = vunpack.c.l.s8.bf16 %v1790
    %v2319 = vunpack.c.l.s8.bf16 %v1791
    %v2320 = vunpack.c.l.s8.bf16 %v1792
    %v2321 = vunpack.c.l.s8.bf16 %v1793
    %v2322 = vunpack.c.l.s8.bf16 %v1794
    %v2323 = vunpack.c.h.s8.bf16 %v1787
    %v2324 = vunpack.c.h.s8.bf16 %v1788
    %v2325 = vunpack.c.h.s8.bf16 %v1789
    %v2326 = vunpack.c.h.s8.bf16 %v1790
    %v2327 = vunpack.c.h.s8.bf16 %v1791
    %v2328 = vunpack.c.h.s8.bf16 %v1792
    %v2329 = vunpack.c.h.s8.bf16 %v1793
    %v2330 = vunpack.c.h.s8.bf16 %v1794
    %v2331 = vunpack.c.l.s8.bf16 %v1795
    %v2332 = vunpack.c.l.s8.bf16 %v1796
    %v2333 = vunpack.c.l.s8.bf16 %v1797
    %v2334 = vunpack.c.l.s8.bf16 %v1798
    %v2335 = vunpack.c.l.s8.bf16 %v1799
    %v2336 = vunpack.c.l.s8.bf16 %v1800
    %v2337 = vunpack.c.l.s8.bf16 %v1801
    %v2338 = vunpack.c.l.s8.bf16 %v1802
    %v2339 = vunpack.c.h.s8.bf16 %v1795
    %v2340 = vunpack.c.h.s8.bf16 %v1796
    %v2341 = vunpack.c.h.s8.bf16 %v1797
    %v2342 = vunpack.c.h.s8.bf16 %v1798
    %v2343 = vunpack.c.h.s8.bf16 %v1799
    %v2344 = vunpack.c.h.s8.bf16 %v1800
    %v2345 = vunpack.c.h.s8.bf16 %v1801
    %v2346 = vunpack.c.h.s8.bf16 %v1802
    %v2347 = vunpack.c.l.s8.bf16 %v1803
    %v2348 = vunpack.c.l.s8.bf16 %v1804
    %v2349 = vunpack.c.l.s8.bf16 %v1805
    %v2350 = vunpack.c.l.s8.bf16 %v1806
    %v2351 = vunpack.c.l.s8.bf16 %v1807
    %v2352 = vunpack.c.l.s8.bf16 %v1808
    %v2353 = vunpack.c.l.s8.bf16 %v1809
    %v2354 = vunpack.c.l.s8.bf16 %v1810
    %v2355 = vunpack.c.h.s8.bf16 %v1803
    %v2356 = vunpack.c.h.s8.bf16 %v1804
    %v2357 = vunpack.c.h.s8.bf16 %v1805
    %v2358 = vunpack.c.h.s8.bf16 %v1806
    %v2359 = vunpack.c.h.s8.bf16 %v1807
    %v2360 = vunpack.c.h.s8.bf16 %v1808
    %v2361 = vunpack.c.h.s8.bf16 %v1809
    %v2362 = vunpack.c.h.s8.bf16 %v1810
    %v2363 = vunpack.c.l.s8.bf16 %v1811
    %v2364 = vunpack.c.l.s8.bf16 %v1812
    %v2365 = vunpack.c.l.s8.bf16 %v1813
    %v2366 = vunpack.c.l.s8.bf16 %v1814
    %v2367 = vunpack.c.l.s8.bf16 %v1815
    %v2368 = vunpack.c.l.s8.bf16 %v1816
    %v2369 = vunpack.c.l.s8.bf16 %v1817
    %v2370 = vunpack.c.l.s8.bf16 %v1818
    %v2371 = vunpack.c.h.s8.bf16 %v1811
    %v2372 = vunpack.c.h.s8.bf16 %v1812
    %v2373 = vunpack.c.h.s8.bf16 %v1813
    %v2374 = vunpack.c.h.s8.bf16 %v1814
    %v2375 = vunpack.c.h.s8.bf16 %v1815
    %v2376 = vunpack.c.h.s8.bf16 %v1816
    %v2377 = vunpack.c.h.s8.bf16 %v1817
    %v2378 = vunpack.c.h.s8.bf16 %v1818
    %v2379 = vunpack.c.l.s8.bf16 %v1819
    %v2380 = vunpack.c.l.s8.bf16 %v1820
    %v2381 = vunpack.c.l.s8.bf16 %v1821
    %v2382 = vunpack.c.l.s8.bf16 %v1822
    %v2383 = vunpack.c.l.s8.bf16 %v1823
    %v2384 = vunpack.c.l.s8.bf16 %v1824
    %v2385 = vunpack.c.l.s8.bf16 %v1825
    %v2386 = vunpack.c.l.s8.bf16 %v1826
    %v2387 = vunpack.c.h.s8.bf16 %v1819
    %v2388 = vunpack.c.h.s8.bf16 %v1820
    %v2389 = vunpack.c.h.s8.bf16 %v1821
    %v2390 = vunpack.c.h.s8.bf16 %v1822
    %v2391 = vunpack.c.h.s8.bf16 %v1823
    %v2392 = vunpack.c.h.s8.bf16 %v1824
    %v2393 = vunpack.c.h.s8.bf16 %v1825
    %v2394 = vunpack.c.h.s8.bf16 %v1826
    %v2395 = vunpack.c.l.s8.bf16 %v1827
    %v2396 = vunpack.c.l.s8.bf16 %v1828
    %v2397 = vunpack.c.l.s8.bf16 %v1829
    %v2398 = vunpack.c.l.s8.bf16 %v1830
    %v2399 = vunpack.c.l.s8.bf16 %v1831
    %v2400 = vunpack.c.l.s8.bf16 %v1832
    %v2401 = vunpack.c.l.s8.bf16 %v1833
    %v2402 = vunpack.c.l.s8.bf16 %v1834
    %v2403 = vunpack.c.h.s8.bf16 %v1827
    %v2404 = vunpack.c.h.s8.bf16 %v1828
    %v2405 = vunpack.c.h.s8.bf16 %v1829
    %v2406 = vunpack.c.h.s8.bf16 %v1830
    %v2407 = vunpack.c.h.s8.bf16 %v1831
    %v2408 = vunpack.c.h.s8.bf16 %v1832
    %v2409 = vunpack.c.h.s8.bf16 %v1833
    %v2410 = vunpack.c.h.s8.bf16 %v1834
    %v2411 = vunpack.c.l.s8.bf16 %v1835
    %v2412 = vunpack.c.l.s8.bf16 %v1836
    %v2413 = vunpack.c.l.s8.bf16 %v1837
    %v2414 = vunpack.c.l.s8.bf16 %v1838
    %v2415 = vunpack.c.l.s8.bf16 %v1839
    %v2416 = vunpack.c.l.s8.bf16 %v1840
    %v2417 = vunpack.c.l.s8.bf16 %v1841
    %v2418 = vunpack.c.l.s8.bf16 %v1842
    %v2419 = vunpack.c.h.s8.bf16 %v1835
    %v2420 = vunpack.c.h.s8.bf16 %v1836
    %v2421 = vunpack.c.h.s8.bf16 %v1837
    %v2422 = vunpack.c.h.s8.bf16 %v1838
    %v2423 = vunpack.c.h.s8.bf16 %v1839
    %v2424 = vunpack.c.h.s8.bf16 %v1840
    %v2425 = vunpack.c.h.s8.bf16 %v1841
    %v2426 = vunpack.c.h.s8.bf16 %v1842
    %v2427 = vunpack.c.l.s8.bf16 %v1843
    %v2428 = vunpack.c.l.s8.bf16 %v1844
    %v2429 = vunpack.c.l.s8.bf16 %v1845
    %v2430 = vunpack.c.l.s8.bf16 %v1846
    %v2431 = vunpack.c.l.s8.bf16 %v1847
    %v2432 = vunpack.c.l.s8.bf16 %v1848
    %v2433 = vunpack.c.l.s8.bf16 %v1849
    %v2434 = vunpack.c.l.s8.bf16 %v1850
    %v2435 = vunpack.c.h.s8.bf16 %v1843
    %v2436 = vunpack.c.h.s8.bf16 %v1844
    %v2437 = vunpack.c.h.s8.bf16 %v1845
    %v2438 = vunpack.c.h.s8.bf16 %v1846
    %v2439 = vunpack.c.h.s8.bf16 %v1847
    %v2440 = vunpack.c.h.s8.bf16 %v1848
    %v2441 = vunpack.c.h.s8.bf16 %v1849
    %v2442 = vunpack.c.h.s8.bf16 %v1850
    %v2443 = vunpack.c.l.s8.bf16 %v1851
    %v2444 = vunpack.c.l.s8.bf16 %v1852
    %v2445 = vunpack.c.l.s8.bf16 %v1853
    %v2446 = vunpack.c.l.s8.bf16 %v1854
    %v2447 = vunpack.c.l.s8.bf16 %v1855
    %v2448 = vunpack.c.l.s8.bf16 %v1856
    %v2449 = vunpack.c.l.s8.bf16 %v1857
    %v2450 = vunpack.c.l.s8.bf16 %v1858
    %v2451 = vunpack.c.h.s8.bf16 %v1851
    %v2452 = vunpack.c.h.s8.bf16 %v1852
    %v2453 = vunpack.c.h.s8.bf16 %v1853
    %v2454 = vunpack.c.h.s8.bf16 %v1854
    %v2455 = vunpack.c.h.s8.bf16 %v1855
    %v2456 = vunpack.c.h.s8.bf16 %v1856
    %v2457 = vunpack.c.h.s8.bf16 %v1857
    %v2458 = vunpack.c.h.s8.bf16 %v1858
    %v2459 = vunpack.c.l.s8.bf16 %v1859
    %v2460 = vunpack.c.l.s8.bf16 %v1860
    %v2461 = vunpack.c.l.s8.bf16 %v1861
    %v2462 = vunpack.c.l.s8.bf16 %v1862
    %v2463 = vunpack.c.l.s8.bf16 %v1863
    %v2464 = vunpack.c.l.s8.bf16 %v1864
    %v2465 = vunpack.c.l.s8.bf16 %v1865
    %v2466 = vunpack.c.l.s8.bf16 %v1866
    %v2467 = vunpack.c.h.s8.bf16 %v1859
    %v2468 = vunpack.c.h.s8.bf16 %v1860
    %v2469 = vunpack.c.h.s8.bf16 %v1861
    %v2470 = vunpack.c.h.s8.bf16 %v1862
    %v2471 = vunpack.c.h.s8.bf16 %v1863
    %v2472 = vunpack.c.h.s8.bf16 %v1864
    %v2473 = vunpack.c.h.s8.bf16 %v1865
    %v2474 = vunpack.c.h.s8.bf16 %v1866
    %v2475 = vunpack.c.l.s8.bf16 %v1867
    %v2476 = vunpack.c.l.s8.bf16 %v1868
    %v2477 = vunpack.c.l.s8.bf16 %v1869
    %v2478 = vunpack.c.l.s8.bf16 %v1870
    %v2479 = vunpack.c.l.s8.bf16 %v1871
    %v2480 = vunpack.c.l.s8.bf16 %v1872
    %v2481 = vunpack.c.l.s8.bf16 %v1873
    %v2482 = vunpack.c.l.s8.bf16 %v1874
    %v2483 = vunpack.c.h.s8.bf16 %v1867
    %v2484 = vunpack.c.h.s8.bf16 %v1868
    %v2485 = vunpack.c.h.s8.bf16 %v1869
    %v2486 = vunpack.c.h.s8.bf16 %v1870
    %v2487 = vunpack.c.h.s8.bf16 %v1871
    %v2488 = vunpack.c.h.s8.bf16 %v1872
    %v2489 = vunpack.c.h.s8.bf16 %v1873
    %v2490 = vunpack.c.h.s8.bf16 %v1874
    %v2491 = vunpack.c.l.s8.bf16 %v1875
    %v2492 = vunpack.c.l.s8.bf16 %v1876
    %v2493 = vunpack.c.l.s8.bf16 %v1877
    %v2494 = vunpack.c.l.s8.bf16 %v1878
    %v2495 = vunpack.c.l.s8.bf16 %v1879
    %v2496 = vunpack.c.l.s8.bf16 %v1880
    %v2497 = vunpack.c.l.s8.bf16 %v1881
    %v2498 = vunpack.c.l.s8.bf16 %v1882
    %v2499 = vunpack.c.h.s8.bf16 %v1875
    %v2500 = vunpack.c.h.s8.bf16 %v1876
    %v2501 = vunpack.c.h.s8.bf16 %v1877
    %v2502 = vunpack.c.h.s8.bf16 %v1878
    %v2503 = vunpack.c.h.s8.bf16 %v1879
    %v2504 = vunpack.c.h.s8.bf16 %v1880
    %v2505 = vunpack.c.h.s8.bf16 %v1881
    %v2506 = vunpack.c.h.s8.bf16 %v1882
    %v2507 = vunpack.c.l.s8.bf16 %v1883
    %v2508 = vunpack.c.l.s8.bf16 %v1884
    %v2509 = vunpack.c.l.s8.bf16 %v1885
    %v2510 = vunpack.c.l.s8.bf16 %v1886
    %v2511 = vunpack.c.l.s8.bf16 %v1887
    %v2512 = vunpack.c.l.s8.bf16 %v1888
    %v2513 = vunpack.c.l.s8.bf16 %v1889
    %v2514 = vunpack.c.l.s8.bf16 %v1890
    %v2515 = vunpack.c.h.s8.bf16 %v1883
    %v2516 = vunpack.c.h.s8.bf16 %v1884
    %v2517 = vunpack.c.h.s8.bf16 %v1885
    %v2518 = vunpack.c.h.s8.bf16 %v1886
    %v2519 = vunpack.c.h.s8.bf16 %v1887
    %v2520 = vunpack.c.h.s8.bf16 %v1888
    %v2521 = vunpack.c.h.s8.bf16 %v1889
    %v2522 = vunpack.c.h.s8.bf16 %v1890
    %v2523 = vunpack.c.l.s8.bf16 %v1891
    %v2524 = vunpack.c.l.s8.bf16 %v1892
    %v2525 = vunpack.c.l.s8.bf16 %v1893
    %v2526 = vunpack.c.l.s8.bf16 %v1894
    %v2527 = vunpack.c.l.s8.bf16 %v1895
    %v2528 = vunpack.c.l.s8.bf16 %v1896
    %v2529 = vunpack.c.l.s8.bf16 %v1897
    %v2530 = vunpack.c.l.s8.bf16 %v1898
    %v2531 = vunpack.c.h.s8.bf16 %v1891
    %v2532 = vunpack.c.h.s8.bf16 %v1892
    %v2533 = vunpack.c.h.s8.bf16 %v1893
    %v2534 = vunpack.c.h.s8.bf16 %v1894
    %v2535 = vunpack.c.h.s8.bf16 %v1895
    %v2536 = vunpack.c.h.s8.bf16 %v1896
    %v2537 = vunpack.c.h.s8.bf16 %v1897
    %v2538 = vunpack.c.h.s8.bf16 %v1898
    %v2539 = vunpack.c.l.s8.bf16 %v1899
    %v2540 = vunpack.c.l.s8.bf16 %v1900
    %v2541 = vunpack.c.l.s8.bf16 %v1901
    %v2542 = vunpack.c.l.s8.bf16 %v1902
    %v2543 = vunpack.c.l.s8.bf16 %v1903
    %v2544 = vunpack.c.l.s8.bf16 %v1904
    %v2545 = vunpack.c.l.s8.bf16 %v1905
    %v2546 = vunpack.c.l.s8.bf16 %v1906
    %v2547 = vunpack.c.h.s8.bf16 %v1899
    %v2548 = vunpack.c.h.s8.bf16 %v1900
    %v2549 = vunpack.c.h.s8.bf16 %v1901
    %v2550 = vunpack.c.h.s8.bf16 %v1902
    %v2551 = vunpack.c.h.s8.bf16 %v1903
    %v2552 = vunpack.c.h.s8.bf16 %v1904
    %v2553 = vunpack.c.h.s8.bf16 %v1905
    %v2554 = vunpack.c.h.s8.bf16 %v1906
    %v2555 = vunpack.c.l.s8.bf16 %v1907
    %v2556 = vunpack.c.l.s8.bf16 %v1908
    %v2557 = vunpack.c.l.s8.bf16 %v1909
    %v2558 = vunpack.c.l.s8.bf16 %v1910
    %v2559 = vunpack.c.l.s8.bf16 %v1911
    %v2560 = vunpack.c.l.s8.bf16 %v1912
    %v2561 = vunpack.c.l.s8.bf16 %v1913
    %v2562 = vunpack.c.l.s8.bf16 %v1914
    %v2563 = vunpack.c.h.s8.bf16 %v1907
    %v2564 = vunpack.c.h.s8.bf16 %v1908
    %v2565 = vunpack.c.h.s8.bf16 %v1909
    %v2566 = vunpack.c.h.s8.bf16 %v1910
    %v2567 = vunpack.c.h.s8.bf16 %v1911
    %v2568 = vunpack.c.h.s8.bf16 %v1912
    %v2569 = vunpack.c.h.s8.bf16 %v1913
    %v2570 = vunpack.c.h.s8.bf16 %v1914
    %v2571 = vunpack.c.l.s8.bf16 %v1915
    %v2572 = vunpack.c.l.s8.bf16 %v1916
    %v2573 = vunpack.c.l.s8.bf16 %v1917
    %v2574 = vunpack.c.l.s8.bf16 %v1918
    %v2575 = vunpack.c.l.s8.bf16 %v1919
    %v2576 = vunpack.c.l.s8.bf16 %v1920
    %v2577 = vunpack.c.l.s8.bf16 %v1921
    %v2578 = vunpack.c.l.s8.bf16 %v1922
    %v2579 = vunpack.c.h.s8.bf16 %v1915
    %v2580 = vunpack.c.h.s8.bf16 %v1916
    %v2581 = vunpack.c.h.s8.bf16 %v1917
    %v2582 = vunpack.c.h.s8.bf16 %v1918
    %v2583 = vunpack.c.h.s8.bf16 %v1919
    %v2584 = vunpack.c.h.s8.bf16 %v1920
    %v2585 = vunpack.c.h.s8.bf16 %v1921
    %v2586 = vunpack.c.h.s8.bf16 %v1922
    %v2587 = vunpack.c.l.s8.bf16 %v1923
    %v2588 = vunpack.c.l.s8.bf16 %v1924
    %v2589 = vunpack.c.l.s8.bf16 %v1925
    %v2590 = vunpack.c.l.s8.bf16 %v1926
    %v2591 = vunpack.c.l.s8.bf16 %v1927
    %v2592 = vunpack.c.l.s8.bf16 %v1928
    %v2593 = vunpack.c.l.s8.bf16 %v1929
    %v2594 = vunpack.c.l.s8.bf16 %v1930
    %v2595 = vunpack.c.h.s8.bf16 %v1923
    %v2596 = vunpack.c.h.s8.bf16 %v1924
    %v2597 = vunpack.c.h.s8.bf16 %v1925
    %v2598 = vunpack.c.h.s8.bf16 %v1926
    %v2599 = vunpack.c.h.s8.bf16 %v1927
    %v2600 = vunpack.c.h.s8.bf16 %v1928
    %v2601 = vunpack.c.h.s8.bf16 %v1929
    %v2602 = vunpack.c.h.s8.bf16 %v1930
    %v2603 = vunpack.c.l.s8.bf16 %v1931
    %v2604 = vunpack.c.l.s8.bf16 %v1932
    %v2605 = vunpack.c.l.s8.bf16 %v1933
    %v2606 = vunpack.c.l.s8.bf16 %v1934
    %v2607 = vunpack.c.l.s8.bf16 %v1935
    %v2608 = vunpack.c.l.s8.bf16 %v1936
    %v2609 = vunpack.c.l.s8.bf16 %v1937
    %v2610 = vunpack.c.l.s8.bf16 %v1938
    %v2611 = vunpack.c.h.s8.bf16 %v1931
    %v2612 = vunpack.c.h.s8.bf16 %v1932
    %v2613 = vunpack.c.h.s8.bf16 %v1933
    %v2614 = vunpack.c.h.s8.bf16 %v1934
    %v2615 = vunpack.c.h.s8.bf16 %v1935
    %v2616 = vunpack.c.h.s8.bf16 %v1936
    %v2617 = vunpack.c.h.s8.bf16 %v1937
    %v2618 = vunpack.c.h.s8.bf16 %v1938
    %v2619 = vunpack.c.l.s8.bf16 %v1939
    %v2620 = vunpack.c.l.s8.bf16 %v1940
    %v2621 = vunpack.c.l.s8.bf16 %v1941
    %v2622 = vunpack.c.l.s8.bf16 %v1942
    %v2623 = vunpack.c.l.s8.bf16 %v1943
    %v2624 = vunpack.c.l.s8.bf16 %v1944
    %v2625 = vunpack.c.l.s8.bf16 %v1945
    %v2626 = vunpack.c.l.s8.bf16 %v1946
    %v2627 = vunpack.c.h.s8.bf16 %v1939
    %v2628 = vunpack.c.h.s8.bf16 %v1940
    %v2629 = vunpack.c.h.s8.bf16 %v1941
    %v2630 = vunpack.c.h.s8.bf16 %v1942
    %v2631 = vunpack.c.h.s8.bf16 %v1943
    %v2632 = vunpack.c.h.s8.bf16 %v1944
    %v2633 = vunpack.c.h.s8.bf16 %v1945
    %v2634 = vunpack.c.h.s8.bf16 %v1946
    %v2635 = vunpack.c.l.s8.bf16 %v1947
    %v2636 = vunpack.c.l.s8.bf16 %v1948
    %v2637 = vunpack.c.l.s8.bf16 %v1949
    %v2638 = vunpack.c.l.s8.bf16 %v1950
    %v2639 = vunpack.c.l.s8.bf16 %v1951
    %v2640 = vunpack.c.l.s8.bf16 %v1952
    %v2641 = vunpack.c.l.s8.bf16 %v1953
    %v2642 = vunpack.c.l.s8.bf16 %v1954
    %v2643 = vunpack.c.h.s8.bf16 %v1947
    %v2644 = vunpack.c.h.s8.bf16 %v1948
    %v2645 = vunpack.c.h.s8.bf16 %v1949
    %v2646 = vunpack.c.h.s8.bf16 %v1950
    %v2647 = vunpack.c.h.s8.bf16 %v1951
    %v2648 = vunpack.c.h.s8.bf16 %v1952
    %v2649 = vunpack.c.h.s8.bf16 %v1953
    %v2650 = vunpack.c.h.s8.bf16 %v1954
    %v2651 = vunpack.c.l.s8.bf16 %v1955
    %v2652 = vunpack.c.l.s8.bf16 %v1956
    %v2653 = vunpack.c.l.s8.bf16 %v1957
    %v2654 = vunpack.c.l.s8.bf16 %v1958
    %v2655 = vunpack.c.l.s8.bf16 %v1959
    %v2656 = vunpack.c.l.s8.bf16 %v1960
    %v2657 = vunpack.c.l.s8.bf16 %v1961
    %v2658 = vunpack.c.l.s8.bf16 %v1962
    %v2659 = vunpack.c.h.s8.bf16 %v1955
    %v2660 = vunpack.c.h.s8.bf16 %v1956
    %v2661 = vunpack.c.h.s8.bf16 %v1957
    %v2662 = vunpack.c.h.s8.bf16 %v1958
    %v2663 = vunpack.c.h.s8.bf16 %v1959
    %v2664 = vunpack.c.h.s8.bf16 %v1960
    %v2665 = vunpack.c.h.s8.bf16 %v1961
    %v2666 = vunpack.c.h.s8.bf16 %v1962
    %v2667 = vunpack.c.l.s8.bf16 %v1963
    %v2668 = vunpack.c.l.s8.bf16 %v1964
    %v2669 = vunpack.c.l.s8.bf16 %v1965
    %v2670 = vunpack.c.l.s8.bf16 %v1966
    %v2671 = vunpack.c.l.s8.bf16 %v1967
    %v2672 = vunpack.c.l.s8.bf16 %v1968
    %v2673 = vunpack.c.l.s8.bf16 %v1969
    %v2674 = vunpack.c.l.s8.bf16 %v1970
    %v2675 = vunpack.c.h.s8.bf16 %v1963
    %v2676 = vunpack.c.h.s8.bf16 %v1964
    %v2677 = vunpack.c.h.s8.bf16 %v1965
    %v2678 = vunpack.c.h.s8.bf16 %v1966
    %v2679 = vunpack.c.h.s8.bf16 %v1967
    %v2680 = vunpack.c.h.s8.bf16 %v1968
    %v2681 = vunpack.c.h.s8.bf16 %v1969
    %v2682 = vunpack.c.h.s8.bf16 %v1970
    %v2683 = vunpack.c.l.s8.bf16 %v1971
    %v2684 = vunpack.c.l.s8.bf16 %v1972
    %v2685 = vunpack.c.l.s8.bf16 %v1973
    %v2686 = vunpack.c.l.s8.bf16 %v1974
    %v2687 = vunpack.c.l.s8.bf16 %v1975
    %v2688 = vunpack.c.l.s8.bf16 %v1976
    %v2689 = vunpack.c.l.s8.bf16 %v1977
    %v2690 = vunpack.c.l.s8.bf16 %v1978
    %v2691 = vunpack.c.h.s8.bf16 %v1971
    %v2692 = vunpack.c.h.s8.bf16 %v1972
    %v2693 = vunpack.c.h.s8.bf16 %v1973
    %v2694 = vunpack.c.h.s8.bf16 %v1974
    %v2695 = vunpack.c.h.s8.bf16 %v1975
    %v2696 = vunpack.c.h.s8.bf16 %v1976
    %v2697 = vunpack.c.h.s8.bf16 %v1977
    %v2698 = vunpack.c.h.s8.bf16 %v1978
    %v2699 = vunpack.c.l.s8.bf16 %v1979
    %v2700 = vunpack.c.l.s8.bf16 %v1980
    %v2701 = vunpack.c.l.s8.bf16 %v1981
    %v2702 = vunpack.c.l.s8.bf16 %v1982
    %v2703 = vunpack.c.l.s8.bf16 %v1983
    %v2704 = vunpack.c.l.s8.bf16 %v1984
    %v2705 = vunpack.c.l.s8.bf16 %v1985
    %v2706 = vunpack.c.l.s8.bf16 %v1986
    %v2707 = vunpack.c.h.s8.bf16 %v1979
    %v2708 = vunpack.c.h.s8.bf16 %v1980
    %v2709 = vunpack.c.h.s8.bf16 %v1981
    %v2710 = vunpack.c.h.s8.bf16 %v1982
    %v2711 = vunpack.c.h.s8.bf16 %v1983
    %v2712 = vunpack.c.h.s8.bf16 %v1984
    %v2713 = vunpack.c.h.s8.bf16 %v1985
    %v2714 = vunpack.c.h.s8.bf16 %v1986
    %v2715 = vunpack.c.l.s8.bf16 %v1987
    %v2716 = vunpack.c.l.s8.bf16 %v1988
    %v2717 = vunpack.c.l.s8.bf16 %v1989
    %v2718 = vunpack.c.l.s8.bf16 %v1990
    %v2719 = vunpack.c.l.s8.bf16 %v1991
    %v2720 = vunpack.c.l.s8.bf16 %v1992
    %v2721 = vunpack.c.l.s8.bf16 %v1993
    %v2722 = vunpack.c.l.s8.bf16 %v1994
    %v2723 = vunpack.c.h.s8.bf16 %v1987
    %v2724 = vunpack.c.h.s8.bf16 %v1988
    %v2725 = vunpack.c.h.s8.bf16 %v1989
    %v2726 = vunpack.c.h.s8.bf16 %v1990
    %v2727 = vunpack.c.h.s8.bf16 %v1991
    %v2728 = vunpack.c.h.s8.bf16 %v1992
    %v2729 = vunpack.c.h.s8.bf16 %v1993
    %v2730 = vunpack.c.h.s8.bf16 %v1994
    %v2731 = vunpack.c.l.s8.bf16 %v1995
    %v2732 = vunpack.c.l.s8.bf16 %v1996
    %v2733 = vunpack.c.l.s8.bf16 %v1997
    %v2734 = vunpack.c.l.s8.bf16 %v1998
    %v2735 = vunpack.c.l.s8.bf16 %v1999
    %v2736 = vunpack.c.l.s8.bf16 %v2000
    %v2737 = vunpack.c.l.s8.bf16 %v2001
    %v2738 = vunpack.c.l.s8.bf16 %v2002
    %v2739 = vunpack.c.h.s8.bf16 %v1995
    %v2740 = vunpack.c.h.s8.bf16 %v1996
    %v2741 = vunpack.c.h.s8.bf16 %v1997
    %v2742 = vunpack.c.h.s8.bf16 %v1998
    %v2743 = vunpack.c.h.s8.bf16 %v1999
    %v2744 = vunpack.c.h.s8.bf16 %v2000
    %v2745 = vunpack.c.h.s8.bf16 %v2001
    %v2746 = vunpack.c.h.s8.bf16 %v2002
    %v2747 = vunpack.c.l.s8.bf16 %v2003
    %v2748 = vunpack.c.l.s8.bf16 %v2004
    %v2749 = vunpack.c.l.s8.bf16 %v2005
    %v2750 = vunpack.c.l.s8.bf16 %v2006
    %v2751 = vunpack.c.l.s8.bf16 %v2007
    %v2752 = vunpack.c.l.s8.bf16 %v2008
    %v2753 = vunpack.c.l.s8.bf16 %v2009
    %v2754 = vunpack.c.l.s8.bf16 %v2010
    %v2755 = vunpack.c.h.s8.bf16 %v2003
    %v2756 = vunpack.c.h.s8.bf16 %v2004
    %v2757 = vunpack.c.h.s8.bf16 %v2005
    %v2758 = vunpack.c.h.s8.bf16 %v2006
    %v2759 = vunpack.c.h.s8.bf16 %v2007
    %v2760 = vunpack.c.h.s8.bf16 %v2008
    %v2761 = vunpack.c.h.s8.bf16 %v2009
    %v2762 = vunpack.c.h.s8.bf16 %v2010
    %v2763 = vunpack.c.l.s8.bf16 %v2011
    %v2764 = vunpack.c.l.s8.bf16 %v2012
    %v2765 = vunpack.c.l.s8.bf16 %v2013
    %v2766 = vunpack.c.l.s8.bf16 %v2014
    %v2767 = vunpack.c.l.s8.bf16 %v2015
    %v2768 = vunpack.c.l.s8.bf16 %v2016
    %v2769 = vunpack.c.l.s8.bf16 %v2017
    %v2770 = vunpack.c.l.s8.bf16 %v2018
    %v2771 = vunpack.c.h.s8.bf16 %v2011
    %v2772 = vunpack.c.h.s8.bf16 %v2012
    %v2773 = vunpack.c.h.s8.bf16 %v2013
    %v2774 = vunpack.c.h.s8.bf16 %v2014
    %v2775 = vunpack.c.h.s8.bf16 %v2015
    %v2776 = vunpack.c.h.s8.bf16 %v2016
    %v2777 = vunpack.c.h.s8.bf16 %v2017
    %v2778 = vunpack.c.h.s8.bf16 %v2018
    %v2779 = vunpack.c.l.s8.bf16 %v2019
    %v2780 = vunpack.c.l.s8.bf16 %v2020
    %v2781 = vunpack.c.l.s8.bf16 %v2021
    %v2782 = vunpack.c.l.s8.bf16 %v2022
    %v2783 = vunpack.c.l.s8.bf16 %v2023
    %v2784 = vunpack.c.l.s8.bf16 %v2024
    %v2785 = vunpack.c.l.s8.bf16 %v2025
    %v2786 = vunpack.c.l.s8.bf16 %v2026
    %v2787 = vunpack.c.h.s8.bf16 %v2019
    %v2788 = vunpack.c.h.s8.bf16 %v2020
    %v2789 = vunpack.c.h.s8.bf16 %v2021
    %v2790 = vunpack.c.h.s8.bf16 %v2022
    %v2791 = vunpack.c.h.s8.bf16 %v2023
    %v2792 = vunpack.c.h.s8.bf16 %v2024
    %v2793 = vunpack.c.h.s8.bf16 %v2025
    %v2794 = vunpack.c.h.s8.bf16 %v2026
    %v2795 = vunpack.c.l.s8.bf16 %v2027
    %v2796 = vunpack.c.l.s8.bf16 %v2028
    %v2797 = vunpack.c.l.s8.bf16 %v2029
    %v2798 = vunpack.c.l.s8.bf16 %v2030
    %v2799 = vunpack.c.l.s8.bf16 %v2031
    %v2800 = vunpack.c.l.s8.bf16 %v2032
    %v2801 = vunpack.c.l.s8.bf16 %v2033
    %v2802 = vunpack.c.l.s8.bf16 %v2034
    %v2803 = vunpack.c.h.s8.bf16 %v2027
    %v2804 = vunpack.c.h.s8.bf16 %v2028
    %v2805 = vunpack.c.h.s8.bf16 %v2029
    %v2806 = vunpack.c.h.s8.bf16 %v2030
    %v2807 = vunpack.c.h.s8.bf16 %v2031
    %v2808 = vunpack.c.h.s8.bf16 %v2032
    %v2809 = vunpack.c.h.s8.bf16 %v2033
    %v2810 = vunpack.c.h.s8.bf16 %v2034
    %v2811 = vunpack.c.l.s8.bf16 %v2035
    %v2812 = vunpack.c.l.s8.bf16 %v2036
    %v2813 = vunpack.c.l.s8.bf16 %v2037
    %v2814 = vunpack.c.l.s8.bf16 %v2038
    %v2815 = vunpack.c.l.s8.bf16 %v2039
    %v2816 = vunpack.c.l.s8.bf16 %v2040
    %v2817 = vunpack.c.l.s8.bf16 %v2041
    %v2818 = vunpack.c.l.s8.bf16 %v2042
    %v2819 = vunpack.c.h.s8.bf16 %v2035
    %v2820 = vunpack.c.h.s8.bf16 %v2036
    %v2821 = vunpack.c.h.s8.bf16 %v2037
    %v2822 = vunpack.c.h.s8.bf16 %v2038
    %v2823 = vunpack.c.h.s8.bf16 %v2039
    %v2824 = vunpack.c.h.s8.bf16 %v2040
    %v2825 = vunpack.c.h.s8.bf16 %v2041
    %v2826 = vunpack.c.h.s8.bf16 %v2042
    %v2827 = vunpack.c.l.s8.bf16 %v2043
    %v2828 = vunpack.c.l.s8.bf16 %v2044
    %v2829 = vunpack.c.l.s8.bf16 %v2045
    %v2830 = vunpack.c.l.s8.bf16 %v2046
    %v2831 = vunpack.c.l.s8.bf16 %v2047
    %v2832 = vunpack.c.l.s8.bf16 %v2048
    %v2833 = vunpack.c.l.s8.bf16 %v2049
    %v2834 = vunpack.c.l.s8.bf16 %v2050
    %v2835 = vunpack.c.h.s8.bf16 %v2043
    %v2836 = vunpack.c.h.s8.bf16 %v2044
    %v2837 = vunpack.c.h.s8.bf16 %v2045
    %v2838 = vunpack.c.h.s8.bf16 %v2046
    %v2839 = vunpack.c.h.s8.bf16 %v2047
    %v2840 = vunpack.c.h.s8.bf16 %v2048
    %v2841 = vunpack.c.h.s8.bf16 %v2049
    %v2842 = vunpack.c.h.s8.bf16 %v2050
    %v2843 = vunpack.c.l.s8.bf16 %v2051
    %v2844 = vunpack.c.l.s8.bf16 %v2052
    %v2845 = vunpack.c.l.s8.bf16 %v2053
    %v2846 = vunpack.c.l.s8.bf16 %v2054
    %v2847 = vunpack.c.l.s8.bf16 %v2055
    %v2848 = vunpack.c.l.s8.bf16 %v2056
    %v2849 = vunpack.c.l.s8.bf16 %v2057
    %v2850 = vunpack.c.l.s8.bf16 %v2058
    %v2851 = vunpack.c.h.s8.bf16 %v2051
    %v2852 = vunpack.c.h.s8.bf16 %v2052
    %v2853 = vunpack.c.h.s8.bf16 %v2053
    %v2854 = vunpack.c.h.s8.bf16 %v2054
    %v2855 = vunpack.c.h.s8.bf16 %v2055
    %v2856 = vunpack.c.h.s8.bf16 %v2056
    %v2857 = vunpack.c.h.s8.bf16 %v2057
    %v2858 = vunpack.c.h.s8.bf16 %v2058
    %v2859 = vunpack.c.l.s8.bf16 %v2059
    %v2860 = vunpack.c.l.s8.bf16 %v2060
    %v2861 = vunpack.c.l.s8.bf16 %v2061
    %v2862 = vunpack.c.l.s8.bf16 %v2062
    %v2863 = vunpack.c.l.s8.bf16 %v2063
    %v2864 = vunpack.c.l.s8.bf16 %v2064
    %v2865 = vunpack.c.l.s8.bf16 %v2065
    %v2866 = vunpack.c.l.s8.bf16 %v2066
    %v2867 = vunpack.c.h.s8.bf16 %v2059
    %v2868 = vunpack.c.h.s8.bf16 %v2060
    %v2869 = vunpack.c.h.s8.bf16 %v2061
    %v2870 = vunpack.c.h.s8.bf16 %v2062
    %v2871 = vunpack.c.h.s8.bf16 %v2063
    %v2872 = vunpack.c.h.s8.bf16 %v2064
    %v2873 = vunpack.c.h.s8.bf16 %v2065
    %v2874 = vunpack.c.h.s8.bf16 %v2066
    %v2875 = vunpack.c.l.s8.bf16 %v2067
    %v2876 = vunpack.c.l.s8.bf16 %v2068
    %v2877 = vunpack.c.l.s8.bf16 %v2069
    %v2878 = vunpack.c.l.s8.bf16 %v2070
    %v2879 = vunpack.c.l.s8.bf16 %v2071
    %v2880 = vunpack.c.l.s8.bf16 %v2072
    %v2881 = vunpack.c.l.s8.bf16 %v2073
    %v2882 = vunpack.c.l.s8.bf16 %v2074
    %v2883 = vunpack.c.h.s8.bf16 %v2067
    %v2884 = vunpack.c.h.s8.bf16 %v2068
    %v2885 = vunpack.c.h.s8.bf16 %v2069
    %v2886 = vunpack.c.h.s8.bf16 %v2070
    %v2887 = vunpack.c.h.s8.bf16 %v2071
    %v2888 = vunpack.c.h.s8.bf16 %v2072
    %v2889 = vunpack.c.h.s8.bf16 %v2073
    %v2890 = vunpack.c.h.s8.bf16 %v2074
    %v2891 = vunpack.c.l.s8.bf16 %v2075
    %v2892 = vunpack.c.l.s8.bf16 %v2076
    %v2893 = vunpack.c.l.s8.bf16 %v2077
    %v2894 = vunpack.c.l.s8.bf16 %v2078
    %v2895 = vunpack.c.l.s8.bf16 %v2079
    %v2896 = vunpack.c.l.s8.bf16 %v2080
    %v2897 = vunpack.c.l.s8.bf16 %v2081
    %v2898 = vunpack.c.l.s8.bf16 %v2082
    %v2899 = vunpack.c.h.s8.bf16 %v2075
    %v2900 = vunpack.c.h.s8.bf16 %v2076
    %v2901 = vunpack.c.h.s8.bf16 %v2077
    %v2902 = vunpack.c.h.s8.bf16 %v2078
    %v2903 = vunpack.c.h.s8.bf16 %v2079
    %v2904 = vunpack.c.h.s8.bf16 %v2080
    %v2905 = vunpack.c.h.s8.bf16 %v2081
    %v2906 = vunpack.c.h.s8.bf16 %v2082
    %v2907 = vunpack.c.l.s8.bf16 %v2083
    %v2908 = vunpack.c.l.s8.bf16 %v2084
    %v2909 = vunpack.c.l.s8.bf16 %v2085
    %v2910 = vunpack.c.l.s8.bf16 %v2086
    %v2911 = vunpack.c.l.s8.bf16 %v2087
    %v2912 = vunpack.c.l.s8.bf16 %v2088
    %v2913 = vunpack.c.l.s8.bf16 %v2089
    %v2914 = vunpack.c.l.s8.bf16 %v2090
    %v2915 = vunpack.c.h.s8.bf16 %v2083
    %v2916 = vunpack.c.h.s8.bf16 %v2084
    %v2917 = vunpack.c.h.s8.bf16 %v2085
    %v2918 = vunpack.c.h.s8.bf16 %v2086
    %v2919 = vunpack.c.h.s8.bf16 %v2087
    %v2920 = vunpack.c.h.s8.bf16 %v2088
    %v2921 = vunpack.c.h.s8.bf16 %v2089
    %v2922 = vunpack.c.h.s8.bf16 %v2090
    %v2923 = vunpack.c.l.s8.bf16 %v2091
    %v2924 = vunpack.c.l.s8.bf16 %v2092
    %v2925 = vunpack.c.l.s8.bf16 %v2093
    %v2926 = vunpack.c.l.s8.bf16 %v2094
    %v2927 = vunpack.c.l.s8.bf16 %v2095
    %v2928 = vunpack.c.l.s8.bf16 %v2096
    %v2929 = vunpack.c.l.s8.bf16 %v2097
    %v2930 = vunpack.c.l.s8.bf16 %v2098
    %v2931 = vunpack.c.h.s8.bf16 %v2091
    %v2932 = vunpack.c.h.s8.bf16 %v2092
    %v2933 = vunpack.c.h.s8.bf16 %v2093
    %v2934 = vunpack.c.h.s8.bf16 %v2094
    %v2935 = vunpack.c.h.s8.bf16 %v2095
    %v2936 = vunpack.c.h.s8.bf16 %v2096
    %v2937 = vunpack.c.h.s8.bf16 %v2097
    %v2938 = vunpack.c.h.s8.bf16 %v2098
    %v2939 = vunpack.c.l.s8.bf16 %v2099
    %v2940 = vunpack.c.l.s8.bf16 %v2100
    %v2941 = vunpack.c.l.s8.bf16 %v2101
    %v2942 = vunpack.c.l.s8.bf16 %v2102
    %v2943 = vunpack.c.l.s8.bf16 %v2103
    %v2944 = vunpack.c.l.s8.bf16 %v2104
    %v2945 = vunpack.c.l.s8.bf16 %v2105
    %v2946 = vunpack.c.l.s8.bf16 %v2106
    %v2947 = vunpack.c.h.s8.bf16 %v2099
    %v2948 = vunpack.c.h.s8.bf16 %v2100
    %v2949 = vunpack.c.h.s8.bf16 %v2101
    %v2950 = vunpack.c.h.s8.bf16 %v2102
    %v2951 = vunpack.c.h.s8.bf16 %v2103
    %v2952 = vunpack.c.h.s8.bf16 %v2104
    %v2953 = vunpack.c.h.s8.bf16 %v2105
    %v2954 = vunpack.c.h.s8.bf16 %v2106
    %v2955 = vunpack.c.l.s8.bf16 %v2107
    %v2956 = vunpack.c.l.s8.bf16 %v2108
    %v2957 = vunpack.c.l.s8.bf16 %v2109
    %v2958 = vunpack.c.l.s8.bf16 %v2110
    %v2959 = vunpack.c.l.s8.bf16 %v2111
    %v2960 = vunpack.c.l.s8.bf16 %v2112
    %v2961 = vunpack.c.l.s8.bf16 %v2113
    %v2962 = vunpack.c.l.s8.bf16 %v2114
    %v2963 = vunpack.c.h.s8.bf16 %v2107
    %v2964 = vunpack.c.h.s8.bf16 %v2108
    %v2965 = vunpack.c.h.s8.bf16 %v2109
    %v2966 = vunpack.c.h.s8.bf16 %v2110
    %v2967 = vunpack.c.h.s8.bf16 %v2111
    %v2968 = vunpack.c.h.s8.bf16 %v2112
    %v2969 = vunpack.c.h.s8.bf16 %v2113
    %v2970 = vunpack.c.h.s8.bf16 %v2114
    %v2971 = vunpack.c.l.s8.bf16 %v2115
    %v2972 = vunpack.c.l.s8.bf16 %v2116
    %v2973 = vunpack.c.l.s8.bf16 %v2117
    %v2974 = vunpack.c.l.s8.bf16 %v2118
    %v2975 = vunpack.c.l.s8.bf16 %v2119
    %v2976 = vunpack.c.l.s8.bf16 %v2120
    %v2977 = vunpack.c.l.s8.bf16 %v2121
    %v2978 = vunpack.c.l.s8.bf16 %v2122
    %v2979 = vunpack.c.h.s8.bf16 %v2115
    %v2980 = vunpack.c.h.s8.bf16 %v2116
    %v2981 = vunpack.c.h.s8.bf16 %v2117
    %v2982 = vunpack.c.h.s8.bf16 %v2118
    %v2983 = vunpack.c.h.s8.bf16 %v2119
    %v2984 = vunpack.c.h.s8.bf16 %v2120
    %v2985 = vunpack.c.h.s8.bf16 %v2121
    %v2986 = vunpack.c.h.s8.bf16 %v2122
    %v2987 = vunpack.c.l.s8.bf16 %v2123
    %v2988 = vunpack.c.l.s8.bf16 %v2124
    %v2989 = vunpack.c.l.s8.bf16 %v2125
    %v2990 = vunpack.c.l.s8.bf16 %v2126
    %v2991 = vunpack.c.l.s8.bf16 %v2127
    %v2992 = vunpack.c.l.s8.bf16 %v2128
    %v2993 = vunpack.c.l.s8.bf16 %v2129
    %v2994 = vunpack.c.l.s8.bf16 %v2130
    %v2995 = vunpack.c.h.s8.bf16 %v2123
    %v2996 = vunpack.c.h.s8.bf16 %v2124
    %v2997 = vunpack.c.h.s8.bf16 %v2125
    %v2998 = vunpack.c.h.s8.bf16 %v2126
    %v2999 = vunpack.c.h.s8.bf16 %v2127
    %v3000 = vunpack.c.h.s8.bf16 %v2128
    %v3001 = vunpack.c.h.s8.bf16 %v2129
    %v3002 = vunpack.c.h.s8.bf16 %v2130
    %v3003 = vunpack.c.l.s8.bf16 %v2131
    %v3004 = vunpack.c.l.s8.bf16 %v2132
    %v3005 = vunpack.c.l.s8.bf16 %v2133
    %v3006 = vunpack.c.l.s8.bf16 %v2134
    %v3007 = vunpack.c.l.s8.bf16 %v2135
    %v3008 = vunpack.c.l.s8.bf16 %v2136
    %v3009 = vunpack.c.l.s8.bf16 %v2137
    %v3010 = vunpack.c.l.s8.bf16 %v2138
    %v3011 = vunpack.c.h.s8.bf16 %v2131
    %v3012 = vunpack.c.h.s8.bf16 %v2132
    %v3013 = vunpack.c.h.s8.bf16 %v2133
    %v3014 = vunpack.c.h.s8.bf16 %v2134
    %v3015 = vunpack.c.h.s8.bf16 %v2135
    %v3016 = vunpack.c.h.s8.bf16 %v2136
    %v3017 = vunpack.c.h.s8.bf16 %v2137
    %v3018 = vunpack.c.h.s8.bf16 %v2138
    %v3019 = vunpack.c.l.s8.bf16 %v2139
    %v3020 = vunpack.c.l.s8.bf16 %v2140
    %v3021 = vunpack.c.l.s8.bf16 %v2141
    %v3022 = vunpack.c.l.s8.bf16 %v2142
    %v3023 = vunpack.c.l.s8.bf16 %v2143
    %v3024 = vunpack.c.l.s8.bf16 %v2144
    %v3025 = vunpack.c.l.s8.bf16 %v2145
    %v3026 = vunpack.c.l.s8.bf16 %v2146
    %v3027 = vunpack.c.h.s8.bf16 %v2139
    %v3028 = vunpack.c.h.s8.bf16 %v2140
    %v3029 = vunpack.c.h.s8.bf16 %v2141
    %v3030 = vunpack.c.h.s8.bf16 %v2142
    %v3031 = vunpack.c.h.s8.bf16 %v2143
    %v3032 = vunpack.c.h.s8.bf16 %v2144
    %v3033 = vunpack.c.h.s8.bf16 %v2145
    %v3034 = vunpack.c.h.s8.bf16 %v2146
    %v3035 = vunpack.c.l.s8.bf16 %v2147
    %v3036 = vunpack.c.l.s8.bf16 %v2148
    %v3037 = vunpack.c.l.s8.bf16 %v2149
    %v3038 = vunpack.c.l.s8.bf16 %v2150
    %v3039 = vunpack.c.l.s8.bf16 %v2151
    %v3040 = vunpack.c.l.s8.bf16 %v2152
    %v3041 = vunpack.c.l.s8.bf16 %v2153
    %v3042 = vunpack.c.l.s8.bf16 %v2154
    %v3043 = vunpack.c.h.s8.bf16 %v2147
    %v3044 = vunpack.c.h.s8.bf16 %v2148
    %v3045 = vunpack.c.h.s8.bf16 %v2149
    %v3046 = vunpack.c.h.s8.bf16 %v2150
    %v3047 = vunpack.c.h.s8.bf16 %v2151
    %v3048 = vunpack.c.h.s8.bf16 %v2152
    %v3049 = vunpack.c.h.s8.bf16 %v2153
    %v3050 = vunpack.c.h.s8.bf16 %v2154
    %v3051 = vunpack.c.l.s8.bf16 %v2155
    %v3052 = vunpack.c.l.s8.bf16 %v2156
    %v3053 = vunpack.c.l.s8.bf16 %v2157
    %v3054 = vunpack.c.l.s8.bf16 %v2158
    %v3055 = vunpack.c.l.s8.bf16 %v2159
    %v3056 = vunpack.c.l.s8.bf16 %v2160
    %v3057 = vunpack.c.l.s8.bf16 %v2161
    %v3058 = vunpack.c.l.s8.bf16 %v2162
    %v3059 = vunpack.c.h.s8.bf16 %v2155
    %v3060 = vunpack.c.h.s8.bf16 %v2156
    %v3061 = vunpack.c.h.s8.bf16 %v2157
    %v3062 = vunpack.c.h.s8.bf16 %v2158
    %v3063 = vunpack.c.h.s8.bf16 %v2159
    %v3064 = vunpack.c.h.s8.bf16 %v2160
    %v3065 = vunpack.c.h.s8.bf16 %v2161
    %v3066 = vunpack.c.h.s8.bf16 %v2162
    %v3067 = vunpack.c.l.s8.bf16 %v2163
    %v3068 = vunpack.c.l.s8.bf16 %v2164
    %v3069 = vunpack.c.l.s8.bf16 %v2165
    %v3070 = vunpack.c.l.s8.bf16 %v2166
    %v3071 = vunpack.c.l.s8.bf16 %v2167
    %v3072 = vunpack.c.l.s8.bf16 %v2168
    %v3073 = vunpack.c.l.s8.bf16 %v2169
    %v3074 = vunpack.c.l.s8.bf16 %v2170
    %v3075 = vunpack.c.h.s8.bf16 %v2163
    %v3076 = vunpack.c.h.s8.bf16 %v2164
    %v3077 = vunpack.c.h.s8.bf16 %v2165
    %v3078 = vunpack.c.h.s8.bf16 %v2166
    %v3079 = vunpack.c.h.s8.bf16 %v2167
    %v3080 = vunpack.c.h.s8.bf16 %v2168
    %v3081 = vunpack.c.h.s8.bf16 %v2169
    %v3082 = vunpack.c.h.s8.bf16 %v2170
    %v3083 = vunpack.c.l.s8.bf16 %v2171
    %v3084 = vunpack.c.l.s8.bf16 %v2172
    %v3085 = vunpack.c.l.s8.bf16 %v2173
    %v3086 = vunpack.c.l.s8.bf16 %v2174
    %v3087 = vunpack.c.l.s8.bf16 %v2175
    %v3088 = vunpack.c.l.s8.bf16 %v2176
    %v3089 = vunpack.c.l.s8.bf16 %v2177
    %v3090 = vunpack.c.l.s8.bf16 %v2178
    %v3091 = vunpack.c.h.s8.bf16 %v2171
    %v3092 = vunpack.c.h.s8.bf16 %v2172
    %v3093 = vunpack.c.h.s8.bf16 %v2173
    %v3094 = vunpack.c.h.s8.bf16 %v2174
    %v3095 = vunpack.c.h.s8.bf16 %v2175
    %v3096 = vunpack.c.h.s8.bf16 %v2176
    %v3097 = vunpack.c.h.s8.bf16 %v2177
    %v3098 = vunpack.c.h.s8.bf16 %v2178
    %v3099 = vunpack.c.l.s8.bf16 %v2179
    %v3100 = vunpack.c.l.s8.bf16 %v2180
    %v3101 = vunpack.c.l.s8.bf16 %v2181
    %v3102 = vunpack.c.l.s8.bf16 %v2182
    %v3103 = vunpack.c.l.s8.bf16 %v2183
    %v3104 = vunpack.c.l.s8.bf16 %v2184
    %v3105 = vunpack.c.l.s8.bf16 %v2185
    %v3106 = vunpack.c.l.s8.bf16 %v2186
    %v3107 = vunpack.c.h.s8.bf16 %v2179
    %v3108 = vunpack.c.h.s8.bf16 %v2180
    %v3109 = vunpack.c.h.s8.bf16 %v2181
    %v3110 = vunpack.c.h.s8.bf16 %v2182
    %v3111 = vunpack.c.h.s8.bf16 %v2183
    %v3112 = vunpack.c.h.s8.bf16 %v2184
    %v3113 = vunpack.c.h.s8.bf16 %v2185
    %v3114 = vunpack.c.h.s8.bf16 %v2186
    %v3115 = vunpack.c.l.s8.bf16 %v2187
    %v3116 = vunpack.c.l.s8.bf16 %v2188
    %v3117 = vunpack.c.l.s8.bf16 %v2189
    %v3118 = vunpack.c.l.s8.bf16 %v2190
    %v3119 = vunpack.c.l.s8.bf16 %v2191
    %v3120 = vunpack.c.l.s8.bf16 %v2192
    %v3121 = vunpack.c.l.s8.bf16 %v2193
    %v3122 = vunpack.c.l.s8.bf16 %v2194
    %v3123 = vunpack.c.h.s8.bf16 %v2187
    %v3124 = vunpack.c.h.s8.bf16 %v2188
    %v3125 = vunpack.c.h.s8.bf16 %v2189
    %v3126 = vunpack.c.h.s8.bf16 %v2190
    %v3127 = vunpack.c.h.s8.bf16 %v2191
    %v3128 = vunpack.c.h.s8.bf16 %v2192
    %v3129 = vunpack.c.h.s8.bf16 %v2193
    %v3130 = vunpack.c.h.s8.bf16 %v2194
    %v3131 = vunpack.c.l.s8.bf16 %v2195
    %v3132 = vunpack.c.l.s8.bf16 %v2196
    %v3133 = vunpack.c.l.s8.bf16 %v2197
    %v3134 = vunpack.c.l.s8.bf16 %v2198
    %v3135 = vunpack.c.l.s8.bf16 %v2199
    %v3136 = vunpack.c.l.s8.bf16 %v2200
    %v3137 = vunpack.c.l.s8.bf16 %v2201
    %v3138 = vunpack.c.l.s8.bf16 %v2202
    %v3139 = vunpack.c.h.s8.bf16 %v2195
    %v3140 = vunpack.c.h.s8.bf16 %v2196
    %v3141 = vunpack.c.h.s8.bf16 %v2197
    %v3142 = vunpack.c.h.s8.bf16 %v2198
    %v3143 = vunpack.c.h.s8.bf16 %v2199
    %v3144 = vunpack.c.h.s8.bf16 %v2200
    %v3145 = vunpack.c.h.s8.bf16 %v2201
    %v3146 = vunpack.c.h.s8.bf16 %v2202
    %v3147 = vunpack.c.l.s8.bf16 %v2203
    %v3148 = vunpack.c.l.s8.bf16 %v2204
    %v3149 = vunpack.c.l.s8.bf16 %v2205
    %v3150 = vunpack.c.l.s8.bf16 %v2206
    %v3151 = vunpack.c.l.s8.bf16 %v2207
    %v3152 = vunpack.c.l.s8.bf16 %v2208
    %v3153 = vunpack.c.l.s8.bf16 %v2209
    %v3154 = vunpack.c.l.s8.bf16 %v2210
    %v3155 = vunpack.c.h.s8.bf16 %v2203
    %v3156 = vunpack.c.h.s8.bf16 %v2204
    %v3157 = vunpack.c.h.s8.bf16 %v2205
    %v3158 = vunpack.c.h.s8.bf16 %v2206
    %v3159 = vunpack.c.h.s8.bf16 %v2207
    %v3160 = vunpack.c.h.s8.bf16 %v2208
    %v3161 = vunpack.c.h.s8.bf16 %v2209
    %v3162 = vunpack.c.h.s8.bf16 %v2210
    %v3163 = vunpack.c.l.s8.bf16 %v2211
    %v3164 = vunpack.c.l.s8.bf16 %v2212
    %v3165 = vunpack.c.l.s8.bf16 %v2213
    %v3166 = vunpack.c.l.s8.bf16 %v2214
    %v3167 = vunpack.c.l.s8.bf16 %v2215
    %v3168 = vunpack.c.l.s8.bf16 %v2216
    %v3169 = vunpack.c.l.s8.bf16 %v2217
    %v3170 = vunpack.c.l.s8.bf16 %v2218
    %v3171 = vunpack.c.h.s8.bf16 %v2211
    %v3172 = vunpack.c.h.s8.bf16 %v2212
    %v3173 = vunpack.c.h.s8.bf16 %v2213
    %v3174 = vunpack.c.h.s8.bf16 %v2214
    %v3175 = vunpack.c.h.s8.bf16 %v2215
    %v3176 = vunpack.c.h.s8.bf16 %v2216
    %v3177 = vunpack.c.h.s8.bf16 %v2217
    %v3178 = vunpack.c.h.s8.bf16 %v2218
    %v3179 = vunpack.c.l.s8.bf16 %v2219
    %v3180 = vunpack.c.l.s8.bf16 %v2220
    %v3181 = vunpack.c.l.s8.bf16 %v2221
    %v3182 = vunpack.c.l.s8.bf16 %v2222
    %v3183 = vunpack.c.l.s8.bf16 %v2223
    %v3184 = vunpack.c.l.s8.bf16 %v2224
    %v3185 = vunpack.c.l.s8.bf16 %v2225
    %v3186 = vunpack.c.l.s8.bf16 %v2226
    %v3187 = vunpack.c.h.s8.bf16 %v2219
    %v3188 = vunpack.c.h.s8.bf16 %v2220
    %v3189 = vunpack.c.h.s8.bf16 %v2221
    %v3190 = vunpack.c.h.s8.bf16 %v2222
    %v3191 = vunpack.c.h.s8.bf16 %v2223
    %v3192 = vunpack.c.h.s8.bf16 %v2224
    %v3193 = vunpack.c.h.s8.bf16 %v2225
    %v3194 = vunpack.c.h.s8.bf16 %v2226
    %v3195 = vunpack.c.l.s8.bf16 %v2227
    %v3196 = vunpack.c.l.s8.bf16 %v2228
    %v3197 = vunpack.c.l.s8.bf16 %v2229
    %v3198 = vunpack.c.l.s8.bf16 %v2230
    %v3199 = vunpack.c.l.s8.bf16 %v2231
    %v3200 = vunpack.c.l.s8.bf16 %v2232
    %v3201 = vunpack.c.l.s8.bf16 %v2233
    %v3202 = vunpack.c.l.s8.bf16 %v2234
    %v3203 = vunpack.c.h.s8.bf16 %v2227
    %v3204 = vunpack.c.h.s8.bf16 %v2228
    %v3205 = vunpack.c.h.s8.bf16 %v2229
    %v3206 = vunpack.c.h.s8.bf16 %v2230
    %v3207 = vunpack.c.h.s8.bf16 %v2231
    %v3208 = vunpack.c.h.s8.bf16 %v2232
    %v3209 = vunpack.c.h.s8.bf16 %v2233
    %v3210 = vunpack.c.h.s8.bf16 %v2234
    %v3211 = vunpack.c.l.s8.bf16 %v2235
    %v3212 = vunpack.c.l.s8.bf16 %v2236
    %v3213 = vunpack.c.l.s8.bf16 %v2237
    %v3214 = vunpack.c.l.s8.bf16 %v2238
    %v3215 = vunpack.c.l.s8.bf16 %v2239
    %v3216 = vunpack.c.l.s8.bf16 %v2240
    %v3217 = vunpack.c.l.s8.bf16 %v2241
    %v3218 = vunpack.c.l.s8.bf16 %v2242
    %v3219 = vunpack.c.h.s8.bf16 %v2235
    %v3220 = vunpack.c.h.s8.bf16 %v2236
    %v3221 = vunpack.c.h.s8.bf16 %v2237
    %v3222 = vunpack.c.h.s8.bf16 %v2238
    %v3223 = vunpack.c.h.s8.bf16 %v2239
    %v3224 = vunpack.c.h.s8.bf16 %v2240
    %v3225 = vunpack.c.h.s8.bf16 %v2241
    %v3226 = vunpack.c.h.s8.bf16 %v2242
    %v3227 = vunpack.c.l.s8.bf16 %v2243
    %v3228 = vunpack.c.l.s8.bf16 %v2244
    %v3229 = vunpack.c.l.s8.bf16 %v2245
    %v3230 = vunpack.c.l.s8.bf16 %v2246
    %v3231 = vunpack.c.l.s8.bf16 %v2247
    %v3232 = vunpack.c.l.s8.bf16 %v2248
    %v3233 = vunpack.c.l.s8.bf16 %v2249
    %v3234 = vunpack.c.l.s8.bf16 %v2250
    %v3235 = vunpack.c.h.s8.bf16 %v2243
    %v3236 = vunpack.c.h.s8.bf16 %v2244
    %v3237 = vunpack.c.h.s8.bf16 %v2245
    %v3238 = vunpack.c.h.s8.bf16 %v2246
    %v3239 = vunpack.c.h.s8.bf16 %v2247
    %v3240 = vunpack.c.h.s8.bf16 %v2248
    %v3241 = vunpack.c.h.s8.bf16 %v2249
    %v3242 = vunpack.c.h.s8.bf16 %v2250
    %v3243 = vunpack.c.l.s8.bf16 %v2251
    %v3244 = vunpack.c.l.s8.bf16 %v2252
    %v3245 = vunpack.c.l.s8.bf16 %v2253
    %v3246 = vunpack.c.l.s8.bf16 %v2254
    %v3247 = vunpack.c.l.s8.bf16 %v2255
    %v3248 = vunpack.c.l.s8.bf16 %v2256
    %v3249 = vunpack.c.l.s8.bf16 %v2257
    %v3250 = vunpack.c.l.s8.bf16 %v2258
    %v3251 = vunpack.c.h.s8.bf16 %v2251
    %v3252 = vunpack.c.h.s8.bf16 %v2252
    %v3253 = vunpack.c.h.s8.bf16 %v2253
    %v3254 = vunpack.c.h.s8.bf16 %v2254
    %v3255 = vunpack.c.h.s8.bf16 %v2255
    %v3256 = vunpack.c.h.s8.bf16 %v2256
    %v3257 = vunpack.c.h.s8.bf16 %v2257
    %v3258 = vunpack.c.h.s8.bf16 %v2258
    %v3259 = vunpack.c.l.s8.bf16 %v2259
    %v3260 = vunpack.c.l.s8.bf16 %v2260
    %v3261 = vunpack.c.l.s8.bf16 %v2261
    %v3262 = vunpack.c.l.s8.bf16 %v2262
    %v3263 = vunpack.c.l.s8.bf16 %v2263
    %v3264 = vunpack.c.l.s8.bf16 %v2264
    %v3265 = vunpack.c.l.s8.bf16 %v2265
    %v3266 = vunpack.c.l.s8.bf16 %v2266
    %v3267 = vunpack.c.h.s8.bf16 %v2259
    %v3268 = vunpack.c.h.s8.bf16 %v2260
    %v3269 = vunpack.c.h.s8.bf16 %v2261
    %v3270 = vunpack.c.h.s8.bf16 %v2262
    %v3271 = vunpack.c.h.s8.bf16 %v2263
    %v3272 = vunpack.c.h.s8.bf16 %v2264
    %v3273 = vunpack.c.h.s8.bf16 %v2265
    %v3274 = vunpack.c.h.s8.bf16 %v2266
    %v3275 = vunpack.c.l.s8.bf16 %v2267
    %v3276 = vunpack.c.l.s8.bf16 %v2268
    %v3277 = vunpack.c.l.s8.bf16 %v2269
    %v3278 = vunpack.c.l.s8.bf16 %v2270
    %v3279 = vunpack.c.l.s8.bf16 %v2271
    %v3280 = vunpack.c.l.s8.bf16 %v2272
    %v3281 = vunpack.c.l.s8.bf16 %v2273
    %v3282 = vunpack.c.l.s8.bf16 %v2274
    %v3283 = vunpack.c.h.s8.bf16 %v2267
    %v3284 = vunpack.c.h.s8.bf16 %v2268
    %v3285 = vunpack.c.h.s8.bf16 %v2269
    %v3286 = vunpack.c.h.s8.bf16 %v2270
    %v3287 = vunpack.c.h.s8.bf16 %v2271
    %v3288 = vunpack.c.h.s8.bf16 %v2272
    %v3289 = vunpack.c.h.s8.bf16 %v2273
    %v3290 = vunpack.c.h.s8.bf16 %v2274
    %v3291 = vunpack.c.l.s8.bf16 %v2275
    %v3292 = vunpack.c.l.s8.bf16 %v2276
    %v3293 = vunpack.c.l.s8.bf16 %v2277
    %v3294 = vunpack.c.l.s8.bf16 %v2278
    %v3295 = vunpack.c.l.s8.bf16 %v2279
    %v3296 = vunpack.c.l.s8.bf16 %v2280
    %v3297 = vunpack.c.l.s8.bf16 %v2281
    %v3298 = vunpack.c.l.s8.bf16 %v2282
    %v3299 = vunpack.c.h.s8.bf16 %v2275
    %v3300 = vunpack.c.h.s8.bf16 %v2276
    %v3301 = vunpack.c.h.s8.bf16 %v2277
    %v3302 = vunpack.c.h.s8.bf16 %v2278
    %v3303 = vunpack.c.h.s8.bf16 %v2279
    %v3304 = vunpack.c.h.s8.bf16 %v2280
    %v3305 = vunpack.c.h.s8.bf16 %v2281
    %v3306 = vunpack.c.h.s8.bf16 %v2282
    %3307 = vmatprep.subr.bf16.mxu0 %v2340
    %3308 = vmatpush1.bf16.msra.mxu0 %v2339
    %3309 = vmatprep.subr.bf16.mxu0 %v2332
    %3310 = vmatpush1.bf16.msra.mxu0 %v2331
    %3311 = vmatprep.subr.bf16.mxu0 %v2324
    %3312 = vmatpush1.bf16.msra.mxu0 %v2323
    %3313 = vmatprep.subr.bf16.mxu0 %v2316
    %3314 = vmatpush1.bf16.msra.mxu0 %v2315
    %3315 = vmatprep.subr.bf16.mxu0 %v2308
    %3316 = vmatpush1.bf16.msra.mxu0 %v2307
    %3317 = vmatprep.subr.bf16.mxu0 %v2300
    %3318 = vmatpush1.bf16.msra.mxu0 %v2299
    %3319 = vmatprep.subr.bf16.mxu0 %v2292
    %3320 = vmatpush1.bf16.msra.mxu0 %v2291
    %3321 = vmatprep.subr.bf16.mxu0 %v2284
    %3322 = vmatpush1.bf16.msra.mxu0 %v2283
    %3323 = vmatprep.subr.bf16.mxu0 %v2404
    %3324 = vmatpush2.bf16.msra.mxu0 %v2403
    %3325 = vmatprep.subr.bf16.mxu0 %v2396
    %3326 = vmatpush2.bf16.msra.mxu0 %v2395
    %3327 = vmatprep.subr.bf16.mxu0 %v2388
    %3328 = vmatpush2.bf16.msra.mxu0 %v2387
    %3329 = vmatprep.subr.bf16.mxu0 %v2380
    %3330 = vmatpush2.bf16.msra.mxu0 %v2379
    %3331 = vmatprep.subr.bf16.mxu0 %v2372
    %3332 = vmatpush2.bf16.msra.mxu0 %v2371
    %3333 = vmatprep.subr.bf16.mxu0 %v2364
    %3334 = vmatpush2.bf16.msra.mxu0 %v2363
    %3335 = vmatprep.subr.bf16.mxu0 %v2356
    %3336 = vmatpush2.bf16.msra.mxu0 %v2355
    %3337 = vmatprep.subr.bf16.mxu0 %v2348
    %3338 = vmatpush2.bf16.msra.mxu0 %v2347
    %3339 = vmatprep.mubr.bf16.mxu0 %v1748
    %3340 = vmatmul.mubr.bf16.gmra.mxu0 %v1747
    %v3341 = vpop.f32.mrf.mxu0
    %v3342 = vadd.f32 0.0, %v3341
    %v3343 = vpop.f32.mrf.mxu0
    %v3344 = vadd.f32 0.0, %v3343
    %v3345 = vpop.f32.mrf.mxu0
    %v3346 = vpop.f32.mrf.mxu0
    %3347 = vdwg.mxu0
    %3348 = vmatprep.subr.bf16.mxu0 %v2468
    %3349 = vmatpush1.bf16.msra.mxu0 %v2467
    %3350 = vmatprep.subr.bf16.mxu0 %v2460
    %3351 = vmatpush1.bf16.msra.mxu0 %v2459
    %3352 = vmatprep.subr.bf16.mxu0 %v2452
    %3353 = vmatpush1.bf16.msra.mxu0 %v2451
    %3354 = vmatprep.subr.bf16.mxu0 %v2444
    %3355 = vmatpush1.bf16.msra.mxu0 %v2443
    %3356 = vmatprep.subr.bf16.mxu0 %v2436
    %3357 = vmatpush1.bf16.msra.mxu0 %v2435
    %3358 = vmatprep.subr.bf16.mxu0 %v2428
    %3359 = vmatpush1.bf16.msra.mxu0 %v2427
    %3360 = vmatprep.subr.bf16.mxu0 %v2420
    %3361 = vmatpush1.bf16.msra.mxu0 %v2419
    %3362 = vmatprep.subr.bf16.mxu0 %v2412
    %3363 = vmatpush1.bf16.msra.mxu0 %v2411
    %3364 = vmatprep.subr.bf16.mxu0 %v2532
    %3365 = vmatpush2.bf16.msra.mxu0 %v2531
    %3366 = vmatprep.subr.bf16.mxu0 %v2524
    %3367 = vmatpush2.bf16.msra.mxu0 %v2523
    %3368 = vmatprep.subr.bf16.mxu0 %v2516
    %3369 = vmatpush2.bf16.msra.mxu0 %v2515
    %3370 = vmatprep.subr.bf16.mxu0 %v2508
    %3371 = vmatpush2.bf16.msra.mxu0 %v2507
    %3372 = vmatprep.subr.bf16.mxu0 %v2500
    %3373 = vmatpush2.bf16.msra.mxu0 %v2499
    %3374 = vmatprep.subr.bf16.mxu0 %v2492
    %3375 = vmatpush2.bf16.msra.mxu0 %v2491
    %3376 = vmatprep.subr.bf16.mxu0 %v2484
    %3377 = vmatpush2.bf16.msra.mxu0 %v2483
    %3378 = vmatprep.subr.bf16.mxu0 %v2476
    %3379 = vmatpush2.bf16.msra.mxu0 %v2475
    %3380 = vmatprep.mubr.bf16.mxu0 %v1750
    %3381 = vmatmul.mubr.bf16.gmra.mxu0 %v1749
    %v3382 = vpop.f32.mrf.mxu0
    %v3383 = vadd.f32 %v3342, %v3382
    %v3384 = vpop.f32.mrf.mxu0
    %v3385 = vadd.f32 %v3344, %v3384
    %v3386 = vpop.f32.mrf.mxu0
    %v3387 = vpop.f32.mrf.mxu0
    %3388 = vdwg.mxu0
    %3389 = vmatprep.subr.bf16.mxu0 %v2596
    %3390 = vmatpush1.bf16.msra.mxu0 %v2595
    %3391 = vmatprep.subr.bf16.mxu0 %v2588
    %3392 = vmatpush1.bf16.msra.mxu0 %v2587
    %3393 = vmatprep.subr.bf16.mxu0 %v2580
    %3394 = vmatpush1.bf16.msra.mxu0 %v2579
    %3395 = vmatprep.subr.bf16.mxu0 %v2572
    %3396 = vmatpush1.bf16.msra.mxu0 %v2571
    %3397 = vmatprep.subr.bf16.mxu0 %v2564
    %3398 = vmatpush1.bf16.msra.mxu0 %v2563
    %3399 = vmatprep.subr.bf16.mxu0 %v2556
    %3400 = vmatpush1.bf16.msra.mxu0 %v2555
    %3401 = vmatprep.subr.bf16.mxu0 %v2548
    %3402 = vmatpush1.bf16.msra.mxu0 %v2547
    %3403 = vmatprep.subr.bf16.mxu0 %v2540
    %3404 = vmatpush1.bf16.msra.mxu0 %v2539
    %3405 = vmatprep.subr.bf16.mxu0 %v2660
    %3406 = vmatpush2.bf16.msra.mxu0 %v2659
    %3407 = vmatprep.subr.bf16.mxu0 %v2652
    %3408 = vmatpush2.bf16.msra.mxu0 %v2651
    %3409 = vmatprep.subr.bf16.mxu0 %v2644
    %3410 = vmatpush2.bf16.msra.mxu0 %v2643
    %3411 = vmatprep.subr.bf16.mxu0 %v2636
    %3412 = vmatpush2.bf16.msra.mxu0 %v2635
    %3413 = vmatprep.subr.bf16.mxu0 %v2628
    %3414 = vmatpush2.bf16.msra.mxu0 %v2627
    %3415 = vmatprep.subr.bf16.mxu0 %v2620
    %3416 = vmatpush2.bf16.msra.mxu0 %v2619
    %3417 = vmatprep.subr.bf16.mxu0 %v2612
    %3418 = vmatpush2.bf16.msra.mxu0 %v2611
    %3419 = vmatprep.subr.bf16.mxu0 %v2604
    %3420 = vmatpush2.bf16.msra.mxu0 %v2603
    %3421 = vmatprep.mubr.bf16.mxu0 %v1752
    %3422 = vmatmul.mubr.bf16.gmra.mxu0 %v1751
    %v3423 = vpop.f32.mrf.mxu0
    %v3424 = vadd.f32 %v3383, %v3423
    %v3425 = vpop.f32.mrf.mxu0
    %v3426 = vadd.f32 %v3385, %v3425
    %v3427 = vpop.f32.mrf.mxu0
    %v3428 = vpop.f32.mrf.mxu0
    %3429 = vdwg.mxu0
    %3430 = vmatprep.subr.bf16.mxu0 %v2724
    %3431 = vmatpush1.bf16.msra.mxu0 %v2723
    %3432 = vmatprep.subr.bf16.mxu0 %v2716
    %3433 = vmatpush1.bf16.msra.mxu0 %v2715
    %3434 = vmatprep.subr.bf16.mxu0 %v2708
    %3435 = vmatpush1.bf16.msra.mxu0 %v2707
    %3436 = vmatprep.subr.bf16.mxu0 %v2700
    %3437 = vmatpush1.bf16.msra.mxu0 %v2699
    %3438 = vmatprep.subr.bf16.mxu0 %v2692
    %3439 = vmatpush1.bf16.msra.mxu0 %v2691
    %3440 = vmatprep.subr.bf16.mxu0 %v2684
    %3441 = vmatpush1.bf16.msra.mxu0 %v2683
    %3442 = vmatprep.subr.bf16.mxu0 %v2676
    %3443 = vmatpush1.bf16.msra.mxu0 %v2675
    %3444 = vmatprep.subr.bf16.mxu0 %v2668
    %3445 = vmatpush1.bf16.msra.mxu0 %v2667
    %3446 = vmatprep.subr.bf16.mxu0 %v2788
    %3447 = vmatpush2.bf16.msra.mxu0 %v2787
    %3448 = vmatprep.subr.bf16.mxu0 %v2780
    %3449 = vmatpush2.bf16.msra.mxu0 %v2779
    %3450 = vmatprep.subr.bf16.mxu0 %v2772
    %3451 = vmatpush2.bf16.msra.mxu0 %v2771
    %3452 = vmatprep.subr.bf16.mxu0 %v2764
    %3453 = vmatpush2.bf16.msra.mxu0 %v2763
    %3454 = vmatprep.subr.bf16.mxu0 %v2756
    %3455 = vmatpush2.bf16.msra.mxu0 %v2755
    %3456 = vmatprep.subr.bf16.mxu0 %v2748
    %3457 = vmatpush2.bf16.msra.mxu0 %v2747
    %3458 = vmatprep.subr.bf16.mxu0 %v2740
    %3459 = vmatpush2.bf16.msra.mxu0 %v2739
    %3460 = vmatprep.subr.bf16.mxu0 %v2732
    %3461 = vmatpush2.bf16.msra.mxu0 %v2731
    %3462 = vmatprep.mubr.bf16.mxu0 %v1754
    %3463 = vmatmul.mubr.bf16.gmra.mxu0 %v1753
    %v3464 = vpop.f32.mrf.mxu0
    %v3465 = vadd.f32 %v3424, %v3464
    %v3466 = vpop.f32.mrf.mxu0
    %v3467 = vadd.f32 %v3426, %v3466
    %v3468 = vpop.f32.mrf.mxu0
    %v3469 = vpop.f32.mrf.mxu0
    %3470 = vdwg.mxu0
    %3471 = vmatprep.subr.bf16.mxu0 %v2852
    %3472 = vmatpush1.bf16.msra.mxu0 %v2851
    %3473 = vmatprep.subr.bf16.mxu0 %v2844
    %3474 = vmatpush1.bf16.msra.mxu0 %v2843
    %3475 = vmatprep.subr.bf16.mxu0 %v2836
    %3476 = vmatpush1.bf16.msra.mxu0 %v2835
    %3477 = vmatprep.subr.bf16.mxu0 %v2828
    %3478 = vmatpush1.bf16.msra.mxu0 %v2827
    %3479 = vmatprep.subr.bf16.mxu0 %v2820
    %3480 = vmatpush1.bf16.msra.mxu0 %v2819
    %3481 = vmatprep.subr.bf16.mxu0 %v2812
    %3482 = vmatpush1.bf16.msra.mxu0 %v2811
    %3483 = vmatprep.subr.bf16.mxu0 %v2804
    %3484 = vmatpush1.bf16.msra.mxu0 %v2803
    %3485 = vmatprep.subr.bf16.mxu0 %v2796
    %3486 = vmatpush1.bf16.msra.mxu0 %v2795
    %3487 = vmatprep.subr.bf16.mxu0 %v2916
    %3488 = vmatpush2.bf16.msra.mxu0 %v2915
    %3489 = vmatprep.subr.bf16.mxu0 %v2908
    %3490 = vmatpush2.bf16.msra.mxu0 %v2907
    %3491 = vmatprep.subr.bf16.mxu0 %v2900
    %3492 = vmatpush2.bf16.msra.mxu0 %v2899
    %3493 = vmatprep.subr.bf16.mxu0 %v2892
    %3494 = vmatpush2.bf16.msra.mxu0 %v2891
    %3495 = vmatprep.subr.bf16.mxu0 %v2884
    %3496 = vmatpush2.bf16.msra.mxu0 %v2883
    %3497 = vmatprep.subr.bf16.mxu0 %v2876
    %3498 = vmatpush2.bf16.msra.mxu0 %v2875
    %3499 = vmatprep.subr.bf16.mxu0 %v2868
    %3500 = vmatpush2.bf16.msra.mxu0 %v2867
    %3501 = vmatprep.subr.bf16.mxu0 %v2860
    %3502 = vmatpush2.bf16.msra.mxu0 %v2859
    %3503 = vmatprep.mubr.bf16.mxu0 %v1756
    %3504 = vmatmul.mubr.bf16.gmra.mxu0 %v1755
    %v3505 = vpop.f32.mrf.mxu0
    %v3506 = vadd.f32 %v3465, %v3505
    %v3507 = vpop.f32.mrf.mxu0
    %v3508 = vadd.f32 %v3467, %v3507
    %v3509 = vpop.f32.mrf.mxu0
    %v3510 = vpop.f32.mrf.mxu0
    %3511 = vdwg.mxu0
    %3512 = vmatprep.subr.bf16.mxu0 %v2980
    %3513 = vmatpush1.bf16.msra.mxu0 %v2979
    %3514 = vmatprep.subr.bf16.mxu0 %v2972
    %3515 = vmatpush1.bf16.msra.mxu0 %v2971
    %3516 = vmatprep.subr.bf16.mxu0 %v2964
    %3517 = vmatpush1.bf16.msra.mxu0 %v2963
    %3518 = vmatprep.subr.bf16.mxu0 %v2956
    %3519 = vmatpush1.bf16.msra.mxu0 %v2955
    %3520 = vmatprep.subr.bf16.mxu0 %v2948
    %3521 = vmatpush1.bf16.msra.mxu0 %v2947
    %3522 = vmatprep.subr.bf16.mxu0 %v2940
    %3523 = vmatpush1.bf16.msra.mxu0 %v2939
    %3524 = vmatprep.subr.bf16.mxu0 %v2932
    %3525 = vmatpush1.bf16.msra.mxu0 %v2931
    %3526 = vmatprep.subr.bf16.mxu0 %v2924
    %3527 = vmatpush1.bf16.msra.mxu0 %v2923
    %3528 = vmatprep.subr.bf16.mxu0 %v3044
    %3529 = vmatpush2.bf16.msra.mxu0 %v3043
    %3530 = vmatprep.subr.bf16.mxu0 %v3036
    %3531 = vmatpush2.bf16.msra.mxu0 %v3035
    %3532 = vmatprep.subr.bf16.mxu0 %v3028
    %3533 = vmatpush2.bf16.msra.mxu0 %v3027
    %3534 = vmatprep.subr.bf16.mxu0 %v3020
    %3535 = vmatpush2.bf16.msra.mxu0 %v3019
    %3536 = vmatprep.subr.bf16.mxu0 %v3012
    %3537 = vmatpush2.bf16.msra.mxu0 %v3011
    %3538 = vmatprep.subr.bf16.mxu0 %v3004
    %3539 = vmatpush2.bf16.msra.mxu0 %v3003
    %3540 = vmatprep.subr.bf16.mxu0 %v2996
    %3541 = vmatpush2.bf16.msra.mxu0 %v2995
    %3542 = vmatprep.subr.bf16.mxu0 %v2988
    %3543 = vmatpush2.bf16.msra.mxu0 %v2987
    %3544 = vmatprep.mubr.bf16.mxu0 %v1758
    %3545 = vmatmul.mubr.bf16.gmra.mxu0 %v1757
    %v3546 = vpop.f32.mrf.mxu0
    %v3547 = vadd.f32 %v3506, %v3546
    %v3548 = vpop.f32.mrf.mxu0
    %v3549 = vadd.f32 %v3508, %v3548
    %v3550 = vpop.f32.mrf.mxu0
    %v3551 = vpop.f32.mrf.mxu0
    %3552 = vdwg.mxu0
    %3553 = vmatprep.subr.bf16.mxu0 %v3108
    %3554 = vmatpush1.bf16.msra.mxu0 %v3107
    %3555 = vmatprep.subr.bf16.mxu0 %v3100
    %3556 = vmatpush1.bf16.msra.mxu0 %v3099
    %3557 = vmatprep.subr.bf16.mxu0 %v3092
    %3558 = vmatpush1.bf16.msra.mxu0 %v3091
    %3559 = vmatprep.subr.bf16.mxu0 %v3084
    %3560 = vmatpush1.bf16.msra.mxu0 %v3083
    %3561 = vmatprep.subr.bf16.mxu0 %v3076
    %3562 = vmatpush1.bf16.msra.mxu0 %v3075
    %3563 = vmatprep.subr.bf16.mxu0 %v3068
    %3564 = vmatpush1.bf16.msra.mxu0 %v3067
    %3565 = vmatprep.subr.bf16.mxu0 %v3060
    %3566 = vmatpush1.bf16.msra.mxu0 %v3059
    %3567 = vmatprep.subr.bf16.mxu0 %v3052
    %3568 = vmatpush1.bf16.msra.mxu0 %v3051
    %3569 = vmatprep.subr.bf16.mxu0 %v3172
    %3570 = vmatpush2.bf16.msra.mxu0 %v3171
    %3571 = vmatprep.subr.bf16.mxu0 %v3164
    %3572 = vmatpush2.bf16.msra.mxu0 %v3163
    %3573 = vmatprep.subr.bf16.mxu0 %v3156
    %3574 = vmatpush2.bf16.msra.mxu0 %v3155
    %3575 = vmatprep.subr.bf16.mxu0 %v3148
    %3576 = vmatpush2.bf16.msra.mxu0 %v3147
    %3577 = vmatprep.subr.bf16.mxu0 %v3140
    %3578 = vmatpush2.bf16.msra.mxu0 %v3139
    %3579 = vmatprep.subr.bf16.mxu0 %v3132
    %3580 = vmatpush2.bf16.msra.mxu0 %v3131
    %3581 = vmatprep.subr.bf16.mxu0 %v3124
    %3582 = vmatpush2.bf16.msra.mxu0 %v3123
    %3583 = vmatprep.subr.bf16.mxu0 %v3116
    %3584 = vmatpush2.bf16.msra.mxu0 %v3115
    %3585 = vmatprep.mubr.bf16.mxu0 %v1760
    %3586 = vmatmul.mubr.bf16.gmra.mxu0 %v1759
    %v3587 = vpop.f32.mrf.mxu0
    %v3588 = vadd.f32 %v3547, %v3587
    %v3589 = vpop.f32.mrf.mxu0
    %v3590 = vadd.f32 %v3549, %v3589
    %v3591 = vpop.f32.mrf.mxu0
    %v3592 = vpop.f32.mrf.mxu0
    %3593 = vdwg.mxu0
    %3594 = vmatprep.subr.bf16.mxu0 %v3236
    %3595 = vmatpush1.bf16.msra.mxu0 %v3235
    %3596 = vmatprep.subr.bf16.mxu0 %v3228
    %3597 = vmatpush1.bf16.msra.mxu0 %v3227
    %3598 = vmatprep.subr.bf16.mxu0 %v3220
    %3599 = vmatpush1.bf16.msra.mxu0 %v3219
    %3600 = vmatprep.subr.bf16.mxu0 %v3212
    %3601 = vmatpush1.bf16.msra.mxu0 %v3211
    %3602 = vmatprep.subr.bf16.mxu0 %v3204
    %3603 = vmatpush1.bf16.msra.mxu0 %v3203
    %3604 = vmatprep.subr.bf16.mxu0 %v3196
    %3605 = vmatpush1.bf16.msra.mxu0 %v3195
    %3606 = vmatprep.subr.bf16.mxu0 %v3188
    %3607 = vmatpush1.bf16.msra.mxu0 %v3187
    %3608 = vmatprep.subr.bf16.mxu0 %v3180
    %3609 = vmatpush1.bf16.msra.mxu0 %v3179
    %3610 = vmatprep.subr.bf16.mxu0 %v3300
    %3611 = vmatpush2.bf16.msra.mxu0 %v3299
    %3612 = vmatprep.subr.bf16.mxu0 %v3292
    %3613 = vmatpush2.bf16.msra.mxu0 %v3291
    %3614 = vmatprep.subr.bf16.mxu0 %v3284
    %3615 = vmatpush2.bf16.msra.mxu0 %v3283
    %3616 = vmatprep.subr.bf16.mxu0 %v3276
    %3617 = vmatpush2.bf16.msra.mxu0 %v3275
    %3618 = vmatprep.subr.bf16.mxu0 %v3268
    %3619 = vmatpush2.bf16.msra.mxu0 %v3267
    %3620 = vmatprep.subr.bf16.mxu0 %v3260
    %3621 = vmatpush2.bf16.msra.mxu0 %v3259
    %3622 = vmatprep.subr.bf16.mxu0 %v3252
    %3623 = vmatpush2.bf16.msra.mxu0 %v3251
    %3624 = vmatprep.subr.bf16.mxu0 %v3244
    %3625 = vmatpush2.bf16.msra.mxu0 %v3243
    %3626 = vmatprep.mubr.bf16.mxu0 %v1762
    %3627 = vmatmul.mubr.bf16.gmra.mxu0 %v1761
    %v3628 = vpop.f32.mrf.mxu0
    %v3629 = vadd.f32 %v3588, %v3628
    %v3630 = vpop.f32.mrf.mxu0
    %v3631 = vadd.f32 %v3590, %v3630
    %v3632 = vpop.f32.mrf.mxu0
    %v3633 = vpop.f32.mrf.mxu0
    %3634 = vdwg.mxu0
    %3635 = vmatprep.subr.bf16.mxu0 %v2342
    %3636 = vmatpush1.bf16.msra.mxu0 %v2341
    %3637 = vmatprep.subr.bf16.mxu0 %v2334
    %3638 = vmatpush1.bf16.msra.mxu0 %v2333
    %3639 = vmatprep.subr.bf16.mxu0 %v2326
    %3640 = vmatpush1.bf16.msra.mxu0 %v2325
    %3641 = vmatprep.subr.bf16.mxu0 %v2318
    %3642 = vmatpush1.bf16.msra.mxu0 %v2317
    %3643 = vmatprep.subr.bf16.mxu0 %v2310
    %3644 = vmatpush1.bf16.msra.mxu0 %v2309
    %3645 = vmatprep.subr.bf16.mxu0 %v2302
    %3646 = vmatpush1.bf16.msra.mxu0 %v2301
    %3647 = vmatprep.subr.bf16.mxu0 %v2294
    %3648 = vmatpush1.bf16.msra.mxu0 %v2293
    %3649 = vmatprep.subr.bf16.mxu0 %v2286
    %3650 = vmatpush1.bf16.msra.mxu0 %v2285
    %3651 = vmatprep.subr.bf16.mxu0 %v2406
    %3652 = vmatpush2.bf16.msra.mxu0 %v2405
    %3653 = vmatprep.subr.bf16.mxu0 %v2398
    %3654 = vmatpush2.bf16.msra.mxu0 %v2397
    %3655 = vmatprep.subr.bf16.mxu0 %v2390
    %3656 = vmatpush2.bf16.msra.mxu0 %v2389
    %3657 = vmatprep.subr.bf16.mxu0 %v2382
    %3658 = vmatpush2.bf16.msra.mxu0 %v2381
    %3659 = vmatprep.subr.bf16.mxu0 %v2374
    %3660 = vmatpush2.bf16.msra.mxu0 %v2373
    %3661 = vmatprep.subr.bf16.mxu0 %v2366
    %3662 = vmatpush2.bf16.msra.mxu0 %v2365
    %3663 = vmatprep.subr.bf16.mxu0 %v2358
    %3664 = vmatpush2.bf16.msra.mxu0 %v2357
    %3665 = vmatprep.subr.bf16.mxu0 %v2350
    %3666 = vmatpush2.bf16.msra.mxu0 %v2349
    %3667 = vmatprep.mubr.bf16.mxu0 %v1748
    %3668 = vmatmul.mubr.bf16.gmra.mxu0 %v1747
    %v3669 = vpop.f32.mrf.mxu0
    %v3670 = vadd.f32 0.0, %v3669
    %v3671 = vpop.f32.mrf.mxu0
    %v3672 = vadd.f32 0.0, %v3671
    %v3673 = vpop.f32.mrf.mxu0
    %v3674 = vpop.f32.mrf.mxu0
    %3675 = vdwg.mxu0
    %3676 = vmatprep.subr.bf16.mxu0 %v2470
    %3677 = vmatpush1.bf16.msra.mxu0 %v2469
    %3678 = vmatprep.subr.bf16.mxu0 %v2462
    %3679 = vmatpush1.bf16.msra.mxu0 %v2461
    %3680 = vmatprep.subr.bf16.mxu0 %v2454
    %3681 = vmatpush1.bf16.msra.mxu0 %v2453
    %3682 = vmatprep.subr.bf16.mxu0 %v2446
    %3683 = vmatpush1.bf16.msra.mxu0 %v2445
    %3684 = vmatprep.subr.bf16.mxu0 %v2438
    %3685 = vmatpush1.bf16.msra.mxu0 %v2437
    %3686 = vmatprep.subr.bf16.mxu0 %v2430
    %3687 = vmatpush1.bf16.msra.mxu0 %v2429
    %3688 = vmatprep.subr.bf16.mxu0 %v2422
    %3689 = vmatpush1.bf16.msra.mxu0 %v2421
    %3690 = vmatprep.subr.bf16.mxu0 %v2414
    %3691 = vmatpush1.bf16.msra.mxu0 %v2413
    %3692 = vmatprep.subr.bf16.mxu0 %v2534
    %3693 = vmatpush2.bf16.msra.mxu0 %v2533
    %3694 = vmatprep.subr.bf16.mxu0 %v2526
    %3695 = vmatpush2.bf16.msra.mxu0 %v2525
    %3696 = vmatprep.subr.bf16.mxu0 %v2518
    %3697 = vmatpush2.bf16.msra.mxu0 %v2517
    %3698 = vmatprep.subr.bf16.mxu0 %v2510
    %3699 = vmatpush2.bf16.msra.mxu0 %v2509
    %3700 = vmatprep.subr.bf16.mxu0 %v2502
    %3701 = vmatpush2.bf16.msra.mxu0 %v2501
    %3702 = vmatprep.subr.bf16.mxu0 %v2494
    %3703 = vmatpush2.bf16.msra.mxu0 %v2493
    %3704 = vmatprep.subr.bf16.mxu0 %v2486
    %3705 = vmatpush2.bf16.msra.mxu0 %v2485
    %3706 = vmatprep.subr.bf16.mxu0 %v2478
    %3707 = vmatpush2.bf16.msra.mxu0 %v2477
    %3708 = vmatprep.mubr.bf16.mxu0 %v1750
    %3709 = vmatmul.mubr.bf16.gmra.mxu0 %v1749
    %v3710 = vpop.f32.mrf.mxu0
    %v3711 = vadd.f32 %v3670, %v3710
    %v3712 = vpop.f32.mrf.mxu0
    %v3713 = vadd.f32 %v3672, %v3712
    %v3714 = vpop.f32.mrf.mxu0
    %v3715 = vpop.f32.mrf.mxu0
    %3716 = vdwg.mxu0
    %3717 = vmatprep.subr.bf16.mxu0 %v2598
    %3718 = vmatpush1.bf16.msra.mxu0 %v2597
    %3719 = vmatprep.subr.bf16.mxu0 %v2590
    %3720 = vmatpush1.bf16.msra.mxu0 %v2589
    %3721 = vmatprep.subr.bf16.mxu0 %v2582
    %3722 = vmatpush1.bf16.msra.mxu0 %v2581
    %3723 = vmatprep.subr.bf16.mxu0 %v2574
    %3724 = vmatpush1.bf16.msra.mxu0 %v2573
    %3725 = vmatprep.subr.bf16.mxu0 %v2566
    %3726 = vmatpush1.bf16.msra.mxu0 %v2565
    %3727 = vmatprep.subr.bf16.mxu0 %v2558
    %3728 = vmatpush1.bf16.msra.mxu0 %v2557
    %3729 = vmatprep.subr.bf16.mxu0 %v2550
    %3730 = vmatpush1.bf16.msra.mxu0 %v2549
    %3731 = vmatprep.subr.bf16.mxu0 %v2542
    %3732 = vmatpush1.bf16.msra.mxu0 %v2541
    %3733 = vmatprep.subr.bf16.mxu0 %v2662
    %3734 = vmatpush2.bf16.msra.mxu0 %v2661
    %3735 = vmatprep.subr.bf16.mxu0 %v2654
    %3736 = vmatpush2.bf16.msra.mxu0 %v2653
    %3737 = vmatprep.subr.bf16.mxu0 %v2646
    %3738 = vmatpush2.bf16.msra.mxu0 %v2645
    %3739 = vmatprep.subr.bf16.mxu0 %v2638
    %3740 = vmatpush2.bf16.msra.mxu0 %v2637
    %3741 = vmatprep.subr.bf16.mxu0 %v2630
    %3742 = vmatpush2.bf16.msra.mxu0 %v2629
    %3743 = vmatprep.subr.bf16.mxu0 %v2622
    %3744 = vmatpush2.bf16.msra.mxu0 %v2621
    %3745 = vmatprep.subr.bf16.mxu0 %v2614
    %3746 = vmatpush2.bf16.msra.mxu0 %v2613
    %3747 = vmatprep.subr.bf16.mxu0 %v2606
    %3748 = vmatpush2.bf16.msra.mxu0 %v2605
    %3749 = vmatprep.mubr.bf16.mxu0 %v1752
    %3750 = vmatmul.mubr.bf16.gmra.mxu0 %v1751
    %v3751 = vpop.f32.mrf.mxu0
    %v3752 = vadd.f32 %v3711, %v3751
    %v3753 = vpop.f32.mrf.mxu0
    %v3754 = vadd.f32 %v3713, %v3753
    %v3755 = vpop.f32.mrf.mxu0
    %v3756 = vpop.f32.mrf.mxu0
    %3757 = vdwg.mxu0
    %3758 = vmatprep.subr.bf16.mxu0 %v2726
    %3759 = vmatpush1.bf16.msra.mxu0 %v2725
    %3760 = vmatprep.subr.bf16.mxu0 %v2718
    %3761 = vmatpush1.bf16.msra.mxu0 %v2717
    %3762 = vmatprep.subr.bf16.mxu0 %v2710
    %3763 = vmatpush1.bf16.msra.mxu0 %v2709
    %3764 = vmatprep.subr.bf16.mxu0 %v2702
    %3765 = vmatpush1.bf16.msra.mxu0 %v2701
    %3766 = vmatprep.subr.bf16.mxu0 %v2694
    %3767 = vmatpush1.bf16.msra.mxu0 %v2693
    %3768 = vmatprep.subr.bf16.mxu0 %v2686
    %3769 = vmatpush1.bf16.msra.mxu0 %v2685
    %3770 = vmatprep.subr.bf16.mxu0 %v2678
    %3771 = vmatpush1.bf16.msra.mxu0 %v2677
    %3772 = vmatprep.subr.bf16.mxu0 %v2670
    %3773 = vmatpush1.bf16.msra.mxu0 %v2669
    %3774 = vmatprep.subr.bf16.mxu0 %v2790
    %3775 = vmatpush2.bf16.msra.mxu0 %v2789
    %3776 = vmatprep.subr.bf16.mxu0 %v2782
    %3777 = vmatpush2.bf16.msra.mxu0 %v2781
    %3778 = vmatprep.subr.bf16.mxu0 %v2774
    %3779 = vmatpush2.bf16.msra.mxu0 %v2773
    %3780 = vmatprep.subr.bf16.mxu0 %v2766
    %3781 = vmatpush2.bf16.msra.mxu0 %v2765
    %3782 = vmatprep.subr.bf16.mxu0 %v2758
    %3783 = vmatpush2.bf16.msra.mxu0 %v2757
    %3784 = vmatprep.subr.bf16.mxu0 %v2750
    %3785 = vmatpush2.bf16.msra.mxu0 %v2749
    %3786 = vmatprep.subr.bf16.mxu0 %v2742
    %3787 = vmatpush2.bf16.msra.mxu0 %v2741
    %3788 = vmatprep.subr.bf16.mxu0 %v2734
    %3789 = vmatpush2.bf16.msra.mxu0 %v2733
    %3790 = vmatprep.mubr.bf16.mxu0 %v1754
    %3791 = vmatmul.mubr.bf16.gmra.mxu0 %v1753
    %v3792 = vpop.f32.mrf.mxu0
    %v3793 = vadd.f32 %v3752, %v3792
    %v3794 = vpop.f32.mrf.mxu0
    %v3795 = vadd.f32 %v3754, %v3794
    %v3796 = vpop.f32.mrf.mxu0
    %v3797 = vpop.f32.mrf.mxu0
    %3798 = vdwg.mxu0
    %3799 = vmatprep.subr.bf16.mxu0 %v2854
    %3800 = vmatpush1.bf16.msra.mxu0 %v2853
    %3801 = vmatprep.subr.bf16.mxu0 %v2846
    %3802 = vmatpush1.bf16.msra.mxu0 %v2845
    %3803 = vmatprep.subr.bf16.mxu0 %v2838
    %3804 = vmatpush1.bf16.msra.mxu0 %v2837
    %3805 = vmatprep.subr.bf16.mxu0 %v2830
    %3806 = vmatpush1.bf16.msra.mxu0 %v2829
    %3807 = vmatprep.subr.bf16.mxu0 %v2822
    %3808 = vmatpush1.bf16.msra.mxu0 %v2821
    %3809 = vmatprep.subr.bf16.mxu0 %v2814
    %3810 = vmatpush1.bf16.msra.mxu0 %v2813
    %3811 = vmatprep.subr.bf16.mxu0 %v2806
    %3812 = vmatpush1.bf16.msra.mxu0 %v2805
    %3813 = vmatprep.subr.bf16.mxu0 %v2798
    %3814 = vmatpush1.bf16.msra.mxu0 %v2797
    %3815 = vmatprep.subr.bf16.mxu0 %v2918
    %3816 = vmatpush2.bf16.msra.mxu0 %v2917
    %3817 = vmatprep.subr.bf16.mxu0 %v2910
    %3818 = vmatpush2.bf16.msra.mxu0 %v2909
    %3819 = vmatprep.subr.bf16.mxu0 %v2902
    %3820 = vmatpush2.bf16.msra.mxu0 %v2901
    %3821 = vmatprep.subr.bf16.mxu0 %v2894
    %3822 = vmatpush2.bf16.msra.mxu0 %v2893
    %3823 = vmatprep.subr.bf16.mxu0 %v2886
    %3824 = vmatpush2.bf16.msra.mxu0 %v2885
    %3825 = vmatprep.subr.bf16.mxu0 %v2878
    %3826 = vmatpush2.bf16.msra.mxu0 %v2877
    %3827 = vmatprep.subr.bf16.mxu0 %v2870
    %3828 = vmatpush2.bf16.msra.mxu0 %v2869
    %3829 = vmatprep.subr.bf16.mxu0 %v2862
    %3830 = vmatpush2.bf16.msra.mxu0 %v2861
    %3831 = vmatprep.mubr.bf16.mxu0 %v1756
    %3832 = vmatmul.mubr.bf16.gmra.mxu0 %v1755
    %v3833 = vpop.f32.mrf.mxu0
    %v3834 = vadd.f32 %v3793, %v3833
    %v3835 = vpop.f32.mrf.mxu0
    %v3836 = vadd.f32 %v3795, %v3835
    %v3837 = vpop.f32.mrf.mxu0
    %v3838 = vpop.f32.mrf.mxu0
    %3839 = vdwg.mxu0
    %3840 = vmatprep.subr.bf16.mxu0 %v2982
    %3841 = vmatpush1.bf16.msra.mxu0 %v2981
    %3842 = vmatprep.subr.bf16.mxu0 %v2974
    %3843 = vmatpush1.bf16.msra.mxu0 %v2973
    %3844 = vmatprep.subr.bf16.mxu0 %v2966
    %3845 = vmatpush1.bf16.msra.mxu0 %v2965
    %3846 = vmatprep.subr.bf16.mxu0 %v2958
    %3847 = vmatpush1.bf16.msra.mxu0 %v2957
    %3848 = vmatprep.subr.bf16.mxu0 %v2950
    %3849 = vmatpush1.bf16.msra.mxu0 %v2949
    %3850 = vmatprep.subr.bf16.mxu0 %v2942
    %3851 = vmatpush1.bf16.msra.mxu0 %v2941
    %3852 = vmatprep.subr.bf16.mxu0 %v2934
    %3853 = vmatpush1.bf16.msra.mxu0 %v2933
    %3854 = vmatprep.subr.bf16.mxu0 %v2926
    %3855 = vmatpush1.bf16.msra.mxu0 %v2925
    %3856 = vmatprep.subr.bf16.mxu0 %v3046
    %3857 = vmatpush2.bf16.msra.mxu0 %v3045
    %3858 = vmatprep.subr.bf16.mxu0 %v3038
    %3859 = vmatpush2.bf16.msra.mxu0 %v3037
    %3860 = vmatprep.subr.bf16.mxu0 %v3030
    %3861 = vmatpush2.bf16.msra.mxu0 %v3029
    %3862 = vmatprep.subr.bf16.mxu0 %v3022
    %3863 = vmatpush2.bf16.msra.mxu0 %v3021
    %3864 = vmatprep.subr.bf16.mxu0 %v3014
    %3865 = vmatpush2.bf16.msra.mxu0 %v3013
    %3866 = vmatprep.subr.bf16.mxu0 %v3006
    %3867 = vmatpush2.bf16.msra.mxu0 %v3005
    %3868 = vmatprep.subr.bf16.mxu0 %v2998
    %3869 = vmatpush2.bf16.msra.mxu0 %v2997
    %3870 = vmatprep.subr.bf16.mxu0 %v2990
    %3871 = vmatpush2.bf16.msra.mxu0 %v2989
    %3872 = vmatprep.mubr.bf16.mxu0 %v1758
    %3873 = vmatmul.mubr.bf16.gmra.mxu0 %v1757
    %v3874 = vpop.f32.mrf.mxu0
    %v3875 = vadd.f32 %v3834, %v3874
    %v3876 = vpop.f32.mrf.mxu0
    %v3877 = vadd.f32 %v3836, %v3876
    %v3878 = vpop.f32.mrf.mxu0
    %v3879 = vpop.f32.mrf.mxu0
    %3880 = vdwg.mxu0
    %3881 = vmatprep.subr.bf16.mxu0 %v3110
    %3882 = vmatpush1.bf16.msra.mxu0 %v3109
    %3883 = vmatprep.subr.bf16.mxu0 %v3102
    %3884 = vmatpush1.bf16.msra.mxu0 %v3101
    %3885 = vmatprep.subr.bf16.mxu0 %v3094
    %3886 = vmatpush1.bf16.msra.mxu0 %v3093
    %3887 = vmatprep.subr.bf16.mxu0 %v3086
    %3888 = vmatpush1.bf16.msra.mxu0 %v3085
    %3889 = vmatprep.subr.bf16.mxu0 %v3078
    %3890 = vmatpush1.bf16.msra.mxu0 %v3077
    %3891 = vmatprep.subr.bf16.mxu0 %v3070
    %3892 = vmatpush1.bf16.msra.mxu0 %v3069
    %3893 = vmatprep.subr.bf16.mxu0 %v3062
    %3894 = vmatpush1.bf16.msra.mxu0 %v3061
    %3895 = vmatprep.subr.bf16.mxu0 %v3054
    %3896 = vmatpush1.bf16.msra.mxu0 %v3053
    %3897 = vmatprep.subr.bf16.mxu0 %v3174
    %3898 = vmatpush2.bf16.msra.mxu0 %v3173
    %3899 = vmatprep.subr.bf16.mxu0 %v3166
    %3900 = vmatpush2.bf16.msra.mxu0 %v3165
    %3901 = vmatprep.subr.bf16.mxu0 %v3158
    %3902 = vmatpush2.bf16.msra.mxu0 %v3157
    %3903 = vmatprep.subr.bf16.mxu0 %v3150
    %3904 = vmatpush2.bf16.msra.mxu0 %v3149
    %3905 = vmatprep.subr.bf16.mxu0 %v3142
    %3906 = vmatpush2.bf16.msra.mxu0 %v3141
    %3907 = vmatprep.subr.bf16.mxu0 %v3134
    %3908 = vmatpush2.bf16.msra.mxu0 %v3133
    %3909 = vmatprep.subr.bf16.mxu0 %v3126
    %3910 = vmatpush2.bf16.msra.mxu0 %v3125
    %3911 = vmatprep.subr.bf16.mxu0 %v3118
    %3912 = vmatpush2.bf16.msra.mxu0 %v3117
    %3913 = vmatprep.mubr.bf16.mxu0 %v1760
    %3914 = vmatmul.mubr.bf16.gmra.mxu0 %v1759
    %v3915 = vpop.f32.mrf.mxu0
    %v3916 = vadd.f32 %v3875, %v3915
    %v3917 = vpop.f32.mrf.mxu0
    %v3918 = vadd.f32 %v3877, %v3917
    %v3919 = vpop.f32.mrf.mxu0
    %v3920 = vpop.f32.mrf.mxu0
    %3921 = vdwg.mxu0
    %3922 = vmatprep.subr.bf16.mxu0 %v3238
    %3923 = vmatpush1.bf16.msra.mxu0 %v3237
    %3924 = vmatprep.subr.bf16.mxu0 %v3230
    %3925 = vmatpush1.bf16.msra.mxu0 %v3229
    %3926 = vmatprep.subr.bf16.mxu0 %v3222
    %3927 = vmatpush1.bf16.msra.mxu0 %v3221
    %3928 = vmatprep.subr.bf16.mxu0 %v3214
    %3929 = vmatpush1.bf16.msra.mxu0 %v3213
    %3930 = vmatprep.subr.bf16.mxu0 %v3206
    %3931 = vmatpush1.bf16.msra.mxu0 %v3205
    %3932 = vmatprep.subr.bf16.mxu0 %v3198
    %3933 = vmatpush1.bf16.msra.mxu0 %v3197
    %3934 = vmatprep.subr.bf16.mxu0 %v3190
    %3935 = vmatpush1.bf16.msra.mxu0 %v3189
    %3936 = vmatprep.subr.bf16.mxu0 %v3182
    %3937 = vmatpush1.bf16.msra.mxu0 %v3181
    %3938 = vmatprep.subr.bf16.mxu0 %v3302
    %3939 = vmatpush2.bf16.msra.mxu0 %v3301
    %3940 = vmatprep.subr.bf16.mxu0 %v3294
    %3941 = vmatpush2.bf16.msra.mxu0 %v3293
    %3942 = vmatprep.subr.bf16.mxu0 %v3286
    %3943 = vmatpush2.bf16.msra.mxu0 %v3285
    %3944 = vmatprep.subr.bf16.mxu0 %v3278
    %3945 = vmatpush2.bf16.msra.mxu0 %v3277
    %3946 = vmatprep.subr.bf16.mxu0 %v3270
    %3947 = vmatpush2.bf16.msra.mxu0 %v3269
    %3948 = vmatprep.subr.bf16.mxu0 %v3262
    %3949 = vmatpush2.bf16.msra.mxu0 %v3261
    %3950 = vmatprep.subr.bf16.mxu0 %v3254
    %3951 = vmatpush2.bf16.msra.mxu0 %v3253
    %3952 = vmatprep.subr.bf16.mxu0 %v3246
    %3953 = vmatpush2.bf16.msra.mxu0 %v3245
    %3954 = vmatprep.mubr.bf16.mxu0 %v1762
    %3955 = vmatmul.mubr.bf16.gmra.mxu0 %v1761
    %v3956 = vpop.f32.mrf.mxu0
    %v3957 = vadd.f32 %v3916, %v3956
    %v3958 = vpop.f32.mrf.mxu0
    %v3959 = vadd.f32 %v3918, %v3958
    %v3960 = vpop.f32.mrf.mxu0
    %v3961 = vpop.f32.mrf.mxu0
    %3962 = vdwg.mxu0
    %3963 = vmatprep.subr.bf16.mxu0 %v2344
    %3964 = vmatpush1.bf16.msra.mxu0 %v2343
    %3965 = vmatprep.subr.bf16.mxu0 %v2336
    %3966 = vmatpush1.bf16.msra.mxu0 %v2335
    %3967 = vmatprep.subr.bf16.mxu0 %v2328
    %3968 = vmatpush1.bf16.msra.mxu0 %v2327
    %3969 = vmatprep.subr.bf16.mxu0 %v2320
    %3970 = vmatpush1.bf16.msra.mxu0 %v2319
    %3971 = vmatprep.subr.bf16.mxu0 %v2312
    %3972 = vmatpush1.bf16.msra.mxu0 %v2311
    %3973 = vmatprep.subr.bf16.mxu0 %v2304
    %3974 = vmatpush1.bf16.msra.mxu0 %v2303
    %3975 = vmatprep.subr.bf16.mxu0 %v2296
    %3976 = vmatpush1.bf16.msra.mxu0 %v2295
    %3977 = vmatprep.subr.bf16.mxu0 %v2288
    %3978 = vmatpush1.bf16.msra.mxu0 %v2287
    %3979 = vmatprep.subr.bf16.mxu0 %v2408
    %3980 = vmatpush2.bf16.msra.mxu0 %v2407
    %3981 = vmatprep.subr.bf16.mxu0 %v2400
    %3982 = vmatpush2.bf16.msra.mxu0 %v2399
    %3983 = vmatprep.subr.bf16.mxu0 %v2392
    %3984 = vmatpush2.bf16.msra.mxu0 %v2391
    %3985 = vmatprep.subr.bf16.mxu0 %v2384
    %3986 = vmatpush2.bf16.msra.mxu0 %v2383
    %3987 = vmatprep.subr.bf16.mxu0 %v2376
    %3988 = vmatpush2.bf16.msra.mxu0 %v2375
    %3989 = vmatprep.subr.bf16.mxu0 %v2368
    %3990 = vmatpush2.bf16.msra.mxu0 %v2367
    %3991 = vmatprep.subr.bf16.mxu0 %v2360
    %3992 = vmatpush2.bf16.msra.mxu0 %v2359
    %3993 = vmatprep.subr.bf16.mxu0 %v2352
    %3994 = vmatpush2.bf16.msra.mxu0 %v2351
    %3995 = vmatprep.mubr.bf16.mxu0 %v1748
    %3996 = vmatmul.mubr.bf16.gmra.mxu0 %v1747
    %v3997 = vpop.f32.mrf.mxu0
    %v3998 = vadd.f32 0.0, %v3997
    %v3999 = vpop.f32.mrf.mxu0
    %v4000 = vadd.f32 0.0, %v3999
    %v4001 = vpop.f32.mrf.mxu0
    %v4002 = vpop.f32.mrf.mxu0
    %4003 = vdwg.mxu0
    %4004 = vmatprep.subr.bf16.mxu0 %v2472
    %4005 = vmatpush1.bf16.msra.mxu0 %v2471
    %4006 = vmatprep.subr.bf16.mxu0 %v2464
    %4007 = vmatpush1.bf16.msra.mxu0 %v2463
    %4008 = vmatprep.subr.bf16.mxu0 %v2456
    %4009 = vmatpush1.bf16.msra.mxu0 %v2455
    %4010 = vmatprep.subr.bf16.mxu0 %v2448
    %4011 = vmatpush1.bf16.msra.mxu0 %v2447
    %4012 = vmatprep.subr.bf16.mxu0 %v2440
    %4013 = vmatpush1.bf16.msra.mxu0 %v2439
    %4014 = vmatprep.subr.bf16.mxu0 %v2432
    %4015 = vmatpush1.bf16.msra.mxu0 %v2431
    %4016 = vmatprep.subr.bf16.mxu0 %v2424
    %4017 = vmatpush1.bf16.msra.mxu0 %v2423
    %4018 = vmatprep.subr.bf16.mxu0 %v2416
    %4019 = vmatpush1.bf16.msra.mxu0 %v2415
    %4020 = vmatprep.subr.bf16.mxu0 %v2536
    %4021 = vmatpush2.bf16.msra.mxu0 %v2535
    %4022 = vmatprep.subr.bf16.mxu0 %v2528
    %4023 = vmatpush2.bf16.msra.mxu0 %v2527
    %4024 = vmatprep.subr.bf16.mxu0 %v2520
    %4025 = vmatpush2.bf16.msra.mxu0 %v2519
    %4026 = vmatprep.subr.bf16.mxu0 %v2512
    %4027 = vmatpush2.bf16.msra.mxu0 %v2511
    %4028 = vmatprep.subr.bf16.mxu0 %v2504
    %4029 = vmatpush2.bf16.msra.mxu0 %v2503
    %4030 = vmatprep.subr.bf16.mxu0 %v2496
    %4031 = vmatpush2.bf16.msra.mxu0 %v2495
    %4032 = vmatprep.subr.bf16.mxu0 %v2488
    %4033 = vmatpush2.bf16.msra.mxu0 %v2487
    %4034 = vmatprep.subr.bf16.mxu0 %v2480
    %4035 = vmatpush2.bf16.msra.mxu0 %v2479
    %4036 = vmatprep.mubr.bf16.mxu0 %v1750
    %4037 = vmatmul.mubr.bf16.gmra.mxu0 %v1749
    %v4038 = vpop.f32.mrf.mxu0
    %v4039 = vadd.f32 %v3998, %v4038
    %v4040 = vpop.f32.mrf.mxu0
    %v4041 = vadd.f32 %v4000, %v4040
    %v4042 = vpop.f32.mrf.mxu0
    %v4043 = vpop.f32.mrf.mxu0
    %4044 = vdwg.mxu0
    %4045 = vmatprep.subr.bf16.mxu0 %v2600
    %4046 = vmatpush1.bf16.msra.mxu0 %v2599
    %4047 = vmatprep.subr.bf16.mxu0 %v2592
    %4048 = vmatpush1.bf16.msra.mxu0 %v2591
    %4049 = vmatprep.subr.bf16.mxu0 %v2584
    %4050 = vmatpush1.bf16.msra.mxu0 %v2583
    %4051 = vmatprep.subr.bf16.mxu0 %v2576
    %4052 = vmatpush1.bf16.msra.mxu0 %v2575
    %4053 = vmatprep.subr.bf16.mxu0 %v2568
    %4054 = vmatpush1.bf16.msra.mxu0 %v2567
    %4055 = vmatprep.subr.bf16.mxu0 %v2560
    %4056 = vmatpush1.bf16.msra.mxu0 %v2559
    %4057 = vmatprep.subr.bf16.mxu0 %v2552
    %4058 = vmatpush1.bf16.msra.mxu0 %v2551
    %4059 = vmatprep.subr.bf16.mxu0 %v2544
    %4060 = vmatpush1.bf16.msra.mxu0 %v2543
    %4061 = vmatprep.subr.bf16.mxu0 %v2664
    %4062 = vmatpush2.bf16.msra.mxu0 %v2663
    %4063 = vmatprep.subr.bf16.mxu0 %v2656
    %4064 = vmatpush2.bf16.msra.mxu0 %v2655
    %4065 = vmatprep.subr.bf16.mxu0 %v2648
    %4066 = vmatpush2.bf16.msra.mxu0 %v2647
    %4067 = vmatprep.subr.bf16.mxu0 %v2640
    %4068 = vmatpush2.bf16.msra.mxu0 %v2639
    %4069 = vmatprep.subr.bf16.mxu0 %v2632
    %4070 = vmatpush2.bf16.msra.mxu0 %v2631
    %4071 = vmatprep.subr.bf16.mxu0 %v2624
    %4072 = vmatpush2.bf16.msra.mxu0 %v2623
    %4073 = vmatprep.subr.bf16.mxu0 %v2616
    %4074 = vmatpush2.bf16.msra.mxu0 %v2615
    %4075 = vmatprep.subr.bf16.mxu0 %v2608
    %4076 = vmatpush2.bf16.msra.mxu0 %v2607
    %4077 = vmatprep.mubr.bf16.mxu0 %v1752
    %4078 = vmatmul.mubr.bf16.gmra.mxu0 %v1751
    %v4079 = vpop.f32.mrf.mxu0
    %v4080 = vadd.f32 %v4039, %v4079
    %v4081 = vpop.f32.mrf.mxu0
    %v4082 = vadd.f32 %v4041, %v4081
    %v4083 = vpop.f32.mrf.mxu0
    %v4084 = vpop.f32.mrf.mxu0
    %4085 = vdwg.mxu0
    %4086 = vmatprep.subr.bf16.mxu0 %v2728
    %4087 = vmatpush1.bf16.msra.mxu0 %v2727
    %4088 = vmatprep.subr.bf16.mxu0 %v2720
    %4089 = vmatpush1.bf16.msra.mxu0 %v2719
    %4090 = vmatprep.subr.bf16.mxu0 %v2712
    %4091 = vmatpush1.bf16.msra.mxu0 %v2711
    %4092 = vmatprep.subr.bf16.mxu0 %v2704
    %4093 = vmatpush1.bf16.msra.mxu0 %v2703
    %4094 = vmatprep.subr.bf16.mxu0 %v2696
    %4095 = vmatpush1.bf16.msra.mxu0 %v2695
    %4096 = vmatprep.subr.bf16.mxu0 %v2688
    %4097 = vmatpush1.bf16.msra.mxu0 %v2687
    %4098 = vmatprep.subr.bf16.mxu0 %v2680
    %4099 = vmatpush1.bf16.msra.mxu0 %v2679
    %4100 = vmatprep.subr.bf16.mxu0 %v2672
    %4101 = vmatpush1.bf16.msra.mxu0 %v2671
    %4102 = vmatprep.subr.bf16.mxu0 %v2792
    %4103 = vmatpush2.bf16.msra.mxu0 %v2791
    %4104 = vmatprep.subr.bf16.mxu0 %v2784
    %4105 = vmatpush2.bf16.msra.mxu0 %v2783
    %4106 = vmatprep.subr.bf16.mxu0 %v2776
    %4107 = vmatpush2.bf16.msra.mxu0 %v2775
    %4108 = vmatprep.subr.bf16.mxu0 %v2768
    %4109 = vmatpush2.bf16.msra.mxu0 %v2767
    %4110 = vmatprep.subr.bf16.mxu0 %v2760
    %4111 = vmatpush2.bf16.msra.mxu0 %v2759
    %4112 = vmatprep.subr.bf16.mxu0 %v2752
    %4113 = vmatpush2.bf16.msra.mxu0 %v2751
    %4114 = vmatprep.subr.bf16.mxu0 %v2744
    %4115 = vmatpush2.bf16.msra.mxu0 %v2743
    %4116 = vmatprep.subr.bf16.mxu0 %v2736
    %4117 = vmatpush2.bf16.msra.mxu0 %v2735
    %4118 = vmatprep.mubr.bf16.mxu0 %v1754
    %4119 = vmatmul.mubr.bf16.gmra.mxu0 %v1753
    %v4120 = vpop.f32.mrf.mxu0
    %v4121 = vadd.f32 %v4080, %v4120
    %v4122 = vpop.f32.mrf.mxu0
    %v4123 = vadd.f32 %v4082, %v4122
    %v4124 = vpop.f32.mrf.mxu0
    %v4125 = vpop.f32.mrf.mxu0
    %4126 = vdwg.mxu0
    %4127 = vmatprep.subr.bf16.mxu0 %v2856
    %4128 = vmatpush1.bf16.msra.mxu0 %v2855
    %4129 = vmatprep.subr.bf16.mxu0 %v2848
    %4130 = vmatpush1.bf16.msra.mxu0 %v2847
    %4131 = vmatprep.subr.bf16.mxu0 %v2840
    %4132 = vmatpush1.bf16.msra.mxu0 %v2839
    %4133 = vmatprep.subr.bf16.mxu0 %v2832
    %4134 = vmatpush1.bf16.msra.mxu0 %v2831
    %4135 = vmatprep.subr.bf16.mxu0 %v2824
    %4136 = vmatpush1.bf16.msra.mxu0 %v2823
    %4137 = vmatprep.subr.bf16.mxu0 %v2816
    %4138 = vmatpush1.bf16.msra.mxu0 %v2815
    %4139 = vmatprep.subr.bf16.mxu0 %v2808
    %4140 = vmatpush1.bf16.msra.mxu0 %v2807
    %4141 = vmatprep.subr.bf16.mxu0 %v2800
    %4142 = vmatpush1.bf16.msra.mxu0 %v2799
    %4143 = vmatprep.subr.bf16.mxu0 %v2920
    %4144 = vmatpush2.bf16.msra.mxu0 %v2919
    %4145 = vmatprep.subr.bf16.mxu0 %v2912
    %4146 = vmatpush2.bf16.msra.mxu0 %v2911
    %4147 = vmatprep.subr.bf16.mxu0 %v2904
    %4148 = vmatpush2.bf16.msra.mxu0 %v2903
    %4149 = vmatprep.subr.bf16.mxu0 %v2896
    %4150 = vmatpush2.bf16.msra.mxu0 %v2895
    %4151 = vmatprep.subr.bf16.mxu0 %v2888
    %4152 = vmatpush2.bf16.msra.mxu0 %v2887
    %4153 = vmatprep.subr.bf16.mxu0 %v2880
    %4154 = vmatpush2.bf16.msra.mxu0 %v2879
    %4155 = vmatprep.subr.bf16.mxu0 %v2872
    %4156 = vmatpush2.bf16.msra.mxu0 %v2871
    %4157 = vmatprep.subr.bf16.mxu0 %v2864
    %4158 = vmatpush2.bf16.msra.mxu0 %v2863
    %4159 = vmatprep.mubr.bf16.mxu0 %v1756
    %4160 = vmatmul.mubr.bf16.gmra.mxu0 %v1755
    %v4161 = vpop.f32.mrf.mxu0
    %v4162 = vadd.f32 %v4121, %v4161
    %v4163 = vpop.f32.mrf.mxu0
    %v4164 = vadd.f32 %v4123, %v4163
    %v4165 = vpop.f32.mrf.mxu0
    %v4166 = vpop.f32.mrf.mxu0
    %4167 = vdwg.mxu0
    %4168 = vmatprep.subr.bf16.mxu0 %v2984
    %4169 = vmatpush1.bf16.msra.mxu0 %v2983
    %4170 = vmatprep.subr.bf16.mxu0 %v2976
    %4171 = vmatpush1.bf16.msra.mxu0 %v2975
    %4172 = vmatprep.subr.bf16.mxu0 %v2968
    %4173 = vmatpush1.bf16.msra.mxu0 %v2967
    %4174 = vmatprep.subr.bf16.mxu0 %v2960
    %4175 = vmatpush1.bf16.msra.mxu0 %v2959
    %4176 = vmatprep.subr.bf16.mxu0 %v2952
    %4177 = vmatpush1.bf16.msra.mxu0 %v2951
    %4178 = vmatprep.subr.bf16.mxu0 %v2944
    %4179 = vmatpush1.bf16.msra.mxu0 %v2943
    %4180 = vmatprep.subr.bf16.mxu0 %v2936
    %4181 = vmatpush1.bf16.msra.mxu0 %v2935
    %4182 = vmatprep.subr.bf16.mxu0 %v2928
    %4183 = vmatpush1.bf16.msra.mxu0 %v2927
    %4184 = vmatprep.subr.bf16.mxu0 %v3048
    %4185 = vmatpush2.bf16.msra.mxu0 %v3047
    %4186 = vmatprep.subr.bf16.mxu0 %v3040
    %4187 = vmatpush2.bf16.msra.mxu0 %v3039
    %4188 = vmatprep.subr.bf16.mxu0 %v3032
    %4189 = vmatpush2.bf16.msra.mxu0 %v3031
    %4190 = vmatprep.subr.bf16.mxu0 %v3024
    %4191 = vmatpush2.bf16.msra.mxu0 %v3023
    %4192 = vmatprep.subr.bf16.mxu0 %v3016
    %4193 = vmatpush2.bf16.msra.mxu0 %v3015
    %4194 = vmatprep.subr.bf16.mxu0 %v3008
    %4195 = vmatpush2.bf16.msra.mxu0 %v3007
    %4196 = vmatprep.subr.bf16.mxu0 %v3000
    %4197 = vmatpush2.bf16.msra.mxu0 %v2999
    %4198 = vmatprep.subr.bf16.mxu0 %v2992
    %4199 = vmatpush2.bf16.msra.mxu0 %v2991
    %4200 = vmatprep.mubr.bf16.mxu0 %v1758
    %4201 = vmatmul.mubr.bf16.gmra.mxu0 %v1757
    %v4202 = vpop.f32.mrf.mxu0
    %v4203 = vadd.f32 %v4162, %v4202
    %v4204 = vpop.f32.mrf.mxu0
    %v4205 = vadd.f32 %v4164, %v4204
    %v4206 = vpop.f32.mrf.mxu0
    %v4207 = vpop.f32.mrf.mxu0
    %4208 = vdwg.mxu0
    %4209 = vmatprep.subr.bf16.mxu0 %v3112
    %4210 = vmatpush1.bf16.msra.mxu0 %v3111
    %4211 = vmatprep.subr.bf16.mxu0 %v3104
    %4212 = vmatpush1.bf16.msra.mxu0 %v3103
    %4213 = vmatprep.subr.bf16.mxu0 %v3096
    %4214 = vmatpush1.bf16.msra.mxu0 %v3095
    %4215 = vmatprep.subr.bf16.mxu0 %v3088
    %4216 = vmatpush1.bf16.msra.mxu0 %v3087
    %4217 = vmatprep.subr.bf16.mxu0 %v3080
    %4218 = vmatpush1.bf16.msra.mxu0 %v3079
    %4219 = vmatprep.subr.bf16.mxu0 %v3072
    %4220 = vmatpush1.bf16.msra.mxu0 %v3071
    %4221 = vmatprep.subr.bf16.mxu0 %v3064
    %4222 = vmatpush1.bf16.msra.mxu0 %v3063
    %4223 = vmatprep.subr.bf16.mxu0 %v3056
    %4224 = vmatpush1.bf16.msra.mxu0 %v3055
    %4225 = vmatprep.subr.bf16.mxu0 %v3176
    %4226 = vmatpush2.bf16.msra.mxu0 %v3175
    %4227 = vmatprep.subr.bf16.mxu0 %v3168
    %4228 = vmatpush2.bf16.msra.mxu0 %v3167
    %4229 = vmatprep.subr.bf16.mxu0 %v3160
    %4230 = vmatpush2.bf16.msra.mxu0 %v3159
    %4231 = vmatprep.subr.bf16.mxu0 %v3152
    %4232 = vmatpush2.bf16.msra.mxu0 %v3151
    %4233 = vmatprep.subr.bf16.mxu0 %v3144
    %4234 = vmatpush2.bf16.msra.mxu0 %v3143
    %4235 = vmatprep.subr.bf16.mxu0 %v3136
    %4236 = vmatpush2.bf16.msra.mxu0 %v3135
    %4237 = vmatprep.subr.bf16.mxu0 %v3128
    %4238 = vmatpush2.bf16.msra.mxu0 %v3127
    %4239 = vmatprep.subr.bf16.mxu0 %v3120
    %4240 = vmatpush2.bf16.msra.mxu0 %v3119
    %4241 = vmatprep.mubr.bf16.mxu0 %v1760
    %4242 = vmatmul.mubr.bf16.gmra.mxu0 %v1759
    %v4243 = vpop.f32.mrf.mxu0
    %v4244 = vadd.f32 %v4203, %v4243
    %v4245 = vpop.f32.mrf.mxu0
    %v4246 = vadd.f32 %v4205, %v4245
    %v4247 = vpop.f32.mrf.mxu0
    %v4248 = vpop.f32.mrf.mxu0
    %4249 = vdwg.mxu0
    %4250 = vmatprep.subr.bf16.mxu0 %v3240
    %4251 = vmatpush1.bf16.msra.mxu0 %v3239
    %4252 = vmatprep.subr.bf16.mxu0 %v3232
    %4253 = vmatpush1.bf16.msra.mxu0 %v3231
    %4254 = vmatprep.subr.bf16.mxu0 %v3224
    %4255 = vmatpush1.bf16.msra.mxu0 %v3223
    %4256 = vmatprep.subr.bf16.mxu0 %v3216
    %4257 = vmatpush1.bf16.msra.mxu0 %v3215
    %4258 = vmatprep.subr.bf16.mxu0 %v3208
    %4259 = vmatpush1.bf16.msra.mxu0 %v3207
    %4260 = vmatprep.subr.bf16.mxu0 %v3200
    %4261 = vmatpush1.bf16.msra.mxu0 %v3199
    %4262 = vmatprep.subr.bf16.mxu0 %v3192
    %4263 = vmatpush1.bf16.msra.mxu0 %v3191
    %4264 = vmatprep.subr.bf16.mxu0 %v3184
    %4265 = vmatpush1.bf16.msra.mxu0 %v3183
    %4266 = vmatprep.subr.bf16.mxu0 %v3304
    %4267 = vmatpush2.bf16.msra.mxu0 %v3303
    %4268 = vmatprep.subr.bf16.mxu0 %v3296
    %4269 = vmatpush2.bf16.msra.mxu0 %v3295
    %4270 = vmatprep.subr.bf16.mxu0 %v3288
    %4271 = vmatpush2.bf16.msra.mxu0 %v3287
    %4272 = vmatprep.subr.bf16.mxu0 %v3280
    %4273 = vmatpush2.bf16.msra.mxu0 %v3279
    %4274 = vmatprep.subr.bf16.mxu0 %v3272
    %4275 = vmatpush2.bf16.msra.mxu0 %v3271
    %4276 = vmatprep.subr.bf16.mxu0 %v3264
    %4277 = vmatpush2.bf16.msra.mxu0 %v3263
    %4278 = vmatprep.subr.bf16.mxu0 %v3256
    %4279 = vmatpush2.bf16.msra.mxu0 %v3255
    %4280 = vmatprep.subr.bf16.mxu0 %v3248
    %4281 = vmatpush2.bf16.msra.mxu0 %v3247
    %4282 = vmatprep.mubr.bf16.mxu0 %v1762
    %4283 = vmatmul.mubr.bf16.gmra.mxu0 %v1761
    %v4284 = vpop.f32.mrf.mxu0
    %v4285 = vadd.f32 %v4244, %v4284
    %v4286 = vpop.f32.mrf.mxu0
    %v4287 = vadd.f32 %v4246, %v4286
    %v4288 = vpop.f32.mrf.mxu0
    %v4289 = vpop.f32.mrf.mxu0
    %4290 = vdwg.mxu0
    %4291 = vmatprep.subr.bf16.mxu0 %v2346
    %4292 = vmatpush1.bf16.msra.mxu0 %v2345
    %4293 = vmatprep.subr.bf16.mxu0 %v2338
    %4294 = vmatpush1.bf16.msra.mxu0 %v2337
    %4295 = vmatprep.subr.bf16.mxu0 %v2330
    %4296 = vmatpush1.bf16.msra.mxu0 %v2329
    %4297 = vmatprep.subr.bf16.mxu0 %v2322
    %4298 = vmatpush1.bf16.msra.mxu0 %v2321
    %4299 = vmatprep.subr.bf16.mxu0 %v2314
    %4300 = vmatpush1.bf16.msra.mxu0 %v2313
    %4301 = vmatprep.subr.bf16.mxu0 %v2306
    %4302 = vmatpush1.bf16.msra.mxu0 %v2305
    %4303 = vmatprep.subr.bf16.mxu0 %v2298
    %4304 = vmatpush1.bf16.msra.mxu0 %v2297
    %4305 = vmatprep.subr.bf16.mxu0 %v2290
    %4306 = vmatpush1.bf16.msra.mxu0 %v2289
    %4307 = vmatprep.subr.bf16.mxu0 %v2410
    %4308 = vmatpush2.bf16.msra.mxu0 %v2409
    %4309 = vmatprep.subr.bf16.mxu0 %v2402
    %4310 = vmatpush2.bf16.msra.mxu0 %v2401
    %4311 = vmatprep.subr.bf16.mxu0 %v2394
    %4312 = vmatpush2.bf16.msra.mxu0 %v2393
    %4313 = vmatprep.subr.bf16.mxu0 %v2386
    %4314 = vmatpush2.bf16.msra.mxu0 %v2385
    %4315 = vmatprep.subr.bf16.mxu0 %v2378
    %4316 = vmatpush2.bf16.msra.mxu0 %v2377
    %4317 = vmatprep.subr.bf16.mxu0 %v2370
    %4318 = vmatpush2.bf16.msra.mxu0 %v2369
    %4319 = vmatprep.subr.bf16.mxu0 %v2362
    %4320 = vmatpush2.bf16.msra.mxu0 %v2361
    %4321 = vmatprep.subr.bf16.mxu0 %v2354
    %4322 = vmatpush2.bf16.msra.mxu0 %v2353
    %4323 = vmatprep.mubr.bf16.mxu0 %v1748
    %4324 = vmatmul.mubr.bf16.gmra.mxu0 %v1747
    %v4325 = vpop.f32.mrf.mxu0
    %v4326 = vadd.f32 0.0, %v4325
    %v4327 = vpop.f32.mrf.mxu0
    %v4328 = vadd.f32 0.0, %v4327
    %v4329 = vpop.f32.mrf.mxu0
    %v4330 = vpop.f32.mrf.mxu0
    %4331 = vdwg.mxu0
    %4332 = vmatprep.subr.bf16.mxu0 %v2474
    %4333 = vmatpush1.bf16.msra.mxu0 %v2473
    %4334 = vmatprep.subr.bf16.mxu0 %v2466
    %4335 = vmatpush1.bf16.msra.mxu0 %v2465
    %4336 = vmatprep.subr.bf16.mxu0 %v2458
    %4337 = vmatpush1.bf16.msra.mxu0 %v2457
    %4338 = vmatprep.subr.bf16.mxu0 %v2450
    %4339 = vmatpush1.bf16.msra.mxu0 %v2449
    %4340 = vmatprep.subr.bf16.mxu0 %v2442
    %4341 = vmatpush1.bf16.msra.mxu0 %v2441
    %4342 = vmatprep.subr.bf16.mxu0 %v2434
    %4343 = vmatpush1.bf16.msra.mxu0 %v2433
    %4344 = vmatprep.subr.bf16.mxu0 %v2426
    %4345 = vmatpush1.bf16.msra.mxu0 %v2425
    %4346 = vmatprep.subr.bf16.mxu0 %v2418
    %4347 = vmatpush1.bf16.msra.mxu0 %v2417
    %4348 = vmatprep.subr.bf16.mxu0 %v2538
    %4349 = vmatpush2.bf16.msra.mxu0 %v2537
    %4350 = vmatprep.subr.bf16.mxu0 %v2530
    %4351 = vmatpush2.bf16.msra.mxu0 %v2529
    %4352 = vmatprep.subr.bf16.mxu0 %v2522
    %4353 = vmatpush2.bf16.msra.mxu0 %v2521
    %4354 = vmatprep.subr.bf16.mxu0 %v2514
    %4355 = vmatpush2.bf16.msra.mxu0 %v2513
    %4356 = vmatprep.subr.bf16.mxu0 %v2506
    %4357 = vmatpush2.bf16.msra.mxu0 %v2505
    %4358 = vmatprep.subr.bf16.mxu0 %v2498
    %4359 = vmatpush2.bf16.msra.mxu0 %v2497
    %4360 = vmatprep.subr.bf16.mxu0 %v2490
    %4361 = vmatpush2.bf16.msra.mxu0 %v2489
    %4362 = vmatprep.subr.bf16.mxu0 %v2482
    %4363 = vmatpush2.bf16.msra.mxu0 %v2481
    %4364 = vmatprep.mubr.bf16.mxu0 %v1750
    %4365 = vmatmul.mubr.bf16.gmra.mxu0 %v1749
    %v4366 = vpop.f32.mrf.mxu0
    %v4367 = vadd.f32 %v4326, %v4366
    %v4368 = vpop.f32.mrf.mxu0
    %v4369 = vadd.f32 %v4328, %v4368
    %v4370 = vpop.f32.mrf.mxu0
    %v4371 = vpop.f32.mrf.mxu0
    %4372 = vdwg.mxu0
    %4373 = vmatprep.subr.bf16.mxu0 %v2602
    %4374 = vmatpush1.bf16.msra.mxu0 %v2601
    %4375 = vmatprep.subr.bf16.mxu0 %v2594
    %4376 = vmatpush1.bf16.msra.mxu0 %v2593
    %4377 = vmatprep.subr.bf16.mxu0 %v2586
    %4378 = vmatpush1.bf16.msra.mxu0 %v2585
    %4379 = vmatprep.subr.bf16.mxu0 %v2578
    %4380 = vmatpush1.bf16.msra.mxu0 %v2577
    %4381 = vmatprep.subr.bf16.mxu0 %v2570
    %4382 = vmatpush1.bf16.msra.mxu0 %v2569
    %4383 = vmatprep.subr.bf16.mxu0 %v2562
    %4384 = vmatpush1.bf16.msra.mxu0 %v2561
    %4385 = vmatprep.subr.bf16.mxu0 %v2554
    %4386 = vmatpush1.bf16.msra.mxu0 %v2553
    %4387 = vmatprep.subr.bf16.mxu0 %v2546
    %4388 = vmatpush1.bf16.msra.mxu0 %v2545
    %4389 = vmatprep.subr.bf16.mxu0 %v2666
    %4390 = vmatpush2.bf16.msra.mxu0 %v2665
    %4391 = vmatprep.subr.bf16.mxu0 %v2658
    %4392 = vmatpush2.bf16.msra.mxu0 %v2657
    %4393 = vmatprep.subr.bf16.mxu0 %v2650
    %4394 = vmatpush2.bf16.msra.mxu0 %v2649
    %4395 = vmatprep.subr.bf16.mxu0 %v2642
    %4396 = vmatpush2.bf16.msra.mxu0 %v2641
    %4397 = vmatprep.subr.bf16.mxu0 %v2634
    %4398 = vmatpush2.bf16.msra.mxu0 %v2633
    %4399 = vmatprep.subr.bf16.mxu0 %v2626
    %4400 = vmatpush2.bf16.msra.mxu0 %v2625
    %4401 = vmatprep.subr.bf16.mxu0 %v2618
    %4402 = vmatpush2.bf16.msra.mxu0 %v2617
    %4403 = vmatprep.subr.bf16.mxu0 %v2610
    %4404 = vmatpush2.bf16.msra.mxu0 %v2609
    %4405 = vmatprep.mubr.bf16.mxu0 %v1752
    %4406 = vmatmul.mubr.bf16.gmra.mxu0 %v1751
    %v4407 = vpop.f32.mrf.mxu0
    %v4408 = vadd.f32 %v4367, %v4407
    %v4409 = vpop.f32.mrf.mxu0
    %v4410 = vadd.f32 %v4369, %v4409
    %v4411 = vpop.f32.mrf.mxu0
    %v4412 = vpop.f32.mrf.mxu0
    %4413 = vdwg.mxu0
    %4414 = vmatprep.subr.bf16.mxu0 %v2730
    %4415 = vmatpush1.bf16.msra.mxu0 %v2729
    %4416 = vmatprep.subr.bf16.mxu0 %v2722
    %4417 = vmatpush1.bf16.msra.mxu0 %v2721
    %4418 = vmatprep.subr.bf16.mxu0 %v2714
    %4419 = vmatpush1.bf16.msra.mxu0 %v2713
    %4420 = vmatprep.subr.bf16.mxu0 %v2706
    %4421 = vmatpush1.bf16.msra.mxu0 %v2705
    %4422 = vmatprep.subr.bf16.mxu0 %v2698
    %4423 = vmatpush1.bf16.msra.mxu0 %v2697
    %4424 = vmatprep.subr.bf16.mxu0 %v2690
    %4425 = vmatpush1.bf16.msra.mxu0 %v2689
    %4426 = vmatprep.subr.bf16.mxu0 %v2682
    %4427 = vmatpush1.bf16.msra.mxu0 %v2681
    %4428 = vmatprep.subr.bf16.mxu0 %v2674
    %4429 = vmatpush1.bf16.msra.mxu0 %v2673
    %4430 = vmatprep.subr.bf16.mxu0 %v2794
    %4431 = vmatpush2.bf16.msra.mxu0 %v2793
    %4432 = vmatprep.subr.bf16.mxu0 %v2786
    %4433 = vmatpush2.bf16.msra.mxu0 %v2785
    %4434 = vmatprep.subr.bf16.mxu0 %v2778
    %4435 = vmatpush2.bf16.msra.mxu0 %v2777
    %4436 = vmatprep.subr.bf16.mxu0 %v2770
    %4437 = vmatpush2.bf16.msra.mxu0 %v2769
    %4438 = vmatprep.subr.bf16.mxu0 %v2762
    %4439 = vmatpush2.bf16.msra.mxu0 %v2761
    %4440 = vmatprep.subr.bf16.mxu0 %v2754
    %4441 = vmatpush2.bf16.msra.mxu0 %v2753
    %4442 = vmatprep.subr.bf16.mxu0 %v2746
    %4443 = vmatpush2.bf16.msra.mxu0 %v2745
    %4444 = vmatprep.subr.bf16.mxu0 %v2738
    %4445 = vmatpush2.bf16.msra.mxu0 %v2737
    %4446 = vmatprep.mubr.bf16.mxu0 %v1754
    %4447 = vmatmul.mubr.bf16.gmra.mxu0 %v1753
    %v4448 = vpop.f32.mrf.mxu0
    %v4449 = vadd.f32 %v4408, %v4448
    %v4450 = vpop.f32.mrf.mxu0
    %v4451 = vadd.f32 %v4410, %v4450
    %v4452 = vpop.f32.mrf.mxu0
    %v4453 = vpop.f32.mrf.mxu0
    %4454 = vdwg.mxu0
    %4455 = vmatprep.subr.bf16.mxu0 %v2858
    %4456 = vmatpush1.bf16.msra.mxu0 %v2857
    %4457 = vmatprep.subr.bf16.mxu0 %v2850
    %4458 = vmatpush1.bf16.msra.mxu0 %v2849
    %4459 = vmatprep.subr.bf16.mxu0 %v2842
    %4460 = vmatpush1.bf16.msra.mxu0 %v2841
    %4461 = vmatprep.subr.bf16.mxu0 %v2834
    %4462 = vmatpush1.bf16.msra.mxu0 %v2833
    %4463 = vmatprep.subr.bf16.mxu0 %v2826
    %4464 = vmatpush1.bf16.msra.mxu0 %v2825
    %4465 = vmatprep.subr.bf16.mxu0 %v2818
    %4466 = vmatpush1.bf16.msra.mxu0 %v2817
    %4467 = vmatprep.subr.bf16.mxu0 %v2810
    %4468 = vmatpush1.bf16.msra.mxu0 %v2809
    %4469 = vmatprep.subr.bf16.mxu0 %v2802
    %4470 = vmatpush1.bf16.msra.mxu0 %v2801
    %4471 = vmatprep.subr.bf16.mxu0 %v2922
    %4472 = vmatpush2.bf16.msra.mxu0 %v2921
    %4473 = vmatprep.subr.bf16.mxu0 %v2914
    %4474 = vmatpush2.bf16.msra.mxu0 %v2913
    %4475 = vmatprep.subr.bf16.mxu0 %v2906
    %4476 = vmatpush2.bf16.msra.mxu0 %v2905
    %4477 = vmatprep.subr.bf16.mxu0 %v2898
    %4478 = vmatpush2.bf16.msra.mxu0 %v2897
    %4479 = vmatprep.subr.bf16.mxu0 %v2890
    %4480 = vmatpush2.bf16.msra.mxu0 %v2889
    %4481 = vmatprep.subr.bf16.mxu0 %v2882
    %4482 = vmatpush2.bf16.msra.mxu0 %v2881
    %4483 = vmatprep.subr.bf16.mxu0 %v2874
    %4484 = vmatpush2.bf16.msra.mxu0 %v2873
    %4485 = vmatprep.subr.bf16.mxu0 %v2866
    %4486 = vmatpush2.bf16.msra.mxu0 %v2865
    %4487 = vmatprep.mubr.bf16.mxu0 %v1756
    %4488 = vmatmul.mubr.bf16.gmra.mxu0 %v1755
    %v4489 = vpop.f32.mrf.mxu0
    %v4490 = vadd.f32 %v4449, %v4489
    %v4491 = vpop.f32.mrf.mxu0
    %v4492 = vadd.f32 %v4451, %v4491
    %v4493 = vpop.f32.mrf.mxu0
    %v4494 = vpop.f32.mrf.mxu0
    %4495 = vdwg.mxu0
    %4496 = vmatprep.subr.bf16.mxu0 %v2986
    %4497 = vmatpush1.bf16.msra.mxu0 %v2985
    %4498 = vmatprep.subr.bf16.mxu0 %v2978
    %4499 = vmatpush1.bf16.msra.mxu0 %v2977
    %4500 = vmatprep.subr.bf16.mxu0 %v2970
    %4501 = vmatpush1.bf16.msra.mxu0 %v2969
    %4502 = vmatprep.subr.bf16.mxu0 %v2962
    %4503 = vmatpush1.bf16.msra.mxu0 %v2961
    %4504 = vmatprep.subr.bf16.mxu0 %v2954
    %4505 = vmatpush1.bf16.msra.mxu0 %v2953
    %4506 = vmatprep.subr.bf16.mxu0 %v2946
    %4507 = vmatpush1.bf16.msra.mxu0 %v2945
    %4508 = vmatprep.subr.bf16.mxu0 %v2938
    %4509 = vmatpush1.bf16.msra.mxu0 %v2937
    %4510 = vmatprep.subr.bf16.mxu0 %v2930
    %4511 = vmatpush1.bf16.msra.mxu0 %v2929
    %4512 = vmatprep.subr.bf16.mxu0 %v3050
    %4513 = vmatpush2.bf16.msra.mxu0 %v3049
    %4514 = vmatprep.subr.bf16.mxu0 %v3042
    %4515 = vmatpush2.bf16.msra.mxu0 %v3041
    %4516 = vmatprep.subr.bf16.mxu0 %v3034
    %4517 = vmatpush2.bf16.msra.mxu0 %v3033
    %4518 = vmatprep.subr.bf16.mxu0 %v3026
    %4519 = vmatpush2.bf16.msra.mxu0 %v3025
    %4520 = vmatprep.subr.bf16.mxu0 %v3018
    %4521 = vmatpush2.bf16.msra.mxu0 %v3017
    %4522 = vmatprep.subr.bf16.mxu0 %v3010
    %4523 = vmatpush2.bf16.msra.mxu0 %v3009
    %4524 = vmatprep.subr.bf16.mxu0 %v3002
    %4525 = vmatpush2.bf16.msra.mxu0 %v3001
    %4526 = vmatprep.subr.bf16.mxu0 %v2994
    %4527 = vmatpush2.bf16.msra.mxu0 %v2993
    %4528 = vmatprep.mubr.bf16.mxu0 %v1758
    %4529 = vmatmul.mubr.bf16.gmra.mxu0 %v1757
    %v4530 = vpop.f32.mrf.mxu0
    %v4531 = vadd.f32 %v4490, %v4530
    %v4532 = vpop.f32.mrf.mxu0
    %v4533 = vadd.f32 %v4492, %v4532
    %v4534 = vpop.f32.mrf.mxu0
    %v4535 = vpop.f32.mrf.mxu0
    %4536 = vdwg.mxu0
    %4537 = vmatprep.subr.bf16.mxu0 %v3114
    %4538 = vmatpush1.bf16.msra.mxu0 %v3113
    %4539 = vmatprep.subr.bf16.mxu0 %v3106
    %4540 = vmatpush1.bf16.msra.mxu0 %v3105
    %4541 = vmatprep.subr.bf16.mxu0 %v3098
    %4542 = vmatpush1.bf16.msra.mxu0 %v3097
    %4543 = vmatprep.subr.bf16.mxu0 %v3090
    %4544 = vmatpush1.bf16.msra.mxu0 %v3089
    %4545 = vmatprep.subr.bf16.mxu0 %v3082
    %4546 = vmatpush1.bf16.msra.mxu0 %v3081
    %4547 = vmatprep.subr.bf16.mxu0 %v3074
    %4548 = vmatpush1.bf16.msra.mxu0 %v3073
    %4549 = vmatprep.subr.bf16.mxu0 %v3066
    %4550 = vmatpush1.bf16.msra.mxu0 %v3065
    %4551 = vmatprep.subr.bf16.mxu0 %v3058
    %4552 = vmatpush1.bf16.msra.mxu0 %v3057
    %4553 = vmatprep.subr.bf16.mxu0 %v3178
    %4554 = vmatpush2.bf16.msra.mxu0 %v3177
    %4555 = vmatprep.subr.bf16.mxu0 %v3170
    %4556 = vmatpush2.bf16.msra.mxu0 %v3169
    %4557 = vmatprep.subr.bf16.mxu0 %v3162
    %4558 = vmatpush2.bf16.msra.mxu0 %v3161
    %4559 = vmatprep.subr.bf16.mxu0 %v3154
    %4560 = vmatpush2.bf16.msra.mxu0 %v3153
    %4561 = vmatprep.subr.bf16.mxu0 %v3146
    %4562 = vmatpush2.bf16.msra.mxu0 %v3145
    %4563 = vmatprep.subr.bf16.mxu0 %v3138
    %4564 = vmatpush2.bf16.msra.mxu0 %v3137
    %4565 = vmatprep.subr.bf16.mxu0 %v3130
    %4566 = vmatpush2.bf16.msra.mxu0 %v3129
    %4567 = vmatprep.subr.bf16.mxu0 %v3122
    %4568 = vmatpush2.bf16.msra.mxu0 %v3121
    %4569 = vmatprep.mubr.bf16.mxu0 %v1760
    %4570 = vmatmul.mubr.bf16.gmra.mxu0 %v1759
    %v4571 = vpop.f32.mrf.mxu0
    %v4572 = vadd.f32 %v4531, %v4571
    %v4573 = vpop.f32.mrf.mxu0
    %v4574 = vadd.f32 %v4533, %v4573
    %v4575 = vpop.f32.mrf.mxu0
    %v4576 = vpop.f32.mrf.mxu0
    %4577 = vdwg.mxu0
    %4578 = vmatprep.subr.bf16.mxu0 %v3242
    %4579 = vmatpush1.bf16.msra.mxu0 %v3241
    %4580 = vmatprep.subr.bf16.mxu0 %v3234
    %4581 = vmatpush1.bf16.msra.mxu0 %v3233
    %4582 = vmatprep.subr.bf16.mxu0 %v3226
    %4583 = vmatpush1.bf16.msra.mxu0 %v3225
    %4584 = vmatprep.subr.bf16.mxu0 %v3218
    %4585 = vmatpush1.bf16.msra.mxu0 %v3217
    %4586 = vmatprep.subr.bf16.mxu0 %v3210
    %4587 = vmatpush1.bf16.msra.mxu0 %v3209
    %4588 = vmatprep.subr.bf16.mxu0 %v3202
    %4589 = vmatpush1.bf16.msra.mxu0 %v3201
    %4590 = vmatprep.subr.bf16.mxu0 %v3194
    %4591 = vmatpush1.bf16.msra.mxu0 %v3193
    %4592 = vmatprep.subr.bf16.mxu0 %v3186
    %4593 = vmatpush1.bf16.msra.mxu0 %v3185
    %4594 = vmatprep.subr.bf16.mxu0 %v3306
    %4595 = vmatpush2.bf16.msra.mxu0 %v3305
    %4596 = vmatprep.subr.bf16.mxu0 %v3298
    %4597 = vmatpush2.bf16.msra.mxu0 %v3297
    %4598 = vmatprep.subr.bf16.mxu0 %v3290
    %4599 = vmatpush2.bf16.msra.mxu0 %v3289
    %4600 = vmatprep.subr.bf16.mxu0 %v3282
    %4601 = vmatpush2.bf16.msra.mxu0 %v3281
    %4602 = vmatprep.subr.bf16.mxu0 %v3274
    %4603 = vmatpush2.bf16.msra.mxu0 %v3273
    %4604 = vmatprep.subr.bf16.mxu0 %v3266
    %4605 = vmatpush2.bf16.msra.mxu0 %v3265
    %4606 = vmatprep.subr.bf16.mxu0 %v3258
    %4607 = vmatpush2.bf16.msra.mxu0 %v3257
    %4608 = vmatprep.subr.bf16.mxu0 %v3250
    %4609 = vmatpush2.bf16.msra.mxu0 %v3249
    %4610 = vmatprep.mubr.bf16.mxu0 %v1762
    %4611 = vmatmul.mubr.bf16.gmra.mxu0 %v1761
    %v4612 = vpop.f32.mrf.mxu0
    %v4613 = vadd.f32 %v4572, %v4612
    %v4614 = vpop.f32.mrf.mxu0
    %v4615 = vadd.f32 %v4574, %v4614
    %v4616 = vpop.f32.mrf.mxu0
    %v4617 = vpop.f32.mrf.mxu0
    %4618 = vdwg.mxu0
    %v4619 = vld [vmem:[#allocation13 + $0x10] sm:$0xff]
    %v4621 = vlaneseq
    %v4622 = vshrl.u32 %v4621, 7
    %v4623 = vsub.s32 0, %v4622
    %v4624 = vrot.slane %v4619, %v4623
    %v4625 = vlaneseq
    %v4626 = vshrl.u32 %v4625, 7
    %v4627 = vsub.s32 1, %v4626
    %v4628 = vrot.slane %v4619, %v4627
    %v4629 = vlaneseq
    %v4630 = vshrl.u32 %v4629, 7
    %v4631 = vsub.s32 2, %v4630
    %v4632 = vrot.slane %v4619, %v4631
    %v4633 = vlaneseq
    %v4634 = vshrl.u32 %v4633, 7
    %v4635 = vsub.s32 3, %v4634
    %v4636 = vrot.slane %v4619, %v4635
    %v4637 = vlaneseq
    %v4638 = vshrl.u32 %v4637, 7
    %v4639 = vsub.s32 4, %v4638
    %v4640 = vrot.slane %v4619, %v4639
    %v4641 = vlaneseq
    %v4642 = vshrl.u32 %v4641, 7
    %v4643 = vsub.s32 5, %v4642
    %v4644 = vrot.slane %v4619, %v4643
    %v4645 = vlaneseq
    %v4646 = vshrl.u32 %v4645, 7
    %v4647 = vsub.s32 6, %v4646
    %v4648 = vrot.slane %v4619, %v4647
    %v4649 = vlaneseq
    %v4650 = vshrl.u32 %v4649, 7
    %v4651 = vsub.s32 7, %v4650
    %v4652 = vrot.slane %v4619, %v4651
    %v4661 = vmul.f32 %v3629, %v4624
    %v4662 = vmul.f32 %v3631, %v4628
    %v4663 = vmul.f32 %v3957, %v4632
    %v4664 = vmul.f32 %v3959, %v4636
    %v4665 = vmul.f32 %v4285, %v4640
    %v4666 = vmul.f32 %v4287, %v4644
    %v4667 = vmul.f32 %v4613, %v4648
    %v4668 = vmul.f32 %v4615, %v4652
    %v4669 = vld [vmem:[#allocation15 + $0x10] sm:$0xff]
    %v4671 = vlaneseq
    %v4672 = vshrl.u32 %v4671, 7
    %v4673 = vsub.s32 0, %v4672
    %v4674 = vrot.slane %v4669, %v4673
    %v4675 = vlaneseq
    %v4676 = vshrl.u32 %v4675, 7
    %v4677 = vsub.s32 1, %v4676
    %v4678 = vrot.slane %v4669, %v4677
    %v4679 = vlaneseq
    %v4680 = vshrl.u32 %v4679, 7
    %v4681 = vsub.s32 2, %v4680
    %v4682 = vrot.slane %v4669, %v4681
    %v4683 = vlaneseq
    %v4684 = vshrl.u32 %v4683, 7
    %v4685 = vsub.s32 3, %v4684
    %v4686 = vrot.slane %v4669, %v4685
    %v4687 = vlaneseq
    %v4688 = vshrl.u32 %v4687, 7
    %v4689 = vsub.s32 4, %v4688
    %v4690 = vrot.slane %v4669, %v4689
    %v4691 = vlaneseq
    %v4692 = vshrl.u32 %v4691, 7
    %v4693 = vsub.s32 5, %v4692
    %v4694 = vrot.slane %v4669, %v4693
    %v4695 = vlaneseq
    %v4696 = vshrl.u32 %v4695, 7
    %v4697 = vsub.s32 6, %v4696
    %v4698 = vrot.slane %v4669, %v4697
    %v4699 = vlaneseq
    %v4700 = vshrl.u32 %v4699, 7
    %v4701 = vsub.s32 7, %v4700
    %v4702 = vrot.slane %v4669, %v4701
    %v4711 = vadd.f32 %v4661, %v4674
    %v4712 = vadd.f32 %v4662, %v4678
    %v4713 = vadd.f32 %v4663, %v4682
    %v4714 = vadd.f32 %v4664, %v4686
    %v4715 = vadd.f32 %v4665, %v4690
    %v4716 = vadd.f32 %v4666, %v4694
    %v4717 = vadd.f32 %v4667, %v4698
    %v4718 = vadd.f32 %v4668, %v4702
    %vm4719 = vcmp.ge.f32.partialorder %v4711, 0.0
    %vm4720 = vcmp.ge.f32.partialorder %v4712, 0.0
    %vm4721 = vcmp.ge.f32.partialorder %v4713, 0.0
    %vm4722 = vcmp.ge.f32.partialorder %v4714, 0.0
    %vm4723 = vcmp.ge.f32.partialorder %v4715, 0.0
    %vm4724 = vcmp.ge.f32.partialorder %v4716, 0.0
    %vm4725 = vcmp.ge.f32.partialorder %v4717, 0.0
    %vm4726 = vcmp.ge.f32.partialorder %v4718, 0.0
    %v4727 = vmul.f32 %v4711, 0.01
    %v4728 = vmul.f32 %v4712, 0.01
    %v4729 = vmul.f32 %v4713, 0.01
    %v4730 = vmul.f32 %v4714, 0.01
    %v4731 = vmul.f32 %v4715, 0.01
    %v4732 = vmul.f32 %v4716, 0.01
    %v4733 = vmul.f32 %v4717, 0.01
    %v4734 = vmul.f32 %v4718, 0.01
    %v4735 = vsel %vm4719, %v4711, %v4727
    %v4736 = vsel %vm4720, %v4712, %v4728
    %v4737 = vsel %vm4721, %v4713, %v4729
    %v4738 = vsel %vm4722, %v4714, %v4730
    %v4739 = vsel %vm4723, %v4715, %v4731
    %v4740 = vsel %vm4724, %v4716, %v4732
    %v4741 = vsel %vm4725, %v4717, %v4733
    %v4742 = vsel %vm4726, %v4718, %v4734
    %v4743 = vpack.c.bf16 %v4735, %v4735
    %v4744 = vpack.c.bf16 %v4736, %v4736
    %v4745 = vpack.c.bf16 %v4737, %v4737
    %v4746 = vpack.c.bf16 %v4738, %v4738
    %v4747 = vpack.c.bf16 %v4739, %v4739
    %v4748 = vpack.c.bf16 %v4740, %v4740
    %v4749 = vpack.c.bf16 %v4741, %v4741
    %v4750 = vpack.c.bf16 %v4742, %v4742
    // Predicated region
    $region66: #{tpu_custom_call.1} parent=1 // pred_check
      %p4751 = pneg %p58
    $region67: #{tpu_custom_call.1} parent=1 // pred_check_branch
      %4753 = sbr.rel (%p4751) target = $region69
    $region68: #{tpu_custom_call.1} parent=1 // pred_region
      %s4754 = scalar_lea.sflag [#allocation9], 2
      %s4755 = smul.u32 2, 128
      %s4756 = smul.u32 %s4755, 4
      %s4757 = sshll.u32 %s4756, 4
      %4758 = dma.done %s4754, %s4757
    $region69: #{tpu_custom_call.1} parent=1 // pred_fallthru
      _
    %v4759 = vld [vmem:[#allocation4] sm:$0xff]
    %v4760 = vld [vmem:[#allocation4 + $0x8] sm:$0xff]
    %v4761 = vld [vmem:[#allocation4 + $0x10] sm:$0xff]
    %v4762 = vld [vmem:[#allocation4 + $0x18] sm:$0xff]
    %v4763 = vld [vmem:[#allocation4 + $0x20] sm:$0xff]
    %v4764 = vld [vmem:[#allocation4 + $0x28] sm:$0xff]
    %v4765 = vld [vmem:[#allocation4 + $0x30] sm:$0xff]
    %v4766 = vld [vmem:[#allocation4 + $0x38] sm:$0xff]
    %v4767 = vld [vmem:[#allocation4 + $0x40] sm:$0xff]
    %v4768 = vld [vmem:[#allocation4 + $0x48] sm:$0xff]
    %v4769 = vld [vmem:[#allocation4 + $0x50] sm:$0xff]
    %v4770 = vld [vmem:[#allocation4 + $0x58] sm:$0xff]
    %v4771 = vld [vmem:[#allocation4 + $0x60] sm:$0xff]
    %v4772 = vld [vmem:[#allocation4 + $0x68] sm:$0xff]
    %v4773 = vld [vmem:[#allocation4 + $0x70] sm:$0xff]
    %v4774 = vld [vmem:[#allocation4 + $0x78] sm:$0xff]
    %v4775 = vld [vmem:[#allocation4 + $0x80] sm:$0xff]
    %v4776 = vld [vmem:[#allocation4 + $0x88] sm:$0xff]
    %v4777 = vld [vmem:[#allocation4 + $0x90] sm:$0xff]
    %v4778 = vld [vmem:[#allocation4 + $0x98] sm:$0xff]
    %v4779 = vld [vmem:[#allocation4 + $0xa0] sm:$0xff]
    %v4780 = vld [vmem:[#allocation4 + $0xa8] sm:$0xff]
    %v4781 = vld [vmem:[#allocation4 + $0xb0] sm:$0xff]
    %v4782 = vld [vmem:[#allocation4 + $0xb8] sm:$0xff]
    %v4783 = vld [vmem:[#allocation4 + $0xc0] sm:$0xff]
    %v4784 = vld [vmem:[#allocation4 + $0xc8] sm:$0xff]
    %v4785 = vld [vmem:[#allocation4 + $0xd0] sm:$0xff]
    %v4786 = vld [vmem:[#allocation4 + $0xd8] sm:$0xff]
    %v4787 = vld [vmem:[#allocation4 + $0xe0] sm:$0xff]
    %v4788 = vld [vmem:[#allocation4 + $0xe8] sm:$0xff]
    %v4789 = vld [vmem:[#allocation4 + $0xf0] sm:$0xff]
    %v4790 = vld [vmem:[#allocation4 + $0xf8] sm:$0xff]
    %v4791 = vld [vmem:[#allocation4 + $0x100] sm:$0xff]
    %v4792 = vld [vmem:[#allocation4 + $0x108] sm:$0xff]
    %v4793 = vld [vmem:[#allocation4 + $0x110] sm:$0xff]
    %v4794 = vld [vmem:[#allocation4 + $0x118] sm:$0xff]
    %v4795 = vld [vmem:[#allocation4 + $0x120] sm:$0xff]
    %v4796 = vld [vmem:[#allocation4 + $0x128] sm:$0xff]
    %v4797 = vld [vmem:[#allocation4 + $0x130] sm:$0xff]
    %v4798 = vld [vmem:[#allocation4 + $0x138] sm:$0xff]
    %v4799 = vld [vmem:[#allocation4 + $0x140] sm:$0xff]
    %v4800 = vld [vmem:[#allocation4 + $0x148] sm:$0xff]
    %v4801 = vld [vmem:[#allocation4 + $0x150] sm:$0xff]
    %v4802 = vld [vmem:[#allocation4 + $0x158] sm:$0xff]
    %v4803 = vld [vmem:[#allocation4 + $0x160] sm:$0xff]
    %v4804 = vld [vmem:[#allocation4 + $0x168] sm:$0xff]
    %v4805 = vld [vmem:[#allocation4 + $0x170] sm:$0xff]
    %v4806 = vld [vmem:[#allocation4 + $0x178] sm:$0xff]
    %v4807 = vld [vmem:[#allocation4 + $0x180] sm:$0xff]
    %v4808 = vld [vmem:[#allocation4 + $0x188] sm:$0xff]
    %v4809 = vld [vmem:[#allocation4 + $0x190] sm:$0xff]
    %v4810 = vld [vmem:[#allocation4 + $0x198] sm:$0xff]
    %v4811 = vld [vmem:[#allocation4 + $0x1a0] sm:$0xff]
    %v4812 = vld [vmem:[#allocation4 + $0x1a8] sm:$0xff]
    %v4813 = vld [vmem:[#allocation4 + $0x1b0] sm:$0xff]
    %v4814 = vld [vmem:[#allocation4 + $0x1b8] sm:$0xff]
    %v4815 = vld [vmem:[#allocation4 + $0x1c0] sm:$0xff]
    %v4816 = vld [vmem:[#allocation4 + $0x1c8] sm:$0xff]
    %v4817 = vld [vmem:[#allocation4 + $0x1d0] sm:$0xff]
    %v4818 = vld [vmem:[#allocation4 + $0x1d8] sm:$0xff]
    %v4819 = vld [vmem:[#allocation4 + $0x1e0] sm:$0xff]
    %v4820 = vld [vmem:[#allocation4 + $0x1e8] sm:$0xff]
    %v4821 = vld [vmem:[#allocation4 + $0x1f0] sm:$0xff]
    %v4822 = vld [vmem:[#allocation4 + $0x1f8] sm:$0xff]
    %v4823 = vld [vmem:[#allocation4 + $0x200] sm:$0xff]
    %v4824 = vld [vmem:[#allocation4 + $0x208] sm:$0xff]
    %v4825 = vld [vmem:[#allocation4 + $0x210] sm:$0xff]
    %v4826 = vld [vmem:[#allocation4 + $0x218] sm:$0xff]
    %v4827 = vld [vmem:[#allocation4 + $0x220] sm:$0xff]
    %v4828 = vld [vmem:[#allocation4 + $0x228] sm:$0xff]
    %v4829 = vld [vmem:[#allocation4 + $0x230] sm:$0xff]
    %v4830 = vld [vmem:[#allocation4 + $0x238] sm:$0xff]
    %v4831 = vld [vmem:[#allocation4 + $0x240] sm:$0xff]
    %v4832 = vld [vmem:[#allocation4 + $0x248] sm:$0xff]
    %v4833 = vld [vmem:[#allocation4 + $0x250] sm:$0xff]
    %v4834 = vld [vmem:[#allocation4 + $0x258] sm:$0xff]
    %v4835 = vld [vmem:[#allocation4 + $0x260] sm:$0xff]
    %v4836 = vld [vmem:[#allocation4 + $0x268] sm:$0xff]
    %v4837 = vld [vmem:[#allocation4 + $0x270] sm:$0xff]
    %v4838 = vld [vmem:[#allocation4 + $0x278] sm:$0xff]
    %v4839 = vld [vmem:[#allocation4 + $0x280] sm:$0xff]
    %v4840 = vld [vmem:[#allocation4 + $0x288] sm:$0xff]
    %v4841 = vld [vmem:[#allocation4 + $0x290] sm:$0xff]
    %v4842 = vld [vmem:[#allocation4 + $0x298] sm:$0xff]
    %v4843 = vld [vmem:[#allocation4 + $0x2a0] sm:$0xff]
    %v4844 = vld [vmem:[#allocation4 + $0x2a8] sm:$0xff]
    %v4845 = vld [vmem:[#allocation4 + $0x2b0] sm:$0xff]
    %v4846 = vld [vmem:[#allocation4 + $0x2b8] sm:$0xff]
    %v4847 = vld [vmem:[#allocation4 + $0x2c0] sm:$0xff]
    %v4848 = vld [vmem:[#allocation4 + $0x2c8] sm:$0xff]
    %v4849 = vld [vmem:[#allocation4 + $0x2d0] sm:$0xff]
    %v4850 = vld [vmem:[#allocation4 + $0x2d8] sm:$0xff]
    %v4851 = vld [vmem:[#allocation4 + $0x2e0] sm:$0xff]
    %v4852 = vld [vmem:[#allocation4 + $0x2e8] sm:$0xff]
    %v4853 = vld [vmem:[#allocation4 + $0x2f0] sm:$0xff]
    %v4854 = vld [vmem:[#allocation4 + $0x2f8] sm:$0xff]
    %v4855 = vld [vmem:[#allocation4 + $0x300] sm:$0xff]
    %v4856 = vld [vmem:[#allocation4 + $0x308] sm:$0xff]
    %v4857 = vld [vmem:[#allocation4 + $0x310] sm:$0xff]
    %v4858 = vld [vmem:[#allocation4 + $0x318] sm:$0xff]
    %v4859 = vld [vmem:[#allocation4 + $0x320] sm:$0xff]
    %v4860 = vld [vmem:[#allocation4 + $0x328] sm:$0xff]
    %v4861 = vld [vmem:[#allocation4 + $0x330] sm:$0xff]
    %v4862 = vld [vmem:[#allocation4 + $0x338] sm:$0xff]
    %v4863 = vld [vmem:[#allocation4 + $0x340] sm:$0xff]
    %v4864 = vld [vmem:[#allocation4 + $0x348] sm:$0xff]
    %v4865 = vld [vmem:[#allocation4 + $0x350] sm:$0xff]
    %v4866 = vld [vmem:[#allocation4 + $0x358] sm:$0xff]
    %v4867 = vld [vmem:[#allocation4 + $0x360] sm:$0xff]
    %v4868 = vld [vmem:[#allocation4 + $0x368] sm:$0xff]
    %v4869 = vld [vmem:[#allocation4 + $0x370] sm:$0xff]
    %v4870 = vld [vmem:[#allocation4 + $0x378] sm:$0xff]
    %v4871 = vld [vmem:[#allocation4 + $0x380] sm:$0xff]
    %v4872 = vld [vmem:[#allocation4 + $0x388] sm:$0xff]
    %v4873 = vld [vmem:[#allocation4 + $0x390] sm:$0xff]
    %v4874 = vld [vmem:[#allocation4 + $0x398] sm:$0xff]
    %v4875 = vld [vmem:[#allocation4 + $0x3a0] sm:$0xff]
    %v4876 = vld [vmem:[#allocation4 + $0x3a8] sm:$0xff]
    %v4877 = vld [vmem:[#allocation4 + $0x3b0] sm:$0xff]
    %v4878 = vld [vmem:[#allocation4 + $0x3b8] sm:$0xff]
    %v4879 = vld [vmem:[#allocation4 + $0x3c0] sm:$0xff]
    %v4880 = vld [vmem:[#allocation4 + $0x3c8] sm:$0xff]
    %v4881 = vld [vmem:[#allocation4 + $0x3d0] sm:$0xff]
    %v4882 = vld [vmem:[#allocation4 + $0x3d8] sm:$0xff]
    %v4883 = vld [vmem:[#allocation4 + $0x3e0] sm:$0xff]
    %v4884 = vld [vmem:[#allocation4 + $0x3e8] sm:$0xff]
    %v4885 = vld [vmem:[#allocation4 + $0x3f0] sm:$0xff]
    %v4886 = vld [vmem:[#allocation4 + $0x3f8] sm:$0xff]
    %v4887 = vunpack.c.l.s8.bf16 %v4759
    %v4888 = vunpack.c.l.s8.bf16 %v4760
    %v4889 = vunpack.c.l.s8.bf16 %v4761
    %v4890 = vunpack.c.l.s8.bf16 %v4762
    %v4891 = vunpack.c.h.s8.bf16 %v4759
    %v4892 = vunpack.c.h.s8.bf16 %v4760
    %v4893 = vunpack.c.h.s8.bf16 %v4761
    %v4894 = vunpack.c.h.s8.bf16 %v4762
    %v4895 = vunpack.c.l.s8.bf16 %v4763
    %v4896 = vunpack.c.l.s8.bf16 %v4764
    %v4897 = vunpack.c.l.s8.bf16 %v4765
    %v4898 = vunpack.c.l.s8.bf16 %v4766
    %v4899 = vunpack.c.h.s8.bf16 %v4763
    %v4900 = vunpack.c.h.s8.bf16 %v4764
    %v4901 = vunpack.c.h.s8.bf16 %v4765
    %v4902 = vunpack.c.h.s8.bf16 %v4766
    %v4903 = vunpack.c.l.s8.bf16 %v4767
    %v4904 = vunpack.c.l.s8.bf16 %v4768
    %v4905 = vunpack.c.l.s8.bf16 %v4769
    %v4906 = vunpack.c.l.s8.bf16 %v4770
    %v4907 = vunpack.c.h.s8.bf16 %v4767
    %v4908 = vunpack.c.h.s8.bf16 %v4768
    %v4909 = vunpack.c.h.s8.bf16 %v4769
    %v4910 = vunpack.c.h.s8.bf16 %v4770
    %v4911 = vunpack.c.l.s8.bf16 %v4771
    %v4912 = vunpack.c.l.s8.bf16 %v4772
    %v4913 = vunpack.c.l.s8.bf16 %v4773
    %v4914 = vunpack.c.l.s8.bf16 %v4774
    %v4915 = vunpack.c.h.s8.bf16 %v4771
    %v4916 = vunpack.c.h.s8.bf16 %v4772
    %v4917 = vunpack.c.h.s8.bf16 %v4773
    %v4918 = vunpack.c.h.s8.bf16 %v4774
    %v4919 = vunpack.c.l.s8.bf16 %v4775
    %v4920 = vunpack.c.l.s8.bf16 %v4776
    %v4921 = vunpack.c.l.s8.bf16 %v4777
    %v4922 = vunpack.c.l.s8.bf16 %v4778
    %v4923 = vunpack.c.h.s8.bf16 %v4775
    %v4924 = vunpack.c.h.s8.bf16 %v4776
    %v4925 = vunpack.c.h.s8.bf16 %v4777
    %v4926 = vunpack.c.h.s8.bf16 %v4778
    %v4927 = vunpack.c.l.s8.bf16 %v4779
    %v4928 = vunpack.c.l.s8.bf16 %v4780
    %v4929 = vunpack.c.l.s8.bf16 %v4781
    %v4930 = vunpack.c.l.s8.bf16 %v4782
    %v4931 = vunpack.c.h.s8.bf16 %v4779
    %v4932 = vunpack.c.h.s8.bf16 %v4780
    %v4933 = vunpack.c.h.s8.bf16 %v4781
    %v4934 = vunpack.c.h.s8.bf16 %v4782
    %v4935 = vunpack.c.l.s8.bf16 %v4783
    %v4936 = vunpack.c.l.s8.bf16 %v4784
    %v4937 = vunpack.c.l.s8.bf16 %v4785
    %v4938 = vunpack.c.l.s8.bf16 %v4786
    %v4939 = vunpack.c.h.s8.bf16 %v4783
    %v4940 = vunpack.c.h.s8.bf16 %v4784
    %v4941 = vunpack.c.h.s8.bf16 %v4785
    %v4942 = vunpack.c.h.s8.bf16 %v4786
    %v4943 = vunpack.c.l.s8.bf16 %v4787
    %v4944 = vunpack.c.l.s8.bf16 %v4788
    %v4945 = vunpack.c.l.s8.bf16 %v4789
    %v4946 = vunpack.c.l.s8.bf16 %v4790
    %v4947 = vunpack.c.h.s8.bf16 %v4787
    %v4948 = vunpack.c.h.s8.bf16 %v4788
    %v4949 = vunpack.c.h.s8.bf16 %v4789
    %v4950 = vunpack.c.h.s8.bf16 %v4790
    %v4951 = vunpack.c.l.s8.bf16 %v4791
    %v4952 = vunpack.c.l.s8.bf16 %v4792
    %v4953 = vunpack.c.l.s8.bf16 %v4793
    %v4954 = vunpack.c.l.s8.bf16 %v4794
    %v4955 = vunpack.c.h.s8.bf16 %v4791
    %v4956 = vunpack.c.h.s8.bf16 %v4792
    %v4957 = vunpack.c.h.s8.bf16 %v4793
    %v4958 = vunpack.c.h.s8.bf16 %v4794
    %v4959 = vunpack.c.l.s8.bf16 %v4795
    %v4960 = vunpack.c.l.s8.bf16 %v4796
    %v4961 = vunpack.c.l.s8.bf16 %v4797
    %v4962 = vunpack.c.l.s8.bf16 %v4798
    %v4963 = vunpack.c.h.s8.bf16 %v4795
    %v4964 = vunpack.c.h.s8.bf16 %v4796
    %v4965 = vunpack.c.h.s8.bf16 %v4797
    %v4966 = vunpack.c.h.s8.bf16 %v4798
    %v4967 = vunpack.c.l.s8.bf16 %v4799
    %v4968 = vunpack.c.l.s8.bf16 %v4800
    %v4969 = vunpack.c.l.s8.bf16 %v4801
    %v4970 = vunpack.c.l.s8.bf16 %v4802
    %v4971 = vunpack.c.h.s8.bf16 %v4799
    %v4972 = vunpack.c.h.s8.bf16 %v4800
    %v4973 = vunpack.c.h.s8.bf16 %v4801
    %v4974 = vunpack.c.h.s8.bf16 %v4802
    %v4975 = vunpack.c.l.s8.bf16 %v4803
    %v4976 = vunpack.c.l.s8.bf16 %v4804
    %v4977 = vunpack.c.l.s8.bf16 %v4805
    %v4978 = vunpack.c.l.s8.bf16 %v4806
    %v4979 = vunpack.c.h.s8.bf16 %v4803
    %v4980 = vunpack.c.h.s8.bf16 %v4804
    %v4981 = vunpack.c.h.s8.bf16 %v4805
    %v4982 = vunpack.c.h.s8.bf16 %v4806
    %v4983 = vunpack.c.l.s8.bf16 %v4807
    %v4984 = vunpack.c.l.s8.bf16 %v4808
    %v4985 = vunpack.c.l.s8.bf16 %v4809
    %v4986 = vunpack.c.l.s8.bf16 %v4810
    %v4987 = vunpack.c.h.s8.bf16 %v4807
    %v4988 = vunpack.c.h.s8.bf16 %v4808
    %v4989 = vunpack.c.h.s8.bf16 %v4809
    %v4990 = vunpack.c.h.s8.bf16 %v4810
    %v4991 = vunpack.c.l.s8.bf16 %v4811
    %v4992 = vunpack.c.l.s8.bf16 %v4812
    %v4993 = vunpack.c.l.s8.bf16 %v4813
    %v4994 = vunpack.c.l.s8.bf16 %v4814
    %v4995 = vunpack.c.h.s8.bf16 %v4811
    %v4996 = vunpack.c.h.s8.bf16 %v4812
    %v4997 = vunpack.c.h.s8.bf16 %v4813
    %v4998 = vunpack.c.h.s8.bf16 %v4814
    %v4999 = vunpack.c.l.s8.bf16 %v4815
    %v5000 = vunpack.c.l.s8.bf16 %v4816
    %v5001 = vunpack.c.l.s8.bf16 %v4817
    %v5002 = vunpack.c.l.s8.bf16 %v4818
    %v5003 = vunpack.c.h.s8.bf16 %v4815
    %v5004 = vunpack.c.h.s8.bf16 %v4816
    %v5005 = vunpack.c.h.s8.bf16 %v4817
    %v5006 = vunpack.c.h.s8.bf16 %v4818
    %v5007 = vunpack.c.l.s8.bf16 %v4819
    %v5008 = vunpack.c.l.s8.bf16 %v4820
    %v5009 = vunpack.c.l.s8.bf16 %v4821
    %v5010 = vunpack.c.l.s8.bf16 %v4822
    %v5011 = vunpack.c.h.s8.bf16 %v4819
    %v5012 = vunpack.c.h.s8.bf16 %v4820
    %v5013 = vunpack.c.h.s8.bf16 %v4821
    %v5014 = vunpack.c.h.s8.bf16 %v4822
    %v5015 = vunpack.c.l.s8.bf16 %v4823
    %v5016 = vunpack.c.l.s8.bf16 %v4824
    %v5017 = vunpack.c.l.s8.bf16 %v4825
    %v5018 = vunpack.c.l.s8.bf16 %v4826
    %v5019 = vunpack.c.h.s8.bf16 %v4823
    %v5020 = vunpack.c.h.s8.bf16 %v4824
    %v5021 = vunpack.c.h.s8.bf16 %v4825
    %v5022 = vunpack.c.h.s8.bf16 %v4826
    %v5023 = vunpack.c.l.s8.bf16 %v4827
    %v5024 = vunpack.c.l.s8.bf16 %v4828
    %v5025 = vunpack.c.l.s8.bf16 %v4829
    %v5026 = vunpack.c.l.s8.bf16 %v4830
    %v5027 = vunpack.c.h.s8.bf16 %v4827
    %v5028 = vunpack.c.h.s8.bf16 %v4828
    %v5029 = vunpack.c.h.s8.bf16 %v4829
    %v5030 = vunpack.c.h.s8.bf16 %v4830
    %v5031 = vunpack.c.l.s8.bf16 %v4831
    %v5032 = vunpack.c.l.s8.bf16 %v4832
    %v5033 = vunpack.c.l.s8.bf16 %v4833
    %v5034 = vunpack.c.l.s8.bf16 %v4834
    %v5035 = vunpack.c.h.s8.bf16 %v4831
    %v5036 = vunpack.c.h.s8.bf16 %v4832
    %v5037 = vunpack.c.h.s8.bf16 %v4833
    %v5038 = vunpack.c.h.s8.bf16 %v4834
    %v5039 = vunpack.c.l.s8.bf16 %v4835
    %v5040 = vunpack.c.l.s8.bf16 %v4836
    %v5041 = vunpack.c.l.s8.bf16 %v4837
    %v5042 = vunpack.c.l.s8.bf16 %v4838
    %v5043 = vunpack.c.h.s8.bf16 %v4835
    %v5044 = vunpack.c.h.s8.bf16 %v4836
    %v5045 = vunpack.c.h.s8.bf16 %v4837
    %v5046 = vunpack.c.h.s8.bf16 %v4838
    %v5047 = vunpack.c.l.s8.bf16 %v4839
    %v5048 = vunpack.c.l.s8.bf16 %v4840
    %v5049 = vunpack.c.l.s8.bf16 %v4841
    %v5050 = vunpack.c.l.s8.bf16 %v4842
    %v5051 = vunpack.c.h.s8.bf16 %v4839
    %v5052 = vunpack.c.h.s8.bf16 %v4840
    %v5053 = vunpack.c.h.s8.bf16 %v4841
    %v5054 = vunpack.c.h.s8.bf16 %v4842
    %v5055 = vunpack.c.l.s8.bf16 %v4843
    %v5056 = vunpack.c.l.s8.bf16 %v4844
    %v5057 = vunpack.c.l.s8.bf16 %v4845
    %v5058 = vunpack.c.l.s8.bf16 %v4846
    %v5059 = vunpack.c.h.s8.bf16 %v4843
    %v5060 = vunpack.c.h.s8.bf16 %v4844
    %v5061 = vunpack.c.h.s8.bf16 %v4845
    %v5062 = vunpack.c.h.s8.bf16 %v4846
    %v5063 = vunpack.c.l.s8.bf16 %v4847
    %v5064 = vunpack.c.l.s8.bf16 %v4848
    %v5065 = vunpack.c.l.s8.bf16 %v4849
    %v5066 = vunpack.c.l.s8.bf16 %v4850
    %v5067 = vunpack.c.h.s8.bf16 %v4847
    %v5068 = vunpack.c.h.s8.bf16 %v4848
    %v5069 = vunpack.c.h.s8.bf16 %v4849
    %v5070 = vunpack.c.h.s8.bf16 %v4850
    %v5071 = vunpack.c.l.s8.bf16 %v4851
    %v5072 = vunpack.c.l.s8.bf16 %v4852
    %v5073 = vunpack.c.l.s8.bf16 %v4853
    %v5074 = vunpack.c.l.s8.bf16 %v4854
    %v5075 = vunpack.c.h.s8.bf16 %v4851
    %v5076 = vunpack.c.h.s8.bf16 %v4852
    %v5077 = vunpack.c.h.s8.bf16 %v4853
    %v5078 = vunpack.c.h.s8.bf16 %v4854
    %v5079 = vunpack.c.l.s8.bf16 %v4855
    %v5080 = vunpack.c.l.s8.bf16 %v4856
    %v5081 = vunpack.c.l.s8.bf16 %v4857
    %v5082 = vunpack.c.l.s8.bf16 %v4858
    %v5083 = vunpack.c.h.s8.bf16 %v4855
    %v5084 = vunpack.c.h.s8.bf16 %v4856
    %v5085 = vunpack.c.h.s8.bf16 %v4857
    %v5086 = vunpack.c.h.s8.bf16 %v4858
    %v5087 = vunpack.c.l.s8.bf16 %v4859
    %v5088 = vunpack.c.l.s8.bf16 %v4860
    %v5089 = vunpack.c.l.s8.bf16 %v4861
    %v5090 = vunpack.c.l.s8.bf16 %v4862
    %v5091 = vunpack.c.h.s8.bf16 %v4859
    %v5092 = vunpack.c.h.s8.bf16 %v4860
    %v5093 = vunpack.c.h.s8.bf16 %v4861
    %v5094 = vunpack.c.h.s8.bf16 %v4862
    %v5095 = vunpack.c.l.s8.bf16 %v4863
    %v5096 = vunpack.c.l.s8.bf16 %v4864
    %v5097 = vunpack.c.l.s8.bf16 %v4865
    %v5098 = vunpack.c.l.s8.bf16 %v4866
    %v5099 = vunpack.c.h.s8.bf16 %v4863
    %v5100 = vunpack.c.h.s8.bf16 %v4864
    %v5101 = vunpack.c.h.s8.bf16 %v4865
    %v5102 = vunpack.c.h.s8.bf16 %v4866
    %v5103 = vunpack.c.l.s8.bf16 %v4867
    %v5104 = vunpack.c.l.s8.bf16 %v4868
    %v5105 = vunpack.c.l.s8.bf16 %v4869
    %v5106 = vunpack.c.l.s8.bf16 %v4870
    %v5107 = vunpack.c.h.s8.bf16 %v4867
    %v5108 = vunpack.c.h.s8.bf16 %v4868
    %v5109 = vunpack.c.h.s8.bf16 %v4869
    %v5110 = vunpack.c.h.s8.bf16 %v4870
    %v5111 = vunpack.c.l.s8.bf16 %v4871
    %v5112 = vunpack.c.l.s8.bf16 %v4872
    %v5113 = vunpack.c.l.s8.bf16 %v4873
    %v5114 = vunpack.c.l.s8.bf16 %v4874
    %v5115 = vunpack.c.h.s8.bf16 %v4871
    %v5116 = vunpack.c.h.s8.bf16 %v4872
    %v5117 = vunpack.c.h.s8.bf16 %v4873
    %v5118 = vunpack.c.h.s8.bf16 %v4874
    %v5119 = vunpack.c.l.s8.bf16 %v4875
    %v5120 = vunpack.c.l.s8.bf16 %v4876
    %v5121 = vunpack.c.l.s8.bf16 %v4877
    %v5122 = vunpack.c.l.s8.bf16 %v4878
    %v5123 = vunpack.c.h.s8.bf16 %v4875
    %v5124 = vunpack.c.h.s8.bf16 %v4876
    %v5125 = vunpack.c.h.s8.bf16 %v4877
    %v5126 = vunpack.c.h.s8.bf16 %v4878
    %v5127 = vunpack.c.l.s8.bf16 %v4879
    %v5128 = vunpack.c.l.s8.bf16 %v4880
    %v5129 = vunpack.c.l.s8.bf16 %v4881
    %v5130 = vunpack.c.l.s8.bf16 %v4882
    %v5131 = vunpack.c.h.s8.bf16 %v4879
    %v5132 = vunpack.c.h.s8.bf16 %v4880
    %v5133 = vunpack.c.h.s8.bf16 %v4881
    %v5134 = vunpack.c.h.s8.bf16 %v4882
    %v5135 = vunpack.c.l.s8.bf16 %v4883
    %v5136 = vunpack.c.l.s8.bf16 %v4884
    %v5137 = vunpack.c.l.s8.bf16 %v4885
    %v5138 = vunpack.c.l.s8.bf16 %v4886
    %v5139 = vunpack.c.h.s8.bf16 %v4883
    %v5140 = vunpack.c.h.s8.bf16 %v4884
    %v5141 = vunpack.c.h.s8.bf16 %v4885
    %v5142 = vunpack.c.h.s8.bf16 %v4886
    %5143 = vmatprep.subr.bf16.mxu0 %v4916
    %5144 = vmatpush1.bf16.msra.mxu0 %v4915
    %5145 = vmatprep.subr.bf16.mxu0 %v4912
    %5146 = vmatpush1.bf16.msra.mxu0 %v4911
    %5147 = vmatprep.subr.bf16.mxu0 %v4908
    %5148 = vmatpush1.bf16.msra.mxu0 %v4907
    %5149 = vmatprep.subr.bf16.mxu0 %v4904
    %5150 = vmatpush1.bf16.msra.mxu0 %v4903
    %5151 = vmatprep.subr.bf16.mxu0 %v4900
    %5152 = vmatpush1.bf16.msra.mxu0 %v4899
    %5153 = vmatprep.subr.bf16.mxu0 %v4896
    %5154 = vmatpush1.bf16.msra.mxu0 %v4895
    %5155 = vmatprep.subr.bf16.mxu0 %v4892
    %5156 = vmatpush1.bf16.msra.mxu0 %v4891
    %5157 = vmatprep.subr.bf16.mxu0 %v4888
    %5158 = vmatpush1.bf16.msra.mxu0 %v4887
    %5159 = vmatprep.subr.bf16.mxu0 %v4948
    %5160 = vmatpush2.bf16.msra.mxu0 %v4947
    %5161 = vmatprep.subr.bf16.mxu0 %v4944
    %5162 = vmatpush2.bf16.msra.mxu0 %v4943
    %5163 = vmatprep.subr.bf16.mxu0 %v4940
    %5164 = vmatpush2.bf16.msra.mxu0 %v4939
    %5165 = vmatprep.subr.bf16.mxu0 %v4936
    %5166 = vmatpush2.bf16.msra.mxu0 %v4935
    %5167 = vmatprep.subr.bf16.mxu0 %v4932
    %5168 = vmatpush2.bf16.msra.mxu0 %v4931
    %5169 = vmatprep.subr.bf16.mxu0 %v4928
    %5170 = vmatpush2.bf16.msra.mxu0 %v4927
    %5171 = vmatprep.subr.bf16.mxu0 %v4924
    %5172 = vmatpush2.bf16.msra.mxu0 %v4923
    %5173 = vmatprep.subr.bf16.mxu0 %v4920
    %5174 = vmatpush2.bf16.msra.mxu0 %v4919
    %5175 = vmatprep.mubr.bf16.mxu0 %v4744
    %5176 = vmatmul.mubr.bf16.gmra.mxu0 %v4743
    %v5177 = vpop.f32.mrf.mxu0
    %v5178 = vadd.f32 0.0, %v5177
    %v5179 = vpop.f32.mrf.mxu0
    %v5180 = vadd.f32 0.0, %v5179
    %v5181 = vpop.f32.mrf.mxu0
    %v5182 = vpop.f32.mrf.mxu0
    %5183 = vdwg.mxu0
    %5184 = vmatprep.subr.bf16.mxu0 %v4980
    %5185 = vmatpush1.bf16.msra.mxu0 %v4979
    %5186 = vmatprep.subr.bf16.mxu0 %v4976
    %5187 = vmatpush1.bf16.msra.mxu0 %v4975
    %5188 = vmatprep.subr.bf16.mxu0 %v4972
    %5189 = vmatpush1.bf16.msra.mxu0 %v4971
    %5190 = vmatprep.subr.bf16.mxu0 %v4968
    %5191 = vmatpush1.bf16.msra.mxu0 %v4967
    %5192 = vmatprep.subr.bf16.mxu0 %v4964
    %5193 = vmatpush1.bf16.msra.mxu0 %v4963
    %5194 = vmatprep.subr.bf16.mxu0 %v4960
    %5195 = vmatpush1.bf16.msra.mxu0 %v4959
    %5196 = vmatprep.subr.bf16.mxu0 %v4956
    %5197 = vmatpush1.bf16.msra.mxu0 %v4955
    %5198 = vmatprep.subr.bf16.mxu0 %v4952
    %5199 = vmatpush1.bf16.msra.mxu0 %v4951
    %5200 = vmatprep.subr.bf16.mxu0 %v5012
    %5201 = vmatpush2.bf16.msra.mxu0 %v5011
    %5202 = vmatprep.subr.bf16.mxu0 %v5008
    %5203 = vmatpush2.bf16.msra.mxu0 %v5007
    %5204 = vmatprep.subr.bf16.mxu0 %v5004
    %5205 = vmatpush2.bf16.msra.mxu0 %v5003
    %5206 = vmatprep.subr.bf16.mxu0 %v5000
    %5207 = vmatpush2.bf16.msra.mxu0 %v4999
    %5208 = vmatprep.subr.bf16.mxu0 %v4996
    %5209 = vmatpush2.bf16.msra.mxu0 %v4995
    %5210 = vmatprep.subr.bf16.mxu0 %v4992
    %5211 = vmatpush2.bf16.msra.mxu0 %v4991
    %5212 = vmatprep.subr.bf16.mxu0 %v4988
    %5213 = vmatpush2.bf16.msra.mxu0 %v4987
    %5214 = vmatprep.subr.bf16.mxu0 %v4984
    %5215 = vmatpush2.bf16.msra.mxu0 %v4983
    %5216 = vmatprep.mubr.bf16.mxu0 %v4746
    %5217 = vmatmul.mubr.bf16.gmra.mxu0 %v4745
    %v5218 = vpop.f32.mrf.mxu0
    %v5219 = vadd.f32 %v5178, %v5218
    %v5220 = vpop.f32.mrf.mxu0
    %v5221 = vadd.f32 %v5180, %v5220
    %v5222 = vpop.f32.mrf.mxu0
    %v5223 = vpop.f32.mrf.mxu0
    %5224 = vdwg.mxu0
    %5225 = vmatprep.subr.bf16.mxu0 %v5044
    %5226 = vmatpush1.bf16.msra.mxu0 %v5043
    %5227 = vmatprep.subr.bf16.mxu0 %v5040
    %5228 = vmatpush1.bf16.msra.mxu0 %v5039
    %5229 = vmatprep.subr.bf16.mxu0 %v5036
    %5230 = vmatpush1.bf16.msra.mxu0 %v5035
    %5231 = vmatprep.subr.bf16.mxu0 %v5032
    %5232 = vmatpush1.bf16.msra.mxu0 %v5031
    %5233 = vmatprep.subr.bf16.mxu0 %v5028
    %5234 = vmatpush1.bf16.msra.mxu0 %v5027
    %5235 = vmatprep.subr.bf16.mxu0 %v5024
    %5236 = vmatpush1.bf16.msra.mxu0 %v5023
    %5237 = vmatprep.subr.bf16.mxu0 %v5020
    %5238 = vmatpush1.bf16.msra.mxu0 %v5019
    %5239 = vmatprep.subr.bf16.mxu0 %v5016
    %5240 = vmatpush1.bf16.msra.mxu0 %v5015
    %5241 = vmatprep.subr.bf16.mxu0 %v5076
    %5242 = vmatpush2.bf16.msra.mxu0 %v5075
    %5243 = vmatprep.subr.bf16.mxu0 %v5072
    %5244 = vmatpush2.bf16.msra.mxu0 %v5071
    %5245 = vmatprep.subr.bf16.mxu0 %v5068
    %5246 = vmatpush2.bf16.msra.mxu0 %v5067
    %5247 = vmatprep.subr.bf16.mxu0 %v5064
    %5248 = vmatpush2.bf16.msra.mxu0 %v5063
    %5249 = vmatprep.subr.bf16.mxu0 %v5060
    %5250 = vmatpush2.bf16.msra.mxu0 %v5059
    %5251 = vmatprep.subr.bf16.mxu0 %v5056
    %5252 = vmatpush2.bf16.msra.mxu0 %v5055
    %5253 = vmatprep.subr.bf16.mxu0 %v5052
    %5254 = vmatpush2.bf16.msra.mxu0 %v5051
    %5255 = vmatprep.subr.bf16.mxu0 %v5048
    %5256 = vmatpush2.bf16.msra.mxu0 %v5047
    %5257 = vmatprep.mubr.bf16.mxu0 %v4748
    %5258 = vmatmul.mubr.bf16.gmra.mxu0 %v4747
    %v5259 = vpop.f32.mrf.mxu0
    %v5260 = vadd.f32 %v5219, %v5259
    %v5261 = vpop.f32.mrf.mxu0
    %v5262 = vadd.f32 %v5221, %v5261
    %v5263 = vpop.f32.mrf.mxu0
    %v5264 = vpop.f32.mrf.mxu0
    %5265 = vdwg.mxu0
    %5266 = vmatprep.subr.bf16.mxu0 %v5108
    %5267 = vmatpush1.bf16.msra.mxu0 %v5107
    %5268 = vmatprep.subr.bf16.mxu0 %v5104
    %5269 = vmatpush1.bf16.msra.mxu0 %v5103
    %5270 = vmatprep.subr.bf16.mxu0 %v5100
    %5271 = vmatpush1.bf16.msra.mxu0 %v5099
    %5272 = vmatprep.subr.bf16.mxu0 %v5096
    %5273 = vmatpush1.bf16.msra.mxu0 %v5095
    %5274 = vmatprep.subr.bf16.mxu0 %v5092
    %5275 = vmatpush1.bf16.msra.mxu0 %v5091
    %5276 = vmatprep.subr.bf16.mxu0 %v5088
    %5277 = vmatpush1.bf16.msra.mxu0 %v5087
    %5278 = vmatprep.subr.bf16.mxu0 %v5084
    %5279 = vmatpush1.bf16.msra.mxu0 %v5083
    %5280 = vmatprep.subr.bf16.mxu0 %v5080
    %5281 = vmatpush1.bf16.msra.mxu0 %v5079
    %5282 = vmatprep.subr.bf16.mxu0 %v5140
    %5283 = vmatpush2.bf16.msra.mxu0 %v5139
    %5284 = vmatprep.subr.bf16.mxu0 %v5136
    %5285 = vmatpush2.bf16.msra.mxu0 %v5135
    %5286 = vmatprep.subr.bf16.mxu0 %v5132
    %5287 = vmatpush2.bf16.msra.mxu0 %v5131
    %5288 = vmatprep.subr.bf16.mxu0 %v5128
    %5289 = vmatpush2.bf16.msra.mxu0 %v5127
    %5290 = vmatprep.subr.bf16.mxu0 %v5124
    %5291 = vmatpush2.bf16.msra.mxu0 %v5123
    %5292 = vmatprep.subr.bf16.mxu0 %v5120
    %5293 = vmatpush2.bf16.msra.mxu0 %v5119
    %5294 = vmatprep.subr.bf16.mxu0 %v5116
    %5295 = vmatpush2.bf16.msra.mxu0 %v5115
    %5296 = vmatprep.subr.bf16.mxu0 %v5112
    %5297 = vmatpush2.bf16.msra.mxu0 %v5111
    %5298 = vmatprep.mubr.bf16.mxu0 %v4750
    %5299 = vmatmul.mubr.bf16.gmra.mxu0 %v4749
    %v5300 = vpop.f32.mrf.mxu0
    %v5301 = vadd.f32 %v5260, %v5300
    %v5302 = vpop.f32.mrf.mxu0
    %v5303 = vadd.f32 %v5262, %v5302
    %v5304 = vpop.f32.mrf.mxu0
    %v5305 = vpop.f32.mrf.mxu0
    %5306 = vdwg.mxu0
    %5307 = vmatprep.subr.bf16.mxu0 %v4918
    %5308 = vmatpush1.bf16.msra.mxu0 %v4917
    %5309 = vmatprep.subr.bf16.mxu0 %v4914
    %5310 = vmatpush1.bf16.msra.mxu0 %v4913
    %5311 = vmatprep.subr.bf16.mxu0 %v4910
    %5312 = vmatpush1.bf16.msra.mxu0 %v4909
    %5313 = vmatprep.subr.bf16.mxu0 %v4906
    %5314 = vmatpush1.bf16.msra.mxu0 %v4905
    %5315 = vmatprep.subr.bf16.mxu0 %v4902
    %5316 = vmatpush1.bf16.msra.mxu0 %v4901
    %5317 = vmatprep.subr.bf16.mxu0 %v4898
    %5318 = vmatpush1.bf16.msra.mxu0 %v4897
    %5319 = vmatprep.subr.bf16.mxu0 %v4894
    %5320 = vmatpush1.bf16.msra.mxu0 %v4893
    %5321 = vmatprep.subr.bf16.mxu0 %v4890
    %5322 = vmatpush1.bf16.msra.mxu0 %v4889
    %5323 = vmatprep.subr.bf16.mxu0 %v4950
    %5324 = vmatpush2.bf16.msra.mxu0 %v4949
    %5325 = vmatprep.subr.bf16.mxu0 %v4946
    %5326 = vmatpush2.bf16.msra.mxu0 %v4945
    %5327 = vmatprep.subr.bf16.mxu0 %v4942
    %5328 = vmatpush2.bf16.msra.mxu0 %v4941
    %5329 = vmatprep.subr.bf16.mxu0 %v4938
    %5330 = vmatpush2.bf16.msra.mxu0 %v4937
    %5331 = vmatprep.subr.bf16.mxu0 %v4934
    %5332 = vmatpush2.bf16.msra.mxu0 %v4933
    %5333 = vmatprep.subr.bf16.mxu0 %v4930
    %5334 = vmatpush2.bf16.msra.mxu0 %v4929
    %5335 = vmatprep.subr.bf16.mxu0 %v4926
    %5336 = vmatpush2.bf16.msra.mxu0 %v4925
    %5337 = vmatprep.subr.bf16.mxu0 %v4922
    %5338 = vmatpush2.bf16.msra.mxu0 %v4921
    %5339 = vmatprep.mubr.bf16.mxu0 %v4744
    %5340 = vmatmul.mubr.bf16.gmra.mxu0 %v4743
    %v5341 = vpop.f32.mrf.mxu0
    %v5342 = vadd.f32 0.0, %v5341
    %v5343 = vpop.f32.mrf.mxu0
    %v5344 = vadd.f32 0.0, %v5343
    %v5345 = vpop.f32.mrf.mxu0
    %v5346 = vpop.f32.mrf.mxu0
    %5347 = vdwg.mxu0
    %5348 = vmatprep.subr.bf16.mxu0 %v4982
    %5349 = vmatpush1.bf16.msra.mxu0 %v4981
    %5350 = vmatprep.subr.bf16.mxu0 %v4978
    %5351 = vmatpush1.bf16.msra.mxu0 %v4977
    %5352 = vmatprep.subr.bf16.mxu0 %v4974
    %5353 = vmatpush1.bf16.msra.mxu0 %v4973
    %5354 = vmatprep.subr.bf16.mxu0 %v4970
    %5355 = vmatpush1.bf16.msra.mxu0 %v4969
    %5356 = vmatprep.subr.bf16.mxu0 %v4966
    %5357 = vmatpush1.bf16.msra.mxu0 %v4965
    %5358 = vmatprep.subr.bf16.mxu0 %v4962
    %5359 = vmatpush1.bf16.msra.mxu0 %v4961
    %5360 = vmatprep.subr.bf16.mxu0 %v4958
    %5361 = vmatpush1.bf16.msra.mxu0 %v4957
    %5362 = vmatprep.subr.bf16.mxu0 %v4954
    %5363 = vmatpush1.bf16.msra.mxu0 %v4953
    %5364 = vmatprep.subr.bf16.mxu0 %v5014
    %5365 = vmatpush2.bf16.msra.mxu0 %v5013
    %5366 = vmatprep.subr.bf16.mxu0 %v5010
    %5367 = vmatpush2.bf16.msra.mxu0 %v5009
    %5368 = vmatprep.subr.bf16.mxu0 %v5006
    %5369 = vmatpush2.bf16.msra.mxu0 %v5005
    %5370 = vmatprep.subr.bf16.mxu0 %v5002
    %5371 = vmatpush2.bf16.msra.mxu0 %v5001
    %5372 = vmatprep.subr.bf16.mxu0 %v4998
    %5373 = vmatpush2.bf16.msra.mxu0 %v4997
    %5374 = vmatprep.subr.bf16.mxu0 %v4994
    %5375 = vmatpush2.bf16.msra.mxu0 %v4993
    %5376 = vmatprep.subr.bf16.mxu0 %v4990
    %5377 = vmatpush2.bf16.msra.mxu0 %v4989
    %5378 = vmatprep.subr.bf16.mxu0 %v4986
    %5379 = vmatpush2.bf16.msra.mxu0 %v4985
    %5380 = vmatprep.mubr.bf16.mxu0 %v4746
    %5381 = vmatmul.mubr.bf16.gmra.mxu0 %v4745
    %v5382 = vpop.f32.mrf.mxu0
    %v5383 = vadd.f32 %v5342, %v5382
    %v5384 = vpop.f32.mrf.mxu0
    %v5385 = vadd.f32 %v5344, %v5384
    %v5386 = vpop.f32.mrf.mxu0
    %v5387 = vpop.f32.mrf.mxu0
    %5388 = vdwg.mxu0
    %5389 = vmatprep.subr.bf16.mxu0 %v5046
    %5390 = vmatpush1.bf16.msra.mxu0 %v5045
    %5391 = vmatprep.subr.bf16.mxu0 %v5042
    %5392 = vmatpush1.bf16.msra.mxu0 %v5041
    %5393 = vmatprep.subr.bf16.mxu0 %v5038
    %5394 = vmatpush1.bf16.msra.mxu0 %v5037
    %5395 = vmatprep.subr.bf16.mxu0 %v5034
    %5396 = vmatpush1.bf16.msra.mxu0 %v5033
    %5397 = vmatprep.subr.bf16.mxu0 %v5030
    %5398 = vmatpush1.bf16.msra.mxu0 %v5029
    %5399 = vmatprep.subr.bf16.mxu0 %v5026
    %5400 = vmatpush1.bf16.msra.mxu0 %v5025
    %5401 = vmatprep.subr.bf16.mxu0 %v5022
    %5402 = vmatpush1.bf16.msra.mxu0 %v5021
    %5403 = vmatprep.subr.bf16.mxu0 %v5018
    %5404 = vmatpush1.bf16.msra.mxu0 %v5017
    %5405 = vmatprep.subr.bf16.mxu0 %v5078
    %5406 = vmatpush2.bf16.msra.mxu0 %v5077
    %5407 = vmatprep.subr.bf16.mxu0 %v5074
    %5408 = vmatpush2.bf16.msra.mxu0 %v5073
    %5409 = vmatprep.subr.bf16.mxu0 %v5070
    %5410 = vmatpush2.bf16.msra.mxu0 %v5069
    %5411 = vmatprep.subr.bf16.mxu0 %v5066
    %5412 = vmatpush2.bf16.msra.mxu0 %v5065
    %5413 = vmatprep.subr.bf16.mxu0 %v5062
    %5414 = vmatpush2.bf16.msra.mxu0 %v5061
    %5415 = vmatprep.subr.bf16.mxu0 %v5058
    %5416 = vmatpush2.bf16.msra.mxu0 %v5057
    %5417 = vmatprep.subr.bf16.mxu0 %v5054
    %5418 = vmatpush2.bf16.msra.mxu0 %v5053
    %5419 = vmatprep.subr.bf16.mxu0 %v5050
    %5420 = vmatpush2.bf16.msra.mxu0 %v5049
    %5421 = vmatprep.mubr.bf16.mxu0 %v4748
    %5422 = vmatmul.mubr.bf16.gmra.mxu0 %v4747
    %v5423 = vpop.f32.mrf.mxu0
    %v5424 = vadd.f32 %v5383, %v5423
    %v5425 = vpop.f32.mrf.mxu0
    %v5426 = vadd.f32 %v5385, %v5425
    %v5427 = vpop.f32.mrf.mxu0
    %v5428 = vpop.f32.mrf.mxu0
    %5429 = vdwg.mxu0
    %5430 = vmatprep.subr.bf16.mxu0 %v5110
    %5431 = vmatpush1.bf16.msra.mxu0 %v5109
    %5432 = vmatprep.subr.bf16.mxu0 %v5106
    %5433 = vmatpush1.bf16.msra.mxu0 %v5105
    %5434 = vmatprep.subr.bf16.mxu0 %v5102
    %5435 = vmatpush1.bf16.msra.mxu0 %v5101
    %5436 = vmatprep.subr.bf16.mxu0 %v5098
    %5437 = vmatpush1.bf16.msra.mxu0 %v5097
    %5438 = vmatprep.subr.bf16.mxu0 %v5094
    %5439 = vmatpush1.bf16.msra.mxu0 %v5093
    %5440 = vmatprep.subr.bf16.mxu0 %v5090
    %5441 = vmatpush1.bf16.msra.mxu0 %v5089
    %5442 = vmatprep.subr.bf16.mxu0 %v5086
    %5443 = vmatpush1.bf16.msra.mxu0 %v5085
    %5444 = vmatprep.subr.bf16.mxu0 %v5082
    %5445 = vmatpush1.bf16.msra.mxu0 %v5081
    %5446 = vmatprep.subr.bf16.mxu0 %v5142
    %5447 = vmatpush2.bf16.msra.mxu0 %v5141
    %5448 = vmatprep.subr.bf16.mxu0 %v5138
    %5449 = vmatpush2.bf16.msra.mxu0 %v5137
    %5450 = vmatprep.subr.bf16.mxu0 %v5134
    %5451 = vmatpush2.bf16.msra.mxu0 %v5133
    %5452 = vmatprep.subr.bf16.mxu0 %v5130
    %5453 = vmatpush2.bf16.msra.mxu0 %v5129
    %5454 = vmatprep.subr.bf16.mxu0 %v5126
    %5455 = vmatpush2.bf16.msra.mxu0 %v5125
    %5456 = vmatprep.subr.bf16.mxu0 %v5122
    %5457 = vmatpush2.bf16.msra.mxu0 %v5121
    %5458 = vmatprep.subr.bf16.mxu0 %v5118
    %5459 = vmatpush2.bf16.msra.mxu0 %v5117
    %5460 = vmatprep.subr.bf16.mxu0 %v5114
    %5461 = vmatpush2.bf16.msra.mxu0 %v5113
    %5462 = vmatprep.mubr.bf16.mxu0 %v4750
    %5463 = vmatmul.mubr.bf16.gmra.mxu0 %v4749
    %v5464 = vpop.f32.mrf.mxu0
    %v5465 = vadd.f32 %v5424, %v5464
    %v5466 = vpop.f32.mrf.mxu0
    %v5467 = vadd.f32 %v5426, %v5466
    %v5468 = vpop.f32.mrf.mxu0
    %v5469 = vpop.f32.mrf.mxu0
    %5470 = vdwg.mxu0
    %v5471 = vld [vmem:[#allocation13 + $0x18] sm:$0xf]
    %v5473 = vlaneseq
    %v5474 = vshrl.u32 %v5473, 7
    %v5475 = vsub.s32 0, %v5474
    %v5476 = vrot.slane %v5471, %v5475
    %v5477 = vlaneseq
    %v5478 = vshrl.u32 %v5477, 7
    %v5479 = vsub.s32 1, %v5478
    %v5480 = vrot.slane %v5471, %v5479
    %v5481 = vlaneseq
    %v5482 = vshrl.u32 %v5481, 7
    %v5483 = vsub.s32 2, %v5482
    %v5484 = vrot.slane %v5471, %v5483
    %v5485 = vlaneseq
    %v5486 = vshrl.u32 %v5485, 7
    %v5487 = vsub.s32 3, %v5486
    %v5488 = vrot.slane %v5471, %v5487
    %v5493 = vmul.f32 %v5301, %v5476
    %v5494 = vmul.f32 %v5303, %v5480
    %v5495 = vmul.f32 %v5465, %v5484
    %v5496 = vmul.f32 %v5467, %v5488
    %v5497 = vld [vmem:[#allocation15 + $0x18] sm:$0xf]
    %v5499 = vlaneseq
    %v5500 = vshrl.u32 %v5499, 7
    %v5501 = vsub.s32 0, %v5500
    %v5502 = vrot.slane %v5497, %v5501
    %v5503 = vlaneseq
    %v5504 = vshrl.u32 %v5503, 7
    %v5505 = vsub.s32 1, %v5504
    %v5506 = vrot.slane %v5497, %v5505
    %v5507 = vlaneseq
    %v5508 = vshrl.u32 %v5507, 7
    %v5509 = vsub.s32 2, %v5508
    %v5510 = vrot.slane %v5497, %v5509
    %v5511 = vlaneseq
    %v5512 = vshrl.u32 %v5511, 7
    %v5513 = vsub.s32 3, %v5512
    %v5514 = vrot.slane %v5497, %v5513
    %v5519 = vadd.f32 %v5493, %v5502
    %v5520 = vadd.f32 %v5494, %v5506
    %v5521 = vadd.f32 %v5495, %v5510
    %v5522 = vadd.f32 %v5496, %v5514
    %vm5523 = vcmp.ge.f32.partialorder %v5519, 0.0
    %vm5524 = vcmp.ge.f32.partialorder %v5520, 0.0
    %vm5525 = vcmp.ge.f32.partialorder %v5521, 0.0
    %vm5526 = vcmp.ge.f32.partialorder %v5522, 0.0
    %v5527 = vmul.f32 %v5519, 0.01
    %v5528 = vmul.f32 %v5520, 0.01
    %v5529 = vmul.f32 %v5521, 0.01
    %v5530 = vmul.f32 %v5522, 0.01
    %v5531 = vsel %vm5523, %v5519, %v5527
    %v5532 = vsel %vm5524, %v5520, %v5528
    %v5533 = vsel %vm5525, %v5521, %v5529
    %v5534 = vsel %vm5526, %v5522, %v5530
    %v5535 = vpack.c.bf16 %v5531, %v5531
    %v5536 = vpack.c.bf16 %v5532, %v5532
    %v5537 = vpack.c.bf16 %v5533, %v5533
    %v5538 = vpack.c.bf16 %v5534, %v5534
    // Predicated region
    $region70: #{tpu_custom_call.1} parent=1 // pred_check
      %p5539 = pneg %p58
    $region71: #{tpu_custom_call.1} parent=1 // pred_check_branch
      %5541 = sbr.rel (%p5539) target = $region73
    $region72: #{tpu_custom_call.1} parent=1 // pred_region
      %s5542 = scalar_lea.sflag [#allocation9], 3
      %s5543 = smul.u32 2, 64
      %s5544 = smul.u32 %s5543, 2
      %s5545 = sshll.u32 %s5544, 4
      %5546 = dma.done %s5542, %s5545
    $region73: #{tpu_custom_call.1} parent=1 // pred_fallthru
      _
    %v5547 = vld [vmem:[#allocation5] sm:$0xff]
    %v5548 = vld [vmem:[#allocation5 + $0x8] sm:$0xff]
    %v5549 = vld [vmem:[#allocation5 + $0x10] sm:$0xff]
    %v5550 = vld [vmem:[#allocation5 + $0x18] sm:$0xff]
    %v5551 = vld [vmem:[#allocation5 + $0x20] sm:$0xff]
    %v5552 = vld [vmem:[#allocation5 + $0x28] sm:$0xff]
    %v5553 = vld [vmem:[#allocation5 + $0x30] sm:$0xff]
    %v5554 = vld [vmem:[#allocation5 + $0x38] sm:$0xff]
    %v5555 = vld [vmem:[#allocation5 + $0x40] sm:$0xff]
    %v5556 = vld [vmem:[#allocation5 + $0x48] sm:$0xff]
    %v5557 = vld [vmem:[#allocation5 + $0x50] sm:$0xff]
    %v5558 = vld [vmem:[#allocation5 + $0x58] sm:$0xff]
    %v5559 = vld [vmem:[#allocation5 + $0x60] sm:$0xff]
    %v5560 = vld [vmem:[#allocation5 + $0x68] sm:$0xff]
    %v5561 = vld [vmem:[#allocation5 + $0x70] sm:$0xff]
    %v5562 = vld [vmem:[#allocation5 + $0x78] sm:$0xff]
    %v5563 = vld [vmem:[#allocation5 + $0x80] sm:$0xff]
    %v5564 = vld [vmem:[#allocation5 + $0x88] sm:$0xff]
    %v5565 = vld [vmem:[#allocation5 + $0x90] sm:$0xff]
    %v5566 = vld [vmem:[#allocation5 + $0x98] sm:$0xff]
    %v5567 = vld [vmem:[#allocation5 + $0xa0] sm:$0xff]
    %v5568 = vld [vmem:[#allocation5 + $0xa8] sm:$0xff]
    %v5569 = vld [vmem:[#allocation5 + $0xb0] sm:$0xff]
    %v5570 = vld [vmem:[#allocation5 + $0xb8] sm:$0xff]
    %v5571 = vld [vmem:[#allocation5 + $0xc0] sm:$0xff]
    %v5572 = vld [vmem:[#allocation5 + $0xc8] sm:$0xff]
    %v5573 = vld [vmem:[#allocation5 + $0xd0] sm:$0xff]
    %v5574 = vld [vmem:[#allocation5 + $0xd8] sm:$0xff]
    %v5575 = vld [vmem:[#allocation5 + $0xe0] sm:$0xff]
    %v5576 = vld [vmem:[#allocation5 + $0xe8] sm:$0xff]
    %v5577 = vld [vmem:[#allocation5 + $0xf0] sm:$0xff]
    %v5578 = vld [vmem:[#allocation5 + $0xf8] sm:$0xff]
    %v5579 = vunpack.c.l.s8.bf16 %v5547
    %v5580 = vunpack.c.l.s8.bf16 %v5548
    %v5581 = vunpack.c.h.s8.bf16 %v5547
    %v5582 = vunpack.c.h.s8.bf16 %v5548
    %v5583 = vunpack.c.l.s8.bf16 %v5549
    %v5584 = vunpack.c.l.s8.bf16 %v5550
    %v5585 = vunpack.c.h.s8.bf16 %v5549
    %v5586 = vunpack.c.h.s8.bf16 %v5550
    %v5587 = vunpack.c.l.s8.bf16 %v5551
    %v5588 = vunpack.c.l.s8.bf16 %v5552
    %v5589 = vunpack.c.h.s8.bf16 %v5551
    %v5590 = vunpack.c.h.s8.bf16 %v5552
    %v5591 = vunpack.c.l.s8.bf16 %v5553
    %v5592 = vunpack.c.l.s8.bf16 %v5554
    %v5593 = vunpack.c.h.s8.bf16 %v5553
    %v5594 = vunpack.c.h.s8.bf16 %v5554
    %v5595 = vunpack.c.l.s8.bf16 %v5555
    %v5596 = vunpack.c.l.s8.bf16 %v5556
    %v5597 = vunpack.c.h.s8.bf16 %v5555
    %v5598 = vunpack.c.h.s8.bf16 %v5556
    %v5599 = vunpack.c.l.s8.bf16 %v5557
    %v5600 = vunpack.c.l.s8.bf16 %v5558
    %v5601 = vunpack.c.h.s8.bf16 %v5557
    %v5602 = vunpack.c.h.s8.bf16 %v5558
    %v5603 = vunpack.c.l.s8.bf16 %v5559
    %v5604 = vunpack.c.l.s8.bf16 %v5560
    %v5605 = vunpack.c.h.s8.bf16 %v5559
    %v5606 = vunpack.c.h.s8.bf16 %v5560
    %v5607 = vunpack.c.l.s8.bf16 %v5561
    %v5608 = vunpack.c.l.s8.bf16 %v5562
    %v5609 = vunpack.c.h.s8.bf16 %v5561
    %v5610 = vunpack.c.h.s8.bf16 %v5562
    %v5611 = vunpack.c.l.s8.bf16 %v5563
    %v5612 = vunpack.c.l.s8.bf16 %v5564
    %v5613 = vunpack.c.h.s8.bf16 %v5563
    %v5614 = vunpack.c.h.s8.bf16 %v5564
    %v5615 = vunpack.c.l.s8.bf16 %v5565
    %v5616 = vunpack.c.l.s8.bf16 %v5566
    %v5617 = vunpack.c.h.s8.bf16 %v5565
    %v5618 = vunpack.c.h.s8.bf16 %v5566
    %v5619 = vunpack.c.l.s8.bf16 %v5567
    %v5620 = vunpack.c.l.s8.bf16 %v5568
    %v5621 = vunpack.c.h.s8.bf16 %v5567
    %v5622 = vunpack.c.h.s8.bf16 %v5568
    %v5623 = vunpack.c.l.s8.bf16 %v5569
    %v5624 = vunpack.c.l.s8.bf16 %v5570
    %v5625 = vunpack.c.h.s8.bf16 %v5569
    %v5626 = vunpack.c.h.s8.bf16 %v5570
    %v5627 = vunpack.c.l.s8.bf16 %v5571
    %v5628 = vunpack.c.l.s8.bf16 %v5572
    %v5629 = vunpack.c.h.s8.bf16 %v5571
    %v5630 = vunpack.c.h.s8.bf16 %v5572
    %v5631 = vunpack.c.l.s8.bf16 %v5573
    %v5632 = vunpack.c.l.s8.bf16 %v5574
    %v5633 = vunpack.c.h.s8.bf16 %v5573
    %v5634 = vunpack.c.h.s8.bf16 %v5574
    %v5635 = vunpack.c.l.s8.bf16 %v5575
    %v5636 = vunpack.c.l.s8.bf16 %v5576
    %v5637 = vunpack.c.h.s8.bf16 %v5575
    %v5638 = vunpack.c.h.s8.bf16 %v5576
    %v5639 = vunpack.c.l.s8.bf16 %v5577
    %v5640 = vunpack.c.l.s8.bf16 %v5578
    %v5641 = vunpack.c.h.s8.bf16 %v5577
    %v5642 = vunpack.c.h.s8.bf16 %v5578
    %5643 = vmatprep.subr.bf16.mxu0 %v5594
    %5644 = vmatpush1.bf16.msra.mxu0 %v5593
    %5645 = vmatprep.subr.bf16.mxu0 %v5592
    %5646 = vmatpush1.bf16.msra.mxu0 %v5591
    %5647 = vmatprep.subr.bf16.mxu0 %v5590
    %5648 = vmatpush1.bf16.msra.mxu0 %v5589
    %5649 = vmatprep.subr.bf16.mxu0 %v5588
    %5650 = vmatpush1.bf16.msra.mxu0 %v5587
    %5651 = vmatprep.subr.bf16.mxu0 %v5586
    %5652 = vmatpush1.bf16.msra.mxu0 %v5585
    %5653 = vmatprep.subr.bf16.mxu0 %v5584
    %5654 = vmatpush1.bf16.msra.mxu0 %v5583
    %5655 = vmatprep.subr.bf16.mxu0 %v5582
    %5656 = vmatpush1.bf16.msra.mxu0 %v5581
    %5657 = vmatprep.subr.bf16.mxu0 %v5580
    %5658 = vmatpush1.bf16.msra.mxu0 %v5579
    %5659 = vmatprep.subr.bf16.mxu0 %v5610
    %5660 = vmatpush2.bf16.msra.mxu0 %v5609
    %5661 = vmatprep.subr.bf16.mxu0 %v5608
    %5662 = vmatpush2.bf16.msra.mxu0 %v5607
    %5663 = vmatprep.subr.bf16.mxu0 %v5606
    %5664 = vmatpush2.bf16.msra.mxu0 %v5605
    %5665 = vmatprep.subr.bf16.mxu0 %v5604
    %5666 = vmatpush2.bf16.msra.mxu0 %v5603
    %5667 = vmatprep.subr.bf16.mxu0 %v5602
    %5668 = vmatpush2.bf16.msra.mxu0 %v5601
    %5669 = vmatprep.subr.bf16.mxu0 %v5600
    %5670 = vmatpush2.bf16.msra.mxu0 %v5599
    %5671 = vmatprep.subr.bf16.mxu0 %v5598
    %5672 = vmatpush2.bf16.msra.mxu0 %v5597
    %5673 = vmatprep.subr.bf16.mxu0 %v5596
    %5674 = vmatpush2.bf16.msra.mxu0 %v5595
    %5675 = vmatprep.mubr.bf16.mxu0 %v5536
    %5676 = vmatmul.mubr.bf16.gmra.mxu0 %v5535
    %v5677 = vpop.f32.mrf.mxu0
    %v5678 = vadd.f32 0.0, %v5677
    %v5679 = vpop.f32.mrf.mxu0
    %v5680 = vadd.f32 0.0, %v5679
    %v5681 = vpop.f32.mrf.mxu0
    %v5682 = vpop.f32.mrf.mxu0
    %5683 = vdwg.mxu0
    %5684 = vmatprep.subr.bf16.mxu0 %v5626
    %5685 = vmatpush1.bf16.msra.mxu0 %v5625
    %5686 = vmatprep.subr.bf16.mxu0 %v5624
    %5687 = vmatpush1.bf16.msra.mxu0 %v5623
    %5688 = vmatprep.subr.bf16.mxu0 %v5622
    %5689 = vmatpush1.bf16.msra.mxu0 %v5621
    %5690 = vmatprep.subr.bf16.mxu0 %v5620
    %5691 = vmatpush1.bf16.msra.mxu0 %v5619
    %5692 = vmatprep.subr.bf16.mxu0 %v5618
    %5693 = vmatpush1.bf16.msra.mxu0 %v5617
    %5694 = vmatprep.subr.bf16.mxu0 %v5616
    %5695 = vmatpush1.bf16.msra.mxu0 %v5615
    %5696 = vmatprep.subr.bf16.mxu0 %v5614
    %5697 = vmatpush1.bf16.msra.mxu0 %v5613
    %5698 = vmatprep.subr.bf16.mxu0 %v5612
    %5699 = vmatpush1.bf16.msra.mxu0 %v5611
    %5700 = vmatprep.subr.bf16.mxu0 %v5642
    %5701 = vmatpush2.bf16.msra.mxu0 %v5641
    %5702 = vmatprep.subr.bf16.mxu0 %v5640
    %5703 = vmatpush2.bf16.msra.mxu0 %v5639
    %5704 = vmatprep.subr.bf16.mxu0 %v5638
    %5705 = vmatpush2.bf16.msra.mxu0 %v5637
    %5706 = vmatprep.subr.bf16.mxu0 %v5636
    %5707 = vmatpush2.bf16.msra.mxu0 %v5635
    %5708 = vmatprep.subr.bf16.mxu0 %v5634
    %5709 = vmatpush2.bf16.msra.mxu0 %v5633
    %5710 = vmatprep.subr.bf16.mxu0 %v5632
    %5711 = vmatpush2.bf16.msra.mxu0 %v5631
    %5712 = vmatprep.subr.bf16.mxu0 %v5630
    %5713 = vmatpush2.bf16.msra.mxu0 %v5629
    %5714 = vmatprep.subr.bf16.mxu0 %v5628
    %5715 = vmatpush2.bf16.msra.mxu0 %v5627
    %5716 = vmatprep.mubr.bf16.mxu0 %v5538
    %5717 = vmatmul.mubr.bf16.gmra.mxu0 %v5537
    %v5718 = vpop.f32.mrf.mxu0
    %v5719 = vadd.f32 %v5678, %v5718
    %v5720 = vpop.f32.mrf.mxu0
    %v5721 = vadd.f32 %v5680, %v5720
    %v5722 = vpop.f32.mrf.mxu0
    %v5723 = vpop.f32.mrf.mxu0
    %5724 = vdwg.mxu0
    %v5725 = vld [vmem:[#allocation13 + $0x1c] sm:$0x3]
    %v5727 = vlaneseq
    %v5728 = vshrl.u32 %v5727, 7
    %v5729 = vsub.s32 0, %v5728
    %v5730 = vrot.slane %v5725, %v5729
    %v5731 = vlaneseq
    %v5732 = vshrl.u32 %v5731, 7
    %v5733 = vsub.s32 1, %v5732
    %v5734 = vrot.slane %v5725, %v5733
    %v5737 = vmul.f32 %v5719, %v5730
    %v5738 = vmul.f32 %v5721, %v5734
    %v5739 = vld [vmem:[#allocation15 + $0x1c] sm:$0x3]
    %v5741 = vlaneseq
    %v5742 = vshrl.u32 %v5741, 7
    %v5743 = vsub.s32 0, %v5742
    %v5744 = vrot.slane %v5739, %v5743
    %v5745 = vlaneseq
    %v5746 = vshrl.u32 %v5745, 7
    %v5747 = vsub.s32 1, %v5746
    %v5748 = vrot.slane %v5739, %v5747
    %v5751 = vadd.f32 %v5737, %v5744
    %v5752 = vadd.f32 %v5738, %v5748
    %vm5753 = vcmp.ge.f32.partialorder %v5751, 0.0
    %vm5754 = vcmp.ge.f32.partialorder %v5752, 0.0
    %v5755 = vmul.f32 %v5751, 0.01
    %v5756 = vmul.f32 %v5752, 0.01
    %v5757 = vsel %vm5753, %v5751, %v5755
    %v5758 = vsel %vm5754, %v5752, %v5756
    %v5759 = vpack.c.bf16 %v5757, %v5757
    %v5760 = vpack.c.bf16 %v5758, %v5758
    // Predicated region
    $region74: #{tpu_custom_call.1} parent=1 // pred_check
      %p5761 = pneg %p58
    $region75: #{tpu_custom_call.1} parent=1 // pred_check_branch
      %5763 = sbr.rel (%p5761) target = $region77
    $region76: #{tpu_custom_call.1} parent=1 // pred_region
      %s5764 = scalar_lea.sflag [#allocation9], 4
      %s5765 = smul.u32 2, 32
      %s5766 = smul.u32 %s5765, 1
      %s5767 = sshll.u32 %s5766, 4
      %5768 = dma.done %s5764, %s5767
    $region77: #{tpu_custom_call.1} parent=1 // pred_fallthru
      _
    %v5769 = vld [vmem:[#allocation6] sm:$0xff]
    %v5770 = vld [vmem:[#allocation6 + $0x8] sm:$0xff]
    %v5771 = vld [vmem:[#allocation6 + $0x10] sm:$0xff]
    %v5772 = vld [vmem:[#allocation6 + $0x18] sm:$0xff]
    %v5773 = vld [vmem:[#allocation6 + $0x20] sm:$0xff]
    %v5774 = vld [vmem:[#allocation6 + $0x28] sm:$0xff]
    %v5775 = vld [vmem:[#allocation6 + $0x30] sm:$0xff]
    %v5776 = vld [vmem:[#allocation6 + $0x38] sm:$0xff]
    %v5777 = vunpack.c.l.s8.bf16 %v5769
    %v5778 = vunpack.c.h.s8.bf16 %v5769
    %v5779 = vunpack.c.l.s8.bf16 %v5770
    %v5780 = vunpack.c.h.s8.bf16 %v5770
    %v5781 = vunpack.c.l.s8.bf16 %v5771
    %v5782 = vunpack.c.h.s8.bf16 %v5771
    %v5783 = vunpack.c.l.s8.bf16 %v5772
    %v5784 = vunpack.c.h.s8.bf16 %v5772
    %v5785 = vunpack.c.l.s8.bf16 %v5773
    %v5786 = vunpack.c.h.s8.bf16 %v5773
    %v5787 = vunpack.c.l.s8.bf16 %v5774
    %v5788 = vunpack.c.h.s8.bf16 %v5774
    %v5789 = vunpack.c.l.s8.bf16 %v5775
    %v5790 = vunpack.c.h.s8.bf16 %v5775
    %v5791 = vunpack.c.l.s8.bf16 %v5776
    %v5792 = vunpack.c.h.s8.bf16 %v5776
    %5793 = vmatprep.subr.bf16.mxu0 0
    %5794 = vmatpush1.bf16.msra.mxu0 %v5784
    %5795 = vmatprep.subr.bf16.mxu0 0
    %5796 = vmatpush1.bf16.msra.mxu0 %v5783
    %5797 = vmatprep.subr.bf16.mxu0 0
    %5798 = vmatpush1.bf16.msra.mxu0 %v5782
    %5799 = vmatprep.subr.bf16.mxu0 0
    %5800 = vmatpush1.bf16.msra.mxu0 %v5781
    %5801 = vmatprep.subr.bf16.mxu0 0
    %5802 = vmatpush1.bf16.msra.mxu0 %v5780
    %5803 = vmatprep.subr.bf16.mxu0 0
    %5804 = vmatpush1.bf16.msra.mxu0 %v5779
    %5805 = vmatprep.subr.bf16.mxu0 0
    %5806 = vmatpush1.bf16.msra.mxu0 %v5778
    %5807 = vmatprep.subr.bf16.mxu0 0
    %5808 = vmatpush1.bf16.msra.mxu0 %v5777
    %5809 = vmatprep.subr.bf16.mxu0 0
    %5810 = vmatpush2.bf16.msra.mxu0 %v5792
    %5811 = vmatprep.subr.bf16.mxu0 0
    %5812 = vmatpush2.bf16.msra.mxu0 %v5791
    %5813 = vmatprep.subr.bf16.mxu0 0
    %5814 = vmatpush2.bf16.msra.mxu0 %v5790
    %5815 = vmatprep.subr.bf16.mxu0 0
    %5816 = vmatpush2.bf16.msra.mxu0 %v5789
    %5817 = vmatprep.subr.bf16.mxu0 0
    %5818 = vmatpush2.bf16.msra.mxu0 %v5788
    %5819 = vmatprep.subr.bf16.mxu0 0
    %5820 = vmatpush2.bf16.msra.mxu0 %v5787
    %5821 = vmatprep.subr.bf16.mxu0 0
    %5822 = vmatpush2.bf16.msra.mxu0 %v5786
    %5823 = vmatprep.subr.bf16.mxu0 0
    %5824 = vmatpush2.bf16.msra.mxu0 %v5785
    %5825 = vmatprep.mubr.bf16.mxu0 %v5760
    %5826 = vmatmul.mubr.bf16.gmra.mxu0 %v5759
    %v5827 = vpop.f32.mrf.mxu0
    %v5828 = vadd.f32 0.0, %v5827
    %v5829 = vpop.f32.mrf.mxu0
    %v5830 = vpop.f32.mrf.mxu0
    %v5831 = vpop.f32.mrf.mxu0
    %5832 = vdwg.mxu0
    %v5833 = vld [vmem:[#allocation13 + $0x1e] sm:$0x1]
    %v5835 = vlaneseq
    %v5836 = vshrl.u32 %v5835, 7
    %v5837 = vsub.s32 0, %v5836
    %v5838 = vrot.slane %v5833, %v5837
    %v5840 = vmul.f32 %v5828, %v5838
    %v5841 = vld [vmem:[#allocation15 + $0x1e] sm:$0x1]
    %v5843 = vlaneseq
    %v5844 = vshrl.u32 %v5843, 7
    %v5845 = vsub.s32 0, %v5844
    %v5846 = vrot.slane %v5841, %v5845
    %v5848 = vadd.f32 %v5840, %v5846
    %vm5849 = vcmp.ge.f32.partialorder %v5848, 0.0
    %v5850 = vmul.f32 %v5848, 0.01
    %v5851 = vsel %vm5849, %v5848, %v5850
    %v5852 = vpack.c.bf16 %v5851, %v5851
    // Predicated region
    $region78: #{tpu_custom_call.1} parent=1 // pred_check
      %p5853 = pneg %p58
    $region79: #{tpu_custom_call.1} parent=1 // pred_check_branch
      %5855 = sbr.rel (%p5853) target = $region81
    $region80: #{tpu_custom_call.1} parent=1 // pred_region
      %s5856 = scalar_lea.sflag [#allocation9], 5
      %s5857 = smul.u32 2, 16
      %s5858 = smul.u32 %s5857, 1
      %s5859 = sshll.u32 %s5858, 4
      %5860 = dma.done %s5856, %s5859
    $region81: #{tpu_custom_call.1} parent=1 // pred_fallthru
      _
    %v5861 = vld [vmem:[#allocation7] sm:$0xff]
    %v5862 = vld [vmem:[#allocation7 + $0x8] sm:$0xff]
    %v5863 = vld [vmem:[#allocation7 + $0x10] sm:$0xff]
    %v5864 = vld [vmem:[#allocation7 + $0x18] sm:$0xff]
    %v5865 = vunpack.c.l.s8.bf16 %v5861
    %v5866 = vunpack.c.h.s8.bf16 %v5861
    %v5867 = vunpack.c.l.s8.bf16 %v5862
    %v5868 = vunpack.c.h.s8.bf16 %v5862
    %v5869 = vunpack.c.l.s8.bf16 %v5863
    %v5870 = vunpack.c.h.s8.bf16 %v5863
    %v5871 = vunpack.c.l.s8.bf16 %v5864
    %v5872 = vunpack.c.h.s8.bf16 %v5864
    %5873 = vmatprep.subr.bf16.mxu0 0
    %5874 = vmatpush1.bf16.msra.mxu0 %v5872
    %5875 = vmatprep.subr.bf16.mxu0 0
    %5876 = vmatpush1.bf16.msra.mxu0 %v5871
    %5877 = vmatprep.subr.bf16.mxu0 0
    %5878 = vmatpush1.bf16.msra.mxu0 %v5870
    %5879 = vmatprep.subr.bf16.mxu0 0
    %5880 = vmatpush1.bf16.msra.mxu0 %v5869
    %5881 = vmatprep.subr.bf16.mxu0 0
    %5882 = vmatpush1.bf16.msra.mxu0 %v5868
    %5883 = vmatprep.subr.bf16.mxu0 0
    %5884 = vmatpush1.bf16.msra.mxu0 %v5867
    %5885 = vmatprep.subr.bf16.mxu0 0
    %5886 = vmatpush1.bf16.msra.mxu0 %v5866
    %5887 = vmatprep.subr.bf16.mxu0 0
    %5888 = vmatpush1.bf16.msra.mxu0 %v5865
    %5889 = vmatprep.subr.bf16.mxu0 0
    %5890 = vmatpush2.bf16.msra.mxu0 0
    %5891 = vmatprep.subr.bf16.mxu0 0
    %5892 = vmatpush2.bf16.msra.mxu0 0
    %5893 = vmatprep.subr.bf16.mxu0 0
    %5894 = vmatpush2.bf16.msra.mxu0 0
    %5895 = vmatprep.subr.bf16.mxu0 0
    %5896 = vmatpush2.bf16.msra.mxu0 0
    %5897 = vmatprep.subr.bf16.mxu0 0
    %5898 = vmatpush2.bf16.msra.mxu0 0
    %5899 = vmatprep.subr.bf16.mxu0 0
    %5900 = vmatpush2.bf16.msra.mxu0 0
    %5901 = vmatprep.subr.bf16.mxu0 0
    %5902 = vmatpush2.bf16.msra.mxu0 0
    %5903 = vmatprep.subr.bf16.mxu0 0
    %5904 = vmatpush2.bf16.msra.mxu0 0
    %5905 = vmatprep.mubr.bf16.mxu0 0
    %5906 = vmatmul.mubr.bf16.gmra.mxu0 %v5852
    %v5907 = vpop.f32.mrf.mxu0
    %v5908 = vadd.f32 0.0, %v5907
    %v5909 = vpop.f32.mrf.mxu0
    %v5910 = vpop.f32.mrf.mxu0
    %v5911 = vpop.f32.mrf.mxu0
    %5912 = vdwg.mxu0
    %v5913 = vld [vmem:[#allocation13 + $0x1f] sm:$0x1]
    %v5915 = vlaneseq
    %v5916 = vshrl.u32 %v5915, 7
    %v5917 = vsub.s32 0, %v5916
    %v5918 = vrot.slane %v5913, %v5917
    %v5920 = vmul.f32 %v5908, %v5918
    %v5921 = vld [vmem:[#allocation15 + $0x1f] sm:$0x1]
    %v5923 = vlaneseq
    %v5924 = vshrl.u32 %v5923, 7
    %v5925 = vsub.s32 0, %v5924
    %v5926 = vrot.slane %v5921, %v5925
    %v5928 = vadd.f32 %v5920, %v5926
    %vm5929 = vcmp.ge.f32.partialorder %v5928, 0.0
    %v5930 = vmul.f32 %v5928, 0.01
    %v5931 = vsel %vm5929, %v5928, %v5930
    %v5932 = vpack.c.bf16 %v5931, %v5931
    // Predicated region
    $region82: #{tpu_custom_call.1} parent=1 // pred_check
      %p5933 = pneg %p58
    $region83: #{tpu_custom_call.1} parent=1 // pred_check_branch
      %5935 = sbr.rel (%p5933) target = $region85
    $region84: #{tpu_custom_call.1} parent=1 // pred_region
      %s5936 = scalar_lea.sflag [#allocation9], 6
      %s5937 = smul.u32 2, 16
      %s5938 = smul.u32 %s5937, 1
      %s5939 = sshll.u32 %s5938, 4
      %5940 = dma.done %s5936, %s5939
    $region85: #{tpu_custom_call.1} parent=1 // pred_fallthru
      _
    %v5941 = vld [vmem:[#allocation8] sm:$0xff]
    %v5942 = vld [vmem:[#allocation8 + $0x8] sm:$0xff]
    %v5943 = vld [vmem:[#allocation8 + $0x10] sm:$0xff]
    %v5944 = vld [vmem:[#allocation8 + $0x18] sm:$0xff]
    %v5945 = vunpack.c.l.s8.bf16 %v5941
    %v5946 = vunpack.c.h.s8.bf16 %v5941
    %v5947 = vunpack.c.l.s8.bf16 %v5942
    %v5948 = vunpack.c.h.s8.bf16 %v5942
    %v5949 = vunpack.c.l.s8.bf16 %v5943
    %v5950 = vunpack.c.h.s8.bf16 %v5943
    %v5951 = vunpack.c.l.s8.bf16 %v5944
    %v5952 = vunpack.c.h.s8.bf16 %v5944
    %5953 = vmatprep.subr.bf16.mxu0 0
    %5954 = vmatpush1.bf16.msra.mxu0 %v5952
    %5955 = vmatprep.subr.bf16.mxu0 0
    %5956 = vmatpush1.bf16.msra.mxu0 %v5951
    %5957 = vmatprep.subr.bf16.mxu0 0
    %5958 = vmatpush1.bf16.msra.mxu0 %v5950
    %5959 = vmatprep.subr.bf16.mxu0 0
    %5960 = vmatpush1.bf16.msra.mxu0 %v5949
    %5961 = vmatprep.subr.bf16.mxu0 0
    %5962 = vmatpush1.bf16.msra.mxu0 %v5948
    %5963 = vmatprep.subr.bf16.mxu0 0
    %5964 = vmatpush1.bf16.msra.mxu0 %v5947
    %5965 = vmatprep.subr.bf16.mxu0 0
    %5966 = vmatpush1.bf16.msra.mxu0 %v5946
    %5967 = vmatprep.subr.bf16.mxu0 0
    %5968 = vmatpush1.bf16.msra.mxu0 %v5945
    %5969 = vmatprep.subr.bf16.mxu0 0
    %5970 = vmatpush2.bf16.msra.mxu0 0
    %5971 = vmatprep.subr.bf16.mxu0 0
    %5972 = vmatpush2.bf16.msra.mxu0 0
    %5973 = vmatprep.subr.bf16.mxu0 0
    %5974 = vmatpush2.bf16.msra.mxu0 0
    %5975 = vmatprep.subr.bf16.mxu0 0
    %5976 = vmatpush2.bf16.msra.mxu0 0
    %5977 = vmatprep.subr.bf16.mxu0 0
    %5978 = vmatpush2.bf16.msra.mxu0 0
    %5979 = vmatprep.subr.bf16.mxu0 0
    %5980 = vmatpush2.bf16.msra.mxu0 0
    %5981 = vmatprep.subr.bf16.mxu0 0
    %5982 = vmatpush2.bf16.msra.mxu0 0
    %5983 = vmatprep.subr.bf16.mxu0 0
    %5984 = vmatpush2.bf16.msra.mxu0 0
    %5985 = vmatprep.mubr.bf16.mxu0 0
    %5986 = vmatmul.mubr.bf16.gmra.mxu0 %v5932
    %v5987 = vpop.f32.mrf.mxu0
    %v5988 = vadd.f32 0.0, %v5987
    %v5989 = vpop.f32.mrf.mxu0
    %v5990 = vpop.f32.mrf.mxu0
    %v5991 = vpop.f32.mrf.mxu0
    %5992 = vdwg.mxu0
    %v5993 = vld [vmem:[#allocation13 + $0x20] sm:$0x1]
    %v5995 = vlaneseq
    %v5996 = vshrl.u32 %v5995, 7
    %v5997 = vsub.s32 0, %v5996
    %v5998 = vrot.slane %v5993, %v5997
    %v6000 = vmul.f32 %v5988, %v5998
    %v6001 = vld [vmem:[#allocation15 + $0x20] sm:$0x1]
    %v6003 = vlaneseq
    %v6004 = vshrl.u32 %v6003, 7
    %v6005 = vsub.s32 0, %v6004
    %v6006 = vrot.slane %v6001, %v6005
    %v6008 = vadd.f32 %v6000, %v6006
    %6009 = vst [vmem:[#allocation16] sm:$0xff] %v6008
    // Predicated region
    $region86: #{tpu_custom_call.1} parent=1 // pred_check
      _
    $region87: #{tpu_custom_call.1} parent=1 // pred_check_branch
      %6011 = sbr.rel (0) target = $region89
    $region88: #{tpu_custom_call.1} parent=1 // pred_region
      %s6013 = ssub.s32 128, 128
      %6014 = vsyncadd [#allocation12], %s6013
      %s6016 = sshll.u32 [#allocation16], 4
      %s6017 = int_to_ptr.vmem [resolvable:$true] %s6016
      %6019 = dma.vmem_to_hbm [thread:$0]  %s6017, 128, %s10, [#allocation12]
    $region89: #{tpu_custom_call.1} parent=1 // pred_fallthru
      _
    // Predicated region
    $region90: #{tpu_custom_call.1} parent=1 // pred_check
      _
    $region91: #{tpu_custom_call.1} parent=1 // pred_check_branch
      %6021 = sbr.rel (0) target = $region93
    $region92: #{tpu_custom_call.1} parent=1 // pred_region
      %6022 = dma.done [#allocation12], 128
    $region93: #{tpu_custom_call.1} parent=1 // pred_fallthru
      _
    %6023 = vsyncpa [#allocation11], 1
    %6024 = vsyncpa [#allocation14], 1
    %6025 = vsyncpa [#allocation12], 1
  %6026 = vsyncmov [#allocation9]
  %s6027 = vpop.sfrf %6026
  %p6028 = scmp.eq.s32.totalorder %s6027, 0
  %p6029 = pneg %p6028
  %6031 = shalt.err (%p6029)
  %s6032 = scalar_lea.sflag [#allocation9], 1
  %6033 = vsyncmov %s6032
  %s6034 = vpop.sfrf %6033
  %p6035 = scmp.eq.s32.totalorder %s6034, 0
  %p6036 = pneg %p6035
  %6038 = shalt.err (%p6036)
  %s6039 = scalar_lea.sflag [#allocation9], 2
  %6040 = vsyncmov %s6039
  %s6041 = vpop.sfrf %6040
  %p6042 = scmp.eq.s32.totalorder %s6041, 0
  %p6043 = pneg %p6042
  %6045 = shalt.err (%p6043)
  %s6046 = scalar_lea.sflag [#allocation9], 3
  %6047 = vsyncmov %s6046
  %s6048 = vpop.sfrf %6047
  %p6049 = scmp.eq.s32.totalorder %s6048, 0
  %p6050 = pneg %p6049
  %6052 = shalt.err (%p6050)
  %s6053 = scalar_lea.sflag [#allocation9], 4
  %6054 = vsyncmov %s6053
  %s6055 = vpop.sfrf %6054
  %p6056 = scmp.eq.s32.totalorder %s6055, 0
  %p6057 = pneg %p6056
  %6059 = shalt.err (%p6057)
  %s6060 = scalar_lea.sflag [#allocation9], 5
  %6061 = vsyncmov %s6060
  %s6062 = vpop.sfrf %6061
  %p6063 = scmp.eq.s32.totalorder %s6062, 0
  %p6064 = pneg %p6063
  %6066 = shalt.err (%p6064)
  %s6067 = scalar_lea.sflag [#allocation9], 6
  %6068 = vsyncmov %s6067
  %s6069 = vpop.sfrf %6068
  %p6070 = scmp.eq.s32.totalorder %s6069, 0
  %p6071 = pneg %p6070
  %6073 = shalt.err (%p6071)

</llo_original>
